<compile_context>
chip_gen: v7x
topology: tpu7x:2x2x1
jax: 0.10.0
libtpu: 0.0.40
codegen_flags: <defaults>
</compile_context>

<pallas_src>
import functools

import numpy as np
import jax
import jax.numpy as jnp
from jax.experimental import pallas as pl
from jax.experimental.pallas import tpu as pltpu


# ----------------------------- upsample matrix (host side) -----------------------------

def _interp_matrix_1d(n_in, n_out):
    """(n_out, n_in) linear-interpolation matrix, PyTorch bilinear align_corners=True."""
    m = np.zeros((n_out, n_in), np.float32)
    if n_in == 1 or n_out == 1:
        m[:, 0] = 1.0
        return m
    src = np.arange(n_out, dtype=np.float64) * (n_in - 1) / (n_out - 1)
    i0 = np.clip(np.floor(src).astype(np.int64), 0, n_in - 1)
    i1 = np.minimum(i0 + 1, n_in - 1)
    f = (src - i0).astype(np.float32)
    np.add.at(m, (np.arange(n_out), i0), 1.0 - f)
    np.add.at(m, (np.arange(n_out), i1), f)
    return m


def _place_rows(u, n_target, offset):
    """Embed rows of u into an (n_target, u.shape[1]) zero matrix at `offset`
    (negative offset crops) -- this realises F.pad on the upsampled map."""
    n_up, n_in = u.shape
    out = np.zeros((n_target, n_in), np.float32)
    src_lo = max(0, -offset)
    dst_lo = max(0, offset)
    n = min(n_up - src_lo, n_target - dst_lo)
    if n > 0:
        out[dst_lo:dst_lo + n] = u[src_lo:src_lo + n]
    return out


def _upsample_pad_matrix(hi, wi, hs, ws):
    """(hs*ws, hi*wi) matrix: bilinear x2 upsample (align_corners=True) + F.pad to skip size.
    NOTE: dense Kronecker form; for very large spatial sizes use the separable two-pass form."""
    ho, wo = 2 * hi, 2 * wi
    mh = _place_rows(_interp_matrix_1d(hi, ho), hs, (hs - ho) // 2)
    mw = _place_rows(_interp_matrix_1d(wi, wo), ws, (ws - wo) // 2)
    return np.kron(mh, mw)


# --------------------------------------- kernel ----------------------------------------

def decoder_block_kernel(src_ref, fus_ref, skip_ref, w1_ref, b1_ref, up_ref,
                         w2_ref, b2_ref, out_ref, pad1_ref, pad2_ref):
    # src/fus : (1, Hi, Wi, C)   skip: (1, Hs, Ws, C)
    # w1      : (9*C, C)  b1: (1, C)   up: (Hs*Ws, Hi*Wi)   w2: (18*C, C)  b2: (1, C)
    # out     : (1, Hs, Ws, C)
    # pad1    : VMEM (Hi+2, Wi+2, C)   pad2: VMEM (Hs+2, Ws+2, 2*C)
    _, hi, wi, c = src_ref.shape
    _, hs, ws, _ = skip_ref.shape

    # ---- (src + fused), zero-padded for conv1, entirely in VMEM (no HBM pad copy) ----
    pad1_ref[...] = jnp.zeros_like(pad1_ref)
    pad1_ref[1:hi + 1, 1:wi + 1, :] = src_ref[0] + fus_ref[0]

    # ---- conv1 (dim -> dim, 3x3, pad=1): one (Hi*Wi, 9C) x (9C, C) MXU matmul ----
    slab1 = jnp.concatenate(
        [pad1_ref[dy:dy + hi, dx:dx + wi, :].reshape(hi * wi, c)
         for dy in range(3) for dx in range(3)], axis=-1)              # (Hi*Wi, 9C)
    a1 = jnp.dot(slab1, w1_ref[...], preferred_element_type=jnp.float32)
    a1 = jnp.maximum(a1 + b1_ref[...], 0.0)                            # (Hi*Wi, C)

    # ---- bilinear x2 upsample (align_corners=True) + F.pad, as one matmul ----
    up = jnp.dot(up_ref[...], a1, preferred_element_type=jnp.float32)  # (Hs*Ws, C)

    # ---- cat([skip, up], channel), zero-padded for conv2, in VMEM scratch ----
    pad2_ref[...] = jnp.zeros_like(pad2_ref)
    pad2_ref[1:hs + 1, 1:ws + 1, :c] = skip_ref[0]
    pad2_ref[1:hs + 1, 1:ws + 1, c:] = up.reshape(hs, ws, c)

    # ---- conv2 (2*dim -> dim, 3x3, pad=1): one (Hs*Ws, 18C) x (18C, C) matmul ----
    slab2 = jnp.concatenate(
        [pad2_ref[dy:dy + hs, dx:dx + ws, :].reshape(hs * ws, 2 * c)
         for dy in range(3) for dx in range(3)], axis=-1)              # (Hs*Ws, 18C)
    y = jnp.dot(slab2, w2_ref[...], preferred_element_type=jnp.float32)
    y = jnp.maximum(y + b2_ref[...], 0.0)
    out_ref[0] = y.reshape(hs, ws, c)


# --------------------------------------- wrapper ---------------------------------------

@jax.jit
def _decoder_block_forward(src, fused, skip, w1, b1, w2, b2):
    n, c, hi, wi = src.shape
    hs, ws = skip.shape[2], skip.shape[3]

    # NCHW -> NHWC at the boundary (kernel is channels-last, lane dim = C).
    src_l = jnp.transpose(src, (0, 2, 3, 1))
    fus_l = jnp.transpose(fused, (0, 2, 3, 1))
    skip_l = jnp.transpose(skip, (0, 2, 3, 1))

    # Fold the 3x3 taps into the contraction dim: HWIO (3,3,Cin,Cout) -> (9*Cin, Cout).
    w1f = w1.reshape(9 * c, c)
    w2f = w2.reshape(9 * 2 * c, c)
    up_mat = jnp.asarray(_upsample_pad_matrix(hi, wi, hs, ws))         # (hs*ws, hi*wi)

    out_nhwc = pl.pallas_call(
        decoder_block_kernel,
        out_shape=jax.ShapeDtypeStruct((n, hs, ws, c), jnp.float32),
        grid_spec=pltpu.PrefetchScalarGridSpec(
            num_scalar_prefetch=0,
            grid=(n,),
            in_specs=[
                pl.BlockSpec((1, hi, wi, c), lambda i: (i, 0, 0, 0)),
                pl.BlockSpec((1, hi, wi, c), lambda i: (i, 0, 0, 0)),
                pl.BlockSpec((1, hs, ws, c), lambda i: (i, 0, 0, 0)),
                pl.BlockSpec((9 * c, c), lambda i: (0, 0)),            # weights: constant
                pl.BlockSpec((1, c), lambda i: (0, 0)),                # index maps -> stay
                pl.BlockSpec((hs * ws, hi * wi), lambda i: (0, 0)),    # resident in VMEM
                pl.BlockSpec((9 * 2 * c, c), lambda i: (0, 0)),
                pl.BlockSpec((1, c), lambda i: (0, 0)),
            ],
            out_specs=pl.BlockSpec((1, hs, ws, c), lambda i: (i, 0, 0, 0)),
            scratch_shapes=[
                pltpu.VMEM((hi + 2, wi + 2, c), jnp.float32),          # padded conv1 input
                pltpu.VMEM((hs + 2, ws + 2, 2 * c), jnp.float32),      # padded [skip|up]
            ],
        ),
        compiler_params=pltpu.CompilerParams(
            dimension_semantics=("parallel",),
            vmem_limit_bytes=48 * 1024 * 1024,
        ),
    )(src_l, fus_l, skip_l, w1f, b1.reshape(1, c), up_mat, w2f, b2.reshape(1, c))

    # NHWC -> NCHW to match the PyTorch interface (kernel stores are already lane-dense).
    return jnp.transpose(out_nhwc, (0, 3, 1, 2))


def decoder_block_forward(src, fused, skip, w1, b1, w2, b2):
    """Matches DecoderBlock.forward(src, fused, skip); `fused` may be None."""
    if fused is None:
        fused = jnp.zeros_like(src)   # `if fused is not None: src = src + fused`
    return _decoder_block_forward(src, fused, skip, w1, b1, w2, b2)


# -------------------------------------- reference --------------------------------------

def ref_forward(src, fused, skip, w1, b1, w2, b2):
    """Pure-JAX reference mirroring the PyTorch DecoderBlock (NCHW in/out)."""
    x = src + fused if fused is not None else src
    x = jnp.transpose(x, (0, 2, 3, 1))
    sk = jnp.transpose(skip, (0, 2, 3, 1))
    y = jax.lax.conv_general_dilated(
        x, w1, window_strides=(1, 1), padding=((1, 1), (1, 1)),
        dimension_numbers=("NHWC", "HWIO", "NHWC"))
    y = jax.nn.relu(y + b1)

    n, hi, wi, c = y.shape
    ho, wo = 2 * hi, 2 * wi

    def coords(n_in, n_out):
        s = jnp.arange(n_out) * (n_in - 1) / (n_out - 1)
        i0 = jnp.clip(jnp.floor(s).astype(jnp.int32), 0, n_in - 1)
        i1 = jnp.minimum(i0 + 1, n_in - 1)
        return i0, i1, (s - i0).astype(jnp.float32)

    y0, y1, fy = coords(hi, ho)
    x0, x1, fx = coords(wi, wo)
    fy = fy[None, :, None, None]
    fx = fx[None, None, :, None]
    rows0, rows1 = y[:, y0], y[:, y1]
    top = rows0[:, :, x0] * (1.0 - fx) + rows0[:, :, x1] * fx
    bot = rows1[:, :, x0] * (1.0 - fx) + rows1[:, :, x1] * fx
    up = top * (1.0 - fy) + bot * fy

    hs, ws = sk.shape[1], sk.shape[2]
    dpy, dpx = hs - ho, ws - wo        # >= 0 in this demo (skip is exactly 2x src)
    up = jnp.pad(up, ((0, 0), (dpy // 2, dpy - dpy // 2),
                      (dpx // 2, dpx - dpx // 2), (0, 0)))
    cat = jnp.concatenate([sk, up], axis=-1)
    z = jax.lax.conv_general_dilated(
        cat, w2, window_strides=(1, 1), padding=((1, 1), (1, 1)),
        dimension_numbers=("NHWC", "HWIO", "NHWC"))
    z = jax.nn.relu(z + b2)
    return jnp.transpose(z, (0, 3, 1, 2))


# ----------------------------------------- demo -----------------------------------------

if __name__ == "__main__":
    # Small shapes consistent with the module (default dim=256 scaled down).
    # dim=128 keeps every channel axis exactly one lane register wide, so all kernel
    # loads/stores are lane-dense and in-kernel channel concatenation is 128-aligned.
    N, DIM, HI, WI = 2, 128, 8, 8
    HS, WS = 2 * HI, 2 * WI            # encoder skip at 2x resolution

    key = jax.random.PRNGKey(0)
    ks, kf, kk, k1, kb1, k2, kb2 = jax.random.split(key, 7)

    src = jax.random.normal(ks, (N, DIM, HI, WI), jnp.float32)
    fused = jax.random.normal(kf, (N, DIM, HI, WI), jnp.float32)
    skip = jax.random.normal(kk, (N, DIM, HS, WS), jnp.float32)

    # Parameters stored as HWIO (as the kernel/reference expect); nn.Conv2d-style init.
    lim1 = 1.0 / np.sqrt(DIM * 9)
    w1 = jax.random.uniform(k1, (3, 3, DIM, DIM), jnp.float32, -lim1, lim1)
    b1 = jax.random.uniform(kb1, (DIM,), jnp.float32, -lim1, lim1)
    lim2 = 1.0 / np.sqrt(2 * DIM * 9)
    w2 = jax.random.uniform(k2, (3, 3, 2 * DIM, DIM), jnp.float32, -lim2, lim2)
    b2 = jax.random.uniform(kb2, (DIM,), jnp.float32, -lim2, lim2)

    out = decoder_block_forward(src, fused, skip, w1, b1, w2, b2)
    jax.block_until_ready(out)

    ref = ref_forward(src, fused, skip, w1, b1, w2, b2)
    assert out.shape == (N, DIM, HS, WS), out.shape
    max_err = float(jnp.max(jnp.abs(out - ref)))
    # Default-precision MXU matmuls vs. the element-wise reference interpolation path.
    assert jnp.allclose(out, ref, rtol=5e-3, atol=5e-3), max_err

    print("KERNEL_OK")
</pallas_src>

<mosaic_0001>
module attributes {stable_mosaic.version = 11 : i64} {
  func.func @decoder_block_kernel(%arg0: i32, %arg1: memref<1x8x8x128xf32, #tpu.memory_space<vmem>>, %arg2: memref<1x8x8x128xf32, #tpu.memory_space<vmem>>, %arg3: memref<1x16x16x128xf32, #tpu.memory_space<vmem>>, %arg4: memref<1152x128xf32, #tpu.memory_space<vmem>>, %arg5: memref<1x128xf32, #tpu.memory_space<vmem>>, %arg6: memref<256x64xf32, #tpu.memory_space<vmem>>, %arg7: memref<2304x128xf32, #tpu.memory_space<vmem>>, %arg8: memref<1x128xf32, #tpu.memory_space<vmem>>, %arg9: memref<1x16x16x128xf32, #tpu.memory_space<vmem>>, %arg10: memref<10x10x128xf32, #tpu.memory_space<vmem>>, %arg11: memref<18x18x256xf32, #tpu.memory_space<vmem>>) attributes {dimension_semantics = [#tpu.dimension_semantics<parallel>], iteration_bounds = array<i64: 2>, scalar_prefetch = 0 : i64, scratch_operands = 2 : i64, tpu.core_type = #tpu.core_type<tc>, window_params = [{transform_indices = @transform_0, window_bounds = array<i64: 1, 8, 8, 128>}, {transform_indices = @transform_1, window_bounds = array<i64: 1, 8, 8, 128>}, {transform_indices = @transform_2, window_bounds = array<i64: 1, 16, 16, 128>}, {pipeline_mode = #tpu.pipeline_mode<synchronous>, transform_indices = @transform_3, window_bounds = array<i64: 1152, 128>}, {pipeline_mode = #tpu.pipeline_mode<synchronous>, transform_indices = @transform_4, window_bounds = array<i64: 1, 128>}, {pipeline_mode = #tpu.pipeline_mode<synchronous>, transform_indices = @transform_5, window_bounds = array<i64: 256, 64>}, {pipeline_mode = #tpu.pipeline_mode<synchronous>, transform_indices = @transform_6, window_bounds = array<i64: 2304, 128>}, {pipeline_mode = #tpu.pipeline_mode<synchronous>, transform_indices = @transform_7, window_bounds = array<i64: 1, 128>}, {transform_indices = @transform_8, window_bounds = array<i64: 1, 16, 16, 128>}]} {
    %cst = arith.constant 0.000000e+00 : f32
    %0 = vector.broadcast %cst : f32 to vector<10x10x128xf32>
    %c0 = arith.constant 0 : index
    %c0_0 = arith.constant 0 : index
    %c0_1 = arith.constant 0 : index
    %1 = vector.load %arg10[%c0, %c0_0, %c0_1] : memref<10x10x128xf32, #tpu.memory_space<vmem>>, vector<10x10x128xf32>
    tpu.vector_store %arg10[%c0, %c0_0, %c0_1], %0 {strides = array<i32>} : memref<10x10x128xf32, #tpu.memory_space<vmem>>, vector<10x10x128xf32>,
    %c0_2 = arith.constant 0 : index
    %c0_3 = arith.constant 0 : index
    %c0_4 = arith.constant 0 : index
    %c0_5 = arith.constant 0 : index
    %2 = vector.load %arg1[%c0_2, %c0_3, %c0_4, %c0_5] : memref<1x8x8x128xf32, #tpu.memory_space<vmem>>, vector<1x8x8x128xf32>
    %3 = vector.shape_cast %2 : vector<1x8x8x128xf32> to vector<8x8x128xf32>
    %c0_6 = arith.constant 0 : index
    %c0_7 = arith.constant 0 : index
    %c0_8 = arith.constant 0 : index
    %c0_9 = arith.constant 0 : index
    %4 = vector.load %arg2[%c0_6, %c0_7, %c0_8, %c0_9] : memref<1x8x8x128xf32, #tpu.memory_space<vmem>>, vector<1x8x8x128xf32>
    %5 = vector.shape_cast %4 : vector<1x8x8x128xf32> to vector<8x8x128xf32>
    %6 = arith.addf %3, %5 : vector<8x8x128xf32>
    %c1 = arith.constant 1 : index
    %c1_10 = arith.constant 1 : index
    %c0_11 = arith.constant 0 : index
    %7 = vector.load %arg10[%c1, %c1_10, %c0_11] : memref<10x10x128xf32, #tpu.memory_space<vmem>>, vector<8x8x128xf32>
    tpu.vector_store %arg10[%c1, %c1_10, %c0_11], %6 {strides = array<i32>} : memref<10x10x128xf32, #tpu.memory_space<vmem>>, vector<8x8x128xf32>,
    %c0_12 = arith.constant 0 : index
    %c0_13 = arith.constant 0 : index
    %c0_14 = arith.constant 0 : index
    %8 = vector.load %arg10[%c0_12, %c0_13, %c0_14] : memref<10x10x128xf32, #tpu.memory_space<vmem>>, vector<8x8x128xf32>
    %9 = vector.shape_cast %8 : vector<8x8x128xf32> to vector<64x128xf32>
    %c0_15 = arith.constant 0 : index
    %c1_16 = arith.constant 1 : index
    %c0_17 = arith.constant 0 : index
    %10 = vector.load %arg10[%c0_15, %c1_16, %c0_17] : memref<10x10x128xf32, #tpu.memory_space<vmem>>, vector<8x8x128xf32>
    %11 = vector.shape_cast %10 : vector<8x8x128xf32> to vector<64x128xf32>
    %c0_18 = arith.constant 0 : index
    %c2 = arith.constant 2 : index
    %c0_19 = arith.constant 0 : index
    %12 = vector.load %arg10[%c0_18, %c2, %c0_19] : memref<10x10x128xf32, #tpu.memory_space<vmem>>, vector<8x8x128xf32>
    %13 = vector.shape_cast %12 : vector<8x8x128xf32> to vector<64x128xf32>
    %c1_20 = arith.constant 1 : index
    %c0_21 = arith.constant 0 : index
    %c0_22 = arith.constant 0 : index
    %14 = vector.load %arg10[%c1_20, %c0_21, %c0_22] : memref<10x10x128xf32, #tpu.memory_space<vmem>>, vector<8x8x128xf32>
    %15 = vector.shape_cast %14 : vector<8x8x128xf32> to vector<64x128xf32>
    %c1_23 = arith.constant 1 : index
    %c1_24 = arith.constant 1 : index
    %c0_25 = arith.constant 0 : index
    %16 = vector.load %arg10[%c1_23, %c1_24, %c0_25] : memref<10x10x128xf32, #tpu.memory_space<vmem>>, vector<8x8x128xf32>
    %17 = vector.shape_cast %16 : vector<8x8x128xf32> to vector<64x128xf32>
    %c1_26 = arith.constant 1 : index
    %c2_27 = arith.constant 2 : index
    %c0_28 = arith.constant 0 : index
    %18 = vector.load %arg10[%c1_26, %c2_27, %c0_28] : memref<10x10x128xf32, #tpu.memory_space<vmem>>, vector<8x8x128xf32>
    %19 = vector.shape_cast %18 : vector<8x8x128xf32> to vector<64x128xf32>
    %c2_29 = arith.constant 2 : index
    %c0_30 = arith.constant 0 : index
    %c0_31 = arith.constant 0 : index
    %20 = vector.load %arg10[%c2_29, %c0_30, %c0_31] : memref<10x10x128xf32, #tpu.memory_space<vmem>>, vector<8x8x128xf32>
    %21 = vector.shape_cast %20 : vector<8x8x128xf32> to vector<64x128xf32>
    %c2_32 = arith.constant 2 : index
    %c1_33 = arith.constant 1 : index
    %c0_34 = arith.constant 0 : index
    %22 = vector.load %arg10[%c2_32, %c1_33, %c0_34] : memref<10x10x128xf32, #tpu.memory_space<vmem>>, vector<8x8x128xf32>
    %23 = vector.shape_cast %22 : vector<8x8x128xf32> to vector<64x128xf32>
    %c2_35 = arith.constant 2 : index
    %c2_36 = arith.constant 2 : index
    %c0_37 = arith.constant 0 : index
    %24 = vector.load %arg10[%c2_35, %c2_36, %c0_37] : memref<10x10x128xf32, #tpu.memory_space<vmem>>, vector<8x8x128xf32>
    %25 = vector.shape_cast %24 : vector<8x8x128xf32> to vector<64x128xf32>
    %26 = tpu.concatenate %9, %11, %13, %15, %17, %19, %21, %23, %25 in 1 : vector<64x128xf32>, vector<64x128xf32>, vector<64x128xf32>, vector<64x128xf32>, vector<64x128xf32>, vector<64x128xf32>, vector<64x128xf32>, vector<64x128xf32>, vector<64x128xf32> -> vector<64x1152xf32>
    %c0_38 = arith.constant 0 : index
    %c0_39 = arith.constant 0 : index
    %27 = vector.load %arg4[%c0_38, %c0_39] : memref<1152x128xf32, #tpu.memory_space<vmem>>, vector<1152x128xf32>
    %cst_40 = arith.constant dense<0.000000e+00> : vector<64x128xf32>
    %28 = tpu.matmul %26, %27, %cst_40 {dimension_numbers = #tpu.dot_dimension_numbers<[1], [0], [0], [1], [0, 0, 1, 1], [], []>} : vector<64x1152xf32>, vector<1152x128xf32>, vector<64x128xf32> -> vector<64x128xf32>
    %c0_41 = arith.constant 0 : index
    %c0_42 = arith.constant 0 : index
    %29 = vector.load %arg5[%c0_41, %c0_42] : memref<1x128xf32, #tpu.memory_space<vmem>>, vector<1x128xf32>
    %30 = vector.broadcast %29 : vector<1x128xf32> to vector<64x128xf32>
    %31 = arith.addf %28, %30 : vector<64x128xf32>
    %cst_43 = arith.constant 0.000000e+00 : f32
    %32 = vector.broadcast %cst_43 : f32 to vector<64x128xf32>
    %33 = arith.maximumf %31, %32 : vector<64x128xf32>
    %c0_44 = arith.constant 0 : index
    %c0_45 = arith.constant 0 : index
    %34 = vector.load %arg6[%c0_44, %c0_45] : memref<256x64xf32, #tpu.memory_space<vmem>>, vector<256x64xf32>
    %cst_46 = arith.constant dense<0.000000e+00> : vector<256x128xf32>
    %35 = tpu.matmul %34, %33, %cst_46 {dimension_numbers = #tpu.dot_dimension_numbers<[1], [0], [0], [1], [0, 0, 1, 1], [], []>} : vector<256x64xf32>, vector<64x128xf32>, vector<256x128xf32> -> vector<256x128xf32>
    %cst_47 = arith.constant 0.000000e+00 : f32
    %36 = vector.broadcast %cst_47 : f32 to vector<18x18x256xf32>
    %c0_48 = arith.constant 0 : index
    %c0_49 = arith.constant 0 : index
    %c0_50 = arith.constant 0 : index
    %37 = vector.load %arg11[%c0_48, %c0_49, %c0_50] : memref<18x18x256xf32, #tpu.memory_space<vmem>>, vector<18x18x256xf32>
    tpu.vector_store %arg11[%c0_48, %c0_49, %c0_50], %36 {strides = array<i32>} : memref<18x18x256xf32, #tpu.memory_space<vmem>>, vector<18x18x256xf32>,
    %c0_51 = arith.constant 0 : index
    %c0_52 = arith.constant 0 : index
    %c0_53 = arith.constant 0 : index
    %c0_54 = arith.constant 0 : index
    %38 = vector.load %arg3[%c0_51, %c0_52, %c0_53, %c0_54] : memref<1x16x16x128xf32, #tpu.memory_space<vmem>>, vector<1x16x16x128xf32>
    %39 = vector.shape_cast %38 : vector<1x16x16x128xf32> to vector<16x16x128xf32>
    %c1_55 = arith.constant 1 : index
    %c1_56 = arith.constant 1 : index
    %c0_57 = arith.constant 0 : index
    %40 = vector.load %arg11[%c1_55, %c1_56, %c0_57] : memref<18x18x256xf32, #tpu.memory_space<vmem>>, vector<16x16x128xf32>
    tpu.vector_store %arg11[%c1_55, %c1_56, %c0_57], %39 {strides = array<i32>} : memref<18x18x256xf32, #tpu.memory_space<vmem>>, vector<16x16x128xf32>,
    %41 = vector.shape_cast %35 : vector<256x128xf32> to vector<16x16x128xf32>
    %c1_58 = arith.constant 1 : index
    %c1_59 = arith.constant 1 : index
    %c128 = arith.constant 128 : index
    %42 = vector.load %arg11[%c1_58, %c1_59, %c128] : memref<18x18x256xf32, #tpu.memory_space<vmem>>, vector<16x16x128xf32>
    tpu.vector_store %arg11[%c1_58, %c1_59, %c128], %41 {strides = array<i32>} : memref<18x18x256xf32, #tpu.memory_space<vmem>>, vector<16x16x128xf32>,
    %c0_60 = arith.constant 0 : index
    %c0_61 = arith.constant 0 : index
    %c0_62 = arith.constant 0 : index
    %43 = vector.load %arg11[%c0_60, %c0_61, %c0_62] : memref<18x18x256xf32, #tpu.memory_space<vmem>>, vector<16x16x256xf32>
    %44 = vector.shape_cast %43 : vector<16x16x256xf32> to vector<256x256xf32>
    %c0_63 = arith.constant 0 : index
    %c1_64 = arith.constant 1 : index
    %c0_65 = arith.constant 0 : index
    %45 = vector.load %arg11[%c0_63, %c1_64, %c0_65] : memref<18x18x256xf32, #tpu.memory_space<vmem>>, vector<16x16x256xf32>
    %46 = vector.shape_cast %45 : vector<16x16x256xf32> to vector<256x256xf32>
    %c0_66 = arith.constant 0 : index
    %c2_67 = arith.constant 2 : index
    %c0_68 = arith.constant 0 : index
    %47 = vector.load %arg11[%c0_66, %c2_67, %c0_68] : memref<18x18x256xf32, #tpu.memory_space<vmem>>, vector<16x16x256xf32>
    %48 = vector.shape_cast %47 : vector<16x16x256xf32> to vector<256x256xf32>
    %c1_69 = arith.constant 1 : index
    %c0_70 = arith.constant 0 : index
    %c0_71 = arith.constant 0 : index
    %49 = vector.load %arg11[%c1_69, %c0_70, %c0_71] : memref<18x18x256xf32, #tpu.memory_space<vmem>>, vector<16x16x256xf32>
    %50 = vector.shape_cast %49 : vector<16x16x256xf32> to vector<256x256xf32>
    %c1_72 = arith.constant 1 : index
    %c1_73 = arith.constant 1 : index
    %c0_74 = arith.constant 0 : index
    %51 = vector.load %arg11[%c1_72, %c1_73, %c0_74] : memref<18x18x256xf32, #tpu.memory_space<vmem>>, vector<16x16x256xf32>
    %52 = vector.shape_cast %51 : vector<16x16x256xf32> to vector<256x256xf32>
    %c1_75 = arith.constant 1 : index
    %c2_76 = arith.constant 2 : index
    %c0_77 = arith.constant 0 : index
    %53 = vector.load %arg11[%c1_75, %c2_76, %c0_77] : memref<18x18x256xf32, #tpu.memory_space<vmem>>, vector<16x16x256xf32>
    %54 = vector.shape_cast %53 : vector<16x16x256xf32> to vector<256x256xf32>
    %c2_78 = arith.constant 2 : index
    %c0_79 = arith.constant 0 : index
    %c0_80 = arith.constant 0 : index
    %55 = vector.load %arg11[%c2_78, %c0_79, %c0_80] : memref<18x18x256xf32, #tpu.memory_space<vmem>>, vector<16x16x256xf32>
    %56 = vector.shape_cast %55 : vector<16x16x256xf32> to vector<256x256xf32>
    %c2_81 = arith.constant 2 : index
    %c1_82 = arith.constant 1 : index
    %c0_83 = arith.constant 0 : index
    %57 = vector.load %arg11[%c2_81, %c1_82, %c0_83] : memref<18x18x256xf32, #tpu.memory_space<vmem>>, vector<16x16x256xf32>
    %58 = vector.shape_cast %57 : vector<16x16x256xf32> to vector<256x256xf32>
    %c2_84 = arith.constant 2 : index
    %c2_85 = arith.constant 2 : index
    %c0_86 = arith.constant 0 : index
    %59 = vector.load %arg11[%c2_84, %c2_85, %c0_86] : memref<18x18x256xf32, #tpu.memory_space<vmem>>, vector<16x16x256xf32>
    %60 = vector.shape_cast %59 : vector<16x16x256xf32> to vector<256x256xf32>
    %61 = tpu.concatenate %44, %46, %48, %50, %52, %54, %56, %58, %60 in 1 : vector<256x256xf32>, vector<256x256xf32>, vector<256x256xf32>, vector<256x256xf32>, vector<256x256xf32>, vector<256x256xf32>, vector<256x256xf32>, vector<256x256xf32>, vector<256x256xf32> -> vector<256x2304xf32>
    %c0_87 = arith.constant 0 : index
    %c0_88 = arith.constant 0 : index
    %62 = vector.load %arg7[%c0_87, %c0_88] : memref<2304x128xf32, #tpu.memory_space<vmem>>, vector<2304x128xf32>
    %cst_89 = arith.constant dense<0.000000e+00> : vector<256x128xf32>
    %63 = tpu.matmul %61, %62, %cst_89 {dimension_numbers = #tpu.dot_dimension_numbers<[1], [0], [0], [1], [0, 0, 1, 1], [], []>} : vector<256x2304xf32>, vector<2304x128xf32>, vector<256x128xf32> -> vector<256x128xf32>
    %c0_90 = arith.constant 0 : index
    %c0_91 = arith.constant 0 : index
    %64 = vector.load %arg8[%c0_90, %c0_91] : memref<1x128xf32, #tpu.memory_space<vmem>>, vector<1x128xf32>
    %65 = vector.broadcast %64 : vector<1x128xf32> to vector<256x128xf32>
    %66 = arith.addf %63, %65 : vector<256x128xf32>
    %cst_92 = arith.constant 0.000000e+00 : f32
    %67 = vector.broadcast %cst_92 : f32 to vector<256x128xf32>
    %68 = arith.maximumf %66, %67 : vector<256x128xf32>
    %69 = vector.shape_cast %68 : vector<256x128xf32> to vector<16x16x128xf32>
    %c0_93 = arith.constant 0 : index
    %c0_94 = arith.constant 0 : index
    %c0_95 = arith.constant 0 : index
    %c0_96 = arith.constant 0 : index
    %70 = vector.load %arg9[%c0_93, %c0_94, %c0_95, %c0_96] : memref<1x16x16x128xf32, #tpu.memory_space<vmem>>, vector<1x16x16x128xf32>
    %71 = vector.shape_cast %70 : vector<1x16x16x128xf32> to vector<16x16x128xf32>
    %72 = vector.shape_cast %69 : vector<16x16x128xf32> to vector<1x16x16x128xf32>
    tpu.vector_store %arg9[%c0_93, %c0_94, %c0_95, %c0_96], %72 {strides = array<i32>} : memref<1x16x16x128xf32, #tpu.memory_space<vmem>>, vector<1x16x16x128xf32>,
    return
  }
  func.func @transform_0(%arg0: i32) -> (i32, i32, i32, i32) {
    %c0_i32 = arith.constant 0 : i32
    %c0_i32_0 = arith.constant 0 : i32
    %c0_i32_1 = arith.constant 0 : i32
    %c0_i32_2 = arith.constant 0 : i32
    return %arg0, %c0_i32, %c0_i32_0, %c0_i32_1 : i32, i32, i32, i32
  }
  func.func @transform_1(%arg0: i32) -> (i32, i32, i32, i32) {
    %c0_i32 = arith.constant 0 : i32
    %c0_i32_0 = arith.constant 0 : i32
    %c0_i32_1 = arith.constant 0 : i32
    %c0_i32_2 = arith.constant 0 : i32
    return %arg0, %c0_i32, %c0_i32_0, %c0_i32_1 : i32, i32, i32, i32
  }
  func.func @transform_2(%arg0: i32) -> (i32, i32, i32, i32) {
    %c0_i32 = arith.constant 0 : i32
    %c0_i32_0 = arith.constant 0 : i32
    %c0_i32_1 = arith.constant 0 : i32
    %c0_i32_2 = arith.constant 0 : i32
    return %arg0, %c0_i32, %c0_i32_0, %c0_i32_1 : i32, i32, i32, i32
  }
  func.func @transform_3(%arg0: i32) -> (i32, i32) {
    %c0_i32 = arith.constant 0 : i32
    %c0_i32_0 = arith.constant 0 : i32
    %c0_i32_1 = arith.constant 0 : i32
    return %c0_i32, %c0_i32_0 : i32, i32
  }
  func.func @transform_4(%arg0: i32) -> (i32, i32) {
    %c0_i32 = arith.constant 0 : i32
    %c0_i32_0 = arith.constant 0 : i32
    %c0_i32_1 = arith.constant 0 : i32
    return %c0_i32, %c0_i32_0 : i32, i32
  }
  func.func @transform_5(%arg0: i32) -> (i32, i32) {
    %c0_i32 = arith.constant 0 : i32
    %c0_i32_0 = arith.constant 0 : i32
    %c0_i32_1 = arith.constant 0 : i32
    return %c0_i32, %c0_i32_0 : i32, i32
  }
  func.func @transform_6(%arg0: i32) -> (i32, i32) {
    %c0_i32 = arith.constant 0 : i32
    %c0_i32_0 = arith.constant 0 : i32
    %c0_i32_1 = arith.constant 0 : i32
    return %c0_i32, %c0_i32_0 : i32, i32
  }
  func.func @transform_7(%arg0: i32) -> (i32, i32) {
    %c0_i32 = arith.constant 0 : i32
    %c0_i32_0 = arith.constant 0 : i32
    %c0_i32_1 = arith.constant 0 : i32
    return %c0_i32, %c0_i32_0 : i32, i32
  }
  func.func @transform_8(%arg0: i32) -> (i32, i32, i32, i32) {
    %c0_i32 = arith.constant 0 : i32
    %c0_i32_0 = arith.constant 0 : i32
    %c0_i32_1 = arith.constant 0 : i32
    %c0_i32_2 = arith.constant 0 : i32
    return %arg0, %c0_i32, %c0_i32_0, %c0_i32_1 : i32, i32, i32, i32
  }
}

</mosaic_0001>

<llo_original>
// kernel: _decoder_block_forward.1
$region0: #{_decoder_block_forward.1}
  #allocation0 [shape = 'u32[]', space=smem, size = 0x4, offset = 0x4, fixed_abs, tag = 'smem constant byte address 0x4 - core index']
  #allocation1 [shape = 'u32[144,128]{1,0:T(1,128)}', space=vmem, size = 0x12000, scoped, tag = 'internal scratch']
  #allocation2 [shape = 'f32[10,10,128]{2,1,0:T(8,128)}', space=vmem, size = 0x14000, scoped, tag = 'scratch operand']
  #allocation3 [shape = 'f32[18,18,256]{2,1,0:T(8,128)}', space=vmem, size = 0x6c000, scoped, tag = 'scratch operand']
  %s0 = inlined_call_operand.hbm [shape: f32[2,8,8,128], index: 0, kind: input, shape index: {}]
  %s1 = inlined_call_operand.hbm [shape: f32[2,8,8,128], index: 1, kind: input, shape index: {}]
  %s2 = inlined_call_operand.hbm [shape: f32[2,16,16,128], index: 2, kind: input, shape index: {}]
  %s3 = inlined_call_operand.hbm [shape: f32[1152,128], index: 3, kind: input, shape index: {}]
  %s4 = inlined_call_operand.hbm [shape: f32[1,128], index: 4, kind: input, shape index: {}]
  %s5 = inlined_call_operand.hbm [shape: f32[256,64], index: 5, kind: input, shape index: {}]
  %s6 = inlined_call_operand.hbm [shape: f32[2304,128], index: 6, kind: input, shape index: {}]
  %s7 = inlined_call_operand.hbm [shape: f32[1,128], index: 7, kind: input, shape index: {}]
  %s8 = inlined_call_operand.hbm [shape: f32[2,16,16,128], index: 8, kind: output, shape index: {}]
  %s9 = sld [smem:[#allocation0]]
  $region97: #{_decoder_block_forward.1} parent=0
    _
  %s11 = ssub.s32 1, %s9
  %s12 = scalar_select 0, %s11, %s9
  $region1: #{_decoder_block_forward.1} parent=0
    #allocation4 [shape = 'u8[65536]{0}', space=vmem, size = 0x10000, scoped, tag = 'input window, operand 0']
    #allocation5 [shape = 's32[2]{0}', space=sflag, size = 0x8, scoped, tag = 'scoped memory for _decoder_block_forward.1']
    #allocation6 [shape = 's32[2]{0}', space=sflag, size = 0x8, scoped, tag = 'scoped memory for _decoder_block_forward.1']
    #allocation7 [shape = 'u8[65536]{0}', space=vmem, size = 0x10000, scoped, tag = 'input window, operand 1']
    #allocation8 [shape = 's32[2]{0}', space=sflag, size = 0x8, scoped, tag = 'scoped memory for _decoder_block_forward.1']
    #allocation9 [shape = 'u8[262144]{0}', space=vmem, size = 0x40000, scoped, tag = 'input window, operand 2']
    #allocation10 [shape = 'u8[589824]{0}', space=vmem, size = 0x90000, scoped, tag = 'input window, operand 3, single buffered']
    #allocation11 [shape = 's32[1]{0}', space=sflag, size = 0x4, scoped, tag = 'scoped memory for _decoder_block_forward.1']
    #allocation12 [shape = 'u8[512]{0}', space=vmem, size = 0x400, scoped, tag = 'input window, operand 4, single buffered']
    #allocation13 [shape = 'u8[131072]{0}', space=vmem, size = 0x20000, scoped, tag = 'input window, operand 5, single buffered']
    #allocation14 [shape = 's32[1]{0}', space=sflag, size = 0x4, scoped, tag = 'scoped memory for _decoder_block_forward.1']
    #allocation15 [shape = 'u8[1179648]{0}', space=vmem, size = 0x120000, scoped, tag = 'input window, operand 6, single buffered']
    #allocation16 [shape = 'u8[512]{0}', space=vmem, size = 0x400, scoped, tag = 'input window, operand 7, single buffered']
    #allocation17 [shape = 's32[1]{0}', space=sflag, size = 0x4, scoped, tag = 'scoped memory for _decoder_block_forward.1']
    #allocation18 [shape = 'u8[262144]{0}', space=vmem, size = 0x40000, scoped, tag = 'output window, operand 0']
    %13 = vsyncpa [#allocation5], 0
    %s14 = scalar_lea.sflag [#allocation5], 1
    %15 = vsyncpa %s14, 0
    %16 = vsyncpa [#allocation8], 0
    %s17 = scalar_lea.sflag [#allocation8], 1
    %18 = vsyncpa %s17, 0
    %19 = vsyncpa [#allocation11], 0
    %20 = vsyncpa [#allocation14], 0
    %21 = vsyncpa [#allocation17], 0
    %22 = vsyncpa [#allocation6], 0
    %s23 = scalar_lea.sflag [#allocation6], 1
    %24 = vsyncpa %s23, 0
    loop: start=0, step=1, limit=4
    $region2: #{_decoder_block_forward.1} parent=1 // loop_pre_header
      _
    $region3: #{_decoder_block_forward.1} parent=1 // loop_header
      %s26 = sphi 0, %s30
      %p27 = scmp.ge.s32.totalorder %s26, 4
      %s36 = sphi 0, %s38
      %s39 = sphi 0, %s36
      %s40 = sphi 0, %s39
      %s56 = sphi 0, %s40
      %s62 = sphi 0, %s64
      %s65 = sphi 0, %s62
      %s66 = sphi 0, %s65
      %s82 = sphi 0, %s66
      %s88 = sphi 0, %s90
      %s91 = sphi 0, %s88
      %s92 = sphi 0, %s91
      %s108 = sphi 0, %s92
      %s112 = sphi 0, %s112
      %s114 = sphi 0, %s112
      %s115 = sphi 0, %s114
      %s129 = sphi 0, %s115
      %s133 = sphi 0, %s133
      %s135 = sphi 0, %s133
      %s136 = sphi 0, %s135
      %s150 = sphi 0, %s136
      %s154 = sphi 0, %s154
      %s156 = sphi 0, %s154
      %s157 = sphi 0, %s156
      %s171 = sphi 0, %s157
      %s175 = sphi 0, %s175
      %s177 = sphi 0, %s175
      %s178 = sphi 0, %s177
      %s192 = sphi 0, %s178
      %s196 = sphi 0, %s196
      %s198 = sphi 0, %s196
      %s199 = sphi 0, %s198
      %s213 = sphi 0, %s199
      %s219 = sphi 0, %s221
      %s222 = sphi 0, %s219
      %s223 = sphi 0, %s222
      %s239 = sphi 0, %s223
    $region4: #{_decoder_block_forward.1} parent=1 // loop_header_branch
      %29 = sbr.rel (%p27) target = $region8
    $region5: #{_decoder_block_forward.1} parent=1 // loop_body
      %s31 = ssub.s32 %s26, 1
      %s32 = ssub.s32 %s26, 2
      %s33 = sadd.s32 %s26, 1
      %s34 = ssub.s32 %s26, %s33
      %p35 = scmp.eq.s32.totalorder %s34, 0
      %s37 = sadd.s32 %s36, 1
      %s38 = scalar_select %p35, %s36, %s37
      %p41 = pneg %p35
      %p42 = scmp.eq.s32.totalorder %s26, 1
      %p43 = por %p41, %p42
      %p44 = scmp.ne.s32.totalorder %s36, %s39
      %p45 = scmp.eq.s32.totalorder %s26, 0
      %p46 = por %p44, %p45
      %p47 = scmp.ne.s32.totalorder %s36, %s39
      %p48 = scmp.eq.s32.totalorder %s31, 1
      %p49 = por %p47, %p48
      %p50 = scmp.ne.s32.totalorder %s39, %s40
      %p51 = scmp.eq.s32.totalorder %s31, 0
      %p52 = por %p50, %p51
      %p53 = scmp.ne.s32.totalorder %s39, %s40
      %p54 = scmp.eq.s32.totalorder %s32, 1
      %p55 = por %p53, %p54
      %p57 = scmp.ne.s32.totalorder %s40, %s56
      %p58 = scmp.eq.s32.totalorder %s32, 0
      %p59 = por %p57, %p58
      %s60 = ssub.s32 %s26, %s33
      %p61 = scmp.eq.s32.totalorder %s60, 0
      %s63 = sadd.s32 %s62, 1
      %s64 = scalar_select %p61, %s62, %s63
      %p67 = pneg %p61
      %p68 = scmp.eq.s32.totalorder %s26, 1
      %p69 = por %p67, %p68
      %p70 = scmp.ne.s32.totalorder %s62, %s65
      %p71 = scmp.eq.s32.totalorder %s26, 0
      %p72 = por %p70, %p71
      %p73 = scmp.ne.s32.totalorder %s62, %s65
      %p74 = scmp.eq.s32.totalorder %s31, 1
      %p75 = por %p73, %p74
      %p76 = scmp.ne.s32.totalorder %s65, %s66
      %p77 = scmp.eq.s32.totalorder %s31, 0
      %p78 = por %p76, %p77
      %p79 = scmp.ne.s32.totalorder %s65, %s66
      %p80 = scmp.eq.s32.totalorder %s32, 1
      %p81 = por %p79, %p80
      %p83 = scmp.ne.s32.totalorder %s66, %s82
      %p84 = scmp.eq.s32.totalorder %s32, 0
      %p85 = por %p83, %p84
      %s86 = ssub.s32 %s26, %s33
      %p87 = scmp.eq.s32.totalorder %s86, 0
      %s89 = sadd.s32 %s88, 1
      %s90 = scalar_select %p87, %s88, %s89
      %p93 = pneg %p87
      %p94 = scmp.eq.s32.totalorder %s26, 1
      %p95 = por %p93, %p94
      %p96 = scmp.ne.s32.totalorder %s88, %s91
      %p97 = scmp.eq.s32.totalorder %s26, 0
      %p98 = por %p96, %p97
      %p99 = scmp.ne.s32.totalorder %s88, %s91
      %p100 = scmp.eq.s32.totalorder %s31, 1
      %p101 = por %p99, %p100
      %p102 = scmp.ne.s32.totalorder %s91, %s92
      %p103 = scmp.eq.s32.totalorder %s31, 0
      %p104 = por %p102, %p103
      %p105 = scmp.ne.s32.totalorder %s91, %s92
      %p106 = scmp.eq.s32.totalorder %s32, 1
      %p107 = por %p105, %p106
      %p109 = scmp.ne.s32.totalorder %s92, %s108
      %p110 = scmp.eq.s32.totalorder %s32, 0
      %p111 = por %p109, %p110
      %s113 = sadd.s32 %s112, 1
      %p116 = scmp.eq.s32.totalorder %s26, 1
      %p117 = scmp.ne.s32.totalorder %s112, %s114
      %p118 = scmp.eq.s32.totalorder %s26, 0
      %p119 = por %p117, %p118
      %p120 = scmp.ne.s32.totalorder %s112, %s114
      %p121 = scmp.eq.s32.totalorder %s31, 1
      %p122 = por %p120, %p121
      %p123 = scmp.ne.s32.totalorder %s114, %s115
      %p124 = scmp.eq.s32.totalorder %s31, 0
      %p125 = por %p123, %p124
      %p126 = scmp.ne.s32.totalorder %s114, %s115
      %p127 = scmp.eq.s32.totalorder %s32, 1
      %p128 = por %p126, %p127
      %p130 = scmp.ne.s32.totalorder %s115, %s129
      %p131 = scmp.eq.s32.totalorder %s32, 0
      %p132 = por %p130, %p131
      %s134 = sadd.s32 %s133, 1
      %p137 = scmp.eq.s32.totalorder %s26, 1
      %p138 = scmp.ne.s32.totalorder %s133, %s135
      %p139 = scmp.eq.s32.totalorder %s26, 0
      %p140 = por %p138, %p139
      %p141 = scmp.ne.s32.totalorder %s133, %s135
      %p142 = scmp.eq.s32.totalorder %s31, 1
      %p143 = por %p141, %p142
      %p144 = scmp.ne.s32.totalorder %s135, %s136
      %p145 = scmp.eq.s32.totalorder %s31, 0
      %p146 = por %p144, %p145
      %p147 = scmp.ne.s32.totalorder %s135, %s136
      %p148 = scmp.eq.s32.totalorder %s32, 1
      %p149 = por %p147, %p148
      %p151 = scmp.ne.s32.totalorder %s136, %s150
      %p152 = scmp.eq.s32.totalorder %s32, 0
      %p153 = por %p151, %p152
      %s155 = sadd.s32 %s154, 1
      %p158 = scmp.eq.s32.totalorder %s26, 1
      %p159 = scmp.ne.s32.totalorder %s154, %s156
      %p160 = scmp.eq.s32.totalorder %s26, 0
      %p161 = por %p159, %p160
      %p162 = scmp.ne.s32.totalorder %s154, %s156
      %p163 = scmp.eq.s32.totalorder %s31, 1
      %p164 = por %p162, %p163
      %p165 = scmp.ne.s32.totalorder %s156, %s157
      %p166 = scmp.eq.s32.totalorder %s31, 0
      %p167 = por %p165, %p166
      %p168 = scmp.ne.s32.totalorder %s156, %s157
      %p169 = scmp.eq.s32.totalorder %s32, 1
      %p170 = por %p168, %p169
      %p172 = scmp.ne.s32.totalorder %s157, %s171
      %p173 = scmp.eq.s32.totalorder %s32, 0
      %p174 = por %p172, %p173
      %s176 = sadd.s32 %s175, 1
      %p179 = scmp.eq.s32.totalorder %s26, 1
      %p180 = scmp.ne.s32.totalorder %s175, %s177
      %p181 = scmp.eq.s32.totalorder %s26, 0
      %p182 = por %p180, %p181
      %p183 = scmp.ne.s32.totalorder %s175, %s177
      %p184 = scmp.eq.s32.totalorder %s31, 1
      %p185 = por %p183, %p184
      %p186 = scmp.ne.s32.totalorder %s177, %s178
      %p187 = scmp.eq.s32.totalorder %s31, 0
      %p188 = por %p186, %p187
      %p189 = scmp.ne.s32.totalorder %s177, %s178
      %p190 = scmp.eq.s32.totalorder %s32, 1
      %p191 = por %p189, %p190
      %p193 = scmp.ne.s32.totalorder %s178, %s192
      %p194 = scmp.eq.s32.totalorder %s32, 0
      %p195 = por %p193, %p194
      %s197 = sadd.s32 %s196, 1
      %p200 = scmp.eq.s32.totalorder %s26, 1
      %p201 = scmp.ne.s32.totalorder %s196, %s198
      %p202 = scmp.eq.s32.totalorder %s26, 0
      %p203 = por %p201, %p202
      %p204 = scmp.ne.s32.totalorder %s196, %s198
      %p205 = scmp.eq.s32.totalorder %s31, 1
      %p206 = por %p204, %p205
      %p207 = scmp.ne.s32.totalorder %s198, %s199
      %p208 = scmp.eq.s32.totalorder %s31, 0
      %p209 = por %p207, %p208
      %p210 = scmp.ne.s32.totalorder %s198, %s199
      %p211 = scmp.eq.s32.totalorder %s32, 1
      %p212 = por %p210, %p211
      %p214 = scmp.ne.s32.totalorder %s199, %s213
      %p215 = scmp.eq.s32.totalorder %s32, 0
      %p216 = por %p214, %p215
      %s217 = ssub.s32 %s26, %s33
      %p218 = scmp.eq.s32.totalorder %s217, 0
      %s220 = sadd.s32 %s219, 1
      %s221 = scalar_select %p218, %s219, %s220
      %p224 = pneg %p218
      %p225 = scmp.eq.s32.totalorder %s26, 1
      %p226 = por %p224, %p225
      %p227 = scmp.ne.s32.totalorder %s219, %s222
      %p228 = scmp.eq.s32.totalorder %s26, 0
      %p229 = por %p227, %p228
      %p230 = scmp.ne.s32.totalorder %s219, %s222
      %p231 = scmp.eq.s32.totalorder %s31, 1
      %p232 = por %p230, %p231
      %p233 = scmp.ne.s32.totalorder %s222, %s223
      %p234 = scmp.eq.s32.totalorder %s31, 0
      %p235 = por %p233, %p234
      %p236 = scmp.ne.s32.totalorder %s222, %s223
      %p237 = scmp.eq.s32.totalorder %s32, 1
      %p238 = por %p236, %p237
      %p240 = scmp.ne.s32.totalorder %s223, %s239
      %p241 = scmp.eq.s32.totalorder %s32, 0
      %p242 = por %p240, %p241
      %p243 = scmp.le.s32.totalorder 1, %s26
      %p244 = scmp.lt.s32.totalorder %s26, 3
      %p245 = pnand %p243, %p244
      %p246 = pneg %p245
      // Predicated region
      $region9: #{_decoder_block_forward.1} parent=5 // pred_check
        _
      $region10: #{_decoder_block_forward.1} parent=5 // pred_check_branch
        %248 = sbr.rel (%p245) target = $region12
      $region11: #{_decoder_block_forward.1} parent=5 // pred_region
        %s249 = ssub.s32 %s26, 1
        // Predicated region
        $region13: #{_decoder_block_forward.1} parent=11 // pred_check
          %p250 = pneg %p125
        $region14: #{_decoder_block_forward.1} parent=11 // pred_check_branch
          %252 = sbr.rel (%p250) target = $region16
        $region15: #{_decoder_block_forward.1} parent=11 // pred_region
          %s254 = ssub.s32 18432, 18432
          %255 = vsyncadd [#allocation11], %s254
          %s256 = sshll.u32 [#allocation10], 4
          %s257 = int_to_ptr.vmem [resolvable:$true] %s256
          %262 = dma.hbm_to_vmem [thread:$0]  %s3, 18432, %s257, [#allocation11], 128, 128, 8
        $region16: #{_decoder_block_forward.1} parent=11 // pred_fallthru
          _
        // Predicated region
        $region17: #{_decoder_block_forward.1} parent=11 // pred_check
          %p263 = pneg %p146
        $region18: #{_decoder_block_forward.1} parent=11 // pred_check_branch
          %265 = sbr.rel (%p263) target = $region20
        $region19: #{_decoder_block_forward.1} parent=11 // pred_region
          %s267 = ssub.s32 16, 16
          %268 = vsyncadd [#allocation11], %s267
          %s270 = sshll.u32 [#allocation12], 4
          %s271 = int_to_ptr.vmem [resolvable:$true] %s270
          %273 = dma.hbm_to_vmem [thread:$0]  %s4, 16, %s271, [#allocation11]
        $region20: #{_decoder_block_forward.1} parent=11 // pred_fallthru
          _
        // Predicated region
        $region21: #{_decoder_block_forward.1} parent=11 // pred_check
          %p274 = pneg %p167
        $region22: #{_decoder_block_forward.1} parent=11 // pred_check_branch
          %276 = sbr.rel (%p274) target = $region24
        $region23: #{_decoder_block_forward.1} parent=11 // pred_region
          %s278 = ssub.s32 4096, 4096
          %279 = vsyncadd [#allocation14], %s278
          %s280 = sshll.u32 [#allocation13], 4
          %s281 = int_to_ptr.vmem [resolvable:$true] %s280
          %286 = dma.hbm_to_vmem [thread:$0]  %s5, 4096, %s281, [#allocation14], 128, 128, 8
        $region24: #{_decoder_block_forward.1} parent=11 // pred_fallthru
          _
        // Predicated region
        $region25: #{_decoder_block_forward.1} parent=11 // pred_check
          %p287 = pneg %p188
        $region26: #{_decoder_block_forward.1} parent=11 // pred_check_branch
          %289 = sbr.rel (%p287) target = $region28
        $region27: #{_decoder_block_forward.1} parent=11 // pred_region
          %s291 = ssub.s32 36864, 36864
          %292 = vsyncadd [#allocation14], %s291
          %s293 = sshll.u32 [#allocation15], 4
          %s294 = int_to_ptr.vmem [resolvable:$true] %s293
          %299 = dma.hbm_to_vmem [thread:$0]  %s6, 36864, %s294, [#allocation14], 128, 128, 8
        $region28: #{_decoder_block_forward.1} parent=11 // pred_fallthru
          _
        // Predicated region
        $region29: #{_decoder_block_forward.1} parent=11 // pred_check
          %p300 = pneg %p209
        $region30: #{_decoder_block_forward.1} parent=11 // pred_check_branch
          %302 = sbr.rel (%p300) target = $region32
        $region31: #{_decoder_block_forward.1} parent=11 // pred_region
          %s304 = ssub.s32 16, 16
          %305 = vsyncadd [#allocation17], %s304
          %s307 = sshll.u32 [#allocation16], 4
          %s308 = int_to_ptr.vmem [resolvable:$true] %s307
          %310 = dma.hbm_to_vmem [thread:$0]  %s7, 16, %s308, [#allocation17]
        $region32: #{_decoder_block_forward.1} parent=11 // pred_fallthru
          _
      $region12: #{_decoder_block_forward.1} parent=5 // pred_fallthru
        _
      %p311 = scmp.lt.s32.totalorder %s26, 2
      // Predicated region
      $region33: #{_decoder_block_forward.1} parent=5 // pred_check
        %p312 = pneg %p311
      $region34: #{_decoder_block_forward.1} parent=5 // pred_check_branch
        %314 = sbr.rel (%p312) target = $region36
      $region35: #{_decoder_block_forward.1} parent=5 // pred_region
        // Predicated region
        $region37: #{_decoder_block_forward.1} parent=35 // pred_check
          %p315 = pneg %p46
        $region38: #{_decoder_block_forward.1} parent=35 // pred_check_branch
          %317 = sbr.rel (%p315) target = $region40
        $region39: #{_decoder_block_forward.1} parent=35 // pred_region
          %s318 = sand.u32 %s36, 1
          %s319 = scalar_lea.sflag [#allocation5], %s318
          %s320 = sand.u32 %s36, 1
          %s321 = smul.addr %s320, 64
          %s322 = scalar_lea.vmem [#allocation4], %s321
          %s324 = ssub.s32 1024, 1024
          %325 = vsyncadd %s319, %s324
          %s326 = smul.addr %s26, 8
          %s327 = smul.addr %s326, 128
          %s328 = scalar_lea.hbm %s0, %s327
          %s329 = sshll.u32 %s322, 4
          %s330 = int_to_ptr.vmem [resolvable:$true] %s329
          %335 = dma.hbm_to_vmem [thread:$0]  %s328, 1024, %s330, %s319, 128, 128, 8
        $region40: #{_decoder_block_forward.1} parent=35 // pred_fallthru
          _
        // Predicated region
        $region41: #{_decoder_block_forward.1} parent=35 // pred_check
          %p336 = pneg %p72
        $region42: #{_decoder_block_forward.1} parent=35 // pred_check_branch
          %338 = sbr.rel (%p336) target = $region44
        $region43: #{_decoder_block_forward.1} parent=35 // pred_region
          %s339 = sand.u32 %s26, 1
          %s340 = scalar_lea.sflag [#allocation8], %s339
          %s341 = sand.u32 %s62, 1
          %s342 = smul.addr %s341, 64
          %s343 = scalar_lea.vmem [#allocation7], %s342
          %s345 = ssub.s32 1024, 1024
          %346 = vsyncadd %s340, %s345
          %s347 = smul.addr %s26, 8
          %s348 = smul.addr %s347, 128
          %s349 = scalar_lea.hbm %s1, %s348
          %s350 = sshll.u32 %s343, 4
          %s351 = int_to_ptr.vmem [resolvable:$true] %s350
          %356 = dma.hbm_to_vmem [thread:$0]  %s349, 1024, %s351, %s340, 128, 128, 8
        $region44: #{_decoder_block_forward.1} parent=35 // pred_fallthru
          _
        // Predicated region
        $region45: #{_decoder_block_forward.1} parent=35 // pred_check
          %p357 = pneg %p98
        $region46: #{_decoder_block_forward.1} parent=35 // pred_check_branch
          %359 = sbr.rel (%p357) target = $region48
        $region47: #{_decoder_block_forward.1} parent=35 // pred_region
          %s360 = sand.u32 %s26, 1
          %s361 = scalar_lea.sflag [#allocation8], %s360
          %s362 = sand.u32 %s88, 1
          %s363 = smul.addr %s362, 256
          %s364 = scalar_lea.vmem [#allocation9], %s363
          %s366 = ssub.s32 4096, 4096
          %367 = vsyncadd %s361, %s366
          %s368 = smul.addr %s26, 32
          %s369 = smul.addr %s368, 128
          %s370 = scalar_lea.hbm %s2, %s369
          %s371 = sshll.u32 %s364, 4
          %s372 = int_to_ptr.vmem [resolvable:$true] %s371
          %377 = dma.hbm_to_vmem [thread:$0]  %s370, 4096, %s372, %s361, 128, 128, 8
        $region48: #{_decoder_block_forward.1} parent=35 // pred_fallthru
          _
      $region36: #{_decoder_block_forward.1} parent=5 // pred_fallthru
        _
      %p378 = scmp.le.s32.totalorder 1, %s26
      %p379 = scmp.lt.s32.totalorder %s26, 3
      %p380 = pnand %p378, %p379
      %p381 = pneg %p380
      // Predicated region
      $region49: #{_decoder_block_forward.1} parent=5 // pred_check
        _
      $region50: #{_decoder_block_forward.1} parent=5 // pred_check_branch
        %383 = sbr.rel (%p380) target = $region52
      $region51: #{_decoder_block_forward.1} parent=5 // pred_region
        %s384 = ssub.s32 %s26, 1
        %s385 = sand.u32 %s39, 1
        %s386 = scalar_lea.sflag [#allocation5], %s385
        %s387 = sand.u32 %s39, 1
        %s388 = smul.addr %s387, 64
        %s389 = scalar_lea.vmem [#allocation4], %s388
        // Predicated region
        $region53: #{_decoder_block_forward.1} parent=51 // pred_check
          %p390 = pneg %p52
        $region54: #{_decoder_block_forward.1} parent=51 // pred_check_branch
          %392 = sbr.rel (%p390) target = $region56
        $region55: #{_decoder_block_forward.1} parent=51 // pred_region
          %393 = dma.done %s386, 1024
        $region56: #{_decoder_block_forward.1} parent=51 // pred_fallthru
          _
        %s394 = sand.u32 %s31, 1
        %s395 = scalar_lea.sflag [#allocation8], %s394
        %s396 = sand.u32 %s65, 1
        %s397 = smul.addr %s396, 64
        %s398 = scalar_lea.vmem [#allocation7], %s397
        // Predicated region
        $region57: #{_decoder_block_forward.1} parent=51 // pred_check
          %p399 = pneg %p78
        $region58: #{_decoder_block_forward.1} parent=51 // pred_check_branch
          %401 = sbr.rel (%p399) target = $region60
        $region59: #{_decoder_block_forward.1} parent=51 // pred_region
          %402 = dma.done %s395, 1024
        $region60: #{_decoder_block_forward.1} parent=51 // pred_fallthru
          _
        %s403 = sand.u32 %s31, 1
        %s404 = scalar_lea.sflag [#allocation8], %s403
        %s405 = sand.u32 %s91, 1
        %s406 = smul.addr %s405, 256
        %s407 = scalar_lea.vmem [#allocation9], %s406
        // Predicated region
        $region61: #{_decoder_block_forward.1} parent=51 // pred_check
          %p408 = pneg %p104
        $region62: #{_decoder_block_forward.1} parent=51 // pred_check_branch
          %410 = sbr.rel (%p408) target = $region64
        $region63: #{_decoder_block_forward.1} parent=51 // pred_region
          %411 = dma.done %s404, 4096
        $region64: #{_decoder_block_forward.1} parent=51 // pred_fallthru
          _
        // Predicated region
        $region65: #{_decoder_block_forward.1} parent=51 // pred_check
          %p412 = pneg %p125
        $region66: #{_decoder_block_forward.1} parent=51 // pred_check_branch
          %414 = sbr.rel (%p412) target = $region68
        $region67: #{_decoder_block_forward.1} parent=51 // pred_region
          %415 = dma.done [#allocation11], 18432
        $region68: #{_decoder_block_forward.1} parent=51 // pred_fallthru
          _
        // Predicated region
        $region69: #{_decoder_block_forward.1} parent=51 // pred_check
          %p416 = pneg %p146
        $region70: #{_decoder_block_forward.1} parent=51 // pred_check_branch
          %418 = sbr.rel (%p416) target = $region72
        $region71: #{_decoder_block_forward.1} parent=51 // pred_region
          %419 = dma.done [#allocation11], 16
        $region72: #{_decoder_block_forward.1} parent=51 // pred_fallthru
          _
        // Predicated region
        $region73: #{_decoder_block_forward.1} parent=51 // pred_check
          %p420 = pneg %p167
        $region74: #{_decoder_block_forward.1} parent=51 // pred_check_branch
          %422 = sbr.rel (%p420) target = $region76
        $region75: #{_decoder_block_forward.1} parent=51 // pred_region
          %423 = dma.done [#allocation14], 4096
        $region76: #{_decoder_block_forward.1} parent=51 // pred_fallthru
          _
        // Predicated region
        $region77: #{_decoder_block_forward.1} parent=51 // pred_check
          %p424 = pneg %p188
        $region78: #{_decoder_block_forward.1} parent=51 // pred_check_branch
          %426 = sbr.rel (%p424) target = $region80
        $region79: #{_decoder_block_forward.1} parent=51 // pred_region
          %427 = dma.done [#allocation14], 36864
        $region80: #{_decoder_block_forward.1} parent=51 // pred_fallthru
          _
        // Predicated region
        $region81: #{_decoder_block_forward.1} parent=51 // pred_check
          %p428 = pneg %p209
        $region82: #{_decoder_block_forward.1} parent=51 // pred_check_branch
          %430 = sbr.rel (%p428) target = $region84
        $region83: #{_decoder_block_forward.1} parent=51 // pred_region
          %431 = dma.done [#allocation17], 16
        $region84: #{_decoder_block_forward.1} parent=51 // pred_fallthru
          _
        %s432 = sand.u32 %s39, 1
        %s433 = scalar_lea.sflag [#allocation5], %s432
        %s434 = sand.u32 %s39, 1
        %s435 = smul.addr %s434, 64
        %s436 = scalar_lea.vmem [#allocation4], %s435
        %p437 = pneg %p52
        %p438 = pneg %p49
        %s439 = sand.u32 %s31, 1
        %s440 = scalar_lea.sflag [#allocation8], %s439
        %s441 = sand.u32 %s65, 1
        %s442 = smul.addr %s441, 64
        %s443 = scalar_lea.vmem [#allocation7], %s442
        %p444 = pneg %p78
        %p445 = pneg %p75
        %s446 = sand.u32 %s31, 1
        %s447 = scalar_lea.sflag [#allocation8], %s446
        %s448 = sand.u32 %s91, 1
        %s449 = smul.addr %s448, 256
        %s450 = scalar_lea.vmem [#allocation9], %s449
        %p451 = pneg %p104
        %p452 = pneg %p101
        %p453 = pneg %p125
        %p454 = pneg %p122
        %p455 = pneg %p146
        %p456 = pneg %p143
        %p457 = pneg %p167
        %p458 = pneg %p164
        %p459 = pneg %p188
        %p460 = pneg %p185
        %p461 = pneg %p209
        %p462 = pneg %p206
        %p463 = pneg %p235
        %p464 = pneg %p232
        %s465 = sand.u32 %s222, 1
        %s466 = scalar_lea.sflag [#allocation6], %s465
        %s467 = sand.u32 %s222, 1
        %s468 = smul.addr %s467, 256
        %s469 = scalar_lea.vmem [#allocation18], %s468
        %470 = vst [vmem:[#allocation2] sm:$0xff] 0.0
        %471 = vst [vmem:[#allocation2 + $0x8] sm:$0x3] 0.0
        %472 = vst [vmem:[#allocation2 + $0x10] sm:$0xff] 0.0
        %473 = vst [vmem:[#allocation2 + $0x18] sm:$0x3] 0.0
        %474 = vst [vmem:[#allocation2 + $0x20] sm:$0xff] 0.0
        %475 = vst [vmem:[#allocation2 + $0x28] sm:$0x3] 0.0
        %476 = vst [vmem:[#allocation2 + $0x30] sm:$0xff] 0.0
        %477 = vst [vmem:[#allocation2 + $0x38] sm:$0x3] 0.0
        %478 = vst [vmem:[#allocation2 + $0x40] sm:$0xff] 0.0
        %479 = vst [vmem:[#allocation2 + $0x48] sm:$0x3] 0.0
        %480 = vst [vmem:[#allocation2 + $0x50] sm:$0xff] 0.0
        %481 = vst [vmem:[#allocation2 + $0x58] sm:$0x3] 0.0
        %482 = vst [vmem:[#allocation2 + $0x60] sm:$0xff] 0.0
        %483 = vst [vmem:[#allocation2 + $0x68] sm:$0x3] 0.0
        %484 = vst [vmem:[#allocation2 + $0x70] sm:$0xff] 0.0
        %485 = vst [vmem:[#allocation2 + $0x78] sm:$0x3] 0.0
        %486 = vst [vmem:[#allocation2 + $0x80] sm:$0xff] 0.0
        %487 = vst [vmem:[#allocation2 + $0x88] sm:$0x3] 0.0
        %488 = vst [vmem:[#allocation2 + $0x90] sm:$0xff] 0.0
        %489 = vst [vmem:[#allocation2 + $0x98] sm:$0x3] 0.0
        %v490 = vld [vmem:[%s389] sm:$0xff]
        %v491 = vld [vmem:[%s389 + $0x8] sm:$0xff]
        %v492 = vld [vmem:[%s389 + $0x10] sm:$0xff]
        %v493 = vld [vmem:[%s389 + $0x18] sm:$0xff]
        %v494 = vld [vmem:[%s389 + $0x20] sm:$0xff]
        %v495 = vld [vmem:[%s389 + $0x28] sm:$0xff]
        %v496 = vld [vmem:[%s389 + $0x30] sm:$0xff]
        %v497 = vld [vmem:[%s389 + $0x38] sm:$0xff]
        %v498 = vld [vmem:[%s398] sm:$0xff]
        %v499 = vld [vmem:[%s398 + $0x8] sm:$0xff]
        %v500 = vld [vmem:[%s398 + $0x10] sm:$0xff]
        %v501 = vld [vmem:[%s398 + $0x18] sm:$0xff]
        %v502 = vld [vmem:[%s398 + $0x20] sm:$0xff]
        %v503 = vld [vmem:[%s398 + $0x28] sm:$0xff]
        %v504 = vld [vmem:[%s398 + $0x30] sm:$0xff]
        %v505 = vld [vmem:[%s398 + $0x38] sm:$0xff]
        %v506 = vadd.f32 %v490, %v498
        %v507 = vadd.f32 %v491, %v499
        %v508 = vadd.f32 %v492, %v500
        %v509 = vadd.f32 %v493, %v501
        %v510 = vadd.f32 %v494, %v502
        %v511 = vadd.f32 %v495, %v503
        %v512 = vadd.f32 %v496, %v504
        %v513 = vadd.f32 %v497, %v505
        %s514 = scalar_lea.vmem [#allocation2], 16
        %515 = vst [vmem:[%s514 + $0x1] sm:$0xff] %v506
        %516 = vst [vmem:[%s514 + $0x11] sm:$0xff] %v507
        %517 = vst [vmem:[%s514 + $0x21] sm:$0xff] %v508
        %518 = vst [vmem:[%s514 + $0x31] sm:$0xff] %v509
        %519 = vst [vmem:[%s514 + $0x41] sm:$0xff] %v510
        %520 = vst [vmem:[%s514 + $0x51] sm:$0xff] %v511
        %521 = vst [vmem:[%s514 + $0x61] sm:$0xff] %v512
        %522 = vst [vmem:[%s514 + $0x71] sm:$0xff] %v513
        %v523 = vld [vmem:[#allocation2] sm:$0xff]
        %v524 = vld [vmem:[#allocation2 + $0x10] sm:$0xff]
        %v525 = vld [vmem:[#allocation2 + $0x20] sm:$0xff]
        %v526 = vld [vmem:[#allocation2 + $0x30] sm:$0xff]
        %v527 = vld [vmem:[#allocation2 + $0x40] sm:$0xff]
        %v528 = vld [vmem:[#allocation2 + $0x50] sm:$0xff]
        %v529 = vld [vmem:[#allocation2 + $0x60] sm:$0xff]
        %v530 = vld [vmem:[#allocation2 + $0x70] sm:$0xff]
        %v531 = vld [vmem:[#allocation2 + $0x1] sm:$0xff]
        %v532 = vld [vmem:[#allocation2 + $0x11] sm:$0xff]
        %v533 = vld [vmem:[#allocation2 + $0x21] sm:$0xff]
        %v534 = vld [vmem:[#allocation2 + $0x31] sm:$0xff]
        %v535 = vld [vmem:[#allocation2 + $0x41] sm:$0xff]
        %v536 = vld [vmem:[#allocation2 + $0x51] sm:$0xff]
        %v537 = vld [vmem:[#allocation2 + $0x61] sm:$0xff]
        %v538 = vld [vmem:[#allocation2 + $0x71] sm:$0xff]
        %v539 = vld [vmem:[#allocation2 + $0x2] sm:$0xff]
        %v540 = vld [vmem:[#allocation2 + $0x12] sm:$0xff]
        %v541 = vld [vmem:[#allocation2 + $0x22] sm:$0xff]
        %v542 = vld [vmem:[#allocation2 + $0x32] sm:$0xff]
        %v543 = vld [vmem:[#allocation2 + $0x42] sm:$0xff]
        %v544 = vld [vmem:[#allocation2 + $0x52] sm:$0xff]
        %v545 = vld [vmem:[#allocation2 + $0x62] sm:$0xff]
        %v546 = vld [vmem:[#allocation2 + $0x72] sm:$0xff]
        %v547 = vld [vmem:[%s514] sm:$0xff]
        %v548 = vld [vmem:[%s514 + $0x10] sm:$0xff]
        %v549 = vld [vmem:[%s514 + $0x20] sm:$0xff]
        %v550 = vld [vmem:[%s514 + $0x30] sm:$0xff]
        %v551 = vld [vmem:[%s514 + $0x40] sm:$0xff]
        %v552 = vld [vmem:[%s514 + $0x50] sm:$0xff]
        %v553 = vld [vmem:[%s514 + $0x60] sm:$0xff]
        %v554 = vld [vmem:[%s514 + $0x70] sm:$0xff]
        %v555 = vld [vmem:[%s514 + $0x1] sm:$0xff]
        %v556 = vld [vmem:[%s514 + $0x11] sm:$0xff]
        %v557 = vld [vmem:[%s514 + $0x21] sm:$0xff]
        %v558 = vld [vmem:[%s514 + $0x31] sm:$0xff]
        %v559 = vld [vmem:[%s514 + $0x41] sm:$0xff]
        %v560 = vld [vmem:[%s514 + $0x51] sm:$0xff]
        %v561 = vld [vmem:[%s514 + $0x61] sm:$0xff]
        %v562 = vld [vmem:[%s514 + $0x71] sm:$0xff]
        %v563 = vld [vmem:[%s514 + $0x2] sm:$0xff]
        %v564 = vld [vmem:[%s514 + $0x12] sm:$0xff]
        %v565 = vld [vmem:[%s514 + $0x22] sm:$0xff]
        %v566 = vld [vmem:[%s514 + $0x32] sm:$0xff]
        %v567 = vld [vmem:[%s514 + $0x42] sm:$0xff]
        %v568 = vld [vmem:[%s514 + $0x52] sm:$0xff]
        %v569 = vld [vmem:[%s514 + $0x62] sm:$0xff]
        %v570 = vld [vmem:[%s514 + $0x72] sm:$0xff]
        %s571 = scalar_lea.vmem [#allocation2], 32
        %v572 = vld [vmem:[%s571] sm:$0xff]
        %v573 = vld [vmem:[%s571 + $0x10] sm:$0xff]
        %v574 = vld [vmem:[%s571 + $0x20] sm:$0xff]
        %v575 = vld [vmem:[%s571 + $0x30] sm:$0xff]
        %v576 = vld [vmem:[%s571 + $0x40] sm:$0xff]
        %v577 = vld [vmem:[%s571 + $0x50] sm:$0xff]
        %v578 = vld [vmem:[%s571 + $0x60] sm:$0xff]
        %v579 = vld [vmem:[%s571 + $0x70] sm:$0xff]
        %v580 = vld [vmem:[%s571 + $0x1] sm:$0xff]
        %v581 = vld [vmem:[%s571 + $0x11] sm:$0xff]
        %v582 = vld [vmem:[%s571 + $0x21] sm:$0xff]
        %v583 = vld [vmem:[%s571 + $0x31] sm:$0xff]
        %v584 = vld [vmem:[%s571 + $0x41] sm:$0xff]
        %v585 = vld [vmem:[%s571 + $0x51] sm:$0xff]
        %v586 = vld [vmem:[%s571 + $0x61] sm:$0xff]
        %v587 = vld [vmem:[%s571 + $0x71] sm:$0xff]
        %v588 = vld [vmem:[%s571 + $0x2] sm:$0xff]
        %v589 = vld [vmem:[%s571 + $0x12] sm:$0xff]
        %v590 = vld [vmem:[%s571 + $0x22] sm:$0xff]
        %v591 = vld [vmem:[%s571 + $0x32] sm:$0xff]
        %v592 = vld [vmem:[%s571 + $0x42] sm:$0xff]
        %v593 = vld [vmem:[%s571 + $0x52] sm:$0xff]
        %v594 = vld [vmem:[%s571 + $0x62] sm:$0xff]
        %v595 = vld [vmem:[%s571 + $0x72] sm:$0xff]
        %v596 = vld [vmem:[#allocation10] sm:$0xff]
        %v597 = vld [vmem:[#allocation10 + $0x8] sm:$0xff]
        %v598 = vld [vmem:[#allocation10 + $0x10] sm:$0xff]
        %v599 = vld [vmem:[#allocation10 + $0x18] sm:$0xff]
        %v600 = vld [vmem:[#allocation10 + $0x20] sm:$0xff]
        %v601 = vld [vmem:[#allocation10 + $0x28] sm:$0xff]
        %v602 = vld [vmem:[#allocation10 + $0x30] sm:$0xff]
        %v603 = vld [vmem:[#allocation10 + $0x38] sm:$0xff]
        %v604 = vld [vmem:[#allocation10 + $0x40] sm:$0xff]
        %v605 = vld [vmem:[#allocation10 + $0x48] sm:$0xff]
        %v606 = vld [vmem:[#allocation10 + $0x50] sm:$0xff]
        %v607 = vld [vmem:[#allocation10 + $0x58] sm:$0xff]
        %v608 = vld [vmem:[#allocation10 + $0x60] sm:$0xff]
        %v609 = vld [vmem:[#allocation10 + $0x68] sm:$0xff]
        %v610 = vld [vmem:[#allocation10 + $0x70] sm:$0xff]
        %v611 = vld [vmem:[#allocation10 + $0x78] sm:$0xff]
        %v612 = vld [vmem:[#allocation10 + $0x80] sm:$0xff]
        %v613 = vld [vmem:[#allocation10 + $0x88] sm:$0xff]
        %v614 = vld [vmem:[#allocation10 + $0x90] sm:$0xff]
        %v615 = vld [vmem:[#allocation10 + $0x98] sm:$0xff]
        %v616 = vld [vmem:[#allocation10 + $0xa0] sm:$0xff]
        %v617 = vld [vmem:[#allocation10 + $0xa8] sm:$0xff]
        %v618 = vld [vmem:[#allocation10 + $0xb0] sm:$0xff]
        %v619 = vld [vmem:[#allocation10 + $0xb8] sm:$0xff]
        %v620 = vld [vmem:[#allocation10 + $0xc0] sm:$0xff]
        %v621 = vld [vmem:[#allocation10 + $0xc8] sm:$0xff]
        %v622 = vld [vmem:[#allocation10 + $0xd0] sm:$0xff]
        %v623 = vld [vmem:[#allocation10 + $0xd8] sm:$0xff]
        %v624 = vld [vmem:[#allocation10 + $0xe0] sm:$0xff]
        %v625 = vld [vmem:[#allocation10 + $0xe8] sm:$0xff]
        %v626 = vld [vmem:[#allocation10 + $0xf0] sm:$0xff]
        %v627 = vld [vmem:[#allocation10 + $0xf8] sm:$0xff]
        %v628 = vld [vmem:[#allocation10 + $0x100] sm:$0xff]
        %v629 = vld [vmem:[#allocation10 + $0x108] sm:$0xff]
        %v630 = vld [vmem:[#allocation10 + $0x110] sm:$0xff]
        %v631 = vld [vmem:[#allocation10 + $0x118] sm:$0xff]
        %v632 = vld [vmem:[#allocation10 + $0x120] sm:$0xff]
        %v633 = vld [vmem:[#allocation10 + $0x128] sm:$0xff]
        %v634 = vld [vmem:[#allocation10 + $0x130] sm:$0xff]
        %v635 = vld [vmem:[#allocation10 + $0x138] sm:$0xff]
        %v636 = vld [vmem:[#allocation10 + $0x140] sm:$0xff]
        %v637 = vld [vmem:[#allocation10 + $0x148] sm:$0xff]
        %v638 = vld [vmem:[#allocation10 + $0x150] sm:$0xff]
        %v639 = vld [vmem:[#allocation10 + $0x158] sm:$0xff]
        %v640 = vld [vmem:[#allocation10 + $0x160] sm:$0xff]
        %v641 = vld [vmem:[#allocation10 + $0x168] sm:$0xff]
        %v642 = vld [vmem:[#allocation10 + $0x170] sm:$0xff]
        %v643 = vld [vmem:[#allocation10 + $0x178] sm:$0xff]
        %v644 = vld [vmem:[#allocation10 + $0x180] sm:$0xff]
        %v645 = vld [vmem:[#allocation10 + $0x188] sm:$0xff]
        %v646 = vld [vmem:[#allocation10 + $0x190] sm:$0xff]
        %v647 = vld [vmem:[#allocation10 + $0x198] sm:$0xff]
        %v648 = vld [vmem:[#allocation10 + $0x1a0] sm:$0xff]
        %v649 = vld [vmem:[#allocation10 + $0x1a8] sm:$0xff]
        %v650 = vld [vmem:[#allocation10 + $0x1b0] sm:$0xff]
        %v651 = vld [vmem:[#allocation10 + $0x1b8] sm:$0xff]
        %v652 = vld [vmem:[#allocation10 + $0x1c0] sm:$0xff]
        %v653 = vld [vmem:[#allocation10 + $0x1c8] sm:$0xff]
        %v654 = vld [vmem:[#allocation10 + $0x1d0] sm:$0xff]
        %v655 = vld [vmem:[#allocation10 + $0x1d8] sm:$0xff]
        %v656 = vld [vmem:[#allocation10 + $0x1e0] sm:$0xff]
        %v657 = vld [vmem:[#allocation10 + $0x1e8] sm:$0xff]
        %v658 = vld [vmem:[#allocation10 + $0x1f0] sm:$0xff]
        %v659 = vld [vmem:[#allocation10 + $0x1f8] sm:$0xff]
        %v660 = vld [vmem:[#allocation10 + $0x200] sm:$0xff]
        %v661 = vld [vmem:[#allocation10 + $0x208] sm:$0xff]
        %v662 = vld [vmem:[#allocation10 + $0x210] sm:$0xff]
        %v663 = vld [vmem:[#allocation10 + $0x218] sm:$0xff]
        %v664 = vld [vmem:[#allocation10 + $0x220] sm:$0xff]
        %v665 = vld [vmem:[#allocation10 + $0x228] sm:$0xff]
        %v666 = vld [vmem:[#allocation10 + $0x230] sm:$0xff]
        %v667 = vld [vmem:[#allocation10 + $0x238] sm:$0xff]
        %v668 = vld [vmem:[#allocation10 + $0x240] sm:$0xff]
        %v669 = vld [vmem:[#allocation10 + $0x248] sm:$0xff]
        %v670 = vld [vmem:[#allocation10 + $0x250] sm:$0xff]
        %v671 = vld [vmem:[#allocation10 + $0x258] sm:$0xff]
        %v672 = vld [vmem:[#allocation10 + $0x260] sm:$0xff]
        %v673 = vld [vmem:[#allocation10 + $0x268] sm:$0xff]
        %v674 = vld [vmem:[#allocation10 + $0x270] sm:$0xff]
        %v675 = vld [vmem:[#allocation10 + $0x278] sm:$0xff]
        %v676 = vld [vmem:[#allocation10 + $0x280] sm:$0xff]
        %v677 = vld [vmem:[#allocation10 + $0x288] sm:$0xff]
        %v678 = vld [vmem:[#allocation10 + $0x290] sm:$0xff]
        %v679 = vld [vmem:[#allocation10 + $0x298] sm:$0xff]
        %v680 = vld [vmem:[#allocation10 + $0x2a0] sm:$0xff]
        %v681 = vld [vmem:[#allocation10 + $0x2a8] sm:$0xff]
        %v682 = vld [vmem:[#allocation10 + $0x2b0] sm:$0xff]
        %v683 = vld [vmem:[#allocation10 + $0x2b8] sm:$0xff]
        %v684 = vld [vmem:[#allocation10 + $0x2c0] sm:$0xff]
        %v685 = vld [vmem:[#allocation10 + $0x2c8] sm:$0xff]
        %v686 = vld [vmem:[#allocation10 + $0x2d0] sm:$0xff]
        %v687 = vld [vmem:[#allocation10 + $0x2d8] sm:$0xff]
        %v688 = vld [vmem:[#allocation10 + $0x2e0] sm:$0xff]
        %v689 = vld [vmem:[#allocation10 + $0x2e8] sm:$0xff]
        %v690 = vld [vmem:[#allocation10 + $0x2f0] sm:$0xff]
        %v691 = vld [vmem:[#allocation10 + $0x2f8] sm:$0xff]
        %v692 = vld [vmem:[#allocation10 + $0x300] sm:$0xff]
        %v693 = vld [vmem:[#allocation10 + $0x308] sm:$0xff]
        %v694 = vld [vmem:[#allocation10 + $0x310] sm:$0xff]
        %v695 = vld [vmem:[#allocation10 + $0x318] sm:$0xff]
        %v696 = vld [vmem:[#allocation10 + $0x320] sm:$0xff]
        %v697 = vld [vmem:[#allocation10 + $0x328] sm:$0xff]
        %v698 = vld [vmem:[#allocation10 + $0x330] sm:$0xff]
        %v699 = vld [vmem:[#allocation10 + $0x338] sm:$0xff]
        %v700 = vld [vmem:[#allocation10 + $0x340] sm:$0xff]
        %v701 = vld [vmem:[#allocation10 + $0x348] sm:$0xff]
        %v702 = vld [vmem:[#allocation10 + $0x350] sm:$0xff]
        %v703 = vld [vmem:[#allocation10 + $0x358] sm:$0xff]
        %v704 = vld [vmem:[#allocation10 + $0x360] sm:$0xff]
        %v705 = vld [vmem:[#allocation10 + $0x368] sm:$0xff]
        %v706 = vld [vmem:[#allocation10 + $0x370] sm:$0xff]
        %v707 = vld [vmem:[#allocation10 + $0x378] sm:$0xff]
        %v708 = vld [vmem:[#allocation10 + $0x380] sm:$0xff]
        %v709 = vld [vmem:[#allocation10 + $0x388] sm:$0xff]
        %v710 = vld [vmem:[#allocation10 + $0x390] sm:$0xff]
        %v711 = vld [vmem:[#allocation10 + $0x398] sm:$0xff]
        %v712 = vld [vmem:[#allocation10 + $0x3a0] sm:$0xff]
        %v713 = vld [vmem:[#allocation10 + $0x3a8] sm:$0xff]
        %v714 = vld [vmem:[#allocation10 + $0x3b0] sm:$0xff]
        %v715 = vld [vmem:[#allocation10 + $0x3b8] sm:$0xff]
        %v716 = vld [vmem:[#allocation10 + $0x3c0] sm:$0xff]
        %v717 = vld [vmem:[#allocation10 + $0x3c8] sm:$0xff]
        %v718 = vld [vmem:[#allocation10 + $0x3d0] sm:$0xff]
        %v719 = vld [vmem:[#allocation10 + $0x3d8] sm:$0xff]
        %v720 = vld [vmem:[#allocation10 + $0x3e0] sm:$0xff]
        %v721 = vld [vmem:[#allocation10 + $0x3e8] sm:$0xff]
        %v722 = vld [vmem:[#allocation10 + $0x3f0] sm:$0xff]
        %v723 = vld [vmem:[#allocation10 + $0x3f8] sm:$0xff]
        %v724 = vld [vmem:[#allocation10 + $0x400] sm:$0xff]
        %v725 = vld [vmem:[#allocation10 + $0x408] sm:$0xff]
        %v726 = vld [vmem:[#allocation10 + $0x410] sm:$0xff]
        %v727 = vld [vmem:[#allocation10 + $0x418] sm:$0xff]
        %v728 = vld [vmem:[#allocation10 + $0x420] sm:$0xff]
        %v729 = vld [vmem:[#allocation10 + $0x428] sm:$0xff]
        %v730 = vld [vmem:[#allocation10 + $0x430] sm:$0xff]
        %v731 = vld [vmem:[#allocation10 + $0x438] sm:$0xff]
        %v732 = vld [vmem:[#allocation10 + $0x440] sm:$0xff]
        %v733 = vld [vmem:[#allocation10 + $0x448] sm:$0xff]
        %v734 = vld [vmem:[#allocation10 + $0x450] sm:$0xff]
        %v735 = vld [vmem:[#allocation10 + $0x458] sm:$0xff]
        %v736 = vld [vmem:[#allocation10 + $0x460] sm:$0xff]
        %v737 = vld [vmem:[#allocation10 + $0x468] sm:$0xff]
        %v738 = vld [vmem:[#allocation10 + $0x470] sm:$0xff]
        %v739 = vld [vmem:[#allocation10 + $0x478] sm:$0xff]
        %v740 = vld [vmem:[#allocation12] sm:$0x1]
        %v742 = vlaneseq
        %v743 = vshrl.u32 %v742, 7
        %v744 = vsub.s32 0, %v743
        %v745 = vrot.slane %v740, %v744
        %747 = vmatprep.subr.mxu0 0.0
        %748 = vmatpush1.msra.mxu0 %v596
        %749 = vmatprep.subr.mxu0 0.0
        %750 = vmatpush1.msra.mxu0 %v597
        %751 = vmatprep.subr.mxu0 0.0
        %752 = vmatpush1.msra.mxu0 %v598
        %753 = vmatprep.subr.mxu0 0.0
        %754 = vmatpush1.msra.mxu0 %v599
        %755 = vmatprep.subr.mxu0 0.0
        %756 = vmatpush1.msra.mxu0 %v600
        %757 = vmatprep.subr.mxu0 0.0
        %758 = vmatpush1.msra.mxu0 %v601
        %759 = vmatprep.subr.mxu0 0.0
        %760 = vmatpush1.msra.mxu0 %v602
        %761 = vmatprep.subr.mxu0 0.0
        %762 = vmatpush1.msra.mxu0 %v603
        %763 = vmatprep.subr.mxu0 0.0
        %764 = vmatpush1.msra.mxu0 %v604
        %765 = vmatprep.subr.mxu0 0.0
        %766 = vmatpush1.msra.mxu0 %v605
        %767 = vmatprep.subr.mxu0 0.0
        %768 = vmatpush1.msra.mxu0 %v606
        %769 = vmatprep.subr.mxu0 0.0
        %770 = vmatpush1.msra.mxu0 %v607
        %771 = vmatprep.subr.mxu0 0.0
        %772 = vmatpush1.msra.mxu0 %v608
        %773 = vmatprep.subr.mxu0 0.0
        %774 = vmatpush1.msra.mxu0 %v609
        %775 = vmatprep.subr.mxu0 0.0
        %776 = vmatpush1.msra.mxu0 %v610
        %777 = vmatprep.subr.mxu0 0.0
        %778 = vmatpush1.msra.mxu0 %v611
        %779 = vmatprep.subr.mxu0 0.0
        %780 = vmatpush1.msra.mxu0 %v612
        %781 = vmatprep.subr.mxu0 0.0
        %782 = vmatpush1.msra.mxu0 %v613
        %783 = vmatprep.subr.mxu0 0.0
        %784 = vmatpush1.msra.mxu0 %v614
        %785 = vmatprep.subr.mxu0 0.0
        %786 = vmatpush1.msra.mxu0 %v615
        %787 = vmatprep.subr.mxu0 0.0
        %788 = vmatpush1.msra.mxu0 %v616
        %789 = vmatprep.subr.mxu0 0.0
        %790 = vmatpush1.msra.mxu0 %v617
        %791 = vmatprep.subr.mxu0 0.0
        %792 = vmatpush1.msra.mxu0 %v618
        %793 = vmatprep.subr.mxu0 0.0
        %794 = vmatpush1.msra.mxu0 %v619
        %795 = vmatprep.subr.mxu0 0.0
        %796 = vmatpush1.msra.mxu0 %v620
        %797 = vmatprep.subr.mxu0 0.0
        %798 = vmatpush1.msra.mxu0 %v621
        %799 = vmatprep.subr.mxu0 0.0
        %800 = vmatpush1.msra.mxu0 %v622
        %801 = vmatprep.subr.mxu0 0.0
        %802 = vmatpush1.msra.mxu0 %v623
        %803 = vmatprep.subr.mxu0 0.0
        %804 = vmatpush1.msra.mxu0 %v624
        %805 = vmatprep.subr.mxu0 0.0
        %806 = vmatpush1.msra.mxu0 %v625
        %807 = vmatprep.subr.mxu0 0.0
        %808 = vmatpush1.msra.mxu0 %v626
        %809 = vmatprep.subr.mxu0 0.0
        %810 = vmatpush1.msra.mxu0 %v627
        %811 = vmatprep.mubr.f32.mxu0 %v531
        %812 = vmatmul.mubr.f32.gmra.mrb[0].mxu0 %v523
        %v813 = vpop.f32.mrb[0].mxu0
        %v814 = vadd.f32 %v745, %v813
        %v815 = vpop.f32.mrb[0].mxu0
        %816 = vmatprep.mubr.f32.mxu0 %v532
        %817 = vmatmul.mubr.f32.gmra.mrb[0].mxu0 %v524
        %v818 = vpop.f32.mrb[0].mxu0
        %v819 = vadd.f32 %v745, %v818
        %v820 = vpop.f32.mrb[0].mxu0
        %821 = vmatprep.mubr.f32.mxu0 %v533
        %822 = vmatmul.mubr.f32.gmra.mrb[0].mxu0 %v525
        %v823 = vpop.f32.mrb[0].mxu0
        %v824 = vadd.f32 %v745, %v823
        %v825 = vpop.f32.mrb[0].mxu0
        %826 = vmatprep.mubr.f32.mxu0 %v534
        %827 = vmatmul.mubr.f32.gmra.mrb[0].mxu0 %v526
        %v828 = vpop.f32.mrb[0].mxu0
        %v829 = vadd.f32 %v745, %v828
        %v830 = vpop.f32.mrb[0].mxu0
        %831 = vmatprep.mubr.f32.mxu0 %v535
        %832 = vmatmul.mubr.f32.gmra.mrb[0].mxu0 %v527
        %v833 = vpop.f32.mrb[0].mxu0
        %v834 = vadd.f32 %v745, %v833
        %v835 = vpop.f32.mrb[0].mxu0
        %836 = vmatprep.mubr.f32.mxu0 %v536
        %837 = vmatmul.mubr.f32.gmra.mrb[0].mxu0 %v528
        %v838 = vpop.f32.mrb[0].mxu0
        %v839 = vadd.f32 %v745, %v838
        %v840 = vpop.f32.mrb[0].mxu0
        %841 = vmatprep.mubr.f32.mxu0 %v537
        %842 = vmatmul.mubr.f32.gmra.mrb[0].mxu0 %v529
        %v843 = vpop.f32.mrb[0].mxu0
        %v844 = vadd.f32 %v745, %v843
        %v845 = vpop.f32.mrb[0].mxu0
        %846 = vmatprep.mubr.f32.mxu0 %v538
        %847 = vmatmul.mubr.f32.gmra.mrb[0].mxu0 %v530
        %v848 = vpop.f32.mrb[0].mxu0
        %v849 = vadd.f32 %v745, %v848
        %v850 = vpop.f32.mrb[0].mxu0
        %851 = vdwg.mxu0
        %852 = vmatprep.subr.mxu0 0.0
        %853 = vmatpush1.msra.mxu0 %v628
        %854 = vmatprep.subr.mxu0 0.0
        %855 = vmatpush1.msra.mxu0 %v629
        %856 = vmatprep.subr.mxu0 0.0
        %857 = vmatpush1.msra.mxu0 %v630
        %858 = vmatprep.subr.mxu0 0.0
        %859 = vmatpush1.msra.mxu0 %v631
        %860 = vmatprep.subr.mxu0 0.0
        %861 = vmatpush1.msra.mxu0 %v632
        %862 = vmatprep.subr.mxu0 0.0
        %863 = vmatpush1.msra.mxu0 %v633
        %864 = vmatprep.subr.mxu0 0.0
        %865 = vmatpush1.msra.mxu0 %v634
        %866 = vmatprep.subr.mxu0 0.0
        %867 = vmatpush1.msra.mxu0 %v635
        %868 = vmatprep.subr.mxu0 0.0
        %869 = vmatpush1.msra.mxu0 %v636
        %870 = vmatprep.subr.mxu0 0.0
        %871 = vmatpush1.msra.mxu0 %v637
        %872 = vmatprep.subr.mxu0 0.0
        %873 = vmatpush1.msra.mxu0 %v638
        %874 = vmatprep.subr.mxu0 0.0
        %875 = vmatpush1.msra.mxu0 %v639
        %876 = vmatprep.subr.mxu0 0.0
        %877 = vmatpush1.msra.mxu0 %v640
        %878 = vmatprep.subr.mxu0 0.0
        %879 = vmatpush1.msra.mxu0 %v641
        %880 = vmatprep.subr.mxu0 0.0
        %881 = vmatpush1.msra.mxu0 %v642
        %882 = vmatprep.subr.mxu0 0.0
        %883 = vmatpush1.msra.mxu0 %v643
        %884 = vmatprep.subr.mxu0 0.0
        %885 = vmatpush1.msra.mxu0 %v644
        %886 = vmatprep.subr.mxu0 0.0
        %887 = vmatpush1.msra.mxu0 %v645
        %888 = vmatprep.subr.mxu0 0.0
        %889 = vmatpush1.msra.mxu0 %v646
        %890 = vmatprep.subr.mxu0 0.0
        %891 = vmatpush1.msra.mxu0 %v647
        %892 = vmatprep.subr.mxu0 0.0
        %893 = vmatpush1.msra.mxu0 %v648
        %894 = vmatprep.subr.mxu0 0.0
        %895 = vmatpush1.msra.mxu0 %v649
        %896 = vmatprep.subr.mxu0 0.0
        %897 = vmatpush1.msra.mxu0 %v650
        %898 = vmatprep.subr.mxu0 0.0
        %899 = vmatpush1.msra.mxu0 %v651
        %900 = vmatprep.subr.mxu0 0.0
        %901 = vmatpush1.msra.mxu0 %v652
        %902 = vmatprep.subr.mxu0 0.0
        %903 = vmatpush1.msra.mxu0 %v653
        %904 = vmatprep.subr.mxu0 0.0
        %905 = vmatpush1.msra.mxu0 %v654
        %906 = vmatprep.subr.mxu0 0.0
        %907 = vmatpush1.msra.mxu0 %v655
        %908 = vmatprep.subr.mxu0 0.0
        %909 = vmatpush1.msra.mxu0 %v656
        %910 = vmatprep.subr.mxu0 0.0
        %911 = vmatpush1.msra.mxu0 %v657
        %912 = vmatprep.subr.mxu0 0.0
        %913 = vmatpush1.msra.mxu0 %v658
        %914 = vmatprep.subr.mxu0 0.0
        %915 = vmatpush1.msra.mxu0 %v659
        %916 = vmatprep.mubr.f32.mxu0 %v547
        %917 = vmatmul.mubr.f32.gmra.mrb[0].mxu0 %v539
        %v918 = vpop.f32.mrb[0].mxu0
        %v919 = vadd.f32 %v814, %v918
        %v920 = vpop.f32.mrb[0].mxu0
        %921 = vmatprep.mubr.f32.mxu0 %v548
        %922 = vmatmul.mubr.f32.gmra.mrb[0].mxu0 %v540
        %v923 = vpop.f32.mrb[0].mxu0
        %v924 = vadd.f32 %v819, %v923
        %v925 = vpop.f32.mrb[0].mxu0
        %926 = vmatprep.mubr.f32.mxu0 %v549
        %927 = vmatmul.mubr.f32.gmra.mrb[0].mxu0 %v541
        %v928 = vpop.f32.mrb[0].mxu0
        %v929 = vadd.f32 %v824, %v928
        %v930 = vpop.f32.mrb[0].mxu0
        %931 = vmatprep.mubr.f32.mxu0 %v550
        %932 = vmatmul.mubr.f32.gmra.mrb[0].mxu0 %v542
        %v933 = vpop.f32.mrb[0].mxu0
        %v934 = vadd.f32 %v829, %v933
        %v935 = vpop.f32.mrb[0].mxu0
        %936 = vmatprep.mubr.f32.mxu0 %v551
        %937 = vmatmul.mubr.f32.gmra.mrb[0].mxu0 %v543
        %v938 = vpop.f32.mrb[0].mxu0
        %v939 = vadd.f32 %v834, %v938
        %v940 = vpop.f32.mrb[0].mxu0
        %941 = vmatprep.mubr.f32.mxu0 %v552
        %942 = vmatmul.mubr.f32.gmra.mrb[0].mxu0 %v544
        %v943 = vpop.f32.mrb[0].mxu0
        %v944 = vadd.f32 %v839, %v943
        %v945 = vpop.f32.mrb[0].mxu0
        %946 = vmatprep.mubr.f32.mxu0 %v553
        %947 = vmatmul.mubr.f32.gmra.mrb[0].mxu0 %v545
        %v948 = vpop.f32.mrb[0].mxu0
        %v949 = vadd.f32 %v844, %v948
        %v950 = vpop.f32.mrb[0].mxu0
        %951 = vmatprep.mubr.f32.mxu0 %v554
        %952 = vmatmul.mubr.f32.gmra.mrb[0].mxu0 %v546
        %v953 = vpop.f32.mrb[0].mxu0
        %v954 = vadd.f32 %v849, %v953
        %v955 = vpop.f32.mrb[0].mxu0
        %956 = vdwg.mxu0
        %957 = vmatprep.subr.mxu0 0.0
        %958 = vmatpush1.msra.mxu0 %v660
        %959 = vmatprep.subr.mxu0 0.0
        %960 = vmatpush1.msra.mxu0 %v661
        %961 = vmatprep.subr.mxu0 0.0
        %962 = vmatpush1.msra.mxu0 %v662
        %963 = vmatprep.subr.mxu0 0.0
        %964 = vmatpush1.msra.mxu0 %v663
        %965 = vmatprep.subr.mxu0 0.0
        %966 = vmatpush1.msra.mxu0 %v664
        %967 = vmatprep.subr.mxu0 0.0
        %968 = vmatpush1.msra.mxu0 %v665
        %969 = vmatprep.subr.mxu0 0.0
        %970 = vmatpush1.msra.mxu0 %v666
        %971 = vmatprep.subr.mxu0 0.0
        %972 = vmatpush1.msra.mxu0 %v667
        %973 = vmatprep.subr.mxu0 0.0
        %974 = vmatpush1.msra.mxu0 %v668
        %975 = vmatprep.subr.mxu0 0.0
        %976 = vmatpush1.msra.mxu0 %v669
        %977 = vmatprep.subr.mxu0 0.0
        %978 = vmatpush1.msra.mxu0 %v670
        %979 = vmatprep.subr.mxu0 0.0
        %980 = vmatpush1.msra.mxu0 %v671
        %981 = vmatprep.subr.mxu0 0.0
        %982 = vmatpush1.msra.mxu0 %v672
        %983 = vmatprep.subr.mxu0 0.0
        %984 = vmatpush1.msra.mxu0 %v673
        %985 = vmatprep.subr.mxu0 0.0
        %986 = vmatpush1.msra.mxu0 %v674
        %987 = vmatprep.subr.mxu0 0.0
        %988 = vmatpush1.msra.mxu0 %v675
        %989 = vmatprep.subr.mxu0 0.0
        %990 = vmatpush1.msra.mxu0 %v676
        %991 = vmatprep.subr.mxu0 0.0
        %992 = vmatpush1.msra.mxu0 %v677
        %993 = vmatprep.subr.mxu0 0.0
        %994 = vmatpush1.msra.mxu0 %v678
        %995 = vmatprep.subr.mxu0 0.0
        %996 = vmatpush1.msra.mxu0 %v679
        %997 = vmatprep.subr.mxu0 0.0
        %998 = vmatpush1.msra.mxu0 %v680
        %999 = vmatprep.subr.mxu0 0.0
        %1000 = vmatpush1.msra.mxu0 %v681
        %1001 = vmatprep.subr.mxu0 0.0
        %1002 = vmatpush1.msra.mxu0 %v682
        %1003 = vmatprep.subr.mxu0 0.0
        %1004 = vmatpush1.msra.mxu0 %v683
        %1005 = vmatprep.subr.mxu0 0.0
        %1006 = vmatpush1.msra.mxu0 %v684
        %1007 = vmatprep.subr.mxu0 0.0
        %1008 = vmatpush1.msra.mxu0 %v685
        %1009 = vmatprep.subr.mxu0 0.0
        %1010 = vmatpush1.msra.mxu0 %v686
        %1011 = vmatprep.subr.mxu0 0.0
        %1012 = vmatpush1.msra.mxu0 %v687
        %1013 = vmatprep.subr.mxu0 0.0
        %1014 = vmatpush1.msra.mxu0 %v688
        %1015 = vmatprep.subr.mxu0 0.0
        %1016 = vmatpush1.msra.mxu0 %v689
        %1017 = vmatprep.subr.mxu0 0.0
        %1018 = vmatpush1.msra.mxu0 %v690
        %1019 = vmatprep.subr.mxu0 0.0
        %1020 = vmatpush1.msra.mxu0 %v691
        %1021 = vmatprep.mubr.f32.mxu0 %v563
        %1022 = vmatmul.mubr.f32.gmra.mrb[0].mxu0 %v555
        %v1023 = vpop.f32.mrb[0].mxu0
        %v1024 = vadd.f32 %v919, %v1023
        %v1025 = vpop.f32.mrb[0].mxu0
        %1026 = vmatprep.mubr.f32.mxu0 %v564
        %1027 = vmatmul.mubr.f32.gmra.mrb[0].mxu0 %v556
        %v1028 = vpop.f32.mrb[0].mxu0
        %v1029 = vadd.f32 %v924, %v1028
        %v1030 = vpop.f32.mrb[0].mxu0
        %1031 = vmatprep.mubr.f32.mxu0 %v565
        %1032 = vmatmul.mubr.f32.gmra.mrb[0].mxu0 %v557
        %v1033 = vpop.f32.mrb[0].mxu0
        %v1034 = vadd.f32 %v929, %v1033
        %v1035 = vpop.f32.mrb[0].mxu0
        %1036 = vmatprep.mubr.f32.mxu0 %v566
        %1037 = vmatmul.mubr.f32.gmra.mrb[0].mxu0 %v558
        %v1038 = vpop.f32.mrb[0].mxu0
        %v1039 = vadd.f32 %v934, %v1038
        %v1040 = vpop.f32.mrb[0].mxu0
        %1041 = vmatprep.mubr.f32.mxu0 %v567
        %1042 = vmatmul.mubr.f32.gmra.mrb[0].mxu0 %v559
        %v1043 = vpop.f32.mrb[0].mxu0
        %v1044 = vadd.f32 %v939, %v1043
        %v1045 = vpop.f32.mrb[0].mxu0
        %1046 = vmatprep.mubr.f32.mxu0 %v568
        %1047 = vmatmul.mubr.f32.gmra.mrb[0].mxu0 %v560
        %v1048 = vpop.f32.mrb[0].mxu0
        %v1049 = vadd.f32 %v944, %v1048
        %v1050 = vpop.f32.mrb[0].mxu0
        %1051 = vmatprep.mubr.f32.mxu0 %v569
        %1052 = vmatmul.mubr.f32.gmra.mrb[0].mxu0 %v561
        %v1053 = vpop.f32.mrb[0].mxu0
        %v1054 = vadd.f32 %v949, %v1053
        %v1055 = vpop.f32.mrb[0].mxu0
        %1056 = vmatprep.mubr.f32.mxu0 %v570
        %1057 = vmatmul.mubr.f32.gmra.mrb[0].mxu0 %v562
        %v1058 = vpop.f32.mrb[0].mxu0
        %v1059 = vadd.f32 %v954, %v1058
        %v1060 = vpop.f32.mrb[0].mxu0
        %1061 = vdwg.mxu0
        %1062 = vmatprep.subr.mxu0 0.0
        %1063 = vmatpush1.msra.mxu0 %v692
        %1064 = vmatprep.subr.mxu0 0.0
        %1065 = vmatpush1.msra.mxu0 %v693
        %1066 = vmatprep.subr.mxu0 0.0
        %1067 = vmatpush1.msra.mxu0 %v694
        %1068 = vmatprep.subr.mxu0 0.0
        %1069 = vmatpush1.msra.mxu0 %v695
        %1070 = vmatprep.subr.mxu0 0.0
        %1071 = vmatpush1.msra.mxu0 %v696
        %1072 = vmatprep.subr.mxu0 0.0
        %1073 = vmatpush1.msra.mxu0 %v697
        %1074 = vmatprep.subr.mxu0 0.0
        %1075 = vmatpush1.msra.mxu0 %v698
        %1076 = vmatprep.subr.mxu0 0.0
        %1077 = vmatpush1.msra.mxu0 %v699
        %1078 = vmatprep.subr.mxu0 0.0
        %1079 = vmatpush1.msra.mxu0 %v700
        %1080 = vmatprep.subr.mxu0 0.0
        %1081 = vmatpush1.msra.mxu0 %v701
        %1082 = vmatprep.subr.mxu0 0.0
        %1083 = vmatpush1.msra.mxu0 %v702
        %1084 = vmatprep.subr.mxu0 0.0
        %1085 = vmatpush1.msra.mxu0 %v703
        %1086 = vmatprep.subr.mxu0 0.0
        %1087 = vmatpush1.msra.mxu0 %v704
        %1088 = vmatprep.subr.mxu0 0.0
        %1089 = vmatpush1.msra.mxu0 %v705
        %1090 = vmatprep.subr.mxu0 0.0
        %1091 = vmatpush1.msra.mxu0 %v706
        %1092 = vmatprep.subr.mxu0 0.0
        %1093 = vmatpush1.msra.mxu0 %v707
        %1094 = vmatprep.subr.mxu0 0.0
        %1095 = vmatpush1.msra.mxu0 %v708
        %1096 = vmatprep.subr.mxu0 0.0
        %1097 = vmatpush1.msra.mxu0 %v709
        %1098 = vmatprep.subr.mxu0 0.0
        %1099 = vmatpush1.msra.mxu0 %v710
        %1100 = vmatprep.subr.mxu0 0.0
        %1101 = vmatpush1.msra.mxu0 %v711
        %1102 = vmatprep.subr.mxu0 0.0
        %1103 = vmatpush1.msra.mxu0 %v712
        %1104 = vmatprep.subr.mxu0 0.0
        %1105 = vmatpush1.msra.mxu0 %v713
        %1106 = vmatprep.subr.mxu0 0.0
        %1107 = vmatpush1.msra.mxu0 %v714
        %1108 = vmatprep.subr.mxu0 0.0
        %1109 = vmatpush1.msra.mxu0 %v715
        %1110 = vmatprep.subr.mxu0 0.0
        %1111 = vmatpush1.msra.mxu0 %v716
        %1112 = vmatprep.subr.mxu0 0.0
        %1113 = vmatpush1.msra.mxu0 %v717
        %1114 = vmatprep.subr.mxu0 0.0
        %1115 = vmatpush1.msra.mxu0 %v718
        %1116 = vmatprep.subr.mxu0 0.0
        %1117 = vmatpush1.msra.mxu0 %v719
        %1118 = vmatprep.subr.mxu0 0.0
        %1119 = vmatpush1.msra.mxu0 %v720
        %1120 = vmatprep.subr.mxu0 0.0
        %1121 = vmatpush1.msra.mxu0 %v721
        %1122 = vmatprep.subr.mxu0 0.0
        %1123 = vmatpush1.msra.mxu0 %v722
        %1124 = vmatprep.subr.mxu0 0.0
        %1125 = vmatpush1.msra.mxu0 %v723
        %1126 = vmatprep.mubr.f32.mxu0 %v580
        %1127 = vmatmul.mubr.f32.gmra.mrb[0].mxu0 %v572
        %v1128 = vpop.f32.mrb[0].mxu0
        %v1129 = vadd.f32 %v1024, %v1128
        %v1130 = vpop.f32.mrb[0].mxu0
        %1131 = vmatprep.mubr.f32.mxu0 %v581
        %1132 = vmatmul.mubr.f32.gmra.mrb[0].mxu0 %v573
        %v1133 = vpop.f32.mrb[0].mxu0
        %v1134 = vadd.f32 %v1029, %v1133
        %v1135 = vpop.f32.mrb[0].mxu0
        %1136 = vmatprep.mubr.f32.mxu0 %v582
        %1137 = vmatmul.mubr.f32.gmra.mrb[0].mxu0 %v574
        %v1138 = vpop.f32.mrb[0].mxu0
        %v1139 = vadd.f32 %v1034, %v1138
        %v1140 = vpop.f32.mrb[0].mxu0
        %1141 = vmatprep.mubr.f32.mxu0 %v583
        %1142 = vmatmul.mubr.f32.gmra.mrb[0].mxu0 %v575
        %v1143 = vpop.f32.mrb[0].mxu0
        %v1144 = vadd.f32 %v1039, %v1143
        %v1145 = vpop.f32.mrb[0].mxu0
        %1146 = vmatprep.mubr.f32.mxu0 %v584
        %1147 = vmatmul.mubr.f32.gmra.mrb[0].mxu0 %v576
        %v1148 = vpop.f32.mrb[0].mxu0
        %v1149 = vadd.f32 %v1044, %v1148
        %v1150 = vpop.f32.mrb[0].mxu0
        %1151 = vmatprep.mubr.f32.mxu0 %v585
        %1152 = vmatmul.mubr.f32.gmra.mrb[0].mxu0 %v577
        %v1153 = vpop.f32.mrb[0].mxu0
        %v1154 = vadd.f32 %v1049, %v1153
        %v1155 = vpop.f32.mrb[0].mxu0
        %1156 = vmatprep.mubr.f32.mxu0 %v586
        %1157 = vmatmul.mubr.f32.gmra.mrb[0].mxu0 %v578
        %v1158 = vpop.f32.mrb[0].mxu0
        %v1159 = vadd.f32 %v1054, %v1158
        %v1160 = vpop.f32.mrb[0].mxu0
        %1161 = vmatprep.mubr.f32.mxu0 %v587
        %1162 = vmatmul.mubr.f32.gmra.mrb[0].mxu0 %v579
        %v1163 = vpop.f32.mrb[0].mxu0
        %v1164 = vadd.f32 %v1059, %v1163
        %v1165 = vpop.f32.mrb[0].mxu0
        %1166 = vdwg.mxu0
        %1167 = vmatprep.subr.mxu0 0.0
        %1168 = vmatpush1.msra.mxu0 %v724
        %1169 = vmatprep.subr.mxu0 0.0
        %1170 = vmatpush1.msra.mxu0 %v725
        %1171 = vmatprep.subr.mxu0 0.0
        %1172 = vmatpush1.msra.mxu0 %v726
        %1173 = vmatprep.subr.mxu0 0.0
        %1174 = vmatpush1.msra.mxu0 %v727
        %1175 = vmatprep.subr.mxu0 0.0
        %1176 = vmatpush1.msra.mxu0 %v728
        %1177 = vmatprep.subr.mxu0 0.0
        %1178 = vmatpush1.msra.mxu0 %v729
        %1179 = vmatprep.subr.mxu0 0.0
        %1180 = vmatpush1.msra.mxu0 %v730
        %1181 = vmatprep.subr.mxu0 0.0
        %1182 = vmatpush1.msra.mxu0 %v731
        %1183 = vmatprep.subr.mxu0 0.0
        %1184 = vmatpush1.msra.mxu0 %v732
        %1185 = vmatprep.subr.mxu0 0.0
        %1186 = vmatpush1.msra.mxu0 %v733
        %1187 = vmatprep.subr.mxu0 0.0
        %1188 = vmatpush1.msra.mxu0 %v734
        %1189 = vmatprep.subr.mxu0 0.0
        %1190 = vmatpush1.msra.mxu0 %v735
        %1191 = vmatprep.subr.mxu0 0.0
        %1192 = vmatpush1.msra.mxu0 %v736
        %1193 = vmatprep.subr.mxu0 0.0
        %1194 = vmatpush1.msra.mxu0 %v737
        %1195 = vmatprep.subr.mxu0 0.0
        %1196 = vmatpush1.msra.mxu0 %v738
        %1197 = vmatprep.subr.mxu0 0.0
        %1198 = vmatpush1.msra.mxu0 %v739
        %1199 = vmatprep.subr.mxu0 0.0
        %1200 = vmatpush1.msra.mxu0 0.0
        %1201 = vmatprep.subr.mxu0 0.0
        %1202 = vmatpush1.msra.mxu0 0.0
        %1203 = vmatprep.subr.mxu0 0.0
        %1204 = vmatpush1.msra.mxu0 0.0
        %1205 = vmatprep.subr.mxu0 0.0
        %1206 = vmatpush1.msra.mxu0 0.0
        %1207 = vmatprep.subr.mxu0 0.0
        %1208 = vmatpush1.msra.mxu0 0.0
        %1209 = vmatprep.subr.mxu0 0.0
        %1210 = vmatpush1.msra.mxu0 0.0
        %1211 = vmatprep.subr.mxu0 0.0
        %1212 = vmatpush1.msra.mxu0 0.0
        %1213 = vmatprep.subr.mxu0 0.0
        %1214 = vmatpush1.msra.mxu0 0.0
        %1215 = vmatprep.subr.mxu0 0.0
        %1216 = vmatpush1.msra.mxu0 0.0
        %1217 = vmatprep.subr.mxu0 0.0
        %1218 = vmatpush1.msra.mxu0 0.0
        %1219 = vmatprep.subr.mxu0 0.0
        %1220 = vmatpush1.msra.mxu0 0.0
        %1221 = vmatprep.subr.mxu0 0.0
        %1222 = vmatpush1.msra.mxu0 0.0
        %1223 = vmatprep.subr.mxu0 0.0
        %1224 = vmatpush1.msra.mxu0 0.0
        %1225 = vmatprep.subr.mxu0 0.0
        %1226 = vmatpush1.msra.mxu0 0.0
        %1227 = vmatprep.subr.mxu0 0.0
        %1228 = vmatpush1.msra.mxu0 0.0
        %1229 = vmatprep.subr.mxu0 0.0
        %1230 = vmatpush1.msra.mxu0 0.0
        %1231 = vmatprep.mubr.f32.mxu0 0.0
        %1232 = vmatmul.mubr.f32.gmra.mrb[0].mxu0 %v588
        %v1233 = vpop.f32.mrb[0].mxu0
        %v1234 = vadd.f32 %v1129, %v1233
        %v1235 = vpop.f32.mrb[0].mxu0
        %1236 = vmatprep.mubr.f32.mxu0 0.0
        %1237 = vmatmul.mubr.f32.gmra.mrb[0].mxu0 %v589
        %v1238 = vpop.f32.mrb[0].mxu0
        %v1239 = vadd.f32 %v1134, %v1238
        %v1240 = vpop.f32.mrb[0].mxu0
        %1241 = vmatprep.mubr.f32.mxu0 0.0
        %1242 = vmatmul.mubr.f32.gmra.mrb[0].mxu0 %v590
        %v1243 = vpop.f32.mrb[0].mxu0
        %v1244 = vadd.f32 %v1139, %v1243
        %v1245 = vpop.f32.mrb[0].mxu0
        %1246 = vmatprep.mubr.f32.mxu0 0.0
        %1247 = vmatmul.mubr.f32.gmra.mrb[0].mxu0 %v591
        %v1248 = vpop.f32.mrb[0].mxu0
        %v1249 = vadd.f32 %v1144, %v1248
        %v1250 = vpop.f32.mrb[0].mxu0
        %1251 = vmatprep.mubr.f32.mxu0 0.0
        %1252 = vmatmul.mubr.f32.gmra.mrb[0].mxu0 %v592
        %v1253 = vpop.f32.mrb[0].mxu0
        %v1254 = vadd.f32 %v1149, %v1253
        %v1255 = vpop.f32.mrb[0].mxu0
        %1256 = vmatprep.mubr.f32.mxu0 0.0
        %1257 = vmatmul.mubr.f32.gmra.mrb[0].mxu0 %v593
        %v1258 = vpop.f32.mrb[0].mxu0
        %v1259 = vadd.f32 %v1154, %v1258
        %v1260 = vpop.f32.mrb[0].mxu0
        %1261 = vmatprep.mubr.f32.mxu0 0.0
        %1262 = vmatmul.mubr.f32.gmra.mrb[0].mxu0 %v594
        %v1263 = vpop.f32.mrb[0].mxu0
        %v1264 = vadd.f32 %v1159, %v1263
        %v1265 = vpop.f32.mrb[0].mxu0
        %1266 = vmatprep.mubr.f32.mxu0 0.0
        %1267 = vmatmul.mubr.f32.gmra.mrb[0].mxu0 %v595
        %v1268 = vpop.f32.mrb[0].mxu0
        %v1269 = vadd.f32 %v1164, %v1268
        %v1270 = vpop.f32.mrb[0].mxu0
        %1271 = vdwg.mxu0
        %v1272 = vmax.f32 %v1234, 0.0
        %v1273 = vmax.f32 %v1239, 0.0
        %v1274 = vmax.f32 %v1244, 0.0
        %v1275 = vmax.f32 %v1249, 0.0
        %v1276 = vmax.f32 %v1254, 0.0
        %v1277 = vmax.f32 %v1259, 0.0
        %v1278 = vmax.f32 %v1264, 0.0
        %v1279 = vmax.f32 %v1269, 0.0
        %v1280 = vld [vmem:[#allocation13] sm:$0xff]
        %v1281 = vld [vmem:[#allocation13 + $0x8] sm:$0xff]
        %v1282 = vld [vmem:[#allocation13 + $0x10] sm:$0xff]
        %v1283 = vld [vmem:[#allocation13 + $0x18] sm:$0xff]
        %v1284 = vld [vmem:[#allocation13 + $0x20] sm:$0xff]
        %v1285 = vld [vmem:[#allocation13 + $0x28] sm:$0xff]
        %v1286 = vld [vmem:[#allocation13 + $0x30] sm:$0xff]
        %v1287 = vld [vmem:[#allocation13 + $0x38] sm:$0xff]
        %v1288 = vld [vmem:[#allocation13 + $0x40] sm:$0xff]
        %v1289 = vld [vmem:[#allocation13 + $0x48] sm:$0xff]
        %v1290 = vld [vmem:[#allocation13 + $0x50] sm:$0xff]
        %v1291 = vld [vmem:[#allocation13 + $0x58] sm:$0xff]
        %v1292 = vld [vmem:[#allocation13 + $0x60] sm:$0xff]
        %v1293 = vld [vmem:[#allocation13 + $0x68] sm:$0xff]
        %v1294 = vld [vmem:[#allocation13 + $0x70] sm:$0xff]
        %v1295 = vld [vmem:[#allocation13 + $0x78] sm:$0xff]
        %v1296 = vld [vmem:[#allocation13 + $0x80] sm:$0xff]
        %v1297 = vld [vmem:[#allocation13 + $0x88] sm:$0xff]
        %v1298 = vld [vmem:[#allocation13 + $0x90] sm:$0xff]
        %v1299 = vld [vmem:[#allocation13 + $0x98] sm:$0xff]
        %v1300 = vld [vmem:[#allocation13 + $0xa0] sm:$0xff]
        %v1301 = vld [vmem:[#allocation13 + $0xa8] sm:$0xff]
        %v1302 = vld [vmem:[#allocation13 + $0xb0] sm:$0xff]
        %v1303 = vld [vmem:[#allocation13 + $0xb8] sm:$0xff]
        %v1304 = vld [vmem:[#allocation13 + $0xc0] sm:$0xff]
        %v1305 = vld [vmem:[#allocation13 + $0xc8] sm:$0xff]
        %v1306 = vld [vmem:[#allocation13 + $0xd0] sm:$0xff]
        %v1307 = vld [vmem:[#allocation13 + $0xd8] sm:$0xff]
        %v1308 = vld [vmem:[#allocation13 + $0xe0] sm:$0xff]
        %v1309 = vld [vmem:[#allocation13 + $0xe8] sm:$0xff]
        %v1310 = vld [vmem:[#allocation13 + $0xf0] sm:$0xff]
        %v1311 = vld [vmem:[#allocation13 + $0xf8] sm:$0xff]
        %vm1312 = vcmask 523264
        %v1314 = vsel %vm1312, %v1280, 0
        %v1317 = vsel %vm1312, %v1281, 0
        %v1320 = vsel %vm1312, %v1282, 0
        %v1323 = vsel %vm1312, %v1283, 0
        %v1326 = vsel %vm1312, %v1284, 0
        %v1329 = vsel %vm1312, %v1285, 0
        %v1332 = vsel %vm1312, %v1286, 0
        %v1335 = vsel %vm1312, %v1287, 0
        %v1338 = vsel %vm1312, %v1288, 0
        %v1341 = vsel %vm1312, %v1289, 0
        %v1344 = vsel %vm1312, %v1290, 0
        %v1347 = vsel %vm1312, %v1291, 0
        %v1350 = vsel %vm1312, %v1292, 0
        %v1353 = vsel %vm1312, %v1293, 0
        %v1356 = vsel %vm1312, %v1294, 0
        %v1359 = vsel %vm1312, %v1295, 0
        %v1362 = vsel %vm1312, %v1296, 0
        %v1365 = vsel %vm1312, %v1297, 0
        %v1368 = vsel %vm1312, %v1298, 0
        %v1371 = vsel %vm1312, %v1299, 0
        %v1374 = vsel %vm1312, %v1300, 0
        %v1377 = vsel %vm1312, %v1301, 0
        %v1380 = vsel %vm1312, %v1302, 0
        %v1383 = vsel %vm1312, %v1303, 0
        %v1386 = vsel %vm1312, %v1304, 0
        %v1389 = vsel %vm1312, %v1305, 0
        %v1392 = vsel %vm1312, %v1306, 0
        %v1395 = vsel %vm1312, %v1307, 0
        %v1398 = vsel %vm1312, %v1308, 0
        %v1401 = vsel %vm1312, %v1309, 0
        %v1404 = vsel %vm1312, %v1310, 0
        %v1407 = vsel %vm1312, %v1311, 0
        %1409 = vmatprep.subr.mxu0 0.0
        %1410 = vmatpush1.msra.mxu0 %v1272
        %1411 = vmatprep.subr.mxu0 0.0
        %1412 = vmatpush1.msra.mxu0 %v1273
        %1413 = vmatprep.subr.mxu0 0.0
        %1414 = vmatpush1.msra.mxu0 %v1274
        %1415 = vmatprep.subr.mxu0 0.0
        %1416 = vmatpush1.msra.mxu0 %v1275
        %1417 = vmatprep.subr.mxu0 0.0
        %1418 = vmatpush1.msra.mxu0 %v1276
        %1419 = vmatprep.subr.mxu0 0.0
        %1420 = vmatpush1.msra.mxu0 %v1277
        %1421 = vmatprep.subr.mxu0 0.0
        %1422 = vmatpush1.msra.mxu0 %v1278
        %1423 = vmatprep.subr.mxu0 0.0
        %1424 = vmatpush1.msra.mxu0 %v1279
        %1425 = vmatprep.subr.mxu0 0.0
        %1426 = vmatpush1.msra.mxu0 0.0
        %1427 = vmatprep.subr.mxu0 0.0
        %1428 = vmatpush1.msra.mxu0 0.0
        %1429 = vmatprep.subr.mxu0 0.0
        %1430 = vmatpush1.msra.mxu0 0.0
        %1431 = vmatprep.subr.mxu0 0.0
        %1432 = vmatpush1.msra.mxu0 0.0
        %1433 = vmatprep.subr.mxu0 0.0
        %1434 = vmatpush1.msra.mxu0 0.0
        %1435 = vmatprep.subr.mxu0 0.0
        %1436 = vmatpush1.msra.mxu0 0.0
        %1437 = vmatprep.subr.mxu0 0.0
        %1438 = vmatpush1.msra.mxu0 0.0
        %1439 = vmatprep.subr.mxu0 0.0
        %1440 = vmatpush1.msra.mxu0 0.0
        %1441 = vmatprep.subr.mxu0 0.0
        %1442 = vmatpush1.msra.mxu0 0.0
        %1443 = vmatprep.subr.mxu0 0.0
        %1444 = vmatpush1.msra.mxu0 0.0
        %1445 = vmatprep.subr.mxu0 0.0
        %1446 = vmatpush1.msra.mxu0 0.0
        %1447 = vmatprep.subr.mxu0 0.0
        %1448 = vmatpush1.msra.mxu0 0.0
        %1449 = vmatprep.subr.mxu0 0.0
        %1450 = vmatpush1.msra.mxu0 0.0
        %1451 = vmatprep.subr.mxu0 0.0
        %1452 = vmatpush1.msra.mxu0 0.0
        %1453 = vmatprep.subr.mxu0 0.0
        %1454 = vmatpush1.msra.mxu0 0.0
        %1455 = vmatprep.subr.mxu0 0.0
        %1456 = vmatpush1.msra.mxu0 0.0
        %1457 = vmatprep.subr.mxu0 0.0
        %1458 = vmatpush1.msra.mxu0 0.0
        %1459 = vmatprep.subr.mxu0 0.0
        %1460 = vmatpush1.msra.mxu0 0.0
        %1461 = vmatprep.subr.mxu0 0.0
        %1462 = vmatpush1.msra.mxu0 0.0
        %1463 = vmatprep.subr.mxu0 0.0
        %1464 = vmatpush1.msra.mxu0 0.0
        %1465 = vmatprep.subr.mxu0 0.0
        %1466 = vmatpush1.msra.mxu0 0.0
        %1467 = vmatprep.subr.mxu0 0.0
        %1468 = vmatpush1.msra.mxu0 0.0
        %1469 = vmatprep.subr.mxu0 0.0
        %1470 = vmatpush1.msra.mxu0 0.0
        %1471 = vmatprep.subr.mxu0 0.0
        %1472 = vmatpush1.msra.mxu0 0.0
        %1473 = vmatprep.mubr.f32.mxu0 0.0
        %1474 = vmatmul.mubr.f32.gmra.mrb[0].mxu0 %v1314
        %v1475 = vpop.f32.mrb[0].mxu0
        %v1476 = vadd.f32 0.0, %v1475
        %v1477 = vpop.f32.mrb[0].mxu0
        %1478 = vmatprep.mubr.f32.mxu0 0.0
        %1479 = vmatmul.mubr.f32.gmra.mrb[0].mxu0 %v1317
        %v1480 = vpop.f32.mrb[0].mxu0
        %v1481 = vadd.f32 0.0, %v1480
        %v1482 = vpop.f32.mrb[0].mxu0
        %1483 = vmatprep.mubr.f32.mxu0 0.0
        %1484 = vmatmul.mubr.f32.gmra.mrb[0].mxu0 %v1320
        %v1485 = vpop.f32.mrb[0].mxu0
        %v1486 = vadd.f32 0.0, %v1485
        %v1487 = vpop.f32.mrb[0].mxu0
        %1488 = vmatprep.mubr.f32.mxu0 0.0
        %1489 = vmatmul.mubr.f32.gmra.mrb[0].mxu0 %v1323
        %v1490 = vpop.f32.mrb[0].mxu0
        %v1491 = vadd.f32 0.0, %v1490
        %v1492 = vpop.f32.mrb[0].mxu0
        %1493 = vmatprep.mubr.f32.mxu0 0.0
        %1494 = vmatmul.mubr.f32.gmra.mrb[0].mxu0 %v1326
        %v1495 = vpop.f32.mrb[0].mxu0
        %v1496 = vadd.f32 0.0, %v1495
        %v1497 = vpop.f32.mrb[0].mxu0
        %1498 = vmatprep.mubr.f32.mxu0 0.0
        %1499 = vmatmul.mubr.f32.gmra.mrb[0].mxu0 %v1329
        %v1500 = vpop.f32.mrb[0].mxu0
        %v1501 = vadd.f32 0.0, %v1500
        %v1502 = vpop.f32.mrb[0].mxu0
        %1503 = vmatprep.mubr.f32.mxu0 0.0
        %1504 = vmatmul.mubr.f32.gmra.mrb[0].mxu0 %v1332
        %v1505 = vpop.f32.mrb[0].mxu0
        %v1506 = vadd.f32 0.0, %v1505
        %v1507 = vpop.f32.mrb[0].mxu0
        %1508 = vmatprep.mubr.f32.mxu0 0.0
        %1509 = vmatmul.mubr.f32.gmra.mrb[0].mxu0 %v1335
        %v1510 = vpop.f32.mrb[0].mxu0
        %v1511 = vadd.f32 0.0, %v1510
        %v1512 = vpop.f32.mrb[0].mxu0
        %1513 = vmatprep.mubr.f32.mxu0 0.0
        %1514 = vmatmul.mubr.f32.gmra.mrb[0].mxu0 %v1338
        %v1515 = vpop.f32.mrb[0].mxu0
        %v1516 = vadd.f32 0.0, %v1515
        %v1517 = vpop.f32.mrb[0].mxu0
        %1518 = vmatprep.mubr.f32.mxu0 0.0
        %1519 = vmatmul.mubr.f32.gmra.mrb[0].mxu0 %v1341
        %v1520 = vpop.f32.mrb[0].mxu0
        %v1521 = vadd.f32 0.0, %v1520
        %v1522 = vpop.f32.mrb[0].mxu0
        %1523 = vmatprep.mubr.f32.mxu0 0.0
        %1524 = vmatmul.mubr.f32.gmra.mrb[0].mxu0 %v1344
        %v1525 = vpop.f32.mrb[0].mxu0
        %v1526 = vadd.f32 0.0, %v1525
        %v1527 = vpop.f32.mrb[0].mxu0
        %1528 = vmatprep.mubr.f32.mxu0 0.0
        %1529 = vmatmul.mubr.f32.gmra.mrb[0].mxu0 %v1347
        %v1530 = vpop.f32.mrb[0].mxu0
        %v1531 = vadd.f32 0.0, %v1530
        %v1532 = vpop.f32.mrb[0].mxu0
        %1533 = vmatprep.mubr.f32.mxu0 0.0
        %1534 = vmatmul.mubr.f32.gmra.mrb[0].mxu0 %v1350
        %v1535 = vpop.f32.mrb[0].mxu0
        %v1536 = vadd.f32 0.0, %v1535
        %v1537 = vpop.f32.mrb[0].mxu0
        %1538 = vmatprep.mubr.f32.mxu0 0.0
        %1539 = vmatmul.mubr.f32.gmra.mrb[0].mxu0 %v1353
        %v1540 = vpop.f32.mrb[0].mxu0
        %v1541 = vadd.f32 0.0, %v1540
        %v1542 = vpop.f32.mrb[0].mxu0
        %1543 = vmatprep.mubr.f32.mxu0 0.0
        %1544 = vmatmul.mubr.f32.gmra.mrb[0].mxu0 %v1356
        %v1545 = vpop.f32.mrb[0].mxu0
        %v1546 = vadd.f32 0.0, %v1545
        %v1547 = vpop.f32.mrb[0].mxu0
        %1548 = vmatprep.mubr.f32.mxu0 0.0
        %1549 = vmatmul.mubr.f32.gmra.mrb[0].mxu0 %v1359
        %v1550 = vpop.f32.mrb[0].mxu0
        %v1551 = vadd.f32 0.0, %v1550
        %v1552 = vpop.f32.mrb[0].mxu0
        %1553 = vmatprep.mubr.f32.mxu0 0.0
        %1554 = vmatmul.mubr.f32.gmra.mrb[0].mxu0 %v1362
        %v1555 = vpop.f32.mrb[0].mxu0
        %v1556 = vadd.f32 0.0, %v1555
        %v1557 = vpop.f32.mrb[0].mxu0
        %1558 = vmatprep.mubr.f32.mxu0 0.0
        %1559 = vmatmul.mubr.f32.gmra.mrb[0].mxu0 %v1365
        %v1560 = vpop.f32.mrb[0].mxu0
        %v1561 = vadd.f32 0.0, %v1560
        %v1562 = vpop.f32.mrb[0].mxu0
        %1563 = vmatprep.mubr.f32.mxu0 0.0
        %1564 = vmatmul.mubr.f32.gmra.mrb[0].mxu0 %v1368
        %v1565 = vpop.f32.mrb[0].mxu0
        %v1566 = vadd.f32 0.0, %v1565
        %v1567 = vpop.f32.mrb[0].mxu0
        %1568 = vmatprep.mubr.f32.mxu0 0.0
        %1569 = vmatmul.mubr.f32.gmra.mrb[0].mxu0 %v1371
        %v1570 = vpop.f32.mrb[0].mxu0
        %v1571 = vadd.f32 0.0, %v1570
        %v1572 = vpop.f32.mrb[0].mxu0
        %1573 = vmatprep.mubr.f32.mxu0 0.0
        %1574 = vmatmul.mubr.f32.gmra.mrb[0].mxu0 %v1374
        %v1575 = vpop.f32.mrb[0].mxu0
        %v1576 = vadd.f32 0.0, %v1575
        %v1577 = vpop.f32.mrb[0].mxu0
        %1578 = vmatprep.mubr.f32.mxu0 0.0
        %1579 = vmatmul.mubr.f32.gmra.mrb[0].mxu0 %v1377
        %v1580 = vpop.f32.mrb[0].mxu0
        %v1581 = vadd.f32 0.0, %v1580
        %v1582 = vpop.f32.mrb[0].mxu0
        %1583 = vmatprep.mubr.f32.mxu0 0.0
        %1584 = vmatmul.mubr.f32.gmra.mrb[0].mxu0 %v1380
        %v1585 = vpop.f32.mrb[0].mxu0
        %v1586 = vadd.f32 0.0, %v1585
        %v1587 = vpop.f32.mrb[0].mxu0
        %1588 = vmatprep.mubr.f32.mxu0 0.0
        %1589 = vmatmul.mubr.f32.gmra.mrb[0].mxu0 %v1383
        %v1590 = vpop.f32.mrb[0].mxu0
        %v1591 = vadd.f32 0.0, %v1590
        %v1592 = vpop.f32.mrb[0].mxu0
        %1593 = vmatprep.mubr.f32.mxu0 0.0
        %1594 = vmatmul.mubr.f32.gmra.mrb[0].mxu0 %v1386
        %v1595 = vpop.f32.mrb[0].mxu0
        %v1596 = vadd.f32 0.0, %v1595
        %v1597 = vpop.f32.mrb[0].mxu0
        %1598 = vmatprep.mubr.f32.mxu0 0.0
        %1599 = vmatmul.mubr.f32.gmra.mrb[0].mxu0 %v1389
        %v1600 = vpop.f32.mrb[0].mxu0
        %v1601 = vadd.f32 0.0, %v1600
        %v1602 = vpop.f32.mrb[0].mxu0
        %1603 = vmatprep.mubr.f32.mxu0 0.0
        %1604 = vmatmul.mubr.f32.gmra.mrb[0].mxu0 %v1392
        %v1605 = vpop.f32.mrb[0].mxu0
        %v1606 = vadd.f32 0.0, %v1605
        %v1607 = vpop.f32.mrb[0].mxu0
        %1608 = vmatprep.mubr.f32.mxu0 0.0
        %1609 = vmatmul.mubr.f32.gmra.mrb[0].mxu0 %v1395
        %v1610 = vpop.f32.mrb[0].mxu0
        %v1611 = vadd.f32 0.0, %v1610
        %v1612 = vpop.f32.mrb[0].mxu0
        %1613 = vmatprep.mubr.f32.mxu0 0.0
        %1614 = vmatmul.mubr.f32.gmra.mrb[0].mxu0 %v1398
        %v1615 = vpop.f32.mrb[0].mxu0
        %v1616 = vadd.f32 0.0, %v1615
        %v1617 = vpop.f32.mrb[0].mxu0
        %1618 = vmatprep.mubr.f32.mxu0 0.0
        %1619 = vmatmul.mubr.f32.gmra.mrb[0].mxu0 %v1401
        %v1620 = vpop.f32.mrb[0].mxu0
        %v1621 = vadd.f32 0.0, %v1620
        %v1622 = vpop.f32.mrb[0].mxu0
        %1623 = vmatprep.mubr.f32.mxu0 0.0
        %1624 = vmatmul.mubr.f32.gmra.mrb[0].mxu0 %v1404
        %v1625 = vpop.f32.mrb[0].mxu0
        %v1626 = vadd.f32 0.0, %v1625
        %v1627 = vpop.f32.mrb[0].mxu0
        %1628 = vmatprep.mubr.f32.mxu0 0.0
        %1629 = vmatmul.mubr.f32.gmra.mrb[0].mxu0 %v1407
        %v1630 = vpop.f32.mrb[0].mxu0
        %v1631 = vadd.f32 0.0, %v1630
        %v1632 = vpop.f32.mrb[0].mxu0
        %1633 = vdwg.mxu0
        %1634 = vst [vmem:[#allocation3] sm:$0xff] 0.0
        %1635 = vst [vmem:[#allocation3 + $0x8] sm:$0xff] 0.0
        %1636 = vst [vmem:[#allocation3 + $0x10] sm:$0xff] 0.0
        %1637 = vst [vmem:[#allocation3 + $0x18] sm:$0xff] 0.0
        %1638 = vst [vmem:[#allocation3 + $0x20] sm:$0x3] 0.0
        %1639 = vst [vmem:[#allocation3 + $0x28] sm:$0x3] 0.0
        %1640 = vst [vmem:[#allocation3 + $0x30] sm:$0xff] 0.0
        %1641 = vst [vmem:[#allocation3 + $0x38] sm:$0xff] 0.0
        %1642 = vst [vmem:[#allocation3 + $0x40] sm:$0xff] 0.0
        %1643 = vst [vmem:[#allocation3 + $0x48] sm:$0xff] 0.0
        %1644 = vst [vmem:[#allocation3 + $0x50] sm:$0x3] 0.0
        %1645 = vst [vmem:[#allocation3 + $0x58] sm:$0x3] 0.0
        %1646 = vst [vmem:[#allocation3 + $0x60] sm:$0xff] 0.0
        %1647 = vst [vmem:[#allocation3 + $0x68] sm:$0xff] 0.0
        %1648 = vst [vmem:[#allocation3 + $0x70] sm:$0xff] 0.0
        %1649 = vst [vmem:[#allocation3 + $0x78] sm:$0xff] 0.0
        %1650 = vst [vmem:[#allocation3 + $0x80] sm:$0x3] 0.0
        %1651 = vst [vmem:[#allocation3 + $0x88] sm:$0x3] 0.0
        %1652 = vst [vmem:[#allocation3 + $0x90] sm:$0xff] 0.0
        %1653 = vst [vmem:[#allocation3 + $0x98] sm:$0xff] 0.0
        %1654 = vst [vmem:[#allocation3 + $0xa0] sm:$0xff] 0.0
        %1655 = vst [vmem:[#allocation3 + $0xa8] sm:$0xff] 0.0
        %1656 = vst [vmem:[#allocation3 + $0xb0] sm:$0x3] 0.0
        %1657 = vst [vmem:[#allocation3 + $0xb8] sm:$0x3] 0.0
        %1658 = vst [vmem:[#allocation3 + $0xc0] sm:$0xff] 0.0
        %1659 = vst [vmem:[#allocation3 + $0xc8] sm:$0xff] 0.0
        %1660 = vst [vmem:[#allocation3 + $0xd0] sm:$0xff] 0.0
        %1661 = vst [vmem:[#allocation3 + $0xd8] sm:$0xff] 0.0
        %1662 = vst [vmem:[#allocation3 + $0xe0] sm:$0x3] 0.0
        %1663 = vst [vmem:[#allocation3 + $0xe8] sm:$0x3] 0.0
        %1664 = vst [vmem:[#allocation3 + $0xf0] sm:$0xff] 0.0
        %1665 = vst [vmem:[#allocation3 + $0xf8] sm:$0xff] 0.0
        %1666 = vst [vmem:[#allocation3 + $0x100] sm:$0xff] 0.0
        %1667 = vst [vmem:[#allocation3 + $0x108] sm:$0xff] 0.0
        %1668 = vst [vmem:[#allocation3 + $0x110] sm:$0x3] 0.0
        %1669 = vst [vmem:[#allocation3 + $0x118] sm:$0x3] 0.0
        %1670 = vst [vmem:[#allocation3 + $0x120] sm:$0xff] 0.0
        %1671 = vst [vmem:[#allocation3 + $0x128] sm:$0xff] 0.0
        %1672 = vst [vmem:[#allocation3 + $0x130] sm:$0xff] 0.0
        %1673 = vst [vmem:[#allocation3 + $0x138] sm:$0xff] 0.0
        %1674 = vst [vmem:[#allocation3 + $0x140] sm:$0x3] 0.0
        %1675 = vst [vmem:[#allocation3 + $0x148] sm:$0x3] 0.0
        %1676 = vst [vmem:[#allocation3 + $0x150] sm:$0xff] 0.0
        %1677 = vst [vmem:[#allocation3 + $0x158] sm:$0xff] 0.0
        %1678 = vst [vmem:[#allocation3 + $0x160] sm:$0xff] 0.0
        %1679 = vst [vmem:[#allocation3 + $0x168] sm:$0xff] 0.0
        %1680 = vst [vmem:[#allocation3 + $0x170] sm:$0x3] 0.0
        %1681 = vst [vmem:[#allocation3 + $0x178] sm:$0x3] 0.0
        %1682 = vst [vmem:[#allocation3 + $0x180] sm:$0xff] 0.0
        %1683 = vst [vmem:[#allocation3 + $0x188] sm:$0xff] 0.0
        %1684 = vst [vmem:[#allocation3 + $0x190] sm:$0xff] 0.0
        %1685 = vst [vmem:[#allocation3 + $0x198] sm:$0xff] 0.0
        %1686 = vst [vmem:[#allocation3 + $0x1a0] sm:$0x3] 0.0
        %1687 = vst [vmem:[#allocation3 + $0x1a8] sm:$0x3] 0.0
        %1688 = vst [vmem:[#allocation3 + $0x1b0] sm:$0xff] 0.0
        %1689 = vst [vmem:[#allocation3 + $0x1b8] sm:$0xff] 0.0
        %1690 = vst [vmem:[#allocation3 + $0x1c0] sm:$0xff] 0.0
        %1691 = vst [vmem:[#allocation3 + $0x1c8] sm:$0xff] 0.0
        %1692 = vst [vmem:[#allocation3 + $0x1d0] sm:$0x3] 0.0
        %1693 = vst [vmem:[#allocation3 + $0x1d8] sm:$0x3] 0.0
        %1694 = vst [vmem:[#allocation3 + $0x1e0] sm:$0xff] 0.0
        %1695 = vst [vmem:[#allocation3 + $0x1e8] sm:$0xff] 0.0
        %1696 = vst [vmem:[#allocation3 + $0x1f0] sm:$0xff] 0.0
        %1697 = vst [vmem:[#allocation3 + $0x1f8] sm:$0xff] 0.0
        %1698 = vst [vmem:[#allocation3 + $0x200] sm:$0x3] 0.0
        %1699 = vst [vmem:[#allocation3 + $0x208] sm:$0x3] 0.0
        %1700 = vst [vmem:[#allocation3 + $0x210] sm:$0xff] 0.0
        %1701 = vst [vmem:[#allocation3 + $0x218] sm:$0xff] 0.0
        %1702 = vst [vmem:[#allocation3 + $0x220] sm:$0xff] 0.0
        %1703 = vst [vmem:[#allocation3 + $0x228] sm:$0xff] 0.0
        %1704 = vst [vmem:[#allocation3 + $0x230] sm:$0x3] 0.0
        %1705 = vst [vmem:[#allocation3 + $0x238] sm:$0x3] 0.0
        %1706 = vst [vmem:[#allocation3 + $0x240] sm:$0xff] 0.0
        %1707 = vst [vmem:[#allocation3 + $0x248] sm:$0xff] 0.0
        %1708 = vst [vmem:[#allocation3 + $0x250] sm:$0xff] 0.0
        %1709 = vst [vmem:[#allocation3 + $0x258] sm:$0xff] 0.0
        %1710 = vst [vmem:[#allocation3 + $0x260] sm:$0x3] 0.0
        %1711 = vst [vmem:[#allocation3 + $0x268] sm:$0x3] 0.0
        %1712 = vst [vmem:[#allocation3 + $0x270] sm:$0xff] 0.0
        %1713 = vst [vmem:[#allocation3 + $0x278] sm:$0xff] 0.0
        %1714 = vst [vmem:[#allocation3 + $0x280] sm:$0xff] 0.0
        %1715 = vst [vmem:[#allocation3 + $0x288] sm:$0xff] 0.0
        %1716 = vst [vmem:[#allocation3 + $0x290] sm:$0x3] 0.0
        %1717 = vst [vmem:[#allocation3 + $0x298] sm:$0x3] 0.0
        %1718 = vst [vmem:[#allocation3 + $0x2a0] sm:$0xff] 0.0
        %1719 = vst [vmem:[#allocation3 + $0x2a8] sm:$0xff] 0.0
        %1720 = vst [vmem:[#allocation3 + $0x2b0] sm:$0xff] 0.0
        %1721 = vst [vmem:[#allocation3 + $0x2b8] sm:$0xff] 0.0
        %1722 = vst [vmem:[#allocation3 + $0x2c0] sm:$0x3] 0.0
        %1723 = vst [vmem:[#allocation3 + $0x2c8] sm:$0x3] 0.0
        %1724 = vst [vmem:[#allocation3 + $0x2d0] sm:$0xff] 0.0
        %1725 = vst [vmem:[#allocation3 + $0x2d8] sm:$0xff] 0.0
        %1726 = vst [vmem:[#allocation3 + $0x2e0] sm:$0xff] 0.0
        %1727 = vst [vmem:[#allocation3 + $0x2e8] sm:$0xff] 0.0
        %1728 = vst [vmem:[#allocation3 + $0x2f0] sm:$0x3] 0.0
        %1729 = vst [vmem:[#allocation3 + $0x2f8] sm:$0x3] 0.0
        %1730 = vst [vmem:[#allocation3 + $0x300] sm:$0xff] 0.0
        %1731 = vst [vmem:[#allocation3 + $0x308] sm:$0xff] 0.0
        %1732 = vst [vmem:[#allocation3 + $0x310] sm:$0xff] 0.0
        %1733 = vst [vmem:[#allocation3 + $0x318] sm:$0xff] 0.0
        %1734 = vst [vmem:[#allocation3 + $0x320] sm:$0x3] 0.0
        %1735 = vst [vmem:[#allocation3 + $0x328] sm:$0x3] 0.0
        %1736 = vst [vmem:[#allocation3 + $0x330] sm:$0xff] 0.0
        %1737 = vst [vmem:[#allocation3 + $0x338] sm:$0xff] 0.0
        %1738 = vst [vmem:[#allocation3 + $0x340] sm:$0xff] 0.0
        %1739 = vst [vmem:[#allocation3 + $0x348] sm:$0xff] 0.0
        %1740 = vst [vmem:[#allocation3 + $0x350] sm:$0x3] 0.0
        %1741 = vst [vmem:[#allocation3 + $0x358] sm:$0x3] 0.0
        %v1742 = vld [vmem:[%s407] sm:$0xff]
        %v1743 = vld [vmem:[%s407 + $0x8] sm:$0xff]
        %v1744 = vld [vmem:[%s407 + $0x10] sm:$0xff]
        %v1745 = vld [vmem:[%s407 + $0x18] sm:$0xff]
        %v1746 = vld [vmem:[%s407 + $0x20] sm:$0xff]
        %v1747 = vld [vmem:[%s407 + $0x28] sm:$0xff]
        %v1748 = vld [vmem:[%s407 + $0x30] sm:$0xff]
        %v1749 = vld [vmem:[%s407 + $0x38] sm:$0xff]
        %v1750 = vld [vmem:[%s407 + $0x40] sm:$0xff]
        %v1751 = vld [vmem:[%s407 + $0x48] sm:$0xff]
        %v1752 = vld [vmem:[%s407 + $0x50] sm:$0xff]
        %v1753 = vld [vmem:[%s407 + $0x58] sm:$0xff]
        %v1754 = vld [vmem:[%s407 + $0x60] sm:$0xff]
        %v1755 = vld [vmem:[%s407 + $0x68] sm:$0xff]
        %v1756 = vld [vmem:[%s407 + $0x70] sm:$0xff]
        %v1757 = vld [vmem:[%s407 + $0x78] sm:$0xff]
        %v1758 = vld [vmem:[%s407 + $0x80] sm:$0xff]
        %v1759 = vld [vmem:[%s407 + $0x88] sm:$0xff]
        %v1760 = vld [vmem:[%s407 + $0x90] sm:$0xff]
        %v1761 = vld [vmem:[%s407 + $0x98] sm:$0xff]
        %v1762 = vld [vmem:[%s407 + $0xa0] sm:$0xff]
        %v1763 = vld [vmem:[%s407 + $0xa8] sm:$0xff]
        %v1764 = vld [vmem:[%s407 + $0xb0] sm:$0xff]
        %v1765 = vld [vmem:[%s407 + $0xb8] sm:$0xff]
        %v1766 = vld [vmem:[%s407 + $0xc0] sm:$0xff]
        %v1767 = vld [vmem:[%s407 + $0xc8] sm:$0xff]
        %v1768 = vld [vmem:[%s407 + $0xd0] sm:$0xff]
        %v1769 = vld [vmem:[%s407 + $0xd8] sm:$0xff]
        %v1770 = vld [vmem:[%s407 + $0xe0] sm:$0xff]
        %v1771 = vld [vmem:[%s407 + $0xe8] sm:$0xff]
        %v1772 = vld [vmem:[%s407 + $0xf0] sm:$0xff]
        %v1773 = vld [vmem:[%s407 + $0xf8] sm:$0xff]
        %vm1806 = vcmask 1040384
        %v1807 = vrot.slane %v1742, 7
        %v1808 = vrot.slane %v1743, 7
        %v1809 = vsel %vm1806, %v1807, %v1808
        %v1810 = vrot.slane %v1744, 7
        %v1811 = vrot.slane %v1745, 7
        %v1812 = vsel %vm1806, %v1810, %v1811
        %v1813 = vrot.slane %v1746, 7
        %v1814 = vrot.slane %v1747, 7
        %v1815 = vsel %vm1806, %v1813, %v1814
        %v1816 = vrot.slane %v1748, 7
        %v1817 = vrot.slane %v1749, 7
        %v1818 = vsel %vm1806, %v1816, %v1817
        %v1819 = vrot.slane %v1750, 7
        %v1820 = vrot.slane %v1751, 7
        %v1821 = vsel %vm1806, %v1819, %v1820
        %v1822 = vrot.slane %v1752, 7
        %v1823 = vrot.slane %v1753, 7
        %v1824 = vsel %vm1806, %v1822, %v1823
        %v1825 = vrot.slane %v1754, 7
        %v1826 = vrot.slane %v1755, 7
        %v1827 = vsel %vm1806, %v1825, %v1826
        %v1828 = vrot.slane %v1756, 7
        %v1829 = vrot.slane %v1757, 7
        %v1830 = vsel %vm1806, %v1828, %v1829
        %v1831 = vrot.slane %v1758, 7
        %v1832 = vrot.slane %v1759, 7
        %v1833 = vsel %vm1806, %v1831, %v1832
        %v1834 = vrot.slane %v1760, 7
        %v1835 = vrot.slane %v1761, 7
        %v1836 = vsel %vm1806, %v1834, %v1835
        %v1837 = vrot.slane %v1762, 7
        %v1838 = vrot.slane %v1763, 7
        %v1839 = vsel %vm1806, %v1837, %v1838
        %v1840 = vrot.slane %v1764, 7
        %v1841 = vrot.slane %v1765, 7
        %v1842 = vsel %vm1806, %v1840, %v1841
        %v1843 = vrot.slane %v1766, 7
        %v1844 = vrot.slane %v1767, 7
        %v1845 = vsel %vm1806, %v1843, %v1844
        %v1846 = vrot.slane %v1768, 7
        %v1847 = vrot.slane %v1769, 7
        %v1848 = vsel %vm1806, %v1846, %v1847
        %v1849 = vrot.slane %v1770, 7
        %v1850 = vrot.slane %v1771, 7
        %v1851 = vsel %vm1806, %v1849, %v1850
        %v1852 = vrot.slane %v1772, 7
        %v1853 = vrot.slane %v1773, 7
        %v1854 = vsel %vm1806, %v1852, %v1853
        %s1903 = scalar_lea.vmem [#allocation3], 48
        %1904 = vst [vmem:[%s1903] sm:$0xfe] %v1807
        %1905 = vst [vmem:[%s1903 + $0x10] sm:$0xff] %v1809
        %1906 = vst [vmem:[%s1903 + $0x20] sm:$0x1] %v1808
        %1907 = vst [vmem:[%s1903 + $0x30] sm:$0xfe] %v1810
        %1908 = vst [vmem:[%s1903 + $0x40] sm:$0xff] %v1812
        %1909 = vst [vmem:[%s1903 + $0x50] sm:$0x1] %v1811
        %1910 = vst [vmem:[%s1903 + $0x60] sm:$0xfe] %v1813
        %1911 = vst [vmem:[%s1903 + $0x70] sm:$0xff] %v1815
        %1912 = vst [vmem:[%s1903 + $0x80] sm:$0x1] %v1814
        %1913 = vst [vmem:[%s1903 + $0x90] sm:$0xfe] %v1816
        %1914 = vst [vmem:[%s1903 + $0xa0] sm:$0xff] %v1818
        %1915 = vst [vmem:[%s1903 + $0xb0] sm:$0x1] %v1817
        %1916 = vst [vmem:[%s1903 + $0xc0] sm:$0xfe] %v1819
        %1917 = vst [vmem:[%s1903 + $0xd0] sm:$0xff] %v1821
        %1918 = vst [vmem:[%s1903 + $0xe0] sm:$0x1] %v1820
        %1919 = vst [vmem:[%s1903 + $0xf0] sm:$0xfe] %v1822
        %1920 = vst [vmem:[%s1903 + $0x100] sm:$0xff] %v1824
        %1921 = vst [vmem:[%s1903 + $0x110] sm:$0x1] %v1823
        %1922 = vst [vmem:[%s1903 + $0x120] sm:$0xfe] %v1825
        %1923 = vst [vmem:[%s1903 + $0x130] sm:$0xff] %v1827
        %1924 = vst [vmem:[%s1903 + $0x140] sm:$0x1] %v1826
        %1925 = vst [vmem:[%s1903 + $0x150] sm:$0xfe] %v1828
        %1926 = vst [vmem:[%s1903 + $0x160] sm:$0xff] %v1830
        %1927 = vst [vmem:[%s1903 + $0x170] sm:$0x1] %v1829
        %1928 = vst [vmem:[%s1903 + $0x180] sm:$0xfe] %v1831
        %1929 = vst [vmem:[%s1903 + $0x190] sm:$0xff] %v1833
        %1930 = vst [vmem:[%s1903 + $0x1a0] sm:$0x1] %v1832
        %1931 = vst [vmem:[%s1903 + $0x1b0] sm:$0xfe] %v1834
        %1932 = vst [vmem:[%s1903 + $0x1c0] sm:$0xff] %v1836
        %1933 = vst [vmem:[%s1903 + $0x1d0] sm:$0x1] %v1835
        %1934 = vst [vmem:[%s1903 + $0x1e0] sm:$0xfe] %v1837
        %1935 = vst [vmem:[%s1903 + $0x1f0] sm:$0xff] %v1839
        %1936 = vst [vmem:[%s1903 + $0x200] sm:$0x1] %v1838
        %1937 = vst [vmem:[%s1903 + $0x210] sm:$0xfe] %v1840
        %1938 = vst [vmem:[%s1903 + $0x220] sm:$0xff] %v1842
        %1939 = vst [vmem:[%s1903 + $0x230] sm:$0x1] %v1841
        %1940 = vst [vmem:[%s1903 + $0x240] sm:$0xfe] %v1843
        %1941 = vst [vmem:[%s1903 + $0x250] sm:$0xff] %v1845
        %1942 = vst [vmem:[%s1903 + $0x260] sm:$0x1] %v1844
        %1943 = vst [vmem:[%s1903 + $0x270] sm:$0xfe] %v1846
        %1944 = vst [vmem:[%s1903 + $0x280] sm:$0xff] %v1848
        %1945 = vst [vmem:[%s1903 + $0x290] sm:$0x1] %v1847
        %1946 = vst [vmem:[%s1903 + $0x2a0] sm:$0xfe] %v1849
        %1947 = vst [vmem:[%s1903 + $0x2b0] sm:$0xff] %v1851
        %1948 = vst [vmem:[%s1903 + $0x2c0] sm:$0x1] %v1850
        %1949 = vst [vmem:[%s1903 + $0x2d0] sm:$0xfe] %v1852
        %1950 = vst [vmem:[%s1903 + $0x2e0] sm:$0xff] %v1854
        %1951 = vst [vmem:[%s1903 + $0x2f0] sm:$0x1] %v1853
        %v1984 = vrot.slane %v1476, 7
        %v1985 = vrot.slane %v1481, 7
        %v1986 = vsel %vm1806, %v1984, %v1985
        %v1987 = vrot.slane %v1486, 7
        %v1988 = vrot.slane %v1491, 7
        %v1989 = vsel %vm1806, %v1987, %v1988
        %v1990 = vrot.slane %v1496, 7
        %v1991 = vrot.slane %v1501, 7
        %v1992 = vsel %vm1806, %v1990, %v1991
        %v1993 = vrot.slane %v1506, 7
        %v1994 = vrot.slane %v1511, 7
        %v1995 = vsel %vm1806, %v1993, %v1994
        %v1996 = vrot.slane %v1516, 7
        %v1997 = vrot.slane %v1521, 7
        %v1998 = vsel %vm1806, %v1996, %v1997
        %v1999 = vrot.slane %v1526, 7
        %v2000 = vrot.slane %v1531, 7
        %v2001 = vsel %vm1806, %v1999, %v2000
        %v2002 = vrot.slane %v1536, 7
        %v2003 = vrot.slane %v1541, 7
        %v2004 = vsel %vm1806, %v2002, %v2003
        %v2005 = vrot.slane %v1546, 7
        %v2006 = vrot.slane %v1551, 7
        %v2007 = vsel %vm1806, %v2005, %v2006
        %v2008 = vrot.slane %v1556, 7
        %v2009 = vrot.slane %v1561, 7
        %v2010 = vsel %vm1806, %v2008, %v2009
        %v2011 = vrot.slane %v1566, 7
        %v2012 = vrot.slane %v1571, 7
        %v2013 = vsel %vm1806, %v2011, %v2012
        %v2014 = vrot.slane %v1576, 7
        %v2015 = vrot.slane %v1581, 7
        %v2016 = vsel %vm1806, %v2014, %v2015
        %v2017 = vrot.slane %v1586, 7
        %v2018 = vrot.slane %v1591, 7
        %v2019 = vsel %vm1806, %v2017, %v2018
        %v2020 = vrot.slane %v1596, 7
        %v2021 = vrot.slane %v1601, 7
        %v2022 = vsel %vm1806, %v2020, %v2021
        %v2023 = vrot.slane %v1606, 7
        %v2024 = vrot.slane %v1611, 7
        %v2025 = vsel %vm1806, %v2023, %v2024
        %v2026 = vrot.slane %v1616, 7
        %v2027 = vrot.slane %v1621, 7
        %v2028 = vsel %vm1806, %v2026, %v2027
        %v2029 = vrot.slane %v1626, 7
        %v2030 = vrot.slane %v1631, 7
        %v2031 = vsel %vm1806, %v2029, %v2030
        %2080 = vst [vmem:[%s1903 + $0x8] sm:$0xfe] %v1984
        %2081 = vst [vmem:[%s1903 + $0x18] sm:$0xff] %v1986
        %2082 = vst [vmem:[%s1903 + $0x28] sm:$0x1] %v1985
        %2083 = vst [vmem:[%s1903 + $0x38] sm:$0xfe] %v1987
        %2084 = vst [vmem:[%s1903 + $0x48] sm:$0xff] %v1989
        %2085 = vst [vmem:[%s1903 + $0x58] sm:$0x1] %v1988
        %2086 = vst [vmem:[%s1903 + $0x68] sm:$0xfe] %v1990
        %2087 = vst [vmem:[%s1903 + $0x78] sm:$0xff] %v1992
        %2088 = vst [vmem:[%s1903 + $0x88] sm:$0x1] %v1991
        %2089 = vst [vmem:[%s1903 + $0x98] sm:$0xfe] %v1993
        %2090 = vst [vmem:[%s1903 + $0xa8] sm:$0xff] %v1995
        %2091 = vst [vmem:[%s1903 + $0xb8] sm:$0x1] %v1994
        %2092 = vst [vmem:[%s1903 + $0xc8] sm:$0xfe] %v1996
        %2093 = vst [vmem:[%s1903 + $0xd8] sm:$0xff] %v1998
        %2094 = vst [vmem:[%s1903 + $0xe8] sm:$0x1] %v1997
        %2095 = vst [vmem:[%s1903 + $0xf8] sm:$0xfe] %v1999
        %2096 = vst [vmem:[%s1903 + $0x108] sm:$0xff] %v2001
        %2097 = vst [vmem:[%s1903 + $0x118] sm:$0x1] %v2000
        %2098 = vst [vmem:[%s1903 + $0x128] sm:$0xfe] %v2002
        %2099 = vst [vmem:[%s1903 + $0x138] sm:$0xff] %v2004
        %2100 = vst [vmem:[%s1903 + $0x148] sm:$0x1] %v2003
        %2101 = vst [vmem:[%s1903 + $0x158] sm:$0xfe] %v2005
        %2102 = vst [vmem:[%s1903 + $0x168] sm:$0xff] %v2007
        %2103 = vst [vmem:[%s1903 + $0x178] sm:$0x1] %v2006
        %2104 = vst [vmem:[%s1903 + $0x188] sm:$0xfe] %v2008
        %2105 = vst [vmem:[%s1903 + $0x198] sm:$0xff] %v2010
        %2106 = vst [vmem:[%s1903 + $0x1a8] sm:$0x1] %v2009
        %2107 = vst [vmem:[%s1903 + $0x1b8] sm:$0xfe] %v2011
        %2108 = vst [vmem:[%s1903 + $0x1c8] sm:$0xff] %v2013
        %2109 = vst [vmem:[%s1903 + $0x1d8] sm:$0x1] %v2012
        %2110 = vst [vmem:[%s1903 + $0x1e8] sm:$0xfe] %v2014
        %2111 = vst [vmem:[%s1903 + $0x1f8] sm:$0xff] %v2016
        %2112 = vst [vmem:[%s1903 + $0x208] sm:$0x1] %v2015
        %2113 = vst [vmem:[%s1903 + $0x218] sm:$0xfe] %v2017
        %2114 = vst [vmem:[%s1903 + $0x228] sm:$0xff] %v2019
        %2115 = vst [vmem:[%s1903 + $0x238] sm:$0x1] %v2018
        %2116 = vst [vmem:[%s1903 + $0x248] sm:$0xfe] %v2020
        %2117 = vst [vmem:[%s1903 + $0x258] sm:$0xff] %v2022
        %2118 = vst [vmem:[%s1903 + $0x268] sm:$0x1] %v2021
        %2119 = vst [vmem:[%s1903 + $0x278] sm:$0xfe] %v2023
        %2120 = vst [vmem:[%s1903 + $0x288] sm:$0xff] %v2025
        %2121 = vst [vmem:[%s1903 + $0x298] sm:$0x1] %v2024
        %2122 = vst [vmem:[%s1903 + $0x2a8] sm:$0xfe] %v2026
        %2123 = vst [vmem:[%s1903 + $0x2b8] sm:$0xff] %v2028
        %2124 = vst [vmem:[%s1903 + $0x2c8] sm:$0x1] %v2027
        %2125 = vst [vmem:[%s1903 + $0x2d8] sm:$0xfe] %v2029
        %2126 = vst [vmem:[%s1903 + $0x2e8] sm:$0xff] %v2031
        %2127 = vst [vmem:[%s1903 + $0x2f8] sm:$0x1] %v2030
        %v2128 = vld [vmem:[#allocation3] sm:$0xff]
        %v2129 = vld [vmem:[#allocation3 + $0x8] sm:$0xff]
        %v2130 = vld [vmem:[#allocation3 + $0x10] sm:$0xff]
        %v2131 = vld [vmem:[#allocation3 + $0x18] sm:$0xff]
        %v2132 = vld [vmem:[#allocation3 + $0x30] sm:$0xff]
        %v2133 = vld [vmem:[#allocation3 + $0x38] sm:$0xff]
        %v2134 = vld [vmem:[#allocation3 + $0x40] sm:$0xff]
        %v2135 = vld [vmem:[#allocation3 + $0x48] sm:$0xff]
        %v2136 = vld [vmem:[#allocation3 + $0x60] sm:$0xff]
        %v2137 = vld [vmem:[#allocation3 + $0x68] sm:$0xff]
        %v2138 = vld [vmem:[#allocation3 + $0x70] sm:$0xff]
        %v2139 = vld [vmem:[#allocation3 + $0x78] sm:$0xff]
        %v2140 = vld [vmem:[#allocation3 + $0x90] sm:$0xff]
        %v2141 = vld [vmem:[#allocation3 + $0x98] sm:$0xff]
        %v2142 = vld [vmem:[#allocation3 + $0xa0] sm:$0xff]
        %v2143 = vld [vmem:[#allocation3 + $0xa8] sm:$0xff]
        %v2144 = vld [vmem:[#allocation3 + $0xc0] sm:$0xff]
        %v2145 = vld [vmem:[#allocation3 + $0xc8] sm:$0xff]
        %v2146 = vld [vmem:[#allocation3 + $0xd0] sm:$0xff]
        %v2147 = vld [vmem:[#allocation3 + $0xd8] sm:$0xff]
        %v2148 = vld [vmem:[#allocation3 + $0xf0] sm:$0xff]
        %v2149 = vld [vmem:[#allocation3 + $0xf8] sm:$0xff]
        %v2150 = vld [vmem:[#allocation3 + $0x100] sm:$0xff]
        %v2151 = vld [vmem:[#allocation3 + $0x108] sm:$0xff]
        %v2152 = vld [vmem:[#allocation3 + $0x120] sm:$0xff]
        %v2153 = vld [vmem:[#allocation3 + $0x128] sm:$0xff]
        %v2154 = vld [vmem:[#allocation3 + $0x130] sm:$0xff]
        %v2155 = vld [vmem:[#allocation3 + $0x138] sm:$0xff]
        %v2156 = vld [vmem:[#allocation3 + $0x150] sm:$0xff]
        %v2157 = vld [vmem:[#allocation3 + $0x158] sm:$0xff]
        %v2158 = vld [vmem:[#allocation3 + $0x160] sm:$0xff]
        %v2159 = vld [vmem:[#allocation3 + $0x168] sm:$0xff]
        %v2160 = vld [vmem:[#allocation3 + $0x180] sm:$0xff]
        %v2161 = vld [vmem:[#allocation3 + $0x188] sm:$0xff]
        %v2162 = vld [vmem:[#allocation3 + $0x190] sm:$0xff]
        %v2163 = vld [vmem:[#allocation3 + $0x198] sm:$0xff]
        %v2164 = vld [vmem:[#allocation3 + $0x1b0] sm:$0xff]
        %v2165 = vld [vmem:[#allocation3 + $0x1b8] sm:$0xff]
        %v2166 = vld [vmem:[#allocation3 + $0x1c0] sm:$0xff]
        %v2167 = vld [vmem:[#allocation3 + $0x1c8] sm:$0xff]
        %v2168 = vld [vmem:[#allocation3 + $0x1e0] sm:$0xff]
        %v2169 = vld [vmem:[#allocation3 + $0x1e8] sm:$0xff]
        %v2170 = vld [vmem:[#allocation3 + $0x1f0] sm:$0xff]
        %v2171 = vld [vmem:[#allocation3 + $0x1f8] sm:$0xff]
        %v2172 = vld [vmem:[#allocation3 + $0x210] sm:$0xff]
        %v2173 = vld [vmem:[#allocation3 + $0x218] sm:$0xff]
        %v2174 = vld [vmem:[#allocation3 + $0x220] sm:$0xff]
        %v2175 = vld [vmem:[#allocation3 + $0x228] sm:$0xff]
        %v2176 = vld [vmem:[#allocation3 + $0x240] sm:$0xff]
        %v2177 = vld [vmem:[#allocation3 + $0x248] sm:$0xff]
        %v2178 = vld [vmem:[#allocation3 + $0x250] sm:$0xff]
        %v2179 = vld [vmem:[#allocation3 + $0x258] sm:$0xff]
        %v2180 = vld [vmem:[#allocation3 + $0x270] sm:$0xff]
        %v2181 = vld [vmem:[#allocation3 + $0x278] sm:$0xff]
        %v2182 = vld [vmem:[#allocation3 + $0x280] sm:$0xff]
        %v2183 = vld [vmem:[#allocation3 + $0x288] sm:$0xff]
        %v2184 = vld [vmem:[#allocation3 + $0x2a0] sm:$0xff]
        %v2185 = vld [vmem:[#allocation3 + $0x2a8] sm:$0xff]
        %v2186 = vld [vmem:[#allocation3 + $0x2b0] sm:$0xff]
        %v2187 = vld [vmem:[#allocation3 + $0x2b8] sm:$0xff]
        %v2188 = vld [vmem:[#allocation3 + $0x2d0] sm:$0xff]
        %v2189 = vld [vmem:[#allocation3 + $0x2d8] sm:$0xff]
        %v2190 = vld [vmem:[#allocation3 + $0x2e0] sm:$0xff]
        %v2191 = vld [vmem:[#allocation3 + $0x2e8] sm:$0xff]
        %v2192 = vld [vmem:[#allocation3] sm:$0xfe]
        %v2193 = vld [vmem:[#allocation3 + $0x8] sm:$0xfe]
        %v2194 = vld [vmem:[#allocation3 + $0x20] sm:$0x1]
        %v2195 = vld [vmem:[#allocation3 + $0x28] sm:$0x1]
        %v2196 = vld [vmem:[#allocation3 + $0x30] sm:$0xfe]
        %v2197 = vld [vmem:[#allocation3 + $0x38] sm:$0xfe]
        %v2198 = vld [vmem:[#allocation3 + $0x50] sm:$0x1]
        %v2199 = vld [vmem:[#allocation3 + $0x58] sm:$0x1]
        %v2200 = vld [vmem:[#allocation3 + $0x60] sm:$0xfe]
        %v2201 = vld [vmem:[#allocation3 + $0x68] sm:$0xfe]
        %v2202 = vld [vmem:[#allocation3 + $0x80] sm:$0x1]
        %v2203 = vld [vmem:[#allocation3 + $0x88] sm:$0x1]
        %v2204 = vld [vmem:[#allocation3 + $0x90] sm:$0xfe]
        %v2205 = vld [vmem:[#allocation3 + $0x98] sm:$0xfe]
        %v2206 = vld [vmem:[#allocation3 + $0xb0] sm:$0x1]
        %v2207 = vld [vmem:[#allocation3 + $0xb8] sm:$0x1]
        %v2208 = vld [vmem:[#allocation3 + $0xc0] sm:$0xfe]
        %v2209 = vld [vmem:[#allocation3 + $0xc8] sm:$0xfe]
        %v2210 = vld [vmem:[#allocation3 + $0xe0] sm:$0x1]
        %v2211 = vld [vmem:[#allocation3 + $0xe8] sm:$0x1]
        %v2212 = vld [vmem:[#allocation3 + $0xf0] sm:$0xfe]
        %v2213 = vld [vmem:[#allocation3 + $0xf8] sm:$0xfe]
        %v2214 = vld [vmem:[#allocation3 + $0x110] sm:$0x1]
        %v2215 = vld [vmem:[#allocation3 + $0x118] sm:$0x1]
        %v2216 = vld [vmem:[#allocation3 + $0x120] sm:$0xfe]
        %v2217 = vld [vmem:[#allocation3 + $0x128] sm:$0xfe]
        %v2218 = vld [vmem:[#allocation3 + $0x140] sm:$0x1]
        %v2219 = vld [vmem:[#allocation3 + $0x148] sm:$0x1]
        %v2220 = vld [vmem:[#allocation3 + $0x150] sm:$0xfe]
        %v2221 = vld [vmem:[#allocation3 + $0x158] sm:$0xfe]
        %v2222 = vld [vmem:[#allocation3 + $0x170] sm:$0x1]
        %v2223 = vld [vmem:[#allocation3 + $0x178] sm:$0x1]
        %v2224 = vld [vmem:[#allocation3 + $0x180] sm:$0xfe]
        %v2225 = vld [vmem:[#allocation3 + $0x188] sm:$0xfe]
        %v2226 = vld [vmem:[#allocation3 + $0x1a0] sm:$0x1]
        %v2227 = vld [vmem:[#allocation3 + $0x1a8] sm:$0x1]
        %v2228 = vld [vmem:[#allocation3 + $0x1b0] sm:$0xfe]
        %v2229 = vld [vmem:[#allocation3 + $0x1b8] sm:$0xfe]
        %v2230 = vld [vmem:[#allocation3 + $0x1d0] sm:$0x1]
        %v2231 = vld [vmem:[#allocation3 + $0x1d8] sm:$0x1]
        %v2232 = vld [vmem:[#allocation3 + $0x1e0] sm:$0xfe]
        %v2233 = vld [vmem:[#allocation3 + $0x1e8] sm:$0xfe]
        %v2234 = vld [vmem:[#allocation3 + $0x200] sm:$0x1]
        %v2235 = vld [vmem:[#allocation3 + $0x208] sm:$0x1]
        %v2236 = vld [vmem:[#allocation3 + $0x210] sm:$0xfe]
        %v2237 = vld [vmem:[#allocation3 + $0x218] sm:$0xfe]
        %v2238 = vld [vmem:[#allocation3 + $0x230] sm:$0x1]
        %v2239 = vld [vmem:[#allocation3 + $0x238] sm:$0x1]
        %v2240 = vld [vmem:[#allocation3 + $0x240] sm:$0xfe]
        %v2241 = vld [vmem:[#allocation3 + $0x248] sm:$0xfe]
        %v2242 = vld [vmem:[#allocation3 + $0x260] sm:$0x1]
        %v2243 = vld [vmem:[#allocation3 + $0x268] sm:$0x1]
        %v2244 = vld [vmem:[#allocation3 + $0x270] sm:$0xfe]
        %v2245 = vld [vmem:[#allocation3 + $0x278] sm:$0xfe]
        %v2246 = vld [vmem:[#allocation3 + $0x290] sm:$0x1]
        %v2247 = vld [vmem:[#allocation3 + $0x298] sm:$0x1]
        %v2248 = vld [vmem:[#allocation3 + $0x2a0] sm:$0xfe]
        %v2249 = vld [vmem:[#allocation3 + $0x2a8] sm:$0xfe]
        %v2250 = vld [vmem:[#allocation3 + $0x2c0] sm:$0x1]
        %v2251 = vld [vmem:[#allocation3 + $0x2c8] sm:$0x1]
        %v2252 = vld [vmem:[#allocation3 + $0x2d0] sm:$0xfe]
        %v2253 = vld [vmem:[#allocation3 + $0x2d8] sm:$0xfe]
        %v2254 = vld [vmem:[#allocation3 + $0x2f0] sm:$0x1]
        %v2255 = vld [vmem:[#allocation3 + $0x2f8] sm:$0x1]
        %vm2352 = vcmask 1046528
        %v2353 = vrot.slane %v2192, 1
        %v2354 = vrot.slane %v2130, 1
        %v2355 = vsel %vm2352, %v2353, %v2354
        %v2356 = vrot.slane %v2193, 1
        %v2357 = vrot.slane %v2131, 1
        %v2358 = vsel %vm2352, %v2356, %v2357
        %v2359 = vrot.slane %v2194, 1
        %v2360 = vsel %vm2352, %v2354, %v2359
        %v2361 = vrot.slane %v2195, 1
        %v2362 = vsel %vm2352, %v2357, %v2361
        %v2363 = vrot.slane %v2196, 1
        %v2364 = vrot.slane %v2134, 1
        %v2365 = vsel %vm2352, %v2363, %v2364
        %v2366 = vrot.slane %v2197, 1
        %v2367 = vrot.slane %v2135, 1
        %v2368 = vsel %vm2352, %v2366, %v2367
        %v2369 = vrot.slane %v2198, 1
        %v2370 = vsel %vm2352, %v2364, %v2369
        %v2371 = vrot.slane %v2199, 1
        %v2372 = vsel %vm2352, %v2367, %v2371
        %v2373 = vrot.slane %v2200, 1
        %v2374 = vrot.slane %v2138, 1
        %v2375 = vsel %vm2352, %v2373, %v2374
        %v2376 = vrot.slane %v2201, 1
        %v2377 = vrot.slane %v2139, 1
        %v2378 = vsel %vm2352, %v2376, %v2377
        %v2379 = vrot.slane %v2202, 1
        %v2380 = vsel %vm2352, %v2374, %v2379
        %v2381 = vrot.slane %v2203, 1
        %v2382 = vsel %vm2352, %v2377, %v2381
        %v2383 = vrot.slane %v2204, 1
        %v2384 = vrot.slane %v2142, 1
        %v2385 = vsel %vm2352, %v2383, %v2384
        %v2386 = vrot.slane %v2205, 1
        %v2387 = vrot.slane %v2143, 1
        %v2388 = vsel %vm2352, %v2386, %v2387
        %v2389 = vrot.slane %v2206, 1
        %v2390 = vsel %vm2352, %v2384, %v2389
        %v2391 = vrot.slane %v2207, 1
        %v2392 = vsel %vm2352, %v2387, %v2391
        %v2393 = vrot.slane %v2208, 1
        %v2394 = vrot.slane %v2146, 1
        %v2395 = vsel %vm2352, %v2393, %v2394
        %v2396 = vrot.slane %v2209, 1
        %v2397 = vrot.slane %v2147, 1
        %v2398 = vsel %vm2352, %v2396, %v2397
        %v2399 = vrot.slane %v2210, 1
        %v2400 = vsel %vm2352, %v2394, %v2399
        %v2401 = vrot.slane %v2211, 1
        %v2402 = vsel %vm2352, %v2397, %v2401
        %v2403 = vrot.slane %v2212, 1
        %v2404 = vrot.slane %v2150, 1
        %v2405 = vsel %vm2352, %v2403, %v2404
        %v2406 = vrot.slane %v2213, 1
        %v2407 = vrot.slane %v2151, 1
        %v2408 = vsel %vm2352, %v2406, %v2407
        %v2409 = vrot.slane %v2214, 1
        %v2410 = vsel %vm2352, %v2404, %v2409
        %v2411 = vrot.slane %v2215, 1
        %v2412 = vsel %vm2352, %v2407, %v2411
        %v2413 = vrot.slane %v2216, 1
        %v2414 = vrot.slane %v2154, 1
        %v2415 = vsel %vm2352, %v2413, %v2414
        %v2416 = vrot.slane %v2217, 1
        %v2417 = vrot.slane %v2155, 1
        %v2418 = vsel %vm2352, %v2416, %v2417
        %v2419 = vrot.slane %v2218, 1
        %v2420 = vsel %vm2352, %v2414, %v2419
        %v2421 = vrot.slane %v2219, 1
        %v2422 = vsel %vm2352, %v2417, %v2421
        %v2423 = vrot.slane %v2220, 1
        %v2424 = vrot.slane %v2158, 1
        %v2425 = vsel %vm2352, %v2423, %v2424
        %v2426 = vrot.slane %v2221, 1
        %v2427 = vrot.slane %v2159, 1
        %v2428 = vsel %vm2352, %v2426, %v2427
        %v2429 = vrot.slane %v2222, 1
        %v2430 = vsel %vm2352, %v2424, %v2429
        %v2431 = vrot.slane %v2223, 1
        %v2432 = vsel %vm2352, %v2427, %v2431
        %v2433 = vrot.slane %v2224, 1
        %v2434 = vrot.slane %v2162, 1
        %v2435 = vsel %vm2352, %v2433, %v2434
        %v2436 = vrot.slane %v2225, 1
        %v2437 = vrot.slane %v2163, 1
        %v2438 = vsel %vm2352, %v2436, %v2437
        %v2439 = vrot.slane %v2226, 1
        %v2440 = vsel %vm2352, %v2434, %v2439
        %v2441 = vrot.slane %v2227, 1
        %v2442 = vsel %vm2352, %v2437, %v2441
        %v2443 = vrot.slane %v2228, 1
        %v2444 = vrot.slane %v2166, 1
        %v2445 = vsel %vm2352, %v2443, %v2444
        %v2446 = vrot.slane %v2229, 1
        %v2447 = vrot.slane %v2167, 1
        %v2448 = vsel %vm2352, %v2446, %v2447
        %v2449 = vrot.slane %v2230, 1
        %v2450 = vsel %vm2352, %v2444, %v2449
        %v2451 = vrot.slane %v2231, 1
        %v2452 = vsel %vm2352, %v2447, %v2451
        %v2453 = vrot.slane %v2232, 1
        %v2454 = vrot.slane %v2170, 1
        %v2455 = vsel %vm2352, %v2453, %v2454
        %v2456 = vrot.slane %v2233, 1
        %v2457 = vrot.slane %v2171, 1
        %v2458 = vsel %vm2352, %v2456, %v2457
        %v2459 = vrot.slane %v2234, 1
        %v2460 = vsel %vm2352, %v2454, %v2459
        %v2461 = vrot.slane %v2235, 1
        %v2462 = vsel %vm2352, %v2457, %v2461
        %v2463 = vrot.slane %v2236, 1
        %v2464 = vrot.slane %v2174, 1
        %v2465 = vsel %vm2352, %v2463, %v2464
        %v2466 = vrot.slane %v2237, 1
        %v2467 = vrot.slane %v2175, 1
        %v2468 = vsel %vm2352, %v2466, %v2467
        %v2469 = vrot.slane %v2238, 1
        %v2470 = vsel %vm2352, %v2464, %v2469
        %v2471 = vrot.slane %v2239, 1
        %v2472 = vsel %vm2352, %v2467, %v2471
        %v2473 = vrot.slane %v2240, 1
        %v2474 = vrot.slane %v2178, 1
        %v2475 = vsel %vm2352, %v2473, %v2474
        %v2476 = vrot.slane %v2241, 1
        %v2477 = vrot.slane %v2179, 1
        %v2478 = vsel %vm2352, %v2476, %v2477
        %v2479 = vrot.slane %v2242, 1
        %v2480 = vsel %vm2352, %v2474, %v2479
        %v2481 = vrot.slane %v2243, 1
        %v2482 = vsel %vm2352, %v2477, %v2481
        %v2483 = vrot.slane %v2244, 1
        %v2484 = vrot.slane %v2182, 1
        %v2485 = vsel %vm2352, %v2483, %v2484
        %v2486 = vrot.slane %v2245, 1
        %v2487 = vrot.slane %v2183, 1
        %v2488 = vsel %vm2352, %v2486, %v2487
        %v2489 = vrot.slane %v2246, 1
        %v2490 = vsel %vm2352, %v2484, %v2489
        %v2491 = vrot.slane %v2247, 1
        %v2492 = vsel %vm2352, %v2487, %v2491
        %v2493 = vrot.slane %v2248, 1
        %v2494 = vrot.slane %v2186, 1
        %v2495 = vsel %vm2352, %v2493, %v2494
        %v2496 = vrot.slane %v2249, 1
        %v2497 = vrot.slane %v2187, 1
        %v2498 = vsel %vm2352, %v2496, %v2497
        %v2499 = vrot.slane %v2250, 1
        %v2500 = vsel %vm2352, %v2494, %v2499
        %v2501 = vrot.slane %v2251, 1
        %v2502 = vsel %vm2352, %v2497, %v2501
        %v2503 = vrot.slane %v2252, 1
        %v2504 = vrot.slane %v2190, 1
        %v2505 = vsel %vm2352, %v2503, %v2504
        %v2506 = vrot.slane %v2253, 1
        %v2507 = vrot.slane %v2191, 1
        %v2508 = vsel %vm2352, %v2506, %v2507
        %v2509 = vrot.slane %v2254, 1
        %v2510 = vsel %vm2352, %v2504, %v2509
        %v2511 = vrot.slane %v2255, 1
        %v2512 = vsel %vm2352, %v2507, %v2511
        %v2577 = vld [vmem:[#allocation3] sm:$0xfc]
        %v2578 = vld [vmem:[#allocation3 + $0x8] sm:$0xfc]
        %v2579 = vld [vmem:[#allocation3 + $0x20] sm:$0x3]
        %v2580 = vld [vmem:[#allocation3 + $0x28] sm:$0x3]
        %v2581 = vld [vmem:[#allocation3 + $0x30] sm:$0xfc]
        %v2582 = vld [vmem:[#allocation3 + $0x38] sm:$0xfc]
        %v2583 = vld [vmem:[#allocation3 + $0x50] sm:$0x3]
        %v2584 = vld [vmem:[#allocation3 + $0x58] sm:$0x3]
        %v2585 = vld [vmem:[#allocation3 + $0x60] sm:$0xfc]
        %v2586 = vld [vmem:[#allocation3 + $0x68] sm:$0xfc]
        %v2587 = vld [vmem:[#allocation3 + $0x80] sm:$0x3]
        %v2588 = vld [vmem:[#allocation3 + $0x88] sm:$0x3]
        %v2589 = vld [vmem:[#allocation3 + $0x90] sm:$0xfc]
        %v2590 = vld [vmem:[#allocation3 + $0x98] sm:$0xfc]
        %v2591 = vld [vmem:[#allocation3 + $0xb0] sm:$0x3]
        %v2592 = vld [vmem:[#allocation3 + $0xb8] sm:$0x3]
        %v2593 = vld [vmem:[#allocation3 + $0xc0] sm:$0xfc]
        %v2594 = vld [vmem:[#allocation3 + $0xc8] sm:$0xfc]
        %v2595 = vld [vmem:[#allocation3 + $0xe0] sm:$0x3]
        %v2596 = vld [vmem:[#allocation3 + $0xe8] sm:$0x3]
        %v2597 = vld [vmem:[#allocation3 + $0xf0] sm:$0xfc]
        %v2598 = vld [vmem:[#allocation3 + $0xf8] sm:$0xfc]
        %v2599 = vld [vmem:[#allocation3 + $0x110] sm:$0x3]
        %v2600 = vld [vmem:[#allocation3 + $0x118] sm:$0x3]
        %v2601 = vld [vmem:[#allocation3 + $0x120] sm:$0xfc]
        %v2602 = vld [vmem:[#allocation3 + $0x128] sm:$0xfc]
        %v2603 = vld [vmem:[#allocation3 + $0x140] sm:$0x3]
        %v2604 = vld [vmem:[#allocation3 + $0x148] sm:$0x3]
        %v2605 = vld [vmem:[#allocation3 + $0x150] sm:$0xfc]
        %v2606 = vld [vmem:[#allocation3 + $0x158] sm:$0xfc]
        %v2607 = vld [vmem:[#allocation3 + $0x170] sm:$0x3]
        %v2608 = vld [vmem:[#allocation3 + $0x178] sm:$0x3]
        %v2609 = vld [vmem:[#allocation3 + $0x180] sm:$0xfc]
        %v2610 = vld [vmem:[#allocation3 + $0x188] sm:$0xfc]
        %v2611 = vld [vmem:[#allocation3 + $0x1a0] sm:$0x3]
        %v2612 = vld [vmem:[#allocation3 + $0x1a8] sm:$0x3]
        %v2613 = vld [vmem:[#allocation3 + $0x1b0] sm:$0xfc]
        %v2614 = vld [vmem:[#allocation3 + $0x1b8] sm:$0xfc]
        %v2615 = vld [vmem:[#allocation3 + $0x1d0] sm:$0x3]
        %v2616 = vld [vmem:[#allocation3 + $0x1d8] sm:$0x3]
        %v2617 = vld [vmem:[#allocation3 + $0x1e0] sm:$0xfc]
        %v2618 = vld [vmem:[#allocation3 + $0x1e8] sm:$0xfc]
        %v2619 = vld [vmem:[#allocation3 + $0x200] sm:$0x3]
        %v2620 = vld [vmem:[#allocation3 + $0x208] sm:$0x3]
        %v2621 = vld [vmem:[#allocation3 + $0x210] sm:$0xfc]
        %v2622 = vld [vmem:[#allocation3 + $0x218] sm:$0xfc]
        %v2623 = vld [vmem:[#allocation3 + $0x230] sm:$0x3]
        %v2624 = vld [vmem:[#allocation3 + $0x238] sm:$0x3]
        %v2625 = vld [vmem:[#allocation3 + $0x240] sm:$0xfc]
        %v2626 = vld [vmem:[#allocation3 + $0x248] sm:$0xfc]
        %v2627 = vld [vmem:[#allocation3 + $0x260] sm:$0x3]
        %v2628 = vld [vmem:[#allocation3 + $0x268] sm:$0x3]
        %v2629 = vld [vmem:[#allocation3 + $0x270] sm:$0xfc]
        %v2630 = vld [vmem:[#allocation3 + $0x278] sm:$0xfc]
        %v2631 = vld [vmem:[#allocation3 + $0x290] sm:$0x3]
        %v2632 = vld [vmem:[#allocation3 + $0x298] sm:$0x3]
        %v2633 = vld [vmem:[#allocation3 + $0x2a0] sm:$0xfc]
        %v2634 = vld [vmem:[#allocation3 + $0x2a8] sm:$0xfc]
        %v2635 = vld [vmem:[#allocation3 + $0x2c0] sm:$0x3]
        %v2636 = vld [vmem:[#allocation3 + $0x2c8] sm:$0x3]
        %v2637 = vld [vmem:[#allocation3 + $0x2d0] sm:$0xfc]
        %v2638 = vld [vmem:[#allocation3 + $0x2d8] sm:$0xfc]
        %v2639 = vld [vmem:[#allocation3 + $0x2f0] sm:$0x3]
        %v2640 = vld [vmem:[#allocation3 + $0x2f8] sm:$0x3]
        %vm2705 = vcmask 1045504
        %v2706 = vrot.slane %v2577, 2
        %v2707 = vrot.slane %v2130, 2
        %v2708 = vsel %vm2705, %v2706, %v2707
        %v2709 = vrot.slane %v2578, 2
        %v2710 = vrot.slane %v2131, 2
        %v2711 = vsel %vm2705, %v2709, %v2710
        %v2712 = vrot.slane %v2579, 2
        %v2713 = vsel %vm2705, %v2707, %v2712
        %v2714 = vrot.slane %v2580, 2
        %v2715 = vsel %vm2705, %v2710, %v2714
        %v2716 = vrot.slane %v2581, 2
        %v2717 = vrot.slane %v2134, 2
        %v2718 = vsel %vm2705, %v2716, %v2717
        %v2719 = vrot.slane %v2582, 2
        %v2720 = vrot.slane %v2135, 2
        %v2721 = vsel %vm2705, %v2719, %v2720
        %v2722 = vrot.slane %v2583, 2
        %v2723 = vsel %vm2705, %v2717, %v2722
        %v2724 = vrot.slane %v2584, 2
        %v2725 = vsel %vm2705, %v2720, %v2724
        %v2726 = vrot.slane %v2585, 2
        %v2727 = vrot.slane %v2138, 2
        %v2728 = vsel %vm2705, %v2726, %v2727
        %v2729 = vrot.slane %v2586, 2
        %v2730 = vrot.slane %v2139, 2
        %v2731 = vsel %vm2705, %v2729, %v2730
        %v2732 = vrot.slane %v2587, 2
        %v2733 = vsel %vm2705, %v2727, %v2732
        %v2734 = vrot.slane %v2588, 2
        %v2735 = vsel %vm2705, %v2730, %v2734
        %v2736 = vrot.slane %v2589, 2
        %v2737 = vrot.slane %v2142, 2
        %v2738 = vsel %vm2705, %v2736, %v2737
        %v2739 = vrot.slane %v2590, 2
        %v2740 = vrot.slane %v2143, 2
        %v2741 = vsel %vm2705, %v2739, %v2740
        %v2742 = vrot.slane %v2591, 2
        %v2743 = vsel %vm2705, %v2737, %v2742
        %v2744 = vrot.slane %v2592, 2
        %v2745 = vsel %vm2705, %v2740, %v2744
        %v2746 = vrot.slane %v2593, 2
        %v2747 = vrot.slane %v2146, 2
        %v2748 = vsel %vm2705, %v2746, %v2747
        %v2749 = vrot.slane %v2594, 2
        %v2750 = vrot.slane %v2147, 2
        %v2751 = vsel %vm2705, %v2749, %v2750
        %v2752 = vrot.slane %v2595, 2
        %v2753 = vsel %vm2705, %v2747, %v2752
        %v2754 = vrot.slane %v2596, 2
        %v2755 = vsel %vm2705, %v2750, %v2754
        %v2756 = vrot.slane %v2597, 2
        %v2757 = vrot.slane %v2150, 2
        %v2758 = vsel %vm2705, %v2756, %v2757
        %v2759 = vrot.slane %v2598, 2
        %v2760 = vrot.slane %v2151, 2
        %v2761 = vsel %vm2705, %v2759, %v2760
        %v2762 = vrot.slane %v2599, 2
        %v2763 = vsel %vm2705, %v2757, %v2762
        %v2764 = vrot.slane %v2600, 2
        %v2765 = vsel %vm2705, %v2760, %v2764
        %v2766 = vrot.slane %v2601, 2
        %v2767 = vrot.slane %v2154, 2
        %v2768 = vsel %vm2705, %v2766, %v2767
        %v2769 = vrot.slane %v2602, 2
        %v2770 = vrot.slane %v2155, 2
        %v2771 = vsel %vm2705, %v2769, %v2770
        %v2772 = vrot.slane %v2603, 2
        %v2773 = vsel %vm2705, %v2767, %v2772
        %v2774 = vrot.slane %v2604, 2
        %v2775 = vsel %vm2705, %v2770, %v2774
        %v2776 = vrot.slane %v2605, 2
        %v2777 = vrot.slane %v2158, 2
        %v2778 = vsel %vm2705, %v2776, %v2777
        %v2779 = vrot.slane %v2606, 2
        %v2780 = vrot.slane %v2159, 2
        %v2781 = vsel %vm2705, %v2779, %v2780
        %v2782 = vrot.slane %v2607, 2
        %v2783 = vsel %vm2705, %v2777, %v2782
        %v2784 = vrot.slane %v2608, 2
        %v2785 = vsel %vm2705, %v2780, %v2784
        %v2786 = vrot.slane %v2609, 2
        %v2787 = vrot.slane %v2162, 2
        %v2788 = vsel %vm2705, %v2786, %v2787
        %v2789 = vrot.slane %v2610, 2
        %v2790 = vrot.slane %v2163, 2
        %v2791 = vsel %vm2705, %v2789, %v2790
        %v2792 = vrot.slane %v2611, 2
        %v2793 = vsel %vm2705, %v2787, %v2792
        %v2794 = vrot.slane %v2612, 2
        %v2795 = vsel %vm2705, %v2790, %v2794
        %v2796 = vrot.slane %v2613, 2
        %v2797 = vrot.slane %v2166, 2
        %v2798 = vsel %vm2705, %v2796, %v2797
        %v2799 = vrot.slane %v2614, 2
        %v2800 = vrot.slane %v2167, 2
        %v2801 = vsel %vm2705, %v2799, %v2800
        %v2802 = vrot.slane %v2615, 2
        %v2803 = vsel %vm2705, %v2797, %v2802
        %v2804 = vrot.slane %v2616, 2
        %v2805 = vsel %vm2705, %v2800, %v2804
        %v2806 = vrot.slane %v2617, 2
        %v2807 = vrot.slane %v2170, 2
        %v2808 = vsel %vm2705, %v2806, %v2807
        %v2809 = vrot.slane %v2618, 2
        %v2810 = vrot.slane %v2171, 2
        %v2811 = vsel %vm2705, %v2809, %v2810
        %v2812 = vrot.slane %v2619, 2
        %v2813 = vsel %vm2705, %v2807, %v2812
        %v2814 = vrot.slane %v2620, 2
        %v2815 = vsel %vm2705, %v2810, %v2814
        %v2816 = vrot.slane %v2621, 2
        %v2817 = vrot.slane %v2174, 2
        %v2818 = vsel %vm2705, %v2816, %v2817
        %v2819 = vrot.slane %v2622, 2
        %v2820 = vrot.slane %v2175, 2
        %v2821 = vsel %vm2705, %v2819, %v2820
        %v2822 = vrot.slane %v2623, 2
        %v2823 = vsel %vm2705, %v2817, %v2822
        %v2824 = vrot.slane %v2624, 2
        %v2825 = vsel %vm2705, %v2820, %v2824
        %v2826 = vrot.slane %v2625, 2
        %v2827 = vrot.slane %v2178, 2
        %v2828 = vsel %vm2705, %v2826, %v2827
        %v2829 = vrot.slane %v2626, 2
        %v2830 = vrot.slane %v2179, 2
        %v2831 = vsel %vm2705, %v2829, %v2830
        %v2832 = vrot.slane %v2627, 2
        %v2833 = vsel %vm2705, %v2827, %v2832
        %v2834 = vrot.slane %v2628, 2
        %v2835 = vsel %vm2705, %v2830, %v2834
        %v2836 = vrot.slane %v2629, 2
        %v2837 = vrot.slane %v2182, 2
        %v2838 = vsel %vm2705, %v2836, %v2837
        %v2839 = vrot.slane %v2630, 2
        %v2840 = vrot.slane %v2183, 2
        %v2841 = vsel %vm2705, %v2839, %v2840
        %v2842 = vrot.slane %v2631, 2
        %v2843 = vsel %vm2705, %v2837, %v2842
        %v2844 = vrot.slane %v2632, 2
        %v2845 = vsel %vm2705, %v2840, %v2844
        %v2846 = vrot.slane %v2633, 2
        %v2847 = vrot.slane %v2186, 2
        %v2848 = vsel %vm2705, %v2846, %v2847
        %v2849 = vrot.slane %v2634, 2
        %v2850 = vrot.slane %v2187, 2
        %v2851 = vsel %vm2705, %v2849, %v2850
        %v2852 = vrot.slane %v2635, 2
        %v2853 = vsel %vm2705, %v2847, %v2852
        %v2854 = vrot.slane %v2636, 2
        %v2855 = vsel %vm2705, %v2850, %v2854
        %v2856 = vrot.slane %v2637, 2
        %v2857 = vrot.slane %v2190, 2
        %v2858 = vsel %vm2705, %v2856, %v2857
        %v2859 = vrot.slane %v2638, 2
        %v2860 = vrot.slane %v2191, 2
        %v2861 = vsel %vm2705, %v2859, %v2860
        %v2862 = vrot.slane %v2639, 2
        %v2863 = vsel %vm2705, %v2857, %v2862
        %v2864 = vrot.slane %v2640, 2
        %v2865 = vsel %vm2705, %v2860, %v2864
        %v2930 = vld [vmem:[%s1903] sm:$0xff]
        %v2931 = vld [vmem:[%s1903 + $0x8] sm:$0xff]
        %v2932 = vld [vmem:[%s1903 + $0x10] sm:$0xff]
        %v2933 = vld [vmem:[%s1903 + $0x18] sm:$0xff]
        %v2934 = vld [vmem:[%s1903 + $0x30] sm:$0xff]
        %v2935 = vld [vmem:[%s1903 + $0x38] sm:$0xff]
        %v2936 = vld [vmem:[%s1903 + $0x40] sm:$0xff]
        %v2937 = vld [vmem:[%s1903 + $0x48] sm:$0xff]
        %v2938 = vld [vmem:[%s1903 + $0x60] sm:$0xff]
        %v2939 = vld [vmem:[%s1903 + $0x68] sm:$0xff]
        %v2940 = vld [vmem:[%s1903 + $0x70] sm:$0xff]
        %v2941 = vld [vmem:[%s1903 + $0x78] sm:$0xff]
        %v2942 = vld [vmem:[%s1903 + $0x90] sm:$0xff]
        %v2943 = vld [vmem:[%s1903 + $0x98] sm:$0xff]
        %v2944 = vld [vmem:[%s1903 + $0xa0] sm:$0xff]
        %v2945 = vld [vmem:[%s1903 + $0xa8] sm:$0xff]
        %v2946 = vld [vmem:[%s1903 + $0xc0] sm:$0xff]
        %v2947 = vld [vmem:[%s1903 + $0xc8] sm:$0xff]
        %v2948 = vld [vmem:[%s1903 + $0xd0] sm:$0xff]
        %v2949 = vld [vmem:[%s1903 + $0xd8] sm:$0xff]
        %v2950 = vld [vmem:[%s1903 + $0xf0] sm:$0xff]
        %v2951 = vld [vmem:[%s1903 + $0xf8] sm:$0xff]
        %v2952 = vld [vmem:[%s1903 + $0x100] sm:$0xff]
        %v2953 = vld [vmem:[%s1903 + $0x108] sm:$0xff]
        %v2954 = vld [vmem:[%s1903 + $0x120] sm:$0xff]
        %v2955 = vld [vmem:[%s1903 + $0x128] sm:$0xff]
        %v2956 = vld [vmem:[%s1903 + $0x130] sm:$0xff]
        %v2957 = vld [vmem:[%s1903 + $0x138] sm:$0xff]
        %v2958 = vld [vmem:[%s1903 + $0x150] sm:$0xff]
        %v2959 = vld [vmem:[%s1903 + $0x158] sm:$0xff]
        %v2960 = vld [vmem:[%s1903 + $0x160] sm:$0xff]
        %v2961 = vld [vmem:[%s1903 + $0x168] sm:$0xff]
        %v2962 = vld [vmem:[%s1903 + $0x180] sm:$0xff]
        %v2963 = vld [vmem:[%s1903 + $0x188] sm:$0xff]
        %v2964 = vld [vmem:[%s1903 + $0x190] sm:$0xff]
        %v2965 = vld [vmem:[%s1903 + $0x198] sm:$0xff]
        %v2966 = vld [vmem:[%s1903 + $0x1b0] sm:$0xff]
        %v2967 = vld [vmem:[%s1903 + $0x1b8] sm:$0xff]
        %v2968 = vld [vmem:[%s1903 + $0x1c0] sm:$0xff]
        %v2969 = vld [vmem:[%s1903 + $0x1c8] sm:$0xff]
        %v2970 = vld [vmem:[%s1903 + $0x1e0] sm:$0xff]
        %v2971 = vld [vmem:[%s1903 + $0x1e8] sm:$0xff]
        %v2972 = vld [vmem:[%s1903 + $0x1f0] sm:$0xff]
        %v2973 = vld [vmem:[%s1903 + $0x1f8] sm:$0xff]
        %v2974 = vld [vmem:[%s1903 + $0x210] sm:$0xff]
        %v2975 = vld [vmem:[%s1903 + $0x218] sm:$0xff]
        %v2976 = vld [vmem:[%s1903 + $0x220] sm:$0xff]
        %v2977 = vld [vmem:[%s1903 + $0x228] sm:$0xff]
        %v2978 = vld [vmem:[%s1903 + $0x240] sm:$0xff]
        %v2979 = vld [vmem:[%s1903 + $0x248] sm:$0xff]
        %v2980 = vld [vmem:[%s1903 + $0x250] sm:$0xff]
        %v2981 = vld [vmem:[%s1903 + $0x258] sm:$0xff]
        %v2982 = vld [vmem:[%s1903 + $0x270] sm:$0xff]
        %v2983 = vld [vmem:[%s1903 + $0x278] sm:$0xff]
        %v2984 = vld [vmem:[%s1903 + $0x280] sm:$0xff]
        %v2985 = vld [vmem:[%s1903 + $0x288] sm:$0xff]
        %v2986 = vld [vmem:[%s1903 + $0x2a0] sm:$0xff]
        %v2987 = vld [vmem:[%s1903 + $0x2a8] sm:$0xff]
        %v2988 = vld [vmem:[%s1903 + $0x2b0] sm:$0xff]
        %v2989 = vld [vmem:[%s1903 + $0x2b8] sm:$0xff]
        %v2990 = vld [vmem:[%s1903 + $0x2d0] sm:$0xff]
        %v2991 = vld [vmem:[%s1903 + $0x2d8] sm:$0xff]
        %v2992 = vld [vmem:[%s1903 + $0x2e0] sm:$0xff]
        %v2993 = vld [vmem:[%s1903 + $0x2e8] sm:$0xff]
        %v2994 = vld [vmem:[%s1903] sm:$0xfe]
        %v2995 = vld [vmem:[%s1903 + $0x8] sm:$0xfe]
        %v2996 = vld [vmem:[%s1903 + $0x20] sm:$0x1]
        %v2997 = vld [vmem:[%s1903 + $0x28] sm:$0x1]
        %v2998 = vld [vmem:[%s1903 + $0x30] sm:$0xfe]
        %v2999 = vld [vmem:[%s1903 + $0x38] sm:$0xfe]
        %v3000 = vld [vmem:[%s1903 + $0x50] sm:$0x1]
        %v3001 = vld [vmem:[%s1903 + $0x58] sm:$0x1]
        %v3002 = vld [vmem:[%s1903 + $0x60] sm:$0xfe]
        %v3003 = vld [vmem:[%s1903 + $0x68] sm:$0xfe]
        %v3004 = vld [vmem:[%s1903 + $0x80] sm:$0x1]
        %v3005 = vld [vmem:[%s1903 + $0x88] sm:$0x1]
        %v3006 = vld [vmem:[%s1903 + $0x90] sm:$0xfe]
        %v3007 = vld [vmem:[%s1903 + $0x98] sm:$0xfe]
        %v3008 = vld [vmem:[%s1903 + $0xb0] sm:$0x1]
        %v3009 = vld [vmem:[%s1903 + $0xb8] sm:$0x1]
        %v3010 = vld [vmem:[%s1903 + $0xc0] sm:$0xfe]
        %v3011 = vld [vmem:[%s1903 + $0xc8] sm:$0xfe]
        %v3012 = vld [vmem:[%s1903 + $0xe0] sm:$0x1]
        %v3013 = vld [vmem:[%s1903 + $0xe8] sm:$0x1]
        %v3014 = vld [vmem:[%s1903 + $0xf0] sm:$0xfe]
        %v3015 = vld [vmem:[%s1903 + $0xf8] sm:$0xfe]
        %v3016 = vld [vmem:[%s1903 + $0x110] sm:$0x1]
        %v3017 = vld [vmem:[%s1903 + $0x118] sm:$0x1]
        %v3018 = vld [vmem:[%s1903 + $0x120] sm:$0xfe]
        %v3019 = vld [vmem:[%s1903 + $0x128] sm:$0xfe]
        %v3020 = vld [vmem:[%s1903 + $0x140] sm:$0x1]
        %v3021 = vld [vmem:[%s1903 + $0x148] sm:$0x1]
        %v3022 = vld [vmem:[%s1903 + $0x150] sm:$0xfe]
        %v3023 = vld [vmem:[%s1903 + $0x158] sm:$0xfe]
        %v3024 = vld [vmem:[%s1903 + $0x170] sm:$0x1]
        %v3025 = vld [vmem:[%s1903 + $0x178] sm:$0x1]
        %v3026 = vld [vmem:[%s1903 + $0x180] sm:$0xfe]
        %v3027 = vld [vmem:[%s1903 + $0x188] sm:$0xfe]
        %v3028 = vld [vmem:[%s1903 + $0x1a0] sm:$0x1]
        %v3029 = vld [vmem:[%s1903 + $0x1a8] sm:$0x1]
        %v3030 = vld [vmem:[%s1903 + $0x1b0] sm:$0xfe]
        %v3031 = vld [vmem:[%s1903 + $0x1b8] sm:$0xfe]
        %v3032 = vld [vmem:[%s1903 + $0x1d0] sm:$0x1]
        %v3033 = vld [vmem:[%s1903 + $0x1d8] sm:$0x1]
        %v3034 = vld [vmem:[%s1903 + $0x1e0] sm:$0xfe]
        %v3035 = vld [vmem:[%s1903 + $0x1e8] sm:$0xfe]
        %v3036 = vld [vmem:[%s1903 + $0x200] sm:$0x1]
        %v3037 = vld [vmem:[%s1903 + $0x208] sm:$0x1]
        %v3038 = vld [vmem:[%s1903 + $0x210] sm:$0xfe]
        %v3039 = vld [vmem:[%s1903 + $0x218] sm:$0xfe]
        %v3040 = vld [vmem:[%s1903 + $0x230] sm:$0x1]
        %v3041 = vld [vmem:[%s1903 + $0x238] sm:$0x1]
        %v3042 = vld [vmem:[%s1903 + $0x240] sm:$0xfe]
        %v3043 = vld [vmem:[%s1903 + $0x248] sm:$0xfe]
        %v3044 = vld [vmem:[%s1903 + $0x260] sm:$0x1]
        %v3045 = vld [vmem:[%s1903 + $0x268] sm:$0x1]
        %v3046 = vld [vmem:[%s1903 + $0x270] sm:$0xfe]
        %v3047 = vld [vmem:[%s1903 + $0x278] sm:$0xfe]
        %v3048 = vld [vmem:[%s1903 + $0x290] sm:$0x1]
        %v3049 = vld [vmem:[%s1903 + $0x298] sm:$0x1]
        %v3050 = vld [vmem:[%s1903 + $0x2a0] sm:$0xfe]
        %v3051 = vld [vmem:[%s1903 + $0x2a8] sm:$0xfe]
        %v3052 = vld [vmem:[%s1903 + $0x2c0] sm:$0x1]
        %v3053 = vld [vmem:[%s1903 + $0x2c8] sm:$0x1]
        %v3054 = vld [vmem:[%s1903 + $0x2d0] sm:$0xfe]
        %v3055 = vld [vmem:[%s1903 + $0x2d8] sm:$0xfe]
        %v3056 = vld [vmem:[%s1903 + $0x2f0] sm:$0x1]
        %v3057 = vld [vmem:[%s1903 + $0x2f8] sm:$0x1]
        %v3154 = vrot.slane %v2994, 1
        %v3155 = vrot.slane %v2932, 1
        %v3156 = vsel %vm2352, %v3154, %v3155
        %v3157 = vrot.slane %v2995, 1
        %v3158 = vrot.slane %v2933, 1
        %v3159 = vsel %vm2352, %v3157, %v3158
        %v3160 = vrot.slane %v2996, 1
        %v3161 = vsel %vm2352, %v3155, %v3160
        %v3162 = vrot.slane %v2997, 1
        %v3163 = vsel %vm2352, %v3158, %v3162
        %v3164 = vrot.slane %v2998, 1
        %v3165 = vrot.slane %v2936, 1
        %v3166 = vsel %vm2352, %v3164, %v3165
        %v3167 = vrot.slane %v2999, 1
        %v3168 = vrot.slane %v2937, 1
        %v3169 = vsel %vm2352, %v3167, %v3168
        %v3170 = vrot.slane %v3000, 1
        %v3171 = vsel %vm2352, %v3165, %v3170
        %v3172 = vrot.slane %v3001, 1
        %v3173 = vsel %vm2352, %v3168, %v3172
        %v3174 = vrot.slane %v3002, 1
        %v3175 = vrot.slane %v2940, 1
        %v3176 = vsel %vm2352, %v3174, %v3175
        %v3177 = vrot.slane %v3003, 1
        %v3178 = vrot.slane %v2941, 1
        %v3179 = vsel %vm2352, %v3177, %v3178
        %v3180 = vrot.slane %v3004, 1
        %v3181 = vsel %vm2352, %v3175, %v3180
        %v3182 = vrot.slane %v3005, 1
        %v3183 = vsel %vm2352, %v3178, %v3182
        %v3184 = vrot.slane %v3006, 1
        %v3185 = vrot.slane %v2944, 1
        %v3186 = vsel %vm2352, %v3184, %v3185
        %v3187 = vrot.slane %v3007, 1
        %v3188 = vrot.slane %v2945, 1
        %v3189 = vsel %vm2352, %v3187, %v3188
        %v3190 = vrot.slane %v3008, 1
        %v3191 = vsel %vm2352, %v3185, %v3190
        %v3192 = vrot.slane %v3009, 1
        %v3193 = vsel %vm2352, %v3188, %v3192
        %v3194 = vrot.slane %v3010, 1
        %v3195 = vrot.slane %v2948, 1
        %v3196 = vsel %vm2352, %v3194, %v3195
        %v3197 = vrot.slane %v3011, 1
        %v3198 = vrot.slane %v2949, 1
        %v3199 = vsel %vm2352, %v3197, %v3198
        %v3200 = vrot.slane %v3012, 1
        %v3201 = vsel %vm2352, %v3195, %v3200
        %v3202 = vrot.slane %v3013, 1
        %v3203 = vsel %vm2352, %v3198, %v3202
        %v3204 = vrot.slane %v3014, 1
        %v3205 = vrot.slane %v2952, 1
        %v3206 = vsel %vm2352, %v3204, %v3205
        %v3207 = vrot.slane %v3015, 1
        %v3208 = vrot.slane %v2953, 1
        %v3209 = vsel %vm2352, %v3207, %v3208
        %v3210 = vrot.slane %v3016, 1
        %v3211 = vsel %vm2352, %v3205, %v3210
        %v3212 = vrot.slane %v3017, 1
        %v3213 = vsel %vm2352, %v3208, %v3212
        %v3214 = vrot.slane %v3018, 1
        %v3215 = vrot.slane %v2956, 1
        %v3216 = vsel %vm2352, %v3214, %v3215
        %v3217 = vrot.slane %v3019, 1
        %v3218 = vrot.slane %v2957, 1
        %v3219 = vsel %vm2352, %v3217, %v3218
        %v3220 = vrot.slane %v3020, 1
        %v3221 = vsel %vm2352, %v3215, %v3220
        %v3222 = vrot.slane %v3021, 1
        %v3223 = vsel %vm2352, %v3218, %v3222
        %v3224 = vrot.slane %v3022, 1
        %v3225 = vrot.slane %v2960, 1
        %v3226 = vsel %vm2352, %v3224, %v3225
        %v3227 = vrot.slane %v3023, 1
        %v3228 = vrot.slane %v2961, 1
        %v3229 = vsel %vm2352, %v3227, %v3228
        %v3230 = vrot.slane %v3024, 1
        %v3231 = vsel %vm2352, %v3225, %v3230
        %v3232 = vrot.slane %v3025, 1
        %v3233 = vsel %vm2352, %v3228, %v3232
        %v3234 = vrot.slane %v3026, 1
        %v3235 = vrot.slane %v2964, 1
        %v3236 = vsel %vm2352, %v3234, %v3235
        %v3237 = vrot.slane %v3027, 1
        %v3238 = vrot.slane %v2965, 1
        %v3239 = vsel %vm2352, %v3237, %v3238
        %v3240 = vrot.slane %v3028, 1
        %v3241 = vsel %vm2352, %v3235, %v3240
        %v3242 = vrot.slane %v3029, 1
        %v3243 = vsel %vm2352, %v3238, %v3242
        %v3244 = vrot.slane %v3030, 1
        %v3245 = vrot.slane %v2968, 1
        %v3246 = vsel %vm2352, %v3244, %v3245
        %v3247 = vrot.slane %v3031, 1
        %v3248 = vrot.slane %v2969, 1
        %v3249 = vsel %vm2352, %v3247, %v3248
        %v3250 = vrot.slane %v3032, 1
        %v3251 = vsel %vm2352, %v3245, %v3250
        %v3252 = vrot.slane %v3033, 1
        %v3253 = vsel %vm2352, %v3248, %v3252
        %v3254 = vrot.slane %v3034, 1
        %v3255 = vrot.slane %v2972, 1
        %v3256 = vsel %vm2352, %v3254, %v3255
        %v3257 = vrot.slane %v3035, 1
        %v3258 = vrot.slane %v2973, 1
        %v3259 = vsel %vm2352, %v3257, %v3258
        %v3260 = vrot.slane %v3036, 1
        %v3261 = vsel %vm2352, %v3255, %v3260
        %v3262 = vrot.slane %v3037, 1
        %v3263 = vsel %vm2352, %v3258, %v3262
        %v3264 = vrot.slane %v3038, 1
        %v3265 = vrot.slane %v2976, 1
        %v3266 = vsel %vm2352, %v3264, %v3265
        %v3267 = vrot.slane %v3039, 1
        %v3268 = vrot.slane %v2977, 1
        %v3269 = vsel %vm2352, %v3267, %v3268
        %v3270 = vrot.slane %v3040, 1
        %v3271 = vsel %vm2352, %v3265, %v3270
        %v3272 = vrot.slane %v3041, 1
        %v3273 = vsel %vm2352, %v3268, %v3272
        %v3274 = vrot.slane %v3042, 1
        %v3275 = vrot.slane %v2980, 1
        %v3276 = vsel %vm2352, %v3274, %v3275
        %v3277 = vrot.slane %v3043, 1
        %v3278 = vrot.slane %v2981, 1
        %v3279 = vsel %vm2352, %v3277, %v3278
        %v3280 = vrot.slane %v3044, 1
        %v3281 = vsel %vm2352, %v3275, %v3280
        %v3282 = vrot.slane %v3045, 1
        %v3283 = vsel %vm2352, %v3278, %v3282
        %v3284 = vrot.slane %v3046, 1
        %v3285 = vrot.slane %v2984, 1
        %v3286 = vsel %vm2352, %v3284, %v3285
        %v3287 = vrot.slane %v3047, 1
        %v3288 = vrot.slane %v2985, 1
        %v3289 = vsel %vm2352, %v3287, %v3288
        %v3290 = vrot.slane %v3048, 1
        %v3291 = vsel %vm2352, %v3285, %v3290
        %v3292 = vrot.slane %v3049, 1
        %v3293 = vsel %vm2352, %v3288, %v3292
        %v3294 = vrot.slane %v3050, 1
        %v3295 = vrot.slane %v2988, 1
        %v3296 = vsel %vm2352, %v3294, %v3295
        %v3297 = vrot.slane %v3051, 1
        %v3298 = vrot.slane %v2989, 1
        %v3299 = vsel %vm2352, %v3297, %v3298
        %v3300 = vrot.slane %v3052, 1
        %v3301 = vsel %vm2352, %v3295, %v3300
        %v3302 = vrot.slane %v3053, 1
        %v3303 = vsel %vm2352, %v3298, %v3302
        %v3304 = vrot.slane %v3054, 1
        %v3305 = vrot.slane %v2992, 1
        %v3306 = vsel %vm2352, %v3304, %v3305
        %v3307 = vrot.slane %v3055, 1
        %v3308 = vrot.slane %v2993, 1
        %v3309 = vsel %vm2352, %v3307, %v3308
        %v3310 = vrot.slane %v3056, 1
        %v3311 = vsel %vm2352, %v3305, %v3310
        %v3312 = vrot.slane %v3057, 1
        %v3313 = vsel %vm2352, %v3308, %v3312
        %v3378 = vld [vmem:[%s1903] sm:$0xfc]
        %v3379 = vld [vmem:[%s1903 + $0x8] sm:$0xfc]
        %v3380 = vld [vmem:[%s1903 + $0x20] sm:$0x3]
        %v3381 = vld [vmem:[%s1903 + $0x28] sm:$0x3]
        %v3382 = vld [vmem:[%s1903 + $0x30] sm:$0xfc]
        %v3383 = vld [vmem:[%s1903 + $0x38] sm:$0xfc]
        %v3384 = vld [vmem:[%s1903 + $0x50] sm:$0x3]
        %v3385 = vld [vmem:[%s1903 + $0x58] sm:$0x3]
        %v3386 = vld [vmem:[%s1903 + $0x60] sm:$0xfc]
        %v3387 = vld [vmem:[%s1903 + $0x68] sm:$0xfc]
        %v3388 = vld [vmem:[%s1903 + $0x80] sm:$0x3]
        %v3389 = vld [vmem:[%s1903 + $0x88] sm:$0x3]
        %v3390 = vld [vmem:[%s1903 + $0x90] sm:$0xfc]
        %v3391 = vld [vmem:[%s1903 + $0x98] sm:$0xfc]
        %v3392 = vld [vmem:[%s1903 + $0xb0] sm:$0x3]
        %v3393 = vld [vmem:[%s1903 + $0xb8] sm:$0x3]
        %v3394 = vld [vmem:[%s1903 + $0xc0] sm:$0xfc]
        %v3395 = vld [vmem:[%s1903 + $0xc8] sm:$0xfc]
        %v3396 = vld [vmem:[%s1903 + $0xe0] sm:$0x3]
        %v3397 = vld [vmem:[%s1903 + $0xe8] sm:$0x3]
        %v3398 = vld [vmem:[%s1903 + $0xf0] sm:$0xfc]
        %v3399 = vld [vmem:[%s1903 + $0xf8] sm:$0xfc]
        %v3400 = vld [vmem:[%s1903 + $0x110] sm:$0x3]
        %v3401 = vld [vmem:[%s1903 + $0x118] sm:$0x3]
        %v3402 = vld [vmem:[%s1903 + $0x120] sm:$0xfc]
        %v3403 = vld [vmem:[%s1903 + $0x128] sm:$0xfc]
        %v3404 = vld [vmem:[%s1903 + $0x140] sm:$0x3]
        %v3405 = vld [vmem:[%s1903 + $0x148] sm:$0x3]
        %v3406 = vld [vmem:[%s1903 + $0x150] sm:$0xfc]
        %v3407 = vld [vmem:[%s1903 + $0x158] sm:$0xfc]
        %v3408 = vld [vmem:[%s1903 + $0x170] sm:$0x3]
        %v3409 = vld [vmem:[%s1903 + $0x178] sm:$0x3]
        %v3410 = vld [vmem:[%s1903 + $0x180] sm:$0xfc]
        %v3411 = vld [vmem:[%s1903 + $0x188] sm:$0xfc]
        %v3412 = vld [vmem:[%s1903 + $0x1a0] sm:$0x3]
        %v3413 = vld [vmem:[%s1903 + $0x1a8] sm:$0x3]
        %v3414 = vld [vmem:[%s1903 + $0x1b0] sm:$0xfc]
        %v3415 = vld [vmem:[%s1903 + $0x1b8] sm:$0xfc]
        %v3416 = vld [vmem:[%s1903 + $0x1d0] sm:$0x3]
        %v3417 = vld [vmem:[%s1903 + $0x1d8] sm:$0x3]
        %v3418 = vld [vmem:[%s1903 + $0x1e0] sm:$0xfc]
        %v3419 = vld [vmem:[%s1903 + $0x1e8] sm:$0xfc]
        %v3420 = vld [vmem:[%s1903 + $0x200] sm:$0x3]
        %v3421 = vld [vmem:[%s1903 + $0x208] sm:$0x3]
        %v3422 = vld [vmem:[%s1903 + $0x210] sm:$0xfc]
        %v3423 = vld [vmem:[%s1903 + $0x218] sm:$0xfc]
        %v3424 = vld [vmem:[%s1903 + $0x230] sm:$0x3]
        %v3425 = vld [vmem:[%s1903 + $0x238] sm:$0x3]
        %v3426 = vld [vmem:[%s1903 + $0x240] sm:$0xfc]
        %v3427 = vld [vmem:[%s1903 + $0x248] sm:$0xfc]
        %v3428 = vld [vmem:[%s1903 + $0x260] sm:$0x3]
        %v3429 = vld [vmem:[%s1903 + $0x268] sm:$0x3]
        %v3430 = vld [vmem:[%s1903 + $0x270] sm:$0xfc]
        %v3431 = vld [vmem:[%s1903 + $0x278] sm:$0xfc]
        %v3432 = vld [vmem:[%s1903 + $0x290] sm:$0x3]
        %v3433 = vld [vmem:[%s1903 + $0x298] sm:$0x3]
        %v3434 = vld [vmem:[%s1903 + $0x2a0] sm:$0xfc]
        %v3435 = vld [vmem:[%s1903 + $0x2a8] sm:$0xfc]
        %v3436 = vld [vmem:[%s1903 + $0x2c0] sm:$0x3]
        %v3437 = vld [vmem:[%s1903 + $0x2c8] sm:$0x3]
        %v3438 = vld [vmem:[%s1903 + $0x2d0] sm:$0xfc]
        %v3439 = vld [vmem:[%s1903 + $0x2d8] sm:$0xfc]
        %v3440 = vld [vmem:[%s1903 + $0x2f0] sm:$0x3]
        %v3441 = vld [vmem:[%s1903 + $0x2f8] sm:$0x3]
        %v3506 = vrot.slane %v3378, 2
        %v3507 = vrot.slane %v2932, 2
        %v3508 = vsel %vm2705, %v3506, %v3507
        %v3509 = vrot.slane %v3379, 2
        %v3510 = vrot.slane %v2933, 2
        %v3511 = vsel %vm2705, %v3509, %v3510
        %v3512 = vrot.slane %v3380, 2
        %v3513 = vsel %vm2705, %v3507, %v3512
        %v3514 = vrot.slane %v3381, 2
        %v3515 = vsel %vm2705, %v3510, %v3514
        %v3516 = vrot.slane %v3382, 2
        %v3517 = vrot.slane %v2936, 2
        %v3518 = vsel %vm2705, %v3516, %v3517
        %v3519 = vrot.slane %v3383, 2
        %v3520 = vrot.slane %v2937, 2
        %v3521 = vsel %vm2705, %v3519, %v3520
        %v3522 = vrot.slane %v3384, 2
        %v3523 = vsel %vm2705, %v3517, %v3522
        %v3524 = vrot.slane %v3385, 2
        %v3525 = vsel %vm2705, %v3520, %v3524
        %v3526 = vrot.slane %v3386, 2
        %v3527 = vrot.slane %v2940, 2
        %v3528 = vsel %vm2705, %v3526, %v3527
        %v3529 = vrot.slane %v3387, 2
        %v3530 = vrot.slane %v2941, 2
        %v3531 = vsel %vm2705, %v3529, %v3530
        %v3532 = vrot.slane %v3388, 2
        %v3533 = vsel %vm2705, %v3527, %v3532
        %v3534 = vrot.slane %v3389, 2
        %v3535 = vsel %vm2705, %v3530, %v3534
        %v3536 = vrot.slane %v3390, 2
        %v3537 = vrot.slane %v2944, 2
        %v3538 = vsel %vm2705, %v3536, %v3537
        %v3539 = vrot.slane %v3391, 2
        %v3540 = vrot.slane %v2945, 2
        %v3541 = vsel %vm2705, %v3539, %v3540
        %v3542 = vrot.slane %v3392, 2
        %v3543 = vsel %vm2705, %v3537, %v3542
        %v3544 = vrot.slane %v3393, 2
        %v3545 = vsel %vm2705, %v3540, %v3544
        %v3546 = vrot.slane %v3394, 2
        %v3547 = vrot.slane %v2948, 2
        %v3548 = vsel %vm2705, %v3546, %v3547
        %v3549 = vrot.slane %v3395, 2
        %v3550 = vrot.slane %v2949, 2
        %v3551 = vsel %vm2705, %v3549, %v3550
        %v3552 = vrot.slane %v3396, 2
        %v3553 = vsel %vm2705, %v3547, %v3552
        %v3554 = vrot.slane %v3397, 2
        %v3555 = vsel %vm2705, %v3550, %v3554
        %v3556 = vrot.slane %v3398, 2
        %v3557 = vrot.slane %v2952, 2
        %v3558 = vsel %vm2705, %v3556, %v3557
        %v3559 = vrot.slane %v3399, 2
        %v3560 = vrot.slane %v2953, 2
        %v3561 = vsel %vm2705, %v3559, %v3560
        %v3562 = vrot.slane %v3400, 2
        %v3563 = vsel %vm2705, %v3557, %v3562
        %v3564 = vrot.slane %v3401, 2
        %v3565 = vsel %vm2705, %v3560, %v3564
        %v3566 = vrot.slane %v3402, 2
        %v3567 = vrot.slane %v2956, 2
        %v3568 = vsel %vm2705, %v3566, %v3567
        %v3569 = vrot.slane %v3403, 2
        %v3570 = vrot.slane %v2957, 2
        %v3571 = vsel %vm2705, %v3569, %v3570
        %v3572 = vrot.slane %v3404, 2
        %v3573 = vsel %vm2705, %v3567, %v3572
        %v3574 = vrot.slane %v3405, 2
        %v3575 = vsel %vm2705, %v3570, %v3574
        %v3576 = vrot.slane %v3406, 2
        %v3577 = vrot.slane %v2960, 2
        %v3578 = vsel %vm2705, %v3576, %v3577
        %v3579 = vrot.slane %v3407, 2
        %v3580 = vrot.slane %v2961, 2
        %v3581 = vsel %vm2705, %v3579, %v3580
        %v3582 = vrot.slane %v3408, 2
        %v3583 = vsel %vm2705, %v3577, %v3582
        %v3584 = vrot.slane %v3409, 2
        %v3585 = vsel %vm2705, %v3580, %v3584
        %v3586 = vrot.slane %v3410, 2
        %v3587 = vrot.slane %v2964, 2
        %v3588 = vsel %vm2705, %v3586, %v3587
        %v3589 = vrot.slane %v3411, 2
        %v3590 = vrot.slane %v2965, 2
        %v3591 = vsel %vm2705, %v3589, %v3590
        %v3592 = vrot.slane %v3412, 2
        %v3593 = vsel %vm2705, %v3587, %v3592
        %v3594 = vrot.slane %v3413, 2
        %v3595 = vsel %vm2705, %v3590, %v3594
        %v3596 = vrot.slane %v3414, 2
        %v3597 = vrot.slane %v2968, 2
        %v3598 = vsel %vm2705, %v3596, %v3597
        %v3599 = vrot.slane %v3415, 2
        %v3600 = vrot.slane %v2969, 2
        %v3601 = vsel %vm2705, %v3599, %v3600
        %v3602 = vrot.slane %v3416, 2
        %v3603 = vsel %vm2705, %v3597, %v3602
        %v3604 = vrot.slane %v3417, 2
        %v3605 = vsel %vm2705, %v3600, %v3604
        %v3606 = vrot.slane %v3418, 2
        %v3607 = vrot.slane %v2972, 2
        %v3608 = vsel %vm2705, %v3606, %v3607
        %v3609 = vrot.slane %v3419, 2
        %v3610 = vrot.slane %v2973, 2
        %v3611 = vsel %vm2705, %v3609, %v3610
        %v3612 = vrot.slane %v3420, 2
        %v3613 = vsel %vm2705, %v3607, %v3612
        %v3614 = vrot.slane %v3421, 2
        %v3615 = vsel %vm2705, %v3610, %v3614
        %v3616 = vrot.slane %v3422, 2
        %v3617 = vrot.slane %v2976, 2
        %v3618 = vsel %vm2705, %v3616, %v3617
        %v3619 = vrot.slane %v3423, 2
        %v3620 = vrot.slane %v2977, 2
        %v3621 = vsel %vm2705, %v3619, %v3620
        %v3622 = vrot.slane %v3424, 2
        %v3623 = vsel %vm2705, %v3617, %v3622
        %v3624 = vrot.slane %v3425, 2
        %v3625 = vsel %vm2705, %v3620, %v3624
        %v3626 = vrot.slane %v3426, 2
        %v3627 = vrot.slane %v2980, 2
        %v3628 = vsel %vm2705, %v3626, %v3627
        %v3629 = vrot.slane %v3427, 2
        %v3630 = vrot.slane %v2981, 2
        %v3631 = vsel %vm2705, %v3629, %v3630
        %v3632 = vrot.slane %v3428, 2
        %v3633 = vsel %vm2705, %v3627, %v3632
        %v3634 = vrot.slane %v3429, 2
        %v3635 = vsel %vm2705, %v3630, %v3634
        %v3636 = vrot.slane %v3430, 2
        %v3637 = vrot.slane %v2984, 2
        %v3638 = vsel %vm2705, %v3636, %v3637
        %v3639 = vrot.slane %v3431, 2
        %v3640 = vrot.slane %v2985, 2
        %v3641 = vsel %vm2705, %v3639, %v3640
        %v3642 = vrot.slane %v3432, 2
        %v3643 = vsel %vm2705, %v3637, %v3642
        %v3644 = vrot.slane %v3433, 2
        %v3645 = vsel %vm2705, %v3640, %v3644
        %v3646 = vrot.slane %v3434, 2
        %v3647 = vrot.slane %v2988, 2
        %v3648 = vsel %vm2705, %v3646, %v3647
        %v3649 = vrot.slane %v3435, 2
        %v3650 = vrot.slane %v2989, 2
        %v3651 = vsel %vm2705, %v3649, %v3650
        %v3652 = vrot.slane %v3436, 2
        %v3653 = vsel %vm2705, %v3647, %v3652
        %v3654 = vrot.slane %v3437, 2
        %v3655 = vsel %vm2705, %v3650, %v3654
        %v3656 = vrot.slane %v3438, 2
        %v3657 = vrot.slane %v2992, 2
        %v3658 = vsel %vm2705, %v3656, %v3657
        %v3659 = vrot.slane %v3439, 2
        %v3660 = vrot.slane %v2993, 2
        %v3661 = vsel %vm2705, %v3659, %v3660
        %v3662 = vrot.slane %v3440, 2
        %v3663 = vsel %vm2705, %v3657, %v3662
        %v3664 = vrot.slane %v3441, 2
        %v3665 = vsel %vm2705, %v3660, %v3664
        %s3730 = scalar_lea.vmem [#allocation3], 96
        %v3731 = vld [vmem:[%s3730] sm:$0xff]
        %v3732 = vld [vmem:[%s3730 + $0x8] sm:$0xff]
        %v3733 = vld [vmem:[%s3730 + $0x10] sm:$0xff]
        %v3734 = vld [vmem:[%s3730 + $0x18] sm:$0xff]
        %v3735 = vld [vmem:[%s3730 + $0x30] sm:$0xff]
        %v3736 = vld [vmem:[%s3730 + $0x38] sm:$0xff]
        %v3737 = vld [vmem:[%s3730 + $0x40] sm:$0xff]
        %v3738 = vld [vmem:[%s3730 + $0x48] sm:$0xff]
        %v3739 = vld [vmem:[%s3730 + $0x60] sm:$0xff]
        %v3740 = vld [vmem:[%s3730 + $0x68] sm:$0xff]
        %v3741 = vld [vmem:[%s3730 + $0x70] sm:$0xff]
        %v3742 = vld [vmem:[%s3730 + $0x78] sm:$0xff]
        %v3743 = vld [vmem:[%s3730 + $0x90] sm:$0xff]
        %v3744 = vld [vmem:[%s3730 + $0x98] sm:$0xff]
        %v3745 = vld [vmem:[%s3730 + $0xa0] sm:$0xff]
        %v3746 = vld [vmem:[%s3730 + $0xa8] sm:$0xff]
        %v3747 = vld [vmem:[%s3730 + $0xc0] sm:$0xff]
        %v3748 = vld [vmem:[%s3730 + $0xc8] sm:$0xff]
        %v3749 = vld [vmem:[%s3730 + $0xd0] sm:$0xff]
        %v3750 = vld [vmem:[%s3730 + $0xd8] sm:$0xff]
        %v3751 = vld [vmem:[%s3730 + $0xf0] sm:$0xff]
        %v3752 = vld [vmem:[%s3730 + $0xf8] sm:$0xff]
        %v3753 = vld [vmem:[%s3730 + $0x100] sm:$0xff]
        %v3754 = vld [vmem:[%s3730 + $0x108] sm:$0xff]
        %v3755 = vld [vmem:[%s3730 + $0x120] sm:$0xff]
        %v3756 = vld [vmem:[%s3730 + $0x128] sm:$0xff]
        %v3757 = vld [vmem:[%s3730 + $0x130] sm:$0xff]
        %v3758 = vld [vmem:[%s3730 + $0x138] sm:$0xff]
        %v3759 = vld [vmem:[%s3730 + $0x150] sm:$0xff]
        %v3760 = vld [vmem:[%s3730 + $0x158] sm:$0xff]
        %v3761 = vld [vmem:[%s3730 + $0x160] sm:$0xff]
        %v3762 = vld [vmem:[%s3730 + $0x168] sm:$0xff]
        %v3763 = vld [vmem:[%s3730 + $0x180] sm:$0xff]
        %v3764 = vld [vmem:[%s3730 + $0x188] sm:$0xff]
        %v3765 = vld [vmem:[%s3730 + $0x190] sm:$0xff]
        %v3766 = vld [vmem:[%s3730 + $0x198] sm:$0xff]
        %v3767 = vld [vmem:[%s3730 + $0x1b0] sm:$0xff]
        %v3768 = vld [vmem:[%s3730 + $0x1b8] sm:$0xff]
        %v3769 = vld [vmem:[%s3730 + $0x1c0] sm:$0xff]
        %v3770 = vld [vmem:[%s3730 + $0x1c8] sm:$0xff]
        %v3771 = vld [vmem:[%s3730 + $0x1e0] sm:$0xff]
        %v3772 = vld [vmem:[%s3730 + $0x1e8] sm:$0xff]
        %v3773 = vld [vmem:[%s3730 + $0x1f0] sm:$0xff]
        %v3774 = vld [vmem:[%s3730 + $0x1f8] sm:$0xff]
        %v3775 = vld [vmem:[%s3730 + $0x210] sm:$0xff]
        %v3776 = vld [vmem:[%s3730 + $0x218] sm:$0xff]
        %v3777 = vld [vmem:[%s3730 + $0x220] sm:$0xff]
        %v3778 = vld [vmem:[%s3730 + $0x228] sm:$0xff]
        %v3779 = vld [vmem:[%s3730 + $0x240] sm:$0xff]
        %v3780 = vld [vmem:[%s3730 + $0x248] sm:$0xff]
        %v3781 = vld [vmem:[%s3730 + $0x250] sm:$0xff]
        %v3782 = vld [vmem:[%s3730 + $0x258] sm:$0xff]
        %v3783 = vld [vmem:[%s3730 + $0x270] sm:$0xff]
        %v3784 = vld [vmem:[%s3730 + $0x278] sm:$0xff]
        %v3785 = vld [vmem:[%s3730 + $0x280] sm:$0xff]
        %v3786 = vld [vmem:[%s3730 + $0x288] sm:$0xff]
        %v3787 = vld [vmem:[%s3730 + $0x2a0] sm:$0xff]
        %v3788 = vld [vmem:[%s3730 + $0x2a8] sm:$0xff]
        %v3789 = vld [vmem:[%s3730 + $0x2b0] sm:$0xff]
        %v3790 = vld [vmem:[%s3730 + $0x2b8] sm:$0xff]
        %v3791 = vld [vmem:[%s3730 + $0x2d0] sm:$0xff]
        %v3792 = vld [vmem:[%s3730 + $0x2d8] sm:$0xff]
        %v3793 = vld [vmem:[%s3730 + $0x2e0] sm:$0xff]
        %v3794 = vld [vmem:[%s3730 + $0x2e8] sm:$0xff]
        %v3795 = vld [vmem:[%s3730] sm:$0xfe]
        %v3796 = vld [vmem:[%s3730 + $0x8] sm:$0xfe]
        %v3797 = vld [vmem:[%s3730 + $0x20] sm:$0x1]
        %v3798 = vld [vmem:[%s3730 + $0x28] sm:$0x1]
        %v3799 = vld [vmem:[%s3730 + $0x30] sm:$0xfe]
        %v3800 = vld [vmem:[%s3730 + $0x38] sm:$0xfe]
        %v3801 = vld [vmem:[%s3730 + $0x50] sm:$0x1]
        %v3802 = vld [vmem:[%s3730 + $0x58] sm:$0x1]
        %v3803 = vld [vmem:[%s3730 + $0x60] sm:$0xfe]
        %v3804 = vld [vmem:[%s3730 + $0x68] sm:$0xfe]
        %v3805 = vld [vmem:[%s3730 + $0x80] sm:$0x1]
        %v3806 = vld [vmem:[%s3730 + $0x88] sm:$0x1]
        %v3807 = vld [vmem:[%s3730 + $0x90] sm:$0xfe]
        %v3808 = vld [vmem:[%s3730 + $0x98] sm:$0xfe]
        %v3809 = vld [vmem:[%s3730 + $0xb0] sm:$0x1]
        %v3810 = vld [vmem:[%s3730 + $0xb8] sm:$0x1]
        %v3811 = vld [vmem:[%s3730 + $0xc0] sm:$0xfe]
        %v3812 = vld [vmem:[%s3730 + $0xc8] sm:$0xfe]
        %v3813 = vld [vmem:[%s3730 + $0xe0] sm:$0x1]
        %v3814 = vld [vmem:[%s3730 + $0xe8] sm:$0x1]
        %v3815 = vld [vmem:[%s3730 + $0xf0] sm:$0xfe]
        %v3816 = vld [vmem:[%s3730 + $0xf8] sm:$0xfe]
        %v3817 = vld [vmem:[%s3730 + $0x110] sm:$0x1]
        %v3818 = vld [vmem:[%s3730 + $0x118] sm:$0x1]
        %v3819 = vld [vmem:[%s3730 + $0x120] sm:$0xfe]
        %v3820 = vld [vmem:[%s3730 + $0x128] sm:$0xfe]
        %v3821 = vld [vmem:[%s3730 + $0x140] sm:$0x1]
        %v3822 = vld [vmem:[%s3730 + $0x148] sm:$0x1]
        %v3823 = vld [vmem:[%s3730 + $0x150] sm:$0xfe]
        %v3824 = vld [vmem:[%s3730 + $0x158] sm:$0xfe]
        %v3825 = vld [vmem:[%s3730 + $0x170] sm:$0x1]
        %v3826 = vld [vmem:[%s3730 + $0x178] sm:$0x1]
        %v3827 = vld [vmem:[%s3730 + $0x180] sm:$0xfe]
        %v3828 = vld [vmem:[%s3730 + $0x188] sm:$0xfe]
        %v3829 = vld [vmem:[%s3730 + $0x1a0] sm:$0x1]
        %v3830 = vld [vmem:[%s3730 + $0x1a8] sm:$0x1]
        %v3831 = vld [vmem:[%s3730 + $0x1b0] sm:$0xfe]
        %v3832 = vld [vmem:[%s3730 + $0x1b8] sm:$0xfe]
        %v3833 = vld [vmem:[%s3730 + $0x1d0] sm:$0x1]
        %v3834 = vld [vmem:[%s3730 + $0x1d8] sm:$0x1]
        %v3835 = vld [vmem:[%s3730 + $0x1e0] sm:$0xfe]
        %v3836 = vld [vmem:[%s3730 + $0x1e8] sm:$0xfe]
        %v3837 = vld [vmem:[%s3730 + $0x200] sm:$0x1]
        %v3838 = vld [vmem:[%s3730 + $0x208] sm:$0x1]
        %v3839 = vld [vmem:[%s3730 + $0x210] sm:$0xfe]
        %v3840 = vld [vmem:[%s3730 + $0x218] sm:$0xfe]
        %v3841 = vld [vmem:[%s3730 + $0x230] sm:$0x1]
        %v3842 = vld [vmem:[%s3730 + $0x238] sm:$0x1]
        %v3843 = vld [vmem:[%s3730 + $0x240] sm:$0xfe]
        %v3844 = vld [vmem:[%s3730 + $0x248] sm:$0xfe]
        %v3845 = vld [vmem:[%s3730 + $0x260] sm:$0x1]
        %v3846 = vld [vmem:[%s3730 + $0x268] sm:$0x1]
        %v3847 = vld [vmem:[%s3730 + $0x270] sm:$0xfe]
        %v3848 = vld [vmem:[%s3730 + $0x278] sm:$0xfe]
        %v3849 = vld [vmem:[%s3730 + $0x290] sm:$0x1]
        %v3850 = vld [vmem:[%s3730 + $0x298] sm:$0x1]
        %v3851 = vld [vmem:[%s3730 + $0x2a0] sm:$0xfe]
        %v3852 = vld [vmem:[%s3730 + $0x2a8] sm:$0xfe]
        %v3853 = vld [vmem:[%s3730 + $0x2c0] sm:$0x1]
        %v3854 = vld [vmem:[%s3730 + $0x2c8] sm:$0x1]
        %v3855 = vld [vmem:[%s3730 + $0x2d0] sm:$0xfe]
        %v3856 = vld [vmem:[%s3730 + $0x2d8] sm:$0xfe]
        %v3857 = vld [vmem:[%s3730 + $0x2f0] sm:$0x1]
        %v3858 = vld [vmem:[%s3730 + $0x2f8] sm:$0x1]
        %v3955 = vrot.slane %v3795, 1
        %v3956 = vrot.slane %v3733, 1
        %v3957 = vsel %vm2352, %v3955, %v3956
        %v3958 = vrot.slane %v3796, 1
        %v3959 = vrot.slane %v3734, 1
        %v3960 = vsel %vm2352, %v3958, %v3959
        %v3961 = vrot.slane %v3797, 1
        %v3962 = vsel %vm2352, %v3956, %v3961
        %v3963 = vrot.slane %v3798, 1
        %v3964 = vsel %vm2352, %v3959, %v3963
        %v3965 = vrot.slane %v3799, 1
        %v3966 = vrot.slane %v3737, 1
        %v3967 = vsel %vm2352, %v3965, %v3966
        %v3968 = vrot.slane %v3800, 1
        %v3969 = vrot.slane %v3738, 1
        %v3970 = vsel %vm2352, %v3968, %v3969
        %v3971 = vrot.slane %v3801, 1
        %v3972 = vsel %vm2352, %v3966, %v3971
        %v3973 = vrot.slane %v3802, 1
        %v3974 = vsel %vm2352, %v3969, %v3973
        %v3975 = vrot.slane %v3803, 1
        %v3976 = vrot.slane %v3741, 1
        %v3977 = vsel %vm2352, %v3975, %v3976
        %v3978 = vrot.slane %v3804, 1
        %v3979 = vrot.slane %v3742, 1
        %v3980 = vsel %vm2352, %v3978, %v3979
        %v3981 = vrot.slane %v3805, 1
        %v3982 = vsel %vm2352, %v3976, %v3981
        %v3983 = vrot.slane %v3806, 1
        %v3984 = vsel %vm2352, %v3979, %v3983
        %v3985 = vrot.slane %v3807, 1
        %v3986 = vrot.slane %v3745, 1
        %v3987 = vsel %vm2352, %v3985, %v3986
        %v3988 = vrot.slane %v3808, 1
        %v3989 = vrot.slane %v3746, 1
        %v3990 = vsel %vm2352, %v3988, %v3989
        %v3991 = vrot.slane %v3809, 1
        %v3992 = vsel %vm2352, %v3986, %v3991
        %v3993 = vrot.slane %v3810, 1
        %v3994 = vsel %vm2352, %v3989, %v3993
        %v3995 = vrot.slane %v3811, 1
        %v3996 = vrot.slane %v3749, 1
        %v3997 = vsel %vm2352, %v3995, %v3996
        %v3998 = vrot.slane %v3812, 1
        %v3999 = vrot.slane %v3750, 1
        %v4000 = vsel %vm2352, %v3998, %v3999
        %v4001 = vrot.slane %v3813, 1
        %v4002 = vsel %vm2352, %v3996, %v4001
        %v4003 = vrot.slane %v3814, 1
        %v4004 = vsel %vm2352, %v3999, %v4003
        %v4005 = vrot.slane %v3815, 1
        %v4006 = vrot.slane %v3753, 1
        %v4007 = vsel %vm2352, %v4005, %v4006
        %v4008 = vrot.slane %v3816, 1
        %v4009 = vrot.slane %v3754, 1
        %v4010 = vsel %vm2352, %v4008, %v4009
        %v4011 = vrot.slane %v3817, 1
        %v4012 = vsel %vm2352, %v4006, %v4011
        %v4013 = vrot.slane %v3818, 1
        %v4014 = vsel %vm2352, %v4009, %v4013
        %v4015 = vrot.slane %v3819, 1
        %v4016 = vrot.slane %v3757, 1
        %v4017 = vsel %vm2352, %v4015, %v4016
        %v4018 = vrot.slane %v3820, 1
        %v4019 = vrot.slane %v3758, 1
        %v4020 = vsel %vm2352, %v4018, %v4019
        %v4021 = vrot.slane %v3821, 1
        %v4022 = vsel %vm2352, %v4016, %v4021
        %v4023 = vrot.slane %v3822, 1
        %v4024 = vsel %vm2352, %v4019, %v4023
        %v4025 = vrot.slane %v3823, 1
        %v4026 = vrot.slane %v3761, 1
        %v4027 = vsel %vm2352, %v4025, %v4026
        %v4028 = vrot.slane %v3824, 1
        %v4029 = vrot.slane %v3762, 1
        %v4030 = vsel %vm2352, %v4028, %v4029
        %v4031 = vrot.slane %v3825, 1
        %v4032 = vsel %vm2352, %v4026, %v4031
        %v4033 = vrot.slane %v3826, 1
        %v4034 = vsel %vm2352, %v4029, %v4033
        %v4035 = vrot.slane %v3827, 1
        %v4036 = vrot.slane %v3765, 1
        %v4037 = vsel %vm2352, %v4035, %v4036
        %v4038 = vrot.slane %v3828, 1
        %v4039 = vrot.slane %v3766, 1
        %v4040 = vsel %vm2352, %v4038, %v4039
        %v4041 = vrot.slane %v3829, 1
        %v4042 = vsel %vm2352, %v4036, %v4041
        %v4043 = vrot.slane %v3830, 1
        %v4044 = vsel %vm2352, %v4039, %v4043
        %v4045 = vrot.slane %v3831, 1
        %v4046 = vrot.slane %v3769, 1
        %v4047 = vsel %vm2352, %v4045, %v4046
        %v4048 = vrot.slane %v3832, 1
        %v4049 = vrot.slane %v3770, 1
        %v4050 = vsel %vm2352, %v4048, %v4049
        %v4051 = vrot.slane %v3833, 1
        %v4052 = vsel %vm2352, %v4046, %v4051
        %v4053 = vrot.slane %v3834, 1
        %v4054 = vsel %vm2352, %v4049, %v4053
        %v4055 = vrot.slane %v3835, 1
        %v4056 = vrot.slane %v3773, 1
        %v4057 = vsel %vm2352, %v4055, %v4056
        %v4058 = vrot.slane %v3836, 1
        %v4059 = vrot.slane %v3774, 1
        %v4060 = vsel %vm2352, %v4058, %v4059
        %v4061 = vrot.slane %v3837, 1
        %v4062 = vsel %vm2352, %v4056, %v4061
        %v4063 = vrot.slane %v3838, 1
        %v4064 = vsel %vm2352, %v4059, %v4063
        %v4065 = vrot.slane %v3839, 1
        %v4066 = vrot.slane %v3777, 1
        %v4067 = vsel %vm2352, %v4065, %v4066
        %v4068 = vrot.slane %v3840, 1
        %v4069 = vrot.slane %v3778, 1
        %v4070 = vsel %vm2352, %v4068, %v4069
        %v4071 = vrot.slane %v3841, 1
        %v4072 = vsel %vm2352, %v4066, %v4071
        %v4073 = vrot.slane %v3842, 1
        %v4074 = vsel %vm2352, %v4069, %v4073
        %v4075 = vrot.slane %v3843, 1
        %v4076 = vrot.slane %v3781, 1
        %v4077 = vsel %vm2352, %v4075, %v4076
        %v4078 = vrot.slane %v3844, 1
        %v4079 = vrot.slane %v3782, 1
        %v4080 = vsel %vm2352, %v4078, %v4079
        %v4081 = vrot.slane %v3845, 1
        %v4082 = vsel %vm2352, %v4076, %v4081
        %v4083 = vrot.slane %v3846, 1
        %v4084 = vsel %vm2352, %v4079, %v4083
        %v4085 = vrot.slane %v3847, 1
        %v4086 = vrot.slane %v3785, 1
        %v4087 = vsel %vm2352, %v4085, %v4086
        %v4088 = vrot.slane %v3848, 1
        %v4089 = vrot.slane %v3786, 1
        %v4090 = vsel %vm2352, %v4088, %v4089
        %v4091 = vrot.slane %v3849, 1
        %v4092 = vsel %vm2352, %v4086, %v4091
        %v4093 = vrot.slane %v3850, 1
        %v4094 = vsel %vm2352, %v4089, %v4093
        %v4095 = vrot.slane %v3851, 1
        %v4096 = vrot.slane %v3789, 1
        %v4097 = vsel %vm2352, %v4095, %v4096
        %v4098 = vrot.slane %v3852, 1
        %v4099 = vrot.slane %v3790, 1
        %v4100 = vsel %vm2352, %v4098, %v4099
        %v4101 = vrot.slane %v3853, 1
        %v4102 = vsel %vm2352, %v4096, %v4101
        %v4103 = vrot.slane %v3854, 1
        %v4104 = vsel %vm2352, %v4099, %v4103
        %v4105 = vrot.slane %v3855, 1
        %v4106 = vrot.slane %v3793, 1
        %v4107 = vsel %vm2352, %v4105, %v4106
        %v4108 = vrot.slane %v3856, 1
        %v4109 = vrot.slane %v3794, 1
        %v4110 = vsel %vm2352, %v4108, %v4109
        %v4111 = vrot.slane %v3857, 1
        %v4112 = vsel %vm2352, %v4106, %v4111
        %v4113 = vrot.slane %v3858, 1
        %v4114 = vsel %vm2352, %v4109, %v4113
        %v4179 = vld [vmem:[%s3730] sm:$0xfc]
        %v4180 = vld [vmem:[%s3730 + $0x8] sm:$0xfc]
        %v4181 = vld [vmem:[%s3730 + $0x20] sm:$0x3]
        %v4182 = vld [vmem:[%s3730 + $0x28] sm:$0x3]
        %v4183 = vld [vmem:[%s3730 + $0x30] sm:$0xfc]
        %v4184 = vld [vmem:[%s3730 + $0x38] sm:$0xfc]
        %v4185 = vld [vmem:[%s3730 + $0x50] sm:$0x3]
        %v4186 = vld [vmem:[%s3730 + $0x58] sm:$0x3]
        %v4187 = vld [vmem:[%s3730 + $0x60] sm:$0xfc]
        %v4188 = vld [vmem:[%s3730 + $0x68] sm:$0xfc]
        %v4189 = vld [vmem:[%s3730 + $0x80] sm:$0x3]
        %v4190 = vld [vmem:[%s3730 + $0x88] sm:$0x3]
        %v4191 = vld [vmem:[%s3730 + $0x90] sm:$0xfc]
        %v4192 = vld [vmem:[%s3730 + $0x98] sm:$0xfc]
        %v4193 = vld [vmem:[%s3730 + $0xb0] sm:$0x3]
        %v4194 = vld [vmem:[%s3730 + $0xb8] sm:$0x3]
        %v4195 = vld [vmem:[%s3730 + $0xc0] sm:$0xfc]
        %v4196 = vld [vmem:[%s3730 + $0xc8] sm:$0xfc]
        %v4197 = vld [vmem:[%s3730 + $0xe0] sm:$0x3]
        %v4198 = vld [vmem:[%s3730 + $0xe8] sm:$0x3]
        %v4199 = vld [vmem:[%s3730 + $0xf0] sm:$0xfc]
        %v4200 = vld [vmem:[%s3730 + $0xf8] sm:$0xfc]
        %v4201 = vld [vmem:[%s3730 + $0x110] sm:$0x3]
        %v4202 = vld [vmem:[%s3730 + $0x118] sm:$0x3]
        %v4203 = vld [vmem:[%s3730 + $0x120] sm:$0xfc]
        %v4204 = vld [vmem:[%s3730 + $0x128] sm:$0xfc]
        %v4205 = vld [vmem:[%s3730 + $0x140] sm:$0x3]
        %v4206 = vld [vmem:[%s3730 + $0x148] sm:$0x3]
        %v4207 = vld [vmem:[%s3730 + $0x150] sm:$0xfc]
        %v4208 = vld [vmem:[%s3730 + $0x158] sm:$0xfc]
        %v4209 = vld [vmem:[%s3730 + $0x170] sm:$0x3]
        %v4210 = vld [vmem:[%s3730 + $0x178] sm:$0x3]
        %v4211 = vld [vmem:[%s3730 + $0x180] sm:$0xfc]
        %v4212 = vld [vmem:[%s3730 + $0x188] sm:$0xfc]
        %v4213 = vld [vmem:[%s3730 + $0x1a0] sm:$0x3]
        %v4214 = vld [vmem:[%s3730 + $0x1a8] sm:$0x3]
        %v4215 = vld [vmem:[%s3730 + $0x1b0] sm:$0xfc]
        %v4216 = vld [vmem:[%s3730 + $0x1b8] sm:$0xfc]
        %v4217 = vld [vmem:[%s3730 + $0x1d0] sm:$0x3]
        %v4218 = vld [vmem:[%s3730 + $0x1d8] sm:$0x3]
        %v4219 = vld [vmem:[%s3730 + $0x1e0] sm:$0xfc]
        %v4220 = vld [vmem:[%s3730 + $0x1e8] sm:$0xfc]
        %v4221 = vld [vmem:[%s3730 + $0x200] sm:$0x3]
        %v4222 = vld [vmem:[%s3730 + $0x208] sm:$0x3]
        %v4223 = vld [vmem:[%s3730 + $0x210] sm:$0xfc]
        %v4224 = vld [vmem:[%s3730 + $0x218] sm:$0xfc]
        %v4225 = vld [vmem:[%s3730 + $0x230] sm:$0x3]
        %v4226 = vld [vmem:[%s3730 + $0x238] sm:$0x3]
        %v4227 = vld [vmem:[%s3730 + $0x240] sm:$0xfc]
        %v4228 = vld [vmem:[%s3730 + $0x248] sm:$0xfc]
        %v4229 = vld [vmem:[%s3730 + $0x260] sm:$0x3]
        %v4230 = vld [vmem:[%s3730 + $0x268] sm:$0x3]
        %v4231 = vld [vmem:[%s3730 + $0x270] sm:$0xfc]
        %v4232 = vld [vmem:[%s3730 + $0x278] sm:$0xfc]
        %v4233 = vld [vmem:[%s3730 + $0x290] sm:$0x3]
        %v4234 = vld [vmem:[%s3730 + $0x298] sm:$0x3]
        %v4235 = vld [vmem:[%s3730 + $0x2a0] sm:$0xfc]
        %v4236 = vld [vmem:[%s3730 + $0x2a8] sm:$0xfc]
        %v4237 = vld [vmem:[%s3730 + $0x2c0] sm:$0x3]
        %v4238 = vld [vmem:[%s3730 + $0x2c8] sm:$0x3]
        %v4239 = vld [vmem:[%s3730 + $0x2d0] sm:$0xfc]
        %v4240 = vld [vmem:[%s3730 + $0x2d8] sm:$0xfc]
        %v4241 = vld [vmem:[%s3730 + $0x2f0] sm:$0x3]
        %v4242 = vld [vmem:[%s3730 + $0x2f8] sm:$0x3]
        %v4307 = vrot.slane %v4179, 2
        %v4308 = vrot.slane %v3733, 2
        %v4309 = vsel %vm2705, %v4307, %v4308
        %v4310 = vrot.slane %v4180, 2
        %v4311 = vrot.slane %v3734, 2
        %v4312 = vsel %vm2705, %v4310, %v4311
        %v4313 = vrot.slane %v4181, 2
        %v4314 = vsel %vm2705, %v4308, %v4313
        %v4315 = vrot.slane %v4182, 2
        %v4316 = vsel %vm2705, %v4311, %v4315
        %v4317 = vrot.slane %v4183, 2
        %v4318 = vrot.slane %v3737, 2
        %v4319 = vsel %vm2705, %v4317, %v4318
        %v4320 = vrot.slane %v4184, 2
        %v4321 = vrot.slane %v3738, 2
        %v4322 = vsel %vm2705, %v4320, %v4321
        %v4323 = vrot.slane %v4185, 2
        %v4324 = vsel %vm2705, %v4318, %v4323
        %v4325 = vrot.slane %v4186, 2
        %v4326 = vsel %vm2705, %v4321, %v4325
        %v4327 = vrot.slane %v4187, 2
        %v4328 = vrot.slane %v3741, 2
        %v4329 = vsel %vm2705, %v4327, %v4328
        %v4330 = vrot.slane %v4188, 2
        %v4331 = vrot.slane %v3742, 2
        %v4332 = vsel %vm2705, %v4330, %v4331
        %v4333 = vrot.slane %v4189, 2
        %v4334 = vsel %vm2705, %v4328, %v4333
        %v4335 = vrot.slane %v4190, 2
        %v4336 = vsel %vm2705, %v4331, %v4335
        %v4337 = vrot.slane %v4191, 2
        %v4338 = vrot.slane %v3745, 2
        %v4339 = vsel %vm2705, %v4337, %v4338
        %v4340 = vrot.slane %v4192, 2
        %v4341 = vrot.slane %v3746, 2
        %v4342 = vsel %vm2705, %v4340, %v4341
        %v4343 = vrot.slane %v4193, 2
        %v4344 = vsel %vm2705, %v4338, %v4343
        %v4345 = vrot.slane %v4194, 2
        %v4346 = vsel %vm2705, %v4341, %v4345
        %v4347 = vrot.slane %v4195, 2
        %v4348 = vrot.slane %v3749, 2
        %v4349 = vsel %vm2705, %v4347, %v4348
        %v4350 = vrot.slane %v4196, 2
        %v4351 = vrot.slane %v3750, 2
        %v4352 = vsel %vm2705, %v4350, %v4351
        %v4353 = vrot.slane %v4197, 2
        %v4354 = vsel %vm2705, %v4348, %v4353
        %v4355 = vrot.slane %v4198, 2
        %v4356 = vsel %vm2705, %v4351, %v4355
        %v4357 = vrot.slane %v4199, 2
        %v4358 = vrot.slane %v3753, 2
        %v4359 = vsel %vm2705, %v4357, %v4358
        %v4360 = vrot.slane %v4200, 2
        %v4361 = vrot.slane %v3754, 2
        %v4362 = vsel %vm2705, %v4360, %v4361
        %v4363 = vrot.slane %v4201, 2
        %v4364 = vsel %vm2705, %v4358, %v4363
        %v4365 = vrot.slane %v4202, 2
        %v4366 = vsel %vm2705, %v4361, %v4365
        %v4367 = vrot.slane %v4203, 2
        %v4368 = vrot.slane %v3757, 2
        %v4369 = vsel %vm2705, %v4367, %v4368
        %v4370 = vrot.slane %v4204, 2
        %v4371 = vrot.slane %v3758, 2
        %v4372 = vsel %vm2705, %v4370, %v4371
        %v4373 = vrot.slane %v4205, 2
        %v4374 = vsel %vm2705, %v4368, %v4373
        %v4375 = vrot.slane %v4206, 2
        %v4376 = vsel %vm2705, %v4371, %v4375
        %v4377 = vrot.slane %v4207, 2
        %v4378 = vrot.slane %v3761, 2
        %v4379 = vsel %vm2705, %v4377, %v4378
        %v4380 = vrot.slane %v4208, 2
        %v4381 = vrot.slane %v3762, 2
        %v4382 = vsel %vm2705, %v4380, %v4381
        %v4383 = vrot.slane %v4209, 2
        %v4384 = vsel %vm2705, %v4378, %v4383
        %v4385 = vrot.slane %v4210, 2
        %v4386 = vsel %vm2705, %v4381, %v4385
        %v4387 = vrot.slane %v4211, 2
        %v4388 = vrot.slane %v3765, 2
        %v4389 = vsel %vm2705, %v4387, %v4388
        %v4390 = vrot.slane %v4212, 2
        %v4391 = vrot.slane %v3766, 2
        %v4392 = vsel %vm2705, %v4390, %v4391
        %v4393 = vrot.slane %v4213, 2
        %v4394 = vsel %vm2705, %v4388, %v4393
        %v4395 = vrot.slane %v4214, 2
        %v4396 = vsel %vm2705, %v4391, %v4395
        %v4397 = vrot.slane %v4215, 2
        %v4398 = vrot.slane %v3769, 2
        %v4399 = vsel %vm2705, %v4397, %v4398
        %v4400 = vrot.slane %v4216, 2
        %v4401 = vrot.slane %v3770, 2
        %v4402 = vsel %vm2705, %v4400, %v4401
        %v4403 = vrot.slane %v4217, 2
        %v4404 = vsel %vm2705, %v4398, %v4403
        %v4405 = vrot.slane %v4218, 2
        %v4406 = vsel %vm2705, %v4401, %v4405
        %v4407 = vrot.slane %v4219, 2
        %v4408 = vrot.slane %v3773, 2
        %v4409 = vsel %vm2705, %v4407, %v4408
        %v4410 = vrot.slane %v4220, 2
        %v4411 = vrot.slane %v3774, 2
        %v4412 = vsel %vm2705, %v4410, %v4411
        %v4413 = vrot.slane %v4221, 2
        %v4414 = vsel %vm2705, %v4408, %v4413
        %v4415 = vrot.slane %v4222, 2
        %v4416 = vsel %vm2705, %v4411, %v4415
        %v4417 = vrot.slane %v4223, 2
        %v4418 = vrot.slane %v3777, 2
        %v4419 = vsel %vm2705, %v4417, %v4418
        %v4420 = vrot.slane %v4224, 2
        %v4421 = vrot.slane %v3778, 2
        %v4422 = vsel %vm2705, %v4420, %v4421
        %v4423 = vrot.slane %v4225, 2
        %v4424 = vsel %vm2705, %v4418, %v4423
        %v4425 = vrot.slane %v4226, 2
        %v4426 = vsel %vm2705, %v4421, %v4425
        %v4427 = vrot.slane %v4227, 2
        %v4428 = vrot.slane %v3781, 2
        %v4429 = vsel %vm2705, %v4427, %v4428
        %v4430 = vrot.slane %v4228, 2
        %v4431 = vrot.slane %v3782, 2
        %v4432 = vsel %vm2705, %v4430, %v4431
        %v4433 = vrot.slane %v4229, 2
        %v4434 = vsel %vm2705, %v4428, %v4433
        %v4435 = vrot.slane %v4230, 2
        %v4436 = vsel %vm2705, %v4431, %v4435
        %v4437 = vrot.slane %v4231, 2
        %v4438 = vrot.slane %v3785, 2
        %v4439 = vsel %vm2705, %v4437, %v4438
        %v4440 = vrot.slane %v4232, 2
        %v4441 = vrot.slane %v3786, 2
        %v4442 = vsel %vm2705, %v4440, %v4441
        %v4443 = vrot.slane %v4233, 2
        %v4444 = vsel %vm2705, %v4438, %v4443
        %v4445 = vrot.slane %v4234, 2
        %v4446 = vsel %vm2705, %v4441, %v4445
        %v4447 = vrot.slane %v4235, 2
        %v4448 = vrot.slane %v3789, 2
        %v4449 = vsel %vm2705, %v4447, %v4448
        %v4450 = vrot.slane %v4236, 2
        %v4451 = vrot.slane %v3790, 2
        %v4452 = vsel %vm2705, %v4450, %v4451
        %v4453 = vrot.slane %v4237, 2
        %v4454 = vsel %vm2705, %v4448, %v4453
        %v4455 = vrot.slane %v4238, 2
        %v4456 = vsel %vm2705, %v4451, %v4455
        %v4457 = vrot.slane %v4239, 2
        %v4458 = vrot.slane %v3793, 2
        %v4459 = vsel %vm2705, %v4457, %v4458
        %v4460 = vrot.slane %v4240, 2
        %v4461 = vrot.slane %v3794, 2
        %v4462 = vsel %vm2705, %v4460, %v4461
        %v4463 = vrot.slane %v4241, 2
        %v4464 = vsel %vm2705, %v4458, %v4463
        %v4465 = vrot.slane %v4242, 2
        %v4466 = vsel %vm2705, %v4461, %v4465
        %v4531 = vld [vmem:[#allocation15] sm:$0xff]
        %v4532 = vld [vmem:[#allocation15 + $0x8] sm:$0xff]
        %v4533 = vld [vmem:[#allocation15 + $0x10] sm:$0xff]
        %v4534 = vld [vmem:[#allocation15 + $0x18] sm:$0xff]
        %v4535 = vld [vmem:[#allocation15 + $0x20] sm:$0xff]
        %v4536 = vld [vmem:[#allocation15 + $0x28] sm:$0xff]
        %v4537 = vld [vmem:[#allocation15 + $0x30] sm:$0xff]
        %v4538 = vld [vmem:[#allocation15 + $0x38] sm:$0xff]
        %v4539 = vld [vmem:[#allocation15 + $0x40] sm:$0xff]
        %v4540 = vld [vmem:[#allocation15 + $0x48] sm:$0xff]
        %v4541 = vld [vmem:[#allocation15 + $0x50] sm:$0xff]
        %v4542 = vld [vmem:[#allocation15 + $0x58] sm:$0xff]
        %v4543 = vld [vmem:[#allocation15 + $0x60] sm:$0xff]
        %v4544 = vld [vmem:[#allocation15 + $0x68] sm:$0xff]
        %v4545 = vld [vmem:[#allocation15 + $0x70] sm:$0xff]
        %v4546 = vld [vmem:[#allocation15 + $0x78] sm:$0xff]
        %v4547 = vld [vmem:[#allocation15 + $0x80] sm:$0xff]
        %v4548 = vld [vmem:[#allocation15 + $0x88] sm:$0xff]
        %v4549 = vld [vmem:[#allocation15 + $0x90] sm:$0xff]
        %v4550 = vld [vmem:[#allocation15 + $0x98] sm:$0xff]
        %v4551 = vld [vmem:[#allocation15 + $0xa0] sm:$0xff]
        %v4552 = vld [vmem:[#allocation15 + $0xa8] sm:$0xff]
        %v4553 = vld [vmem:[#allocation15 + $0xb0] sm:$0xff]
        %v4554 = vld [vmem:[#allocation15 + $0xb8] sm:$0xff]
        %v4555 = vld [vmem:[#allocation15 + $0xc0] sm:$0xff]
        %v4556 = vld [vmem:[#allocation15 + $0xc8] sm:$0xff]
        %v4557 = vld [vmem:[#allocation15 + $0xd0] sm:$0xff]
        %v4558 = vld [vmem:[#allocation15 + $0xd8] sm:$0xff]
        %v4559 = vld [vmem:[#allocation15 + $0xe0] sm:$0xff]
        %v4560 = vld [vmem:[#allocation15 + $0xe8] sm:$0xff]
        %v4561 = vld [vmem:[#allocation15 + $0xf0] sm:$0xff]
        %v4562 = vld [vmem:[#allocation15 + $0xf8] sm:$0xff]
        %v4563 = vld [vmem:[#allocation15 + $0x100] sm:$0xff]
        %v4564 = vld [vmem:[#allocation15 + $0x108] sm:$0xff]
        %v4565 = vld [vmem:[#allocation15 + $0x110] sm:$0xff]
        %v4566 = vld [vmem:[#allocation15 + $0x118] sm:$0xff]
        %v4567 = vld [vmem:[#allocation15 + $0x120] sm:$0xff]
        %v4568 = vld [vmem:[#allocation15 + $0x128] sm:$0xff]
        %v4569 = vld [vmem:[#allocation15 + $0x130] sm:$0xff]
        %v4570 = vld [vmem:[#allocation15 + $0x138] sm:$0xff]
        %v4571 = vld [vmem:[#allocation15 + $0x140] sm:$0xff]
        %v4572 = vld [vmem:[#allocation15 + $0x148] sm:$0xff]
        %v4573 = vld [vmem:[#allocation15 + $0x150] sm:$0xff]
        %v4574 = vld [vmem:[#allocation15 + $0x158] sm:$0xff]
        %v4575 = vld [vmem:[#allocation15 + $0x160] sm:$0xff]
        %v4576 = vld [vmem:[#allocation15 + $0x168] sm:$0xff]
        %v4577 = vld [vmem:[#allocation15 + $0x170] sm:$0xff]
        %v4578 = vld [vmem:[#allocation15 + $0x178] sm:$0xff]
        %v4579 = vld [vmem:[#allocation15 + $0x180] sm:$0xff]
        %v4580 = vld [vmem:[#allocation15 + $0x188] sm:$0xff]
        %v4581 = vld [vmem:[#allocation15 + $0x190] sm:$0xff]
        %v4582 = vld [vmem:[#allocation15 + $0x198] sm:$0xff]
        %v4583 = vld [vmem:[#allocation15 + $0x1a0] sm:$0xff]
        %v4584 = vld [vmem:[#allocation15 + $0x1a8] sm:$0xff]
        %v4585 = vld [vmem:[#allocation15 + $0x1b0] sm:$0xff]
        %v4586 = vld [vmem:[#allocation15 + $0x1b8] sm:$0xff]
        %v4587 = vld [vmem:[#allocation15 + $0x1c0] sm:$0xff]
        %v4588 = vld [vmem:[#allocation15 + $0x1c8] sm:$0xff]
        %v4589 = vld [vmem:[#allocation15 + $0x1d0] sm:$0xff]
        %v4590 = vld [vmem:[#allocation15 + $0x1d8] sm:$0xff]
        %v4591 = vld [vmem:[#allocation15 + $0x1e0] sm:$0xff]
        %v4592 = vld [vmem:[#allocation15 + $0x1e8] sm:$0xff]
        %v4593 = vld [vmem:[#allocation15 + $0x1f0] sm:$0xff]
        %v4594 = vld [vmem:[#allocation15 + $0x1f8] sm:$0xff]
        %v4595 = vld [vmem:[#allocation15 + $0x200] sm:$0xff]
        %v4596 = vld [vmem:[#allocation15 + $0x208] sm:$0xff]
        %v4597 = vld [vmem:[#allocation15 + $0x210] sm:$0xff]
        %v4598 = vld [vmem:[#allocation15 + $0x218] sm:$0xff]
        %v4599 = vld [vmem:[#allocation15 + $0x220] sm:$0xff]
        %v4600 = vld [vmem:[#allocation15 + $0x228] sm:$0xff]
        %v4601 = vld [vmem:[#allocation15 + $0x230] sm:$0xff]
        %v4602 = vld [vmem:[#allocation15 + $0x238] sm:$0xff]
        %v4603 = vld [vmem:[#allocation15 + $0x240] sm:$0xff]
        %v4604 = vld [vmem:[#allocation15 + $0x248] sm:$0xff]
        %v4605 = vld [vmem:[#allocation15 + $0x250] sm:$0xff]
        %v4606 = vld [vmem:[#allocation15 + $0x258] sm:$0xff]
        %v4607 = vld [vmem:[#allocation15 + $0x260] sm:$0xff]
        %v4608 = vld [vmem:[#allocation15 + $0x268] sm:$0xff]
        %v4609 = vld [vmem:[#allocation15 + $0x270] sm:$0xff]
        %v4610 = vld [vmem:[#allocation15 + $0x278] sm:$0xff]
        %v4611 = vld [vmem:[#allocation15 + $0x280] sm:$0xff]
        %v4612 = vld [vmem:[#allocation15 + $0x288] sm:$0xff]
        %v4613 = vld [vmem:[#allocation15 + $0x290] sm:$0xff]
        %v4614 = vld [vmem:[#allocation15 + $0x298] sm:$0xff]
        %v4615 = vld [vmem:[#allocation15 + $0x2a0] sm:$0xff]
        %v4616 = vld [vmem:[#allocation15 + $0x2a8] sm:$0xff]
        %v4617 = vld [vmem:[#allocation15 + $0x2b0] sm:$0xff]
        %v4618 = vld [vmem:[#allocation15 + $0x2b8] sm:$0xff]
        %v4619 = vld [vmem:[#allocation15 + $0x2c0] sm:$0xff]
        %v4620 = vld [vmem:[#allocation15 + $0x2c8] sm:$0xff]
        %v4621 = vld [vmem:[#allocation15 + $0x2d0] sm:$0xff]
        %v4622 = vld [vmem:[#allocation15 + $0x2d8] sm:$0xff]
        %v4623 = vld [vmem:[#allocation15 + $0x2e0] sm:$0xff]
        %v4624 = vld [vmem:[#allocation15 + $0x2e8] sm:$0xff]
        %v4625 = vld [vmem:[#allocation15 + $0x2f0] sm:$0xff]
        %v4626 = vld [vmem:[#allocation15 + $0x2f8] sm:$0xff]
        %v4627 = vld [vmem:[#allocation15 + $0x300] sm:$0xff]
        %v4628 = vld [vmem:[#allocation15 + $0x308] sm:$0xff]
        %v4629 = vld [vmem:[#allocation15 + $0x310] sm:$0xff]
        %v4630 = vld [vmem:[#allocation15 + $0x318] sm:$0xff]
        %v4631 = vld [vmem:[#allocation15 + $0x320] sm:$0xff]
        %v4632 = vld [vmem:[#allocation15 + $0x328] sm:$0xff]
        %v4633 = vld [vmem:[#allocation15 + $0x330] sm:$0xff]
        %v4634 = vld [vmem:[#allocation15 + $0x338] sm:$0xff]
        %v4635 = vld [vmem:[#allocation15 + $0x340] sm:$0xff]
        %v4636 = vld [vmem:[#allocation15 + $0x348] sm:$0xff]
        %v4637 = vld [vmem:[#allocation15 + $0x350] sm:$0xff]
        %v4638 = vld [vmem:[#allocation15 + $0x358] sm:$0xff]
        %v4639 = vld [vmem:[#allocation15 + $0x360] sm:$0xff]
        %v4640 = vld [vmem:[#allocation15 + $0x368] sm:$0xff]
        %v4641 = vld [vmem:[#allocation15 + $0x370] sm:$0xff]
        %v4642 = vld [vmem:[#allocation15 + $0x378] sm:$0xff]
        %v4643 = vld [vmem:[#allocation15 + $0x380] sm:$0xff]
        %v4644 = vld [vmem:[#allocation15 + $0x388] sm:$0xff]
        %v4645 = vld [vmem:[#allocation15 + $0x390] sm:$0xff]
        %v4646 = vld [vmem:[#allocation15 + $0x398] sm:$0xff]
        %v4647 = vld [vmem:[#allocation15 + $0x3a0] sm:$0xff]
        %v4648 = vld [vmem:[#allocation15 + $0x3a8] sm:$0xff]
        %v4649 = vld [vmem:[#allocation15 + $0x3b0] sm:$0xff]
        %v4650 = vld [vmem:[#allocation15 + $0x3b8] sm:$0xff]
        %v4651 = vld [vmem:[#allocation15 + $0x3c0] sm:$0xff]
        %v4652 = vld [vmem:[#allocation15 + $0x3c8] sm:$0xff]
        %v4653 = vld [vmem:[#allocation15 + $0x3d0] sm:$0xff]
        %v4654 = vld [vmem:[#allocation15 + $0x3d8] sm:$0xff]
        %v4655 = vld [vmem:[#allocation15 + $0x3e0] sm:$0xff]
        %v4656 = vld [vmem:[#allocation15 + $0x3e8] sm:$0xff]
        %v4657 = vld [vmem:[#allocation15 + $0x3f0] sm:$0xff]
        %v4658 = vld [vmem:[#allocation15 + $0x3f8] sm:$0xff]
        %v4659 = vld [vmem:[#allocation15 + $0x400] sm:$0xff]
        %v4660 = vld [vmem:[#allocation15 + $0x408] sm:$0xff]
        %v4661 = vld [vmem:[#allocation15 + $0x410] sm:$0xff]
        %v4662 = vld [vmem:[#allocation15 + $0x418] sm:$0xff]
        %v4663 = vld [vmem:[#allocation15 + $0x420] sm:$0xff]
        %v4664 = vld [vmem:[#allocation15 + $0x428] sm:$0xff]
        %v4665 = vld [vmem:[#allocation15 + $0x430] sm:$0xff]
        %v4666 = vld [vmem:[#allocation15 + $0x438] sm:$0xff]
        %v4667 = vld [vmem:[#allocation15 + $0x440] sm:$0xff]
        %v4668 = vld [vmem:[#allocation15 + $0x448] sm:$0xff]
        %v4669 = vld [vmem:[#allocation15 + $0x450] sm:$0xff]
        %v4670 = vld [vmem:[#allocation15 + $0x458] sm:$0xff]
        %v4671 = vld [vmem:[#allocation15 + $0x460] sm:$0xff]
        %v4672 = vld [vmem:[#allocation15 + $0x468] sm:$0xff]
        %v4673 = vld [vmem:[#allocation15 + $0x470] sm:$0xff]
        %v4674 = vld [vmem:[#allocation15 + $0x478] sm:$0xff]
        %v4675 = vld [vmem:[#allocation15 + $0x480] sm:$0xff]
        %v4676 = vld [vmem:[#allocation15 + $0x488] sm:$0xff]
        %v4677 = vld [vmem:[#allocation15 + $0x490] sm:$0xff]
        %v4678 = vld [vmem:[#allocation15 + $0x498] sm:$0xff]
        %v4679 = vld [vmem:[#allocation15 + $0x4a0] sm:$0xff]
        %v4680 = vld [vmem:[#allocation15 + $0x4a8] sm:$0xff]
        %v4681 = vld [vmem:[#allocation15 + $0x4b0] sm:$0xff]
        %v4682 = vld [vmem:[#allocation15 + $0x4b8] sm:$0xff]
        %v4683 = vld [vmem:[#allocation15 + $0x4c0] sm:$0xff]
        %v4684 = vld [vmem:[#allocation15 + $0x4c8] sm:$0xff]
        %v4685 = vld [vmem:[#allocation15 + $0x4d0] sm:$0xff]
        %v4686 = vld [vmem:[#allocation15 + $0x4d8] sm:$0xff]
        %v4687 = vld [vmem:[#allocation15 + $0x4e0] sm:$0xff]
        %v4688 = vld [vmem:[#allocation15 + $0x4e8] sm:$0xff]
        %v4689 = vld [vmem:[#allocation15 + $0x4f0] sm:$0xff]
        %v4690 = vld [vmem:[#allocation15 + $0x4f8] sm:$0xff]
        %v4691 = vld [vmem:[#allocation15 + $0x500] sm:$0xff]
        %v4692 = vld [vmem:[#allocation15 + $0x508] sm:$0xff]
        %v4693 = vld [vmem:[#allocation15 + $0x510] sm:$0xff]
        %v4694 = vld [vmem:[#allocation15 + $0x518] sm:$0xff]
        %v4695 = vld [vmem:[#allocation15 + $0x520] sm:$0xff]
        %v4696 = vld [vmem:[#allocation15 + $0x528] sm:$0xff]
        %v4697 = vld [vmem:[#allocation15 + $0x530] sm:$0xff]
        %v4698 = vld [vmem:[#allocation15 + $0x538] sm:$0xff]
        %v4699 = vld [vmem:[#allocation15 + $0x540] sm:$0xff]
        %v4700 = vld [vmem:[#allocation15 + $0x548] sm:$0xff]
        %v4701 = vld [vmem:[#allocation15 + $0x550] sm:$0xff]
        %v4702 = vld [vmem:[#allocation15 + $0x558] sm:$0xff]
        %v4703 = vld [vmem:[#allocation15 + $0x560] sm:$0xff]
        %v4704 = vld [vmem:[#allocation15 + $0x568] sm:$0xff]
        %v4705 = vld [vmem:[#allocation15 + $0x570] sm:$0xff]
        %v4706 = vld [vmem:[#allocation15 + $0x578] sm:$0xff]
        %v4707 = vld [vmem:[#allocation15 + $0x580] sm:$0xff]
        %v4708 = vld [vmem:[#allocation15 + $0x588] sm:$0xff]
        %v4709 = vld [vmem:[#allocation15 + $0x590] sm:$0xff]
        %v4710 = vld [vmem:[#allocation15 + $0x598] sm:$0xff]
        %v4711 = vld [vmem:[#allocation15 + $0x5a0] sm:$0xff]
        %v4712 = vld [vmem:[#allocation15 + $0x5a8] sm:$0xff]
        %v4713 = vld [vmem:[#allocation15 + $0x5b0] sm:$0xff]
        %v4714 = vld [vmem:[#allocation15 + $0x5b8] sm:$0xff]
        %v4715 = vld [vmem:[#allocation15 + $0x5c0] sm:$0xff]
        %v4716 = vld [vmem:[#allocation15 + $0x5c8] sm:$0xff]
        %v4717 = vld [vmem:[#allocation15 + $0x5d0] sm:$0xff]
        %v4718 = vld [vmem:[#allocation15 + $0x5d8] sm:$0xff]
        %v4719 = vld [vmem:[#allocation15 + $0x5e0] sm:$0xff]
        %v4720 = vld [vmem:[#allocation15 + $0x5e8] sm:$0xff]
        %v4721 = vld [vmem:[#allocation15 + $0x5f0] sm:$0xff]
        %v4722 = vld [vmem:[#allocation15 + $0x5f8] sm:$0xff]
        %v4723 = vld [vmem:[#allocation15 + $0x600] sm:$0xff]
        %v4724 = vld [vmem:[#allocation15 + $0x608] sm:$0xff]
        %v4725 = vld [vmem:[#allocation15 + $0x610] sm:$0xff]
        %v4726 = vld [vmem:[#allocation15 + $0x618] sm:$0xff]
        %v4727 = vld [vmem:[#allocation15 + $0x620] sm:$0xff]
        %v4728 = vld [vmem:[#allocation15 + $0x628] sm:$0xff]
        %v4729 = vld [vmem:[#allocation15 + $0x630] sm:$0xff]
        %v4730 = vld [vmem:[#allocation15 + $0x638] sm:$0xff]
        %v4731 = vld [vmem:[#allocation15 + $0x640] sm:$0xff]
        %v4732 = vld [vmem:[#allocation15 + $0x648] sm:$0xff]
        %v4733 = vld [vmem:[#allocation15 + $0x650] sm:$0xff]
        %v4734 = vld [vmem:[#allocation15 + $0x658] sm:$0xff]
        %v4735 = vld [vmem:[#allocation15 + $0x660] sm:$0xff]
        %v4736 = vld [vmem:[#allocation15 + $0x668] sm:$0xff]
        %v4737 = vld [vmem:[#allocation15 + $0x670] sm:$0xff]
        %v4738 = vld [vmem:[#allocation15 + $0x678] sm:$0xff]
        %v4739 = vld [vmem:[#allocation15 + $0x680] sm:$0xff]
        %v4740 = vld [vmem:[#allocation15 + $0x688] sm:$0xff]
        %v4741 = vld [vmem:[#allocation15 + $0x690] sm:$0xff]
        %v4742 = vld [vmem:[#allocation15 + $0x698] sm:$0xff]
        %v4743 = vld [vmem:[#allocation15 + $0x6a0] sm:$0xff]
        %v4744 = vld [vmem:[#allocation15 + $0x6a8] sm:$0xff]
        %v4745 = vld [vmem:[#allocation15 + $0x6b0] sm:$0xff]
        %v4746 = vld [vmem:[#allocation15 + $0x6b8] sm:$0xff]
        %v4747 = vld [vmem:[#allocation15 + $0x6c0] sm:$0xff]
        %v4748 = vld [vmem:[#allocation15 + $0x6c8] sm:$0xff]
        %v4749 = vld [vmem:[#allocation15 + $0x6d0] sm:$0xff]
        %v4750 = vld [vmem:[#allocation15 + $0x6d8] sm:$0xff]
        %v4751 = vld [vmem:[#allocation15 + $0x6e0] sm:$0xff]
        %v4752 = vld [vmem:[#allocation15 + $0x6e8] sm:$0xff]
        %v4753 = vld [vmem:[#allocation15 + $0x6f0] sm:$0xff]
        %v4754 = vld [vmem:[#allocation15 + $0x6f8] sm:$0xff]
        %v4755 = vld [vmem:[#allocation15 + $0x700] sm:$0xff]
        %v4756 = vld [vmem:[#allocation15 + $0x708] sm:$0xff]
        %v4757 = vld [vmem:[#allocation15 + $0x710] sm:$0xff]
        %v4758 = vld [vmem:[#allocation15 + $0x718] sm:$0xff]
        %v4759 = vld [vmem:[#allocation15 + $0x720] sm:$0xff]
        %v4760 = vld [vmem:[#allocation15 + $0x728] sm:$0xff]
        %v4761 = vld [vmem:[#allocation15 + $0x730] sm:$0xff]
        %v4762 = vld [vmem:[#allocation15 + $0x738] sm:$0xff]
        %v4763 = vld [vmem:[#allocation15 + $0x740] sm:$0xff]
        %v4764 = vld [vmem:[#allocation15 + $0x748] sm:$0xff]
        %v4765 = vld [vmem:[#allocation15 + $0x750] sm:$0xff]
        %v4766 = vld [vmem:[#allocation15 + $0x758] sm:$0xff]
        %v4767 = vld [vmem:[#allocation15 + $0x760] sm:$0xff]
        %v4768 = vld [vmem:[#allocation15 + $0x768] sm:$0xff]
        %v4769 = vld [vmem:[#allocation15 + $0x770] sm:$0xff]
        %v4770 = vld [vmem:[#allocation15 + $0x778] sm:$0xff]
        %v4771 = vld [vmem:[#allocation15 + $0x780] sm:$0xff]
        %v4772 = vld [vmem:[#allocation15 + $0x788] sm:$0xff]
        %v4773 = vld [vmem:[#allocation15 + $0x790] sm:$0xff]
        %v4774 = vld [vmem:[#allocation15 + $0x798] sm:$0xff]
        %v4775 = vld [vmem:[#allocation15 + $0x7a0] sm:$0xff]
        %v4776 = vld [vmem:[#allocation15 + $0x7a8] sm:$0xff]
        %v4777 = vld [vmem:[#allocation15 + $0x7b0] sm:$0xff]
        %v4778 = vld [vmem:[#allocation15 + $0x7b8] sm:$0xff]
        %v4779 = vld [vmem:[#allocation15 + $0x7c0] sm:$0xff]
        %v4780 = vld [vmem:[#allocation15 + $0x7c8] sm:$0xff]
        %v4781 = vld [vmem:[#allocation15 + $0x7d0] sm:$0xff]
        %v4782 = vld [vmem:[#allocation15 + $0x7d8] sm:$0xff]
        %v4783 = vld [vmem:[#allocation15 + $0x7e0] sm:$0xff]
        %v4784 = vld [vmem:[#allocation15 + $0x7e8] sm:$0xff]
        %v4785 = vld [vmem:[#allocation15 + $0x7f0] sm:$0xff]
        %v4786 = vld [vmem:[#allocation15 + $0x7f8] sm:$0xff]
        %v4787 = vld [vmem:[#allocation15 + $0x800] sm:$0xff]
        %v4788 = vld [vmem:[#allocation15 + $0x808] sm:$0xff]
        %v4789 = vld [vmem:[#allocation15 + $0x810] sm:$0xff]
        %v4790 = vld [vmem:[#allocation15 + $0x818] sm:$0xff]
        %v4791 = vld [vmem:[#allocation15 + $0x820] sm:$0xff]
        %v4792 = vld [vmem:[#allocation15 + $0x828] sm:$0xff]
        %v4793 = vld [vmem:[#allocation15 + $0x830] sm:$0xff]
        %v4794 = vld [vmem:[#allocation15 + $0x838] sm:$0xff]
        %v4795 = vld [vmem:[#allocation15 + $0x840] sm:$0xff]
        %v4796 = vld [vmem:[#allocation15 + $0x848] sm:$0xff]
        %v4797 = vld [vmem:[#allocation15 + $0x850] sm:$0xff]
        %v4798 = vld [vmem:[#allocation15 + $0x858] sm:$0xff]
        %v4799 = vld [vmem:[#allocation15 + $0x860] sm:$0xff]
        %v4800 = vld [vmem:[#allocation15 + $0x868] sm:$0xff]
        %v4801 = vld [vmem:[#allocation15 + $0x870] sm:$0xff]
        %v4802 = vld [vmem:[#allocation15 + $0x878] sm:$0xff]
        %v4803 = vld [vmem:[#allocation15 + $0x880] sm:$0xff]
        %v4804 = vld [vmem:[#allocation15 + $0x888] sm:$0xff]
        %v4805 = vld [vmem:[#allocation15 + $0x890] sm:$0xff]
        %v4806 = vld [vmem:[#allocation15 + $0x898] sm:$0xff]
        %v4807 = vld [vmem:[#allocation15 + $0x8a0] sm:$0xff]
        %v4808 = vld [vmem:[#allocation15 + $0x8a8] sm:$0xff]
        %v4809 = vld [vmem:[#allocation15 + $0x8b0] sm:$0xff]
        %v4810 = vld [vmem:[#allocation15 + $0x8b8] sm:$0xff]
        %v4811 = vld [vmem:[#allocation15 + $0x8c0] sm:$0xff]
        %v4812 = vld [vmem:[#allocation15 + $0x8c8] sm:$0xff]
        %v4813 = vld [vmem:[#allocation15 + $0x8d0] sm:$0xff]
        %v4814 = vld [vmem:[#allocation15 + $0x8d8] sm:$0xff]
        %v4815 = vld [vmem:[#allocation15 + $0x8e0] sm:$0xff]
        %v4816 = vld [vmem:[#allocation15 + $0x8e8] sm:$0xff]
        %v4817 = vld [vmem:[#allocation15 + $0x8f0] sm:$0xff]
        %v4818 = vld [vmem:[#allocation15 + $0x8f8] sm:$0xff]
        %v4819 = vld [vmem:[#allocation16] sm:$0x1]
        %v4821 = vlaneseq
        %v4822 = vshrl.u32 %v4821, 7
        %v4823 = vsub.s32 0, %v4822
        %v4824 = vrot.slane %v4819, %v4823
        %4826 = vmatprep.subr.mxu0 0.0
        %4827 = vmatpush1.msra.mxu0 %v4531
        %4828 = vmatprep.subr.mxu0 0.0
        %4829 = vmatpush1.msra.mxu0 %v4532
        %4830 = vmatprep.subr.mxu0 0.0
        %4831 = vmatpush1.msra.mxu0 %v4533
        %4832 = vmatprep.subr.mxu0 0.0
        %4833 = vmatpush1.msra.mxu0 %v4534
        %4834 = vmatprep.subr.mxu0 0.0
        %4835 = vmatpush1.msra.mxu0 %v4535
        %4836 = vmatprep.subr.mxu0 0.0
        %4837 = vmatpush1.msra.mxu0 %v4536
        %4838 = vmatprep.subr.mxu0 0.0
        %4839 = vmatpush1.msra.mxu0 %v4537
        %4840 = vmatprep.subr.mxu0 0.0
        %4841 = vmatpush1.msra.mxu0 %v4538
        %4842 = vmatprep.subr.mxu0 0.0
        %4843 = vmatpush1.msra.mxu0 %v4539
        %4844 = vmatprep.subr.mxu0 0.0
        %4845 = vmatpush1.msra.mxu0 %v4540
        %4846 = vmatprep.subr.mxu0 0.0
        %4847 = vmatpush1.msra.mxu0 %v4541
        %4848 = vmatprep.subr.mxu0 0.0
        %4849 = vmatpush1.msra.mxu0 %v4542
        %4850 = vmatprep.subr.mxu0 0.0
        %4851 = vmatpush1.msra.mxu0 %v4543
        %4852 = vmatprep.subr.mxu0 0.0
        %4853 = vmatpush1.msra.mxu0 %v4544
        %4854 = vmatprep.subr.mxu0 0.0
        %4855 = vmatpush1.msra.mxu0 %v4545
        %4856 = vmatprep.subr.mxu0 0.0
        %4857 = vmatpush1.msra.mxu0 %v4546
        %4858 = vmatprep.subr.mxu0 0.0
        %4859 = vmatpush1.msra.mxu0 %v4547
        %4860 = vmatprep.subr.mxu0 0.0
        %4861 = vmatpush1.msra.mxu0 %v4548
        %4862 = vmatprep.subr.mxu0 0.0
        %4863 = vmatpush1.msra.mxu0 %v4549
        %4864 = vmatprep.subr.mxu0 0.0
        %4865 = vmatpush1.msra.mxu0 %v4550
        %4866 = vmatprep.subr.mxu0 0.0
        %4867 = vmatpush1.msra.mxu0 %v4551
        %4868 = vmatprep.subr.mxu0 0.0
        %4869 = vmatpush1.msra.mxu0 %v4552
        %4870 = vmatprep.subr.mxu0 0.0
        %4871 = vmatpush1.msra.mxu0 %v4553
        %4872 = vmatprep.subr.mxu0 0.0
        %4873 = vmatpush1.msra.mxu0 %v4554
        %4874 = vmatprep.subr.mxu0 0.0
        %4875 = vmatpush1.msra.mxu0 %v4555
        %4876 = vmatprep.subr.mxu0 0.0
        %4877 = vmatpush1.msra.mxu0 %v4556
        %4878 = vmatprep.subr.mxu0 0.0
        %4879 = vmatpush1.msra.mxu0 %v4557
        %4880 = vmatprep.subr.mxu0 0.0
        %4881 = vmatpush1.msra.mxu0 %v4558
        %4882 = vmatprep.subr.mxu0 0.0
        %4883 = vmatpush1.msra.mxu0 %v4559
        %4884 = vmatprep.subr.mxu0 0.0
        %4885 = vmatpush1.msra.mxu0 %v4560
        %4886 = vmatprep.subr.mxu0 0.0
        %4887 = vmatpush1.msra.mxu0 %v4561
        %4888 = vmatprep.subr.mxu0 0.0
        %4889 = vmatpush1.msra.mxu0 %v4562
        %4890 = vmatprep.mubr.f32.mxu0 %v2129
        %4891 = vmatmul.mubr.f32.gmra.mrb[0].mxu0 %v2128
        %v4892 = vpop.f32.mrb[0].mxu0
        %v4893 = vadd.f32 %v4824, %v4892
        %v4894 = vpop.f32.mrb[0].mxu0
        %4895 = vmatprep.mubr.f32.mxu0 %v2131
        %4896 = vmatmul.mubr.f32.gmra.mrb[0].mxu0 %v2130
        %v4897 = vpop.f32.mrb[0].mxu0
        %v4898 = vadd.f32 %v4824, %v4897
        %v4899 = vpop.f32.mrb[0].mxu0
        %4900 = vmatprep.mubr.f32.mxu0 %v2133
        %4901 = vmatmul.mubr.f32.gmra.mrb[0].mxu0 %v2132
        %v4902 = vpop.f32.mrb[0].mxu0
        %v4903 = vadd.f32 %v4824, %v4902
        %v4904 = vpop.f32.mrb[0].mxu0
        %4905 = vmatprep.mubr.f32.mxu0 %v2135
        %4906 = vmatmul.mubr.f32.gmra.mrb[0].mxu0 %v2134
        %v4907 = vpop.f32.mrb[0].mxu0
        %v4908 = vadd.f32 %v4824, %v4907
        %v4909 = vpop.f32.mrb[0].mxu0
        %4910 = vmatprep.mubr.f32.mxu0 %v2137
        %4911 = vmatmul.mubr.f32.gmra.mrb[0].mxu0 %v2136
        %v4912 = vpop.f32.mrb[0].mxu0
        %v4913 = vadd.f32 %v4824, %v4912
        %v4914 = vpop.f32.mrb[0].mxu0
        %4915 = vmatprep.mubr.f32.mxu0 %v2139
        %4916 = vmatmul.mubr.f32.gmra.mrb[0].mxu0 %v2138
        %v4917 = vpop.f32.mrb[0].mxu0
        %v4918 = vadd.f32 %v4824, %v4917
        %v4919 = vpop.f32.mrb[0].mxu0
        %4920 = vmatprep.mubr.f32.mxu0 %v2141
        %4921 = vmatmul.mubr.f32.gmra.mrb[0].mxu0 %v2140
        %v4922 = vpop.f32.mrb[0].mxu0
        %v4923 = vadd.f32 %v4824, %v4922
        %v4924 = vpop.f32.mrb[0].mxu0
        %4925 = vmatprep.mubr.f32.mxu0 %v2143
        %4926 = vmatmul.mubr.f32.gmra.mrb[0].mxu0 %v2142
        %v4927 = vpop.f32.mrb[0].mxu0
        %v4928 = vadd.f32 %v4824, %v4927
        %v4929 = vpop.f32.mrb[0].mxu0
        %4930 = vmatprep.mubr.f32.mxu0 %v2145
        %4931 = vmatmul.mubr.f32.gmra.mrb[0].mxu0 %v2144
        %v4932 = vpop.f32.mrb[0].mxu0
        %v4933 = vadd.f32 %v4824, %v4932
        %v4934 = vpop.f32.mrb[0].mxu0
        %4935 = vmatprep.mubr.f32.mxu0 %v2147
        %4936 = vmatmul.mubr.f32.gmra.mrb[0].mxu0 %v2146
        %v4937 = vpop.f32.mrb[0].mxu0
        %v4938 = vadd.f32 %v4824, %v4937
        %v4939 = vpop.f32.mrb[0].mxu0
        %4940 = vmatprep.mubr.f32.mxu0 %v2149
        %4941 = vmatmul.mubr.f32.gmra.mrb[0].mxu0 %v2148
        %v4942 = vpop.f32.mrb[0].mxu0
        %v4943 = vadd.f32 %v4824, %v4942
        %v4944 = vpop.f32.mrb[0].mxu0
        %4945 = vmatprep.mubr.f32.mxu0 %v2151
        %4946 = vmatmul.mubr.f32.gmra.mrb[0].mxu0 %v2150
        %v4947 = vpop.f32.mrb[0].mxu0
        %v4948 = vadd.f32 %v4824, %v4947
        %v4949 = vpop.f32.mrb[0].mxu0
        %4950 = vmatprep.mubr.f32.mxu0 %v2153
        %4951 = vmatmul.mubr.f32.gmra.mrb[0].mxu0 %v2152
        %v4952 = vpop.f32.mrb[0].mxu0
        %v4953 = vadd.f32 %v4824, %v4952
        %v4954 = vpop.f32.mrb[0].mxu0
        %4955 = vmatprep.mubr.f32.mxu0 %v2155
        %4956 = vmatmul.mubr.f32.gmra.mrb[0].mxu0 %v2154
        %v4957 = vpop.f32.mrb[0].mxu0
        %v4958 = vadd.f32 %v4824, %v4957
        %v4959 = vpop.f32.mrb[0].mxu0
        %4960 = vmatprep.mubr.f32.mxu0 %v2157
        %4961 = vmatmul.mubr.f32.gmra.mrb[0].mxu0 %v2156
        %v4962 = vpop.f32.mrb[0].mxu0
        %v4963 = vadd.f32 %v4824, %v4962
        %v4964 = vpop.f32.mrb[0].mxu0
        %4965 = vmatprep.mubr.f32.mxu0 %v2159
        %4966 = vmatmul.mubr.f32.gmra.mrb[0].mxu0 %v2158
        %v4967 = vpop.f32.mrb[0].mxu0
        %v4968 = vadd.f32 %v4824, %v4967
        %v4969 = vpop.f32.mrb[0].mxu0
        %4970 = vmatprep.mubr.f32.mxu0 %v2161
        %4971 = vmatmul.mubr.f32.gmra.mrb[0].mxu0 %v2160
        %v4972 = vpop.f32.mrb[0].mxu0
        %v4973 = vadd.f32 %v4824, %v4972
        %v4974 = vpop.f32.mrb[0].mxu0
        %4975 = vmatprep.mubr.f32.mxu0 %v2163
        %4976 = vmatmul.mubr.f32.gmra.mrb[0].mxu0 %v2162
        %v4977 = vpop.f32.mrb[0].mxu0
        %v4978 = vadd.f32 %v4824, %v4977
        %v4979 = vpop.f32.mrb[0].mxu0
        %4980 = vmatprep.mubr.f32.mxu0 %v2165
        %4981 = vmatmul.mubr.f32.gmra.mrb[0].mxu0 %v2164
        %v4982 = vpop.f32.mrb[0].mxu0
        %v4983 = vadd.f32 %v4824, %v4982
        %v4984 = vpop.f32.mrb[0].mxu0
        %4985 = vmatprep.mubr.f32.mxu0 %v2167
        %4986 = vmatmul.mubr.f32.gmra.mrb[0].mxu0 %v2166
        %v4987 = vpop.f32.mrb[0].mxu0
        %v4988 = vadd.f32 %v4824, %v4987
        %v4989 = vpop.f32.mrb[0].mxu0
        %4990 = vmatprep.mubr.f32.mxu0 %v2169
        %4991 = vmatmul.mubr.f32.gmra.mrb[0].mxu0 %v2168
        %v4992 = vpop.f32.mrb[0].mxu0
        %v4993 = vadd.f32 %v4824, %v4992
        %v4994 = vpop.f32.mrb[0].mxu0
        %4995 = vmatprep.mubr.f32.mxu0 %v2171
        %4996 = vmatmul.mubr.f32.gmra.mrb[0].mxu0 %v2170
        %v4997 = vpop.f32.mrb[0].mxu0
        %v4998 = vadd.f32 %v4824, %v4997
        %v4999 = vpop.f32.mrb[0].mxu0
        %5000 = vmatprep.mubr.f32.mxu0 %v2173
        %5001 = vmatmul.mubr.f32.gmra.mrb[0].mxu0 %v2172
        %v5002 = vpop.f32.mrb[0].mxu0
        %v5003 = vadd.f32 %v4824, %v5002
        %v5004 = vpop.f32.mrb[0].mxu0
        %5005 = vmatprep.mubr.f32.mxu0 %v2175
        %5006 = vmatmul.mubr.f32.gmra.mrb[0].mxu0 %v2174
        %v5007 = vpop.f32.mrb[0].mxu0
        %v5008 = vadd.f32 %v4824, %v5007
        %v5009 = vpop.f32.mrb[0].mxu0
        %5010 = vmatprep.mubr.f32.mxu0 %v2177
        %5011 = vmatmul.mubr.f32.gmra.mrb[0].mxu0 %v2176
        %v5012 = vpop.f32.mrb[0].mxu0
        %v5013 = vadd.f32 %v4824, %v5012
        %v5014 = vpop.f32.mrb[0].mxu0
        %5015 = vmatprep.mubr.f32.mxu0 %v2179
        %5016 = vmatmul.mubr.f32.gmra.mrb[0].mxu0 %v2178
        %v5017 = vpop.f32.mrb[0].mxu0
        %v5018 = vadd.f32 %v4824, %v5017
        %v5019 = vpop.f32.mrb[0].mxu0
        %5020 = vmatprep.mubr.f32.mxu0 %v2181
        %5021 = vmatmul.mubr.f32.gmra.mrb[0].mxu0 %v2180
        %v5022 = vpop.f32.mrb[0].mxu0
        %v5023 = vadd.f32 %v4824, %v5022
        %v5024 = vpop.f32.mrb[0].mxu0
        %5025 = vmatprep.mubr.f32.mxu0 %v2183
        %5026 = vmatmul.mubr.f32.gmra.mrb[0].mxu0 %v2182
        %v5027 = vpop.f32.mrb[0].mxu0
        %v5028 = vadd.f32 %v4824, %v5027
        %v5029 = vpop.f32.mrb[0].mxu0
        %5030 = vmatprep.mubr.f32.mxu0 %v2185
        %5031 = vmatmul.mubr.f32.gmra.mrb[0].mxu0 %v2184
        %v5032 = vpop.f32.mrb[0].mxu0
        %v5033 = vadd.f32 %v4824, %v5032
        %v5034 = vpop.f32.mrb[0].mxu0
        %5035 = vmatprep.mubr.f32.mxu0 %v2187
        %5036 = vmatmul.mubr.f32.gmra.mrb[0].mxu0 %v2186
        %v5037 = vpop.f32.mrb[0].mxu0
        %v5038 = vadd.f32 %v4824, %v5037
        %v5039 = vpop.f32.mrb[0].mxu0
        %5040 = vmatprep.mubr.f32.mxu0 %v2189
        %5041 = vmatmul.mubr.f32.gmra.mrb[0].mxu0 %v2188
        %v5042 = vpop.f32.mrb[0].mxu0
        %v5043 = vadd.f32 %v4824, %v5042
        %v5044 = vpop.f32.mrb[0].mxu0
        %5045 = vmatprep.mubr.f32.mxu0 %v2191
        %5046 = vmatmul.mubr.f32.gmra.mrb[0].mxu0 %v2190
        %v5047 = vpop.f32.mrb[0].mxu0
        %v5048 = vadd.f32 %v4824, %v5047
        %v5049 = vpop.f32.mrb[0].mxu0
        %5050 = vdwg.mxu0
        %5051 = vmatprep.subr.mxu0 0.0
        %5052 = vmatpush1.msra.mxu0 %v4563
        %5053 = vmatprep.subr.mxu0 0.0
        %5054 = vmatpush1.msra.mxu0 %v4564
        %5055 = vmatprep.subr.mxu0 0.0
        %5056 = vmatpush1.msra.mxu0 %v4565
        %5057 = vmatprep.subr.mxu0 0.0
        %5058 = vmatpush1.msra.mxu0 %v4566
        %5059 = vmatprep.subr.mxu0 0.0
        %5060 = vmatpush1.msra.mxu0 %v4567
        %5061 = vmatprep.subr.mxu0 0.0
        %5062 = vmatpush1.msra.mxu0 %v4568
        %5063 = vmatprep.subr.mxu0 0.0
        %5064 = vmatpush1.msra.mxu0 %v4569
        %5065 = vmatprep.subr.mxu0 0.0
        %5066 = vmatpush1.msra.mxu0 %v4570
        %5067 = vmatprep.subr.mxu0 0.0
        %5068 = vmatpush1.msra.mxu0 %v4571
        %5069 = vmatprep.subr.mxu0 0.0
        %5070 = vmatpush1.msra.mxu0 %v4572
        %5071 = vmatprep.subr.mxu0 0.0
        %5072 = vmatpush1.msra.mxu0 %v4573
        %5073 = vmatprep.subr.mxu0 0.0
        %5074 = vmatpush1.msra.mxu0 %v4574
        %5075 = vmatprep.subr.mxu0 0.0
        %5076 = vmatpush1.msra.mxu0 %v4575
        %5077 = vmatprep.subr.mxu0 0.0
        %5078 = vmatpush1.msra.mxu0 %v4576
        %5079 = vmatprep.subr.mxu0 0.0
        %5080 = vmatpush1.msra.mxu0 %v4577
        %5081 = vmatprep.subr.mxu0 0.0
        %5082 = vmatpush1.msra.mxu0 %v4578
        %5083 = vmatprep.subr.mxu0 0.0
        %5084 = vmatpush1.msra.mxu0 %v4579
        %5085 = vmatprep.subr.mxu0 0.0
        %5086 = vmatpush1.msra.mxu0 %v4580
        %5087 = vmatprep.subr.mxu0 0.0
        %5088 = vmatpush1.msra.mxu0 %v4581
        %5089 = vmatprep.subr.mxu0 0.0
        %5090 = vmatpush1.msra.mxu0 %v4582
        %5091 = vmatprep.subr.mxu0 0.0
        %5092 = vmatpush1.msra.mxu0 %v4583
        %5093 = vmatprep.subr.mxu0 0.0
        %5094 = vmatpush1.msra.mxu0 %v4584
        %5095 = vmatprep.subr.mxu0 0.0
        %5096 = vmatpush1.msra.mxu0 %v4585
        %5097 = vmatprep.subr.mxu0 0.0
        %5098 = vmatpush1.msra.mxu0 %v4586
        %5099 = vmatprep.subr.mxu0 0.0
        %5100 = vmatpush1.msra.mxu0 %v4587
        %5101 = vmatprep.subr.mxu0 0.0
        %5102 = vmatpush1.msra.mxu0 %v4588
        %5103 = vmatprep.subr.mxu0 0.0
        %5104 = vmatpush1.msra.mxu0 %v4589
        %5105 = vmatprep.subr.mxu0 0.0
        %5106 = vmatpush1.msra.mxu0 %v4590
        %5107 = vmatprep.subr.mxu0 0.0
        %5108 = vmatpush1.msra.mxu0 %v4591
        %5109 = vmatprep.subr.mxu0 0.0
        %5110 = vmatpush1.msra.mxu0 %v4592
        %5111 = vmatprep.subr.mxu0 0.0
        %5112 = vmatpush1.msra.mxu0 %v4593
        %5113 = vmatprep.subr.mxu0 0.0
        %5114 = vmatpush1.msra.mxu0 %v4594
        %5115 = vmatprep.mubr.f32.mxu0 %v2358
        %5116 = vmatmul.mubr.f32.gmra.mrb[0].mxu0 %v2355
        %v5117 = vpop.f32.mrb[0].mxu0
        %v5118 = vadd.f32 %v4893, %v5117
        %v5119 = vpop.f32.mrb[0].mxu0
        %5120 = vmatprep.mubr.f32.mxu0 %v2362
        %5121 = vmatmul.mubr.f32.gmra.mrb[0].mxu0 %v2360
        %v5122 = vpop.f32.mrb[0].mxu0
        %v5123 = vadd.f32 %v4898, %v5122
        %v5124 = vpop.f32.mrb[0].mxu0
        %5125 = vmatprep.mubr.f32.mxu0 %v2368
        %5126 = vmatmul.mubr.f32.gmra.mrb[0].mxu0 %v2365
        %v5127 = vpop.f32.mrb[0].mxu0
        %v5128 = vadd.f32 %v4903, %v5127
        %v5129 = vpop.f32.mrb[0].mxu0
        %5130 = vmatprep.mubr.f32.mxu0 %v2372
        %5131 = vmatmul.mubr.f32.gmra.mrb[0].mxu0 %v2370
        %v5132 = vpop.f32.mrb[0].mxu0
        %v5133 = vadd.f32 %v4908, %v5132
        %v5134 = vpop.f32.mrb[0].mxu0
        %5135 = vmatprep.mubr.f32.mxu0 %v2378
        %5136 = vmatmul.mubr.f32.gmra.mrb[0].mxu0 %v2375
        %v5137 = vpop.f32.mrb[0].mxu0
        %v5138 = vadd.f32 %v4913, %v5137
        %v5139 = vpop.f32.mrb[0].mxu0
        %5140 = vmatprep.mubr.f32.mxu0 %v2382
        %5141 = vmatmul.mubr.f32.gmra.mrb[0].mxu0 %v2380
        %v5142 = vpop.f32.mrb[0].mxu0
        %v5143 = vadd.f32 %v4918, %v5142
        %v5144 = vpop.f32.mrb[0].mxu0
        %5145 = vmatprep.mubr.f32.mxu0 %v2388
        %5146 = vmatmul.mubr.f32.gmra.mrb[0].mxu0 %v2385
        %v5147 = vpop.f32.mrb[0].mxu0
        %v5148 = vadd.f32 %v4923, %v5147
        %v5149 = vpop.f32.mrb[0].mxu0
        %5150 = vmatprep.mubr.f32.mxu0 %v2392
        %5151 = vmatmul.mubr.f32.gmra.mrb[0].mxu0 %v2390
        %v5152 = vpop.f32.mrb[0].mxu0
        %v5153 = vadd.f32 %v4928, %v5152
        %v5154 = vpop.f32.mrb[0].mxu0
        %5155 = vmatprep.mubr.f32.mxu0 %v2398
        %5156 = vmatmul.mubr.f32.gmra.mrb[0].mxu0 %v2395
        %v5157 = vpop.f32.mrb[0].mxu0
        %v5158 = vadd.f32 %v4933, %v5157
        %v5159 = vpop.f32.mrb[0].mxu0
        %5160 = vmatprep.mubr.f32.mxu0 %v2402
        %5161 = vmatmul.mubr.f32.gmra.mrb[0].mxu0 %v2400
        %v5162 = vpop.f32.mrb[0].mxu0
        %v5163 = vadd.f32 %v4938, %v5162
        %v5164 = vpop.f32.mrb[0].mxu0
        %5165 = vmatprep.mubr.f32.mxu0 %v2408
        %5166 = vmatmul.mubr.f32.gmra.mrb[0].mxu0 %v2405
        %v5167 = vpop.f32.mrb[0].mxu0
        %v5168 = vadd.f32 %v4943, %v5167
        %v5169 = vpop.f32.mrb[0].mxu0
        %5170 = vmatprep.mubr.f32.mxu0 %v2412
        %5171 = vmatmul.mubr.f32.gmra.mrb[0].mxu0 %v2410
        %v5172 = vpop.f32.mrb[0].mxu0
        %v5173 = vadd.f32 %v4948, %v5172
        %v5174 = vpop.f32.mrb[0].mxu0
        %5175 = vmatprep.mubr.f32.mxu0 %v2418
        %5176 = vmatmul.mubr.f32.gmra.mrb[0].mxu0 %v2415
        %v5177 = vpop.f32.mrb[0].mxu0
        %v5178 = vadd.f32 %v4953, %v5177
        %v5179 = vpop.f32.mrb[0].mxu0
        %5180 = vmatprep.mubr.f32.mxu0 %v2422
        %5181 = vmatmul.mubr.f32.gmra.mrb[0].mxu0 %v2420
        %v5182 = vpop.f32.mrb[0].mxu0
        %v5183 = vadd.f32 %v4958, %v5182
        %v5184 = vpop.f32.mrb[0].mxu0
        %5185 = vmatprep.mubr.f32.mxu0 %v2428
        %5186 = vmatmul.mubr.f32.gmra.mrb[0].mxu0 %v2425
        %v5187 = vpop.f32.mrb[0].mxu0
        %v5188 = vadd.f32 %v4963, %v5187
        %v5189 = vpop.f32.mrb[0].mxu0
        %5190 = vmatprep.mubr.f32.mxu0 %v2432
        %5191 = vmatmul.mubr.f32.gmra.mrb[0].mxu0 %v2430
        %v5192 = vpop.f32.mrb[0].mxu0
        %v5193 = vadd.f32 %v4968, %v5192
        %v5194 = vpop.f32.mrb[0].mxu0
        %5195 = vmatprep.mubr.f32.mxu0 %v2438
        %5196 = vmatmul.mubr.f32.gmra.mrb[0].mxu0 %v2435
        %v5197 = vpop.f32.mrb[0].mxu0
        %v5198 = vadd.f32 %v4973, %v5197
        %v5199 = vpop.f32.mrb[0].mxu0
        %5200 = vmatprep.mubr.f32.mxu0 %v2442
        %5201 = vmatmul.mubr.f32.gmra.mrb[0].mxu0 %v2440
        %v5202 = vpop.f32.mrb[0].mxu0
        %v5203 = vadd.f32 %v4978, %v5202
        %v5204 = vpop.f32.mrb[0].mxu0
        %5205 = vmatprep.mubr.f32.mxu0 %v2448
        %5206 = vmatmul.mubr.f32.gmra.mrb[0].mxu0 %v2445
        %v5207 = vpop.f32.mrb[0].mxu0
        %v5208 = vadd.f32 %v4983, %v5207
        %v5209 = vpop.f32.mrb[0].mxu0
        %5210 = vmatprep.mubr.f32.mxu0 %v2452
        %5211 = vmatmul.mubr.f32.gmra.mrb[0].mxu0 %v2450
        %v5212 = vpop.f32.mrb[0].mxu0
        %v5213 = vadd.f32 %v4988, %v5212
        %v5214 = vpop.f32.mrb[0].mxu0
        %5215 = vmatprep.mubr.f32.mxu0 %v2458
        %5216 = vmatmul.mubr.f32.gmra.mrb[0].mxu0 %v2455
        %v5217 = vpop.f32.mrb[0].mxu0
        %v5218 = vadd.f32 %v4993, %v5217
        %v5219 = vpop.f32.mrb[0].mxu0
        %5220 = vmatprep.mubr.f32.mxu0 %v2462
        %5221 = vmatmul.mubr.f32.gmra.mrb[0].mxu0 %v2460
        %v5222 = vpop.f32.mrb[0].mxu0
        %v5223 = vadd.f32 %v4998, %v5222
        %v5224 = vpop.f32.mrb[0].mxu0
        %5225 = vmatprep.mubr.f32.mxu0 %v2468
        %5226 = vmatmul.mubr.f32.gmra.mrb[0].mxu0 %v2465
        %v5227 = vpop.f32.mrb[0].mxu0
        %v5228 = vadd.f32 %v5003, %v5227
        %v5229 = vpop.f32.mrb[0].mxu0
        %5230 = vmatprep.mubr.f32.mxu0 %v2472
        %5231 = vmatmul.mubr.f32.gmra.mrb[0].mxu0 %v2470
        %v5232 = vpop.f32.mrb[0].mxu0
        %v5233 = vadd.f32 %v5008, %v5232
        %v5234 = vpop.f32.mrb[0].mxu0
        %5235 = vmatprep.mubr.f32.mxu0 %v2478
        %5236 = vmatmul.mubr.f32.gmra.mrb[0].mxu0 %v2475
        %v5237 = vpop.f32.mrb[0].mxu0
        %v5238 = vadd.f32 %v5013, %v5237
        %v5239 = vpop.f32.mrb[0].mxu0
        %5240 = vmatprep.mubr.f32.mxu0 %v2482
        %5241 = vmatmul.mubr.f32.gmra.mrb[0].mxu0 %v2480
        %v5242 = vpop.f32.mrb[0].mxu0
        %v5243 = vadd.f32 %v5018, %v5242
        %v5244 = vpop.f32.mrb[0].mxu0
        %5245 = vmatprep.mubr.f32.mxu0 %v2488
        %5246 = vmatmul.mubr.f32.gmra.mrb[0].mxu0 %v2485
        %v5247 = vpop.f32.mrb[0].mxu0
        %v5248 = vadd.f32 %v5023, %v5247
        %v5249 = vpop.f32.mrb[0].mxu0
        %5250 = vmatprep.mubr.f32.mxu0 %v2492
        %5251 = vmatmul.mubr.f32.gmra.mrb[0].mxu0 %v2490
        %v5252 = vpop.f32.mrb[0].mxu0
        %v5253 = vadd.f32 %v5028, %v5252
        %v5254 = vpop.f32.mrb[0].mxu0
        %5255 = vmatprep.mubr.f32.mxu0 %v2498
        %5256 = vmatmul.mubr.f32.gmra.mrb[0].mxu0 %v2495
        %v5257 = vpop.f32.mrb[0].mxu0
        %v5258 = vadd.f32 %v5033, %v5257
        %v5259 = vpop.f32.mrb[0].mxu0
        %5260 = vmatprep.mubr.f32.mxu0 %v2502
        %5261 = vmatmul.mubr.f32.gmra.mrb[0].mxu0 %v2500
        %v5262 = vpop.f32.mrb[0].mxu0
        %v5263 = vadd.f32 %v5038, %v5262
        %v5264 = vpop.f32.mrb[0].mxu0
        %5265 = vmatprep.mubr.f32.mxu0 %v2508
        %5266 = vmatmul.mubr.f32.gmra.mrb[0].mxu0 %v2505
        %v5267 = vpop.f32.mrb[0].mxu0
        %v5268 = vadd.f32 %v5043, %v5267
        %v5269 = vpop.f32.mrb[0].mxu0
        %5270 = vmatprep.mubr.f32.mxu0 %v2512
        %5271 = vmatmul.mubr.f32.gmra.mrb[0].mxu0 %v2510
        %v5272 = vpop.f32.mrb[0].mxu0
        %v5273 = vadd.f32 %v5048, %v5272
        %v5274 = vpop.f32.mrb[0].mxu0
        %5275 = vdwg.mxu0
        %5276 = vmatprep.subr.mxu0 0.0
        %5277 = vmatpush1.msra.mxu0 %v4595
        %5278 = vmatprep.subr.mxu0 0.0
        %5279 = vmatpush1.msra.mxu0 %v4596
        %5280 = vmatprep.subr.mxu0 0.0
        %5281 = vmatpush1.msra.mxu0 %v4597
        %5282 = vmatprep.subr.mxu0 0.0
        %5283 = vmatpush1.msra.mxu0 %v4598
        %5284 = vmatprep.subr.mxu0 0.0
        %5285 = vmatpush1.msra.mxu0 %v4599
        %5286 = vmatprep.subr.mxu0 0.0
        %5287 = vmatpush1.msra.mxu0 %v4600
        %5288 = vmatprep.subr.mxu0 0.0
        %5289 = vmatpush1.msra.mxu0 %v4601
        %5290 = vmatprep.subr.mxu0 0.0
        %5291 = vmatpush1.msra.mxu0 %v4602
        %5292 = vmatprep.subr.mxu0 0.0
        %5293 = vmatpush1.msra.mxu0 %v4603
        %5294 = vmatprep.subr.mxu0 0.0
        %5295 = vmatpush1.msra.mxu0 %v4604
        %5296 = vmatprep.subr.mxu0 0.0
        %5297 = vmatpush1.msra.mxu0 %v4605
        %5298 = vmatprep.subr.mxu0 0.0
        %5299 = vmatpush1.msra.mxu0 %v4606
        %5300 = vmatprep.subr.mxu0 0.0
        %5301 = vmatpush1.msra.mxu0 %v4607
        %5302 = vmatprep.subr.mxu0 0.0
        %5303 = vmatpush1.msra.mxu0 %v4608
        %5304 = vmatprep.subr.mxu0 0.0
        %5305 = vmatpush1.msra.mxu0 %v4609
        %5306 = vmatprep.subr.mxu0 0.0
        %5307 = vmatpush1.msra.mxu0 %v4610
        %5308 = vmatprep.subr.mxu0 0.0
        %5309 = vmatpush1.msra.mxu0 %v4611
        %5310 = vmatprep.subr.mxu0 0.0
        %5311 = vmatpush1.msra.mxu0 %v4612
        %5312 = vmatprep.subr.mxu0 0.0
        %5313 = vmatpush1.msra.mxu0 %v4613
        %5314 = vmatprep.subr.mxu0 0.0
        %5315 = vmatpush1.msra.mxu0 %v4614
        %5316 = vmatprep.subr.mxu0 0.0
        %5317 = vmatpush1.msra.mxu0 %v4615
        %5318 = vmatprep.subr.mxu0 0.0
        %5319 = vmatpush1.msra.mxu0 %v4616
        %5320 = vmatprep.subr.mxu0 0.0
        %5321 = vmatpush1.msra.mxu0 %v4617
        %5322 = vmatprep.subr.mxu0 0.0
        %5323 = vmatpush1.msra.mxu0 %v4618
        %5324 = vmatprep.subr.mxu0 0.0
        %5325 = vmatpush1.msra.mxu0 %v4619
        %5326 = vmatprep.subr.mxu0 0.0
        %5327 = vmatpush1.msra.mxu0 %v4620
        %5328 = vmatprep.subr.mxu0 0.0
        %5329 = vmatpush1.msra.mxu0 %v4621
        %5330 = vmatprep.subr.mxu0 0.0
        %5331 = vmatpush1.msra.mxu0 %v4622
        %5332 = vmatprep.subr.mxu0 0.0
        %5333 = vmatpush1.msra.mxu0 %v4623
        %5334 = vmatprep.subr.mxu0 0.0
        %5335 = vmatpush1.msra.mxu0 %v4624
        %5336 = vmatprep.subr.mxu0 0.0
        %5337 = vmatpush1.msra.mxu0 %v4625
        %5338 = vmatprep.subr.mxu0 0.0
        %5339 = vmatpush1.msra.mxu0 %v4626
        %5340 = vmatprep.mubr.f32.mxu0 %v2711
        %5341 = vmatmul.mubr.f32.gmra.mrb[0].mxu0 %v2708
        %v5342 = vpop.f32.mrb[0].mxu0
        %v5343 = vadd.f32 %v5118, %v5342
        %v5344 = vpop.f32.mrb[0].mxu0
        %5345 = vmatprep.mubr.f32.mxu0 %v2715
        %5346 = vmatmul.mubr.f32.gmra.mrb[0].mxu0 %v2713
        %v5347 = vpop.f32.mrb[0].mxu0
        %v5348 = vadd.f32 %v5123, %v5347
        %v5349 = vpop.f32.mrb[0].mxu0
        %5350 = vmatprep.mubr.f32.mxu0 %v2721
        %5351 = vmatmul.mubr.f32.gmra.mrb[0].mxu0 %v2718
        %v5352 = vpop.f32.mrb[0].mxu0
        %v5353 = vadd.f32 %v5128, %v5352
        %v5354 = vpop.f32.mrb[0].mxu0
        %5355 = vmatprep.mubr.f32.mxu0 %v2725
        %5356 = vmatmul.mubr.f32.gmra.mrb[0].mxu0 %v2723
        %v5357 = vpop.f32.mrb[0].mxu0
        %v5358 = vadd.f32 %v5133, %v5357
        %v5359 = vpop.f32.mrb[0].mxu0
        %5360 = vmatprep.mubr.f32.mxu0 %v2731
        %5361 = vmatmul.mubr.f32.gmra.mrb[0].mxu0 %v2728
        %v5362 = vpop.f32.mrb[0].mxu0
        %v5363 = vadd.f32 %v5138, %v5362
        %v5364 = vpop.f32.mrb[0].mxu0
        %5365 = vmatprep.mubr.f32.mxu0 %v2735
        %5366 = vmatmul.mubr.f32.gmra.mrb[0].mxu0 %v2733
        %v5367 = vpop.f32.mrb[0].mxu0
        %v5368 = vadd.f32 %v5143, %v5367
        %v5369 = vpop.f32.mrb[0].mxu0
        %5370 = vmatprep.mubr.f32.mxu0 %v2741
        %5371 = vmatmul.mubr.f32.gmra.mrb[0].mxu0 %v2738
        %v5372 = vpop.f32.mrb[0].mxu0
        %v5373 = vadd.f32 %v5148, %v5372
        %v5374 = vpop.f32.mrb[0].mxu0
        %5375 = vmatprep.mubr.f32.mxu0 %v2745
        %5376 = vmatmul.mubr.f32.gmra.mrb[0].mxu0 %v2743
        %v5377 = vpop.f32.mrb[0].mxu0
        %v5378 = vadd.f32 %v5153, %v5377
        %v5379 = vpop.f32.mrb[0].mxu0
        %5380 = vmatprep.mubr.f32.mxu0 %v2751
        %5381 = vmatmul.mubr.f32.gmra.mrb[0].mxu0 %v2748
        %v5382 = vpop.f32.mrb[0].mxu0
        %v5383 = vadd.f32 %v5158, %v5382
        %v5384 = vpop.f32.mrb[0].mxu0
        %5385 = vmatprep.mubr.f32.mxu0 %v2755
        %5386 = vmatmul.mubr.f32.gmra.mrb[0].mxu0 %v2753
        %v5387 = vpop.f32.mrb[0].mxu0
        %v5388 = vadd.f32 %v5163, %v5387
        %v5389 = vpop.f32.mrb[0].mxu0
        %5390 = vmatprep.mubr.f32.mxu0 %v2761
        %5391 = vmatmul.mubr.f32.gmra.mrb[0].mxu0 %v2758
        %v5392 = vpop.f32.mrb[0].mxu0
        %v5393 = vadd.f32 %v5168, %v5392
        %v5394 = vpop.f32.mrb[0].mxu0
        %5395 = vmatprep.mubr.f32.mxu0 %v2765
        %5396 = vmatmul.mubr.f32.gmra.mrb[0].mxu0 %v2763
        %v5397 = vpop.f32.mrb[0].mxu0
        %v5398 = vadd.f32 %v5173, %v5397
        %v5399 = vpop.f32.mrb[0].mxu0
        %5400 = vmatprep.mubr.f32.mxu0 %v2771
        %5401 = vmatmul.mubr.f32.gmra.mrb[0].mxu0 %v2768
        %v5402 = vpop.f32.mrb[0].mxu0
        %v5403 = vadd.f32 %v5178, %v5402
        %v5404 = vpop.f32.mrb[0].mxu0
        %5405 = vmatprep.mubr.f32.mxu0 %v2775
        %5406 = vmatmul.mubr.f32.gmra.mrb[0].mxu0 %v2773
        %v5407 = vpop.f32.mrb[0].mxu0
        %v5408 = vadd.f32 %v5183, %v5407
        %v5409 = vpop.f32.mrb[0].mxu0
        %5410 = vmatprep.mubr.f32.mxu0 %v2781
        %5411 = vmatmul.mubr.f32.gmra.mrb[0].mxu0 %v2778
        %v5412 = vpop.f32.mrb[0].mxu0
        %v5413 = vadd.f32 %v5188, %v5412
        %v5414 = vpop.f32.mrb[0].mxu0
        %5415 = vmatprep.mubr.f32.mxu0 %v2785
        %5416 = vmatmul.mubr.f32.gmra.mrb[0].mxu0 %v2783
        %v5417 = vpop.f32.mrb[0].mxu0
        %v5418 = vadd.f32 %v5193, %v5417
        %v5419 = vpop.f32.mrb[0].mxu0
        %5420 = vmatprep.mubr.f32.mxu0 %v2791
        %5421 = vmatmul.mubr.f32.gmra.mrb[0].mxu0 %v2788
        %v5422 = vpop.f32.mrb[0].mxu0
        %v5423 = vadd.f32 %v5198, %v5422
        %v5424 = vpop.f32.mrb[0].mxu0
        %5425 = vmatprep.mubr.f32.mxu0 %v2795
        %5426 = vmatmul.mubr.f32.gmra.mrb[0].mxu0 %v2793
        %v5427 = vpop.f32.mrb[0].mxu0
        %v5428 = vadd.f32 %v5203, %v5427
        %v5429 = vpop.f32.mrb[0].mxu0
        %5430 = vmatprep.mubr.f32.mxu0 %v2801
        %5431 = vmatmul.mubr.f32.gmra.mrb[0].mxu0 %v2798
        %v5432 = vpop.f32.mrb[0].mxu0
        %v5433 = vadd.f32 %v5208, %v5432
        %v5434 = vpop.f32.mrb[0].mxu0
        %5435 = vmatprep.mubr.f32.mxu0 %v2805
        %5436 = vmatmul.mubr.f32.gmra.mrb[0].mxu0 %v2803
        %v5437 = vpop.f32.mrb[0].mxu0
        %v5438 = vadd.f32 %v5213, %v5437
        %v5439 = vpop.f32.mrb[0].mxu0
        %5440 = vmatprep.mubr.f32.mxu0 %v2811
        %5441 = vmatmul.mubr.f32.gmra.mrb[0].mxu0 %v2808
        %v5442 = vpop.f32.mrb[0].mxu0
        %v5443 = vadd.f32 %v5218, %v5442
        %v5444 = vpop.f32.mrb[0].mxu0
        %5445 = vmatprep.mubr.f32.mxu0 %v2815
        %5446 = vmatmul.mubr.f32.gmra.mrb[0].mxu0 %v2813
        %v5447 = vpop.f32.mrb[0].mxu0
        %v5448 = vadd.f32 %v5223, %v5447
        %v5449 = vpop.f32.mrb[0].mxu0
        %5450 = vmatprep.mubr.f32.mxu0 %v2821
        %5451 = vmatmul.mubr.f32.gmra.mrb[0].mxu0 %v2818
        %v5452 = vpop.f32.mrb[0].mxu0
        %v5453 = vadd.f32 %v5228, %v5452
        %v5454 = vpop.f32.mrb[0].mxu0
        %5455 = vmatprep.mubr.f32.mxu0 %v2825
        %5456 = vmatmul.mubr.f32.gmra.mrb[0].mxu0 %v2823
        %v5457 = vpop.f32.mrb[0].mxu0
        %v5458 = vadd.f32 %v5233, %v5457
        %v5459 = vpop.f32.mrb[0].mxu0
        %5460 = vmatprep.mubr.f32.mxu0 %v2831
        %5461 = vmatmul.mubr.f32.gmra.mrb[0].mxu0 %v2828
        %v5462 = vpop.f32.mrb[0].mxu0
        %v5463 = vadd.f32 %v5238, %v5462
        %v5464 = vpop.f32.mrb[0].mxu0
        %5465 = vmatprep.mubr.f32.mxu0 %v2835
        %5466 = vmatmul.mubr.f32.gmra.mrb[0].mxu0 %v2833
        %v5467 = vpop.f32.mrb[0].mxu0
        %v5468 = vadd.f32 %v5243, %v5467
        %v5469 = vpop.f32.mrb[0].mxu0
        %5470 = vmatprep.mubr.f32.mxu0 %v2841
        %5471 = vmatmul.mubr.f32.gmra.mrb[0].mxu0 %v2838
        %v5472 = vpop.f32.mrb[0].mxu0
        %v5473 = vadd.f32 %v5248, %v5472
        %v5474 = vpop.f32.mrb[0].mxu0
        %5475 = vmatprep.mubr.f32.mxu0 %v2845
        %5476 = vmatmul.mubr.f32.gmra.mrb[0].mxu0 %v2843
        %v5477 = vpop.f32.mrb[0].mxu0
        %v5478 = vadd.f32 %v5253, %v5477
        %v5479 = vpop.f32.mrb[0].mxu0
        %5480 = vmatprep.mubr.f32.mxu0 %v2851
        %5481 = vmatmul.mubr.f32.gmra.mrb[0].mxu0 %v2848
        %v5482 = vpop.f32.mrb[0].mxu0
        %v5483 = vadd.f32 %v5258, %v5482
        %v5484 = vpop.f32.mrb[0].mxu0
        %5485 = vmatprep.mubr.f32.mxu0 %v2855
        %5486 = vmatmul.mubr.f32.gmra.mrb[0].mxu0 %v2853
        %v5487 = vpop.f32.mrb[0].mxu0
        %v5488 = vadd.f32 %v5263, %v5487
        %v5489 = vpop.f32.mrb[0].mxu0
        %5490 = vmatprep.mubr.f32.mxu0 %v2861
        %5491 = vmatmul.mubr.f32.gmra.mrb[0].mxu0 %v2858
        %v5492 = vpop.f32.mrb[0].mxu0
        %v5493 = vadd.f32 %v5268, %v5492
        %v5494 = vpop.f32.mrb[0].mxu0
        %5495 = vmatprep.mubr.f32.mxu0 %v2865
        %5496 = vmatmul.mubr.f32.gmra.mrb[0].mxu0 %v2863
        %v5497 = vpop.f32.mrb[0].mxu0
        %v5498 = vadd.f32 %v5273, %v5497
        %v5499 = vpop.f32.mrb[0].mxu0
        %5500 = vdwg.mxu0
        %5501 = vmatprep.subr.mxu0 0.0
        %5502 = vmatpush1.msra.mxu0 %v4627
        %5503 = vmatprep.subr.mxu0 0.0
        %5504 = vmatpush1.msra.mxu0 %v4628
        %5505 = vmatprep.subr.mxu0 0.0
        %5506 = vmatpush1.msra.mxu0 %v4629
        %5507 = vmatprep.subr.mxu0 0.0
        %5508 = vmatpush1.msra.mxu0 %v4630
        %5509 = vmatprep.subr.mxu0 0.0
        %5510 = vmatpush1.msra.mxu0 %v4631
        %5511 = vmatprep.subr.mxu0 0.0
        %5512 = vmatpush1.msra.mxu0 %v4632
        %5513 = vmatprep.subr.mxu0 0.0
        %5514 = vmatpush1.msra.mxu0 %v4633
        %5515 = vmatprep.subr.mxu0 0.0
        %5516 = vmatpush1.msra.mxu0 %v4634
        %5517 = vmatprep.subr.mxu0 0.0
        %5518 = vmatpush1.msra.mxu0 %v4635
        %5519 = vmatprep.subr.mxu0 0.0
        %5520 = vmatpush1.msra.mxu0 %v4636
        %5521 = vmatprep.subr.mxu0 0.0
        %5522 = vmatpush1.msra.mxu0 %v4637
        %5523 = vmatprep.subr.mxu0 0.0
        %5524 = vmatpush1.msra.mxu0 %v4638
        %5525 = vmatprep.subr.mxu0 0.0
        %5526 = vmatpush1.msra.mxu0 %v4639
        %5527 = vmatprep.subr.mxu0 0.0
        %5528 = vmatpush1.msra.mxu0 %v4640
        %5529 = vmatprep.subr.mxu0 0.0
        %5530 = vmatpush1.msra.mxu0 %v4641
        %5531 = vmatprep.subr.mxu0 0.0
        %5532 = vmatpush1.msra.mxu0 %v4642
        %5533 = vmatprep.subr.mxu0 0.0
        %5534 = vmatpush1.msra.mxu0 %v4643
        %5535 = vmatprep.subr.mxu0 0.0
        %5536 = vmatpush1.msra.mxu0 %v4644
        %5537 = vmatprep.subr.mxu0 0.0
        %5538 = vmatpush1.msra.mxu0 %v4645
        %5539 = vmatprep.subr.mxu0 0.0
        %5540 = vmatpush1.msra.mxu0 %v4646
        %5541 = vmatprep.subr.mxu0 0.0
        %5542 = vmatpush1.msra.mxu0 %v4647
        %5543 = vmatprep.subr.mxu0 0.0
        %5544 = vmatpush1.msra.mxu0 %v4648
        %5545 = vmatprep.subr.mxu0 0.0
        %5546 = vmatpush1.msra.mxu0 %v4649
        %5547 = vmatprep.subr.mxu0 0.0
        %5548 = vmatpush1.msra.mxu0 %v4650
        %5549 = vmatprep.subr.mxu0 0.0
        %5550 = vmatpush1.msra.mxu0 %v4651
        %5551 = vmatprep.subr.mxu0 0.0
        %5552 = vmatpush1.msra.mxu0 %v4652
        %5553 = vmatprep.subr.mxu0 0.0
        %5554 = vmatpush1.msra.mxu0 %v4653
        %5555 = vmatprep.subr.mxu0 0.0
        %5556 = vmatpush1.msra.mxu0 %v4654
        %5557 = vmatprep.subr.mxu0 0.0
        %5558 = vmatpush1.msra.mxu0 %v4655
        %5559 = vmatprep.subr.mxu0 0.0
        %5560 = vmatpush1.msra.mxu0 %v4656
        %5561 = vmatprep.subr.mxu0 0.0
        %5562 = vmatpush1.msra.mxu0 %v4657
        %5563 = vmatprep.subr.mxu0 0.0
        %5564 = vmatpush1.msra.mxu0 %v4658
        %5565 = vmatprep.mubr.f32.mxu0 %v2931
        %5566 = vmatmul.mubr.f32.gmra.mrb[0].mxu0 %v2930
        %v5567 = vpop.f32.mrb[0].mxu0
        %v5568 = vadd.f32 %v5343, %v5567
        %v5569 = vpop.f32.mrb[0].mxu0
        %5570 = vmatprep.mubr.f32.mxu0 %v2933
        %5571 = vmatmul.mubr.f32.gmra.mrb[0].mxu0 %v2932
        %v5572 = vpop.f32.mrb[0].mxu0
        %v5573 = vadd.f32 %v5348, %v5572
        %v5574 = vpop.f32.mrb[0].mxu0
        %5575 = vmatprep.mubr.f32.mxu0 %v2935
        %5576 = vmatmul.mubr.f32.gmra.mrb[0].mxu0 %v2934
        %v5577 = vpop.f32.mrb[0].mxu0
        %v5578 = vadd.f32 %v5353, %v5577
        %v5579 = vpop.f32.mrb[0].mxu0
        %5580 = vmatprep.mubr.f32.mxu0 %v2937
        %5581 = vmatmul.mubr.f32.gmra.mrb[0].mxu0 %v2936
        %v5582 = vpop.f32.mrb[0].mxu0
        %v5583 = vadd.f32 %v5358, %v5582
        %v5584 = vpop.f32.mrb[0].mxu0
        %5585 = vmatprep.mubr.f32.mxu0 %v2939
        %5586 = vmatmul.mubr.f32.gmra.mrb[0].mxu0 %v2938
        %v5587 = vpop.f32.mrb[0].mxu0
        %v5588 = vadd.f32 %v5363, %v5587
        %v5589 = vpop.f32.mrb[0].mxu0
        %5590 = vmatprep.mubr.f32.mxu0 %v2941
        %5591 = vmatmul.mubr.f32.gmra.mrb[0].mxu0 %v2940
        %v5592 = vpop.f32.mrb[0].mxu0
        %v5593 = vadd.f32 %v5368, %v5592
        %v5594 = vpop.f32.mrb[0].mxu0
        %5595 = vmatprep.mubr.f32.mxu0 %v2943
        %5596 = vmatmul.mubr.f32.gmra.mrb[0].mxu0 %v2942
        %v5597 = vpop.f32.mrb[0].mxu0
        %v5598 = vadd.f32 %v5373, %v5597
        %v5599 = vpop.f32.mrb[0].mxu0
        %5600 = vmatprep.mubr.f32.mxu0 %v2945
        %5601 = vmatmul.mubr.f32.gmra.mrb[0].mxu0 %v2944
        %v5602 = vpop.f32.mrb[0].mxu0
        %v5603 = vadd.f32 %v5378, %v5602
        %v5604 = vpop.f32.mrb[0].mxu0
        %5605 = vmatprep.mubr.f32.mxu0 %v2947
        %5606 = vmatmul.mubr.f32.gmra.mrb[0].mxu0 %v2946
        %v5607 = vpop.f32.mrb[0].mxu0
        %v5608 = vadd.f32 %v5383, %v5607
        %v5609 = vpop.f32.mrb[0].mxu0
        %5610 = vmatprep.mubr.f32.mxu0 %v2949
        %5611 = vmatmul.mubr.f32.gmra.mrb[0].mxu0 %v2948
        %v5612 = vpop.f32.mrb[0].mxu0
        %v5613 = vadd.f32 %v5388, %v5612
        %v5614 = vpop.f32.mrb[0].mxu0
        %5615 = vmatprep.mubr.f32.mxu0 %v2951
        %5616 = vmatmul.mubr.f32.gmra.mrb[0].mxu0 %v2950
        %v5617 = vpop.f32.mrb[0].mxu0
        %v5618 = vadd.f32 %v5393, %v5617
        %v5619 = vpop.f32.mrb[0].mxu0
        %5620 = vmatprep.mubr.f32.mxu0 %v2953
        %5621 = vmatmul.mubr.f32.gmra.mrb[0].mxu0 %v2952
        %v5622 = vpop.f32.mrb[0].mxu0
        %v5623 = vadd.f32 %v5398, %v5622
        %v5624 = vpop.f32.mrb[0].mxu0
        %5625 = vmatprep.mubr.f32.mxu0 %v2955
        %5626 = vmatmul.mubr.f32.gmra.mrb[0].mxu0 %v2954
        %v5627 = vpop.f32.mrb[0].mxu0
        %v5628 = vadd.f32 %v5403, %v5627
        %v5629 = vpop.f32.mrb[0].mxu0
        %5630 = vmatprep.mubr.f32.mxu0 %v2957
        %5631 = vmatmul.mubr.f32.gmra.mrb[0].mxu0 %v2956
        %v5632 = vpop.f32.mrb[0].mxu0
        %v5633 = vadd.f32 %v5408, %v5632
        %v5634 = vpop.f32.mrb[0].mxu0
        %5635 = vmatprep.mubr.f32.mxu0 %v2959
        %5636 = vmatmul.mubr.f32.gmra.mrb[0].mxu0 %v2958
        %v5637 = vpop.f32.mrb[0].mxu0
        %v5638 = vadd.f32 %v5413, %v5637
        %v5639 = vpop.f32.mrb[0].mxu0
        %5640 = vmatprep.mubr.f32.mxu0 %v2961
        %5641 = vmatmul.mubr.f32.gmra.mrb[0].mxu0 %v2960
        %v5642 = vpop.f32.mrb[0].mxu0
        %v5643 = vadd.f32 %v5418, %v5642
        %v5644 = vpop.f32.mrb[0].mxu0
        %5645 = vmatprep.mubr.f32.mxu0 %v2963
        %5646 = vmatmul.mubr.f32.gmra.mrb[0].mxu0 %v2962
        %v5647 = vpop.f32.mrb[0].mxu0
        %v5648 = vadd.f32 %v5423, %v5647
        %v5649 = vpop.f32.mrb[0].mxu0
        %5650 = vmatprep.mubr.f32.mxu0 %v2965
        %5651 = vmatmul.mubr.f32.gmra.mrb[0].mxu0 %v2964
        %v5652 = vpop.f32.mrb[0].mxu0
        %v5653 = vadd.f32 %v5428, %v5652
        %v5654 = vpop.f32.mrb[0].mxu0
        %5655 = vmatprep.mubr.f32.mxu0 %v2967
        %5656 = vmatmul.mubr.f32.gmra.mrb[0].mxu0 %v2966
        %v5657 = vpop.f32.mrb[0].mxu0
        %v5658 = vadd.f32 %v5433, %v5657
        %v5659 = vpop.f32.mrb[0].mxu0
        %5660 = vmatprep.mubr.f32.mxu0 %v2969
        %5661 = vmatmul.mubr.f32.gmra.mrb[0].mxu0 %v2968
        %v5662 = vpop.f32.mrb[0].mxu0
        %v5663 = vadd.f32 %v5438, %v5662
        %v5664 = vpop.f32.mrb[0].mxu0
        %5665 = vmatprep.mubr.f32.mxu0 %v2971
        %5666 = vmatmul.mubr.f32.gmra.mrb[0].mxu0 %v2970
        %v5667 = vpop.f32.mrb[0].mxu0
        %v5668 = vadd.f32 %v5443, %v5667
        %v5669 = vpop.f32.mrb[0].mxu0
        %5670 = vmatprep.mubr.f32.mxu0 %v2973
        %5671 = vmatmul.mubr.f32.gmra.mrb[0].mxu0 %v2972
        %v5672 = vpop.f32.mrb[0].mxu0
        %v5673 = vadd.f32 %v5448, %v5672
        %v5674 = vpop.f32.mrb[0].mxu0
        %5675 = vmatprep.mubr.f32.mxu0 %v2975
        %5676 = vmatmul.mubr.f32.gmra.mrb[0].mxu0 %v2974
        %v5677 = vpop.f32.mrb[0].mxu0
        %v5678 = vadd.f32 %v5453, %v5677
        %v5679 = vpop.f32.mrb[0].mxu0
        %5680 = vmatprep.mubr.f32.mxu0 %v2977
        %5681 = vmatmul.mubr.f32.gmra.mrb[0].mxu0 %v2976
        %v5682 = vpop.f32.mrb[0].mxu0
        %v5683 = vadd.f32 %v5458, %v5682
        %v5684 = vpop.f32.mrb[0].mxu0
        %5685 = vmatprep.mubr.f32.mxu0 %v2979
        %5686 = vmatmul.mubr.f32.gmra.mrb[0].mxu0 %v2978
        %v5687 = vpop.f32.mrb[0].mxu0
        %v5688 = vadd.f32 %v5463, %v5687
        %v5689 = vpop.f32.mrb[0].mxu0
        %5690 = vmatprep.mubr.f32.mxu0 %v2981
        %5691 = vmatmul.mubr.f32.gmra.mrb[0].mxu0 %v2980
        %v5692 = vpop.f32.mrb[0].mxu0
        %v5693 = vadd.f32 %v5468, %v5692
        %v5694 = vpop.f32.mrb[0].mxu0
        %5695 = vmatprep.mubr.f32.mxu0 %v2983
        %5696 = vmatmul.mubr.f32.gmra.mrb[0].mxu0 %v2982
        %v5697 = vpop.f32.mrb[0].mxu0
        %v5698 = vadd.f32 %v5473, %v5697
        %v5699 = vpop.f32.mrb[0].mxu0
        %5700 = vmatprep.mubr.f32.mxu0 %v2985
        %5701 = vmatmul.mubr.f32.gmra.mrb[0].mxu0 %v2984
        %v5702 = vpop.f32.mrb[0].mxu0
        %v5703 = vadd.f32 %v5478, %v5702
        %v5704 = vpop.f32.mrb[0].mxu0
        %5705 = vmatprep.mubr.f32.mxu0 %v2987
        %5706 = vmatmul.mubr.f32.gmra.mrb[0].mxu0 %v2986
        %v5707 = vpop.f32.mrb[0].mxu0
        %v5708 = vadd.f32 %v5483, %v5707
        %v5709 = vpop.f32.mrb[0].mxu0
        %5710 = vmatprep.mubr.f32.mxu0 %v2989
        %5711 = vmatmul.mubr.f32.gmra.mrb[0].mxu0 %v2988
        %v5712 = vpop.f32.mrb[0].mxu0
        %v5713 = vadd.f32 %v5488, %v5712
        %v5714 = vpop.f32.mrb[0].mxu0
        %5715 = vmatprep.mubr.f32.mxu0 %v2991
        %5716 = vmatmul.mubr.f32.gmra.mrb[0].mxu0 %v2990
        %v5717 = vpop.f32.mrb[0].mxu0
        %v5718 = vadd.f32 %v5493, %v5717
        %v5719 = vpop.f32.mrb[0].mxu0
        %5720 = vmatprep.mubr.f32.mxu0 %v2993
        %5721 = vmatmul.mubr.f32.gmra.mrb[0].mxu0 %v2992
        %v5722 = vpop.f32.mrb[0].mxu0
        %v5723 = vadd.f32 %v5498, %v5722
        %v5724 = vpop.f32.mrb[0].mxu0
        %5725 = vdwg.mxu0
        %5726 = vmatprep.subr.mxu0 0.0
        %5727 = vmatpush1.msra.mxu0 %v4659
        %5728 = vmatprep.subr.mxu0 0.0
        %5729 = vmatpush1.msra.mxu0 %v4660
        %5730 = vmatprep.subr.mxu0 0.0
        %5731 = vmatpush1.msra.mxu0 %v4661
        %5732 = vmatprep.subr.mxu0 0.0
        %5733 = vmatpush1.msra.mxu0 %v4662
        %5734 = vmatprep.subr.mxu0 0.0
        %5735 = vmatpush1.msra.mxu0 %v4663
        %5736 = vmatprep.subr.mxu0 0.0
        %5737 = vmatpush1.msra.mxu0 %v4664
        %5738 = vmatprep.subr.mxu0 0.0
        %5739 = vmatpush1.msra.mxu0 %v4665
        %5740 = vmatprep.subr.mxu0 0.0
        %5741 = vmatpush1.msra.mxu0 %v4666
        %5742 = vmatprep.subr.mxu0 0.0
        %5743 = vmatpush1.msra.mxu0 %v4667
        %5744 = vmatprep.subr.mxu0 0.0
        %5745 = vmatpush1.msra.mxu0 %v4668
        %5746 = vmatprep.subr.mxu0 0.0
        %5747 = vmatpush1.msra.mxu0 %v4669
        %5748 = vmatprep.subr.mxu0 0.0
        %5749 = vmatpush1.msra.mxu0 %v4670
        %5750 = vmatprep.subr.mxu0 0.0
        %5751 = vmatpush1.msra.mxu0 %v4671
        %5752 = vmatprep.subr.mxu0 0.0
        %5753 = vmatpush1.msra.mxu0 %v4672
        %5754 = vmatprep.subr.mxu0 0.0
        %5755 = vmatpush1.msra.mxu0 %v4673
        %5756 = vmatprep.subr.mxu0 0.0
        %5757 = vmatpush1.msra.mxu0 %v4674
        %5758 = vmatprep.subr.mxu0 0.0
        %5759 = vmatpush1.msra.mxu0 %v4675
        %5760 = vmatprep.subr.mxu0 0.0
        %5761 = vmatpush1.msra.mxu0 %v4676
        %5762 = vmatprep.subr.mxu0 0.0
        %5763 = vmatpush1.msra.mxu0 %v4677
        %5764 = vmatprep.subr.mxu0 0.0
        %5765 = vmatpush1.msra.mxu0 %v4678
        %5766 = vmatprep.subr.mxu0 0.0
        %5767 = vmatpush1.msra.mxu0 %v4679
        %5768 = vmatprep.subr.mxu0 0.0
        %5769 = vmatpush1.msra.mxu0 %v4680
        %5770 = vmatprep.subr.mxu0 0.0
        %5771 = vmatpush1.msra.mxu0 %v4681
        %5772 = vmatprep.subr.mxu0 0.0
        %5773 = vmatpush1.msra.mxu0 %v4682
        %5774 = vmatprep.subr.mxu0 0.0
        %5775 = vmatpush1.msra.mxu0 %v4683
        %5776 = vmatprep.subr.mxu0 0.0
        %5777 = vmatpush1.msra.mxu0 %v4684
        %5778 = vmatprep.subr.mxu0 0.0
        %5779 = vmatpush1.msra.mxu0 %v4685
        %5780 = vmatprep.subr.mxu0 0.0
        %5781 = vmatpush1.msra.mxu0 %v4686
        %5782 = vmatprep.subr.mxu0 0.0
        %5783 = vmatpush1.msra.mxu0 %v4687
        %5784 = vmatprep.subr.mxu0 0.0
        %5785 = vmatpush1.msra.mxu0 %v4688
        %5786 = vmatprep.subr.mxu0 0.0
        %5787 = vmatpush1.msra.mxu0 %v4689
        %5788 = vmatprep.subr.mxu0 0.0
        %5789 = vmatpush1.msra.mxu0 %v4690
        %5790 = vmatprep.mubr.f32.mxu0 %v3159
        %5791 = vmatmul.mubr.f32.gmra.mrb[0].mxu0 %v3156
        %v5792 = vpop.f32.mrb[0].mxu0
        %v5793 = vadd.f32 %v5568, %v5792
        %v5794 = vpop.f32.mrb[0].mxu0
        %5795 = vmatprep.mubr.f32.mxu0 %v3163
        %5796 = vmatmul.mubr.f32.gmra.mrb[0].mxu0 %v3161
        %v5797 = vpop.f32.mrb[0].mxu0
        %v5798 = vadd.f32 %v5573, %v5797
        %v5799 = vpop.f32.mrb[0].mxu0
        %5800 = vmatprep.mubr.f32.mxu0 %v3169
        %5801 = vmatmul.mubr.f32.gmra.mrb[0].mxu0 %v3166
        %v5802 = vpop.f32.mrb[0].mxu0
        %v5803 = vadd.f32 %v5578, %v5802
        %v5804 = vpop.f32.mrb[0].mxu0
        %5805 = vmatprep.mubr.f32.mxu0 %v3173
        %5806 = vmatmul.mubr.f32.gmra.mrb[0].mxu0 %v3171
        %v5807 = vpop.f32.mrb[0].mxu0
        %v5808 = vadd.f32 %v5583, %v5807
        %v5809 = vpop.f32.mrb[0].mxu0
        %5810 = vmatprep.mubr.f32.mxu0 %v3179
        %5811 = vmatmul.mubr.f32.gmra.mrb[0].mxu0 %v3176
        %v5812 = vpop.f32.mrb[0].mxu0
        %v5813 = vadd.f32 %v5588, %v5812
        %v5814 = vpop.f32.mrb[0].mxu0
        %5815 = vmatprep.mubr.f32.mxu0 %v3183
        %5816 = vmatmul.mubr.f32.gmra.mrb[0].mxu0 %v3181
        %v5817 = vpop.f32.mrb[0].mxu0
        %v5818 = vadd.f32 %v5593, %v5817
        %v5819 = vpop.f32.mrb[0].mxu0
        %5820 = vmatprep.mubr.f32.mxu0 %v3189
        %5821 = vmatmul.mubr.f32.gmra.mrb[0].mxu0 %v3186
        %v5822 = vpop.f32.mrb[0].mxu0
        %v5823 = vadd.f32 %v5598, %v5822
        %v5824 = vpop.f32.mrb[0].mxu0
        %5825 = vmatprep.mubr.f32.mxu0 %v3193
        %5826 = vmatmul.mubr.f32.gmra.mrb[0].mxu0 %v3191
        %v5827 = vpop.f32.mrb[0].mxu0
        %v5828 = vadd.f32 %v5603, %v5827
        %v5829 = vpop.f32.mrb[0].mxu0
        %5830 = vmatprep.mubr.f32.mxu0 %v3199
        %5831 = vmatmul.mubr.f32.gmra.mrb[0].mxu0 %v3196
        %v5832 = vpop.f32.mrb[0].mxu0
        %v5833 = vadd.f32 %v5608, %v5832
        %v5834 = vpop.f32.mrb[0].mxu0
        %5835 = vmatprep.mubr.f32.mxu0 %v3203
        %5836 = vmatmul.mubr.f32.gmra.mrb[0].mxu0 %v3201
        %v5837 = vpop.f32.mrb[0].mxu0
        %v5838 = vadd.f32 %v5613, %v5837
        %v5839 = vpop.f32.mrb[0].mxu0
        %5840 = vmatprep.mubr.f32.mxu0 %v3209
        %5841 = vmatmul.mubr.f32.gmra.mrb[0].mxu0 %v3206
        %v5842 = vpop.f32.mrb[0].mxu0
        %v5843 = vadd.f32 %v5618, %v5842
        %v5844 = vpop.f32.mrb[0].mxu0
        %5845 = vmatprep.mubr.f32.mxu0 %v3213
        %5846 = vmatmul.mubr.f32.gmra.mrb[0].mxu0 %v3211
        %v5847 = vpop.f32.mrb[0].mxu0
        %v5848 = vadd.f32 %v5623, %v5847
        %v5849 = vpop.f32.mrb[0].mxu0
        %5850 = vmatprep.mubr.f32.mxu0 %v3219
        %5851 = vmatmul.mubr.f32.gmra.mrb[0].mxu0 %v3216
        %v5852 = vpop.f32.mrb[0].mxu0
        %v5853 = vadd.f32 %v5628, %v5852
        %v5854 = vpop.f32.mrb[0].mxu0
        %5855 = vmatprep.mubr.f32.mxu0 %v3223
        %5856 = vmatmul.mubr.f32.gmra.mrb[0].mxu0 %v3221
        %v5857 = vpop.f32.mrb[0].mxu0
        %v5858 = vadd.f32 %v5633, %v5857
        %v5859 = vpop.f32.mrb[0].mxu0
        %5860 = vmatprep.mubr.f32.mxu0 %v3229
        %5861 = vmatmul.mubr.f32.gmra.mrb[0].mxu0 %v3226
        %v5862 = vpop.f32.mrb[0].mxu0
        %v5863 = vadd.f32 %v5638, %v5862
        %v5864 = vpop.f32.mrb[0].mxu0
        %5865 = vmatprep.mubr.f32.mxu0 %v3233
        %5866 = vmatmul.mubr.f32.gmra.mrb[0].mxu0 %v3231
        %v5867 = vpop.f32.mrb[0].mxu0
        %v5868 = vadd.f32 %v5643, %v5867
        %v5869 = vpop.f32.mrb[0].mxu0
        %5870 = vmatprep.mubr.f32.mxu0 %v3239
        %5871 = vmatmul.mubr.f32.gmra.mrb[0].mxu0 %v3236
        %v5872 = vpop.f32.mrb[0].mxu0
        %v5873 = vadd.f32 %v5648, %v5872
        %v5874 = vpop.f32.mrb[0].mxu0
        %5875 = vmatprep.mubr.f32.mxu0 %v3243
        %5876 = vmatmul.mubr.f32.gmra.mrb[0].mxu0 %v3241
        %v5877 = vpop.f32.mrb[0].mxu0
        %v5878 = vadd.f32 %v5653, %v5877
        %v5879 = vpop.f32.mrb[0].mxu0
        %5880 = vmatprep.mubr.f32.mxu0 %v3249
        %5881 = vmatmul.mubr.f32.gmra.mrb[0].mxu0 %v3246
        %v5882 = vpop.f32.mrb[0].mxu0
        %v5883 = vadd.f32 %v5658, %v5882
        %v5884 = vpop.f32.mrb[0].mxu0
        %5885 = vmatprep.mubr.f32.mxu0 %v3253
        %5886 = vmatmul.mubr.f32.gmra.mrb[0].mxu0 %v3251
        %v5887 = vpop.f32.mrb[0].mxu0
        %v5888 = vadd.f32 %v5663, %v5887
        %v5889 = vpop.f32.mrb[0].mxu0
        %5890 = vmatprep.mubr.f32.mxu0 %v3259
        %5891 = vmatmul.mubr.f32.gmra.mrb[0].mxu0 %v3256
        %v5892 = vpop.f32.mrb[0].mxu0
        %v5893 = vadd.f32 %v5668, %v5892
        %v5894 = vpop.f32.mrb[0].mxu0
        %5895 = vmatprep.mubr.f32.mxu0 %v3263
        %5896 = vmatmul.mubr.f32.gmra.mrb[0].mxu0 %v3261
        %v5897 = vpop.f32.mrb[0].mxu0
        %v5898 = vadd.f32 %v5673, %v5897
        %v5899 = vpop.f32.mrb[0].mxu0
        %5900 = vmatprep.mubr.f32.mxu0 %v3269
        %5901 = vmatmul.mubr.f32.gmra.mrb[0].mxu0 %v3266
        %v5902 = vpop.f32.mrb[0].mxu0
        %v5903 = vadd.f32 %v5678, %v5902
        %v5904 = vpop.f32.mrb[0].mxu0
        %5905 = vmatprep.mubr.f32.mxu0 %v3273
        %5906 = vmatmul.mubr.f32.gmra.mrb[0].mxu0 %v3271
        %v5907 = vpop.f32.mrb[0].mxu0
        %v5908 = vadd.f32 %v5683, %v5907
        %v5909 = vpop.f32.mrb[0].mxu0
        %5910 = vmatprep.mubr.f32.mxu0 %v3279
        %5911 = vmatmul.mubr.f32.gmra.mrb[0].mxu0 %v3276
        %v5912 = vpop.f32.mrb[0].mxu0
        %v5913 = vadd.f32 %v5688, %v5912
        %v5914 = vpop.f32.mrb[0].mxu0
        %5915 = vmatprep.mubr.f32.mxu0 %v3283
        %5916 = vmatmul.mubr.f32.gmra.mrb[0].mxu0 %v3281
        %v5917 = vpop.f32.mrb[0].mxu0
        %v5918 = vadd.f32 %v5693, %v5917
        %v5919 = vpop.f32.mrb[0].mxu0
        %5920 = vmatprep.mubr.f32.mxu0 %v3289
        %5921 = vmatmul.mubr.f32.gmra.mrb[0].mxu0 %v3286
        %v5922 = vpop.f32.mrb[0].mxu0
        %v5923 = vadd.f32 %v5698, %v5922
        %v5924 = vpop.f32.mrb[0].mxu0
        %5925 = vmatprep.mubr.f32.mxu0 %v3293
        %5926 = vmatmul.mubr.f32.gmra.mrb[0].mxu0 %v3291
        %v5927 = vpop.f32.mrb[0].mxu0
        %v5928 = vadd.f32 %v5703, %v5927
        %v5929 = vpop.f32.mrb[0].mxu0
        %5930 = vmatprep.mubr.f32.mxu0 %v3299
        %5931 = vmatmul.mubr.f32.gmra.mrb[0].mxu0 %v3296
        %v5932 = vpop.f32.mrb[0].mxu0
        %v5933 = vadd.f32 %v5708, %v5932
        %v5934 = vpop.f32.mrb[0].mxu0
        %5935 = vmatprep.mubr.f32.mxu0 %v3303
        %5936 = vmatmul.mubr.f32.gmra.mrb[0].mxu0 %v3301
        %v5937 = vpop.f32.mrb[0].mxu0
        %v5938 = vadd.f32 %v5713, %v5937
        %v5939 = vpop.f32.mrb[0].mxu0
        %5940 = vmatprep.mubr.f32.mxu0 %v3309
        %5941 = vmatmul.mubr.f32.gmra.mrb[0].mxu0 %v3306
        %v5942 = vpop.f32.mrb[0].mxu0
        %v5943 = vadd.f32 %v5718, %v5942
        %v5944 = vpop.f32.mrb[0].mxu0
        %5945 = vmatprep.mubr.f32.mxu0 %v3313
        %5946 = vmatmul.mubr.f32.gmra.mrb[0].mxu0 %v3311
        %v5947 = vpop.f32.mrb[0].mxu0
        %v5948 = vadd.f32 %v5723, %v5947
        %v5949 = vpop.f32.mrb[0].mxu0
        %5950 = vdwg.mxu0
        %5951 = vmatprep.subr.mxu0 0.0
        %5952 = vmatpush1.msra.mxu0 %v4691
        %5953 = vmatprep.subr.mxu0 0.0
        %5954 = vmatpush1.msra.mxu0 %v4692
        %5955 = vmatprep.subr.mxu0 0.0
        %5956 = vmatpush1.msra.mxu0 %v4693
        %5957 = vmatprep.subr.mxu0 0.0
        %5958 = vmatpush1.msra.mxu0 %v4694
        %5959 = vmatprep.subr.mxu0 0.0
        %5960 = vmatpush1.msra.mxu0 %v4695
        %5961 = vmatprep.subr.mxu0 0.0
        %5962 = vmatpush1.msra.mxu0 %v4696
        %5963 = vmatprep.subr.mxu0 0.0
        %5964 = vmatpush1.msra.mxu0 %v4697
        %5965 = vmatprep.subr.mxu0 0.0
        %5966 = vmatpush1.msra.mxu0 %v4698
        %5967 = vmatprep.subr.mxu0 0.0
        %5968 = vmatpush1.msra.mxu0 %v4699
        %5969 = vmatprep.subr.mxu0 0.0
        %5970 = vmatpush1.msra.mxu0 %v4700
        %5971 = vmatprep.subr.mxu0 0.0
        %5972 = vmatpush1.msra.mxu0 %v4701
        %5973 = vmatprep.subr.mxu0 0.0
        %5974 = vmatpush1.msra.mxu0 %v4702
        %5975 = vmatprep.subr.mxu0 0.0
        %5976 = vmatpush1.msra.mxu0 %v4703
        %5977 = vmatprep.subr.mxu0 0.0
        %5978 = vmatpush1.msra.mxu0 %v4704
        %5979 = vmatprep.subr.mxu0 0.0
        %5980 = vmatpush1.msra.mxu0 %v4705
        %5981 = vmatprep.subr.mxu0 0.0
        %5982 = vmatpush1.msra.mxu0 %v4706
        %5983 = vmatprep.subr.mxu0 0.0
        %5984 = vmatpush1.msra.mxu0 %v4707
        %5985 = vmatprep.subr.mxu0 0.0
        %5986 = vmatpush1.msra.mxu0 %v4708
        %5987 = vmatprep.subr.mxu0 0.0
        %5988 = vmatpush1.msra.mxu0 %v4709
        %5989 = vmatprep.subr.mxu0 0.0
        %5990 = vmatpush1.msra.mxu0 %v4710
        %5991 = vmatprep.subr.mxu0 0.0
        %5992 = vmatpush1.msra.mxu0 %v4711
        %5993 = vmatprep.subr.mxu0 0.0
        %5994 = vmatpush1.msra.mxu0 %v4712
        %5995 = vmatprep.subr.mxu0 0.0
        %5996 = vmatpush1.msra.mxu0 %v4713
        %5997 = vmatprep.subr.mxu0 0.0
        %5998 = vmatpush1.msra.mxu0 %v4714
        %5999 = vmatprep.subr.mxu0 0.0
        %6000 = vmatpush1.msra.mxu0 %v4715
        %6001 = vmatprep.subr.mxu0 0.0
        %6002 = vmatpush1.msra.mxu0 %v4716
        %6003 = vmatprep.subr.mxu0 0.0
        %6004 = vmatpush1.msra.mxu0 %v4717
        %6005 = vmatprep.subr.mxu0 0.0
        %6006 = vmatpush1.msra.mxu0 %v4718
        %6007 = vmatprep.subr.mxu0 0.0
        %6008 = vmatpush1.msra.mxu0 %v4719
        %6009 = vmatprep.subr.mxu0 0.0
        %6010 = vmatpush1.msra.mxu0 %v4720
        %6011 = vmatprep.subr.mxu0 0.0
        %6012 = vmatpush1.msra.mxu0 %v4721
        %6013 = vmatprep.subr.mxu0 0.0
        %6014 = vmatpush1.msra.mxu0 %v4722
        %6015 = vmatprep.mubr.f32.mxu0 %v3511
        %6016 = vmatmul.mubr.f32.gmra.mrb[0].mxu0 %v3508
        %v6017 = vpop.f32.mrb[0].mxu0
        %v6018 = vadd.f32 %v5793, %v6017
        %v6019 = vpop.f32.mrb[0].mxu0
        %6020 = vmatprep.mubr.f32.mxu0 %v3515
        %6021 = vmatmul.mubr.f32.gmra.mrb[0].mxu0 %v3513
        %v6022 = vpop.f32.mrb[0].mxu0
        %v6023 = vadd.f32 %v5798, %v6022
        %v6024 = vpop.f32.mrb[0].mxu0
        %6025 = vmatprep.mubr.f32.mxu0 %v3521
        %6026 = vmatmul.mubr.f32.gmra.mrb[0].mxu0 %v3518
        %v6027 = vpop.f32.mrb[0].mxu0
        %v6028 = vadd.f32 %v5803, %v6027
        %v6029 = vpop.f32.mrb[0].mxu0
        %6030 = vmatprep.mubr.f32.mxu0 %v3525
        %6031 = vmatmul.mubr.f32.gmra.mrb[0].mxu0 %v3523
        %v6032 = vpop.f32.mrb[0].mxu0
        %v6033 = vadd.f32 %v5808, %v6032
        %v6034 = vpop.f32.mrb[0].mxu0
        %6035 = vmatprep.mubr.f32.mxu0 %v3531
        %6036 = vmatmul.mubr.f32.gmra.mrb[0].mxu0 %v3528
        %v6037 = vpop.f32.mrb[0].mxu0
        %v6038 = vadd.f32 %v5813, %v6037
        %v6039 = vpop.f32.mrb[0].mxu0
        %6040 = vmatprep.mubr.f32.mxu0 %v3535
        %6041 = vmatmul.mubr.f32.gmra.mrb[0].mxu0 %v3533
        %v6042 = vpop.f32.mrb[0].mxu0
        %v6043 = vadd.f32 %v5818, %v6042
        %v6044 = vpop.f32.mrb[0].mxu0
        %6045 = vmatprep.mubr.f32.mxu0 %v3541
        %6046 = vmatmul.mubr.f32.gmra.mrb[0].mxu0 %v3538
        %v6047 = vpop.f32.mrb[0].mxu0
        %v6048 = vadd.f32 %v5823, %v6047
        %v6049 = vpop.f32.mrb[0].mxu0
        %6050 = vmatprep.mubr.f32.mxu0 %v3545
        %6051 = vmatmul.mubr.f32.gmra.mrb[0].mxu0 %v3543
        %v6052 = vpop.f32.mrb[0].mxu0
        %v6053 = vadd.f32 %v5828, %v6052
        %v6054 = vpop.f32.mrb[0].mxu0
        %6055 = vmatprep.mubr.f32.mxu0 %v3551
        %6056 = vmatmul.mubr.f32.gmra.mrb[0].mxu0 %v3548
        %v6057 = vpop.f32.mrb[0].mxu0
        %v6058 = vadd.f32 %v5833, %v6057
        %v6059 = vpop.f32.mrb[0].mxu0
        %6060 = vmatprep.mubr.f32.mxu0 %v3555
        %6061 = vmatmul.mubr.f32.gmra.mrb[0].mxu0 %v3553
        %v6062 = vpop.f32.mrb[0].mxu0
        %v6063 = vadd.f32 %v5838, %v6062
        %v6064 = vpop.f32.mrb[0].mxu0
        %6065 = vmatprep.mubr.f32.mxu0 %v3561
        %6066 = vmatmul.mubr.f32.gmra.mrb[0].mxu0 %v3558
        %v6067 = vpop.f32.mrb[0].mxu0
        %v6068 = vadd.f32 %v5843, %v6067
        %v6069 = vpop.f32.mrb[0].mxu0
        %6070 = vmatprep.mubr.f32.mxu0 %v3565
        %6071 = vmatmul.mubr.f32.gmra.mrb[0].mxu0 %v3563
        %v6072 = vpop.f32.mrb[0].mxu0
        %v6073 = vadd.f32 %v5848, %v6072
        %v6074 = vpop.f32.mrb[0].mxu0
        %6075 = vmatprep.mubr.f32.mxu0 %v3571
        %6076 = vmatmul.mubr.f32.gmra.mrb[0].mxu0 %v3568
        %v6077 = vpop.f32.mrb[0].mxu0
        %v6078 = vadd.f32 %v5853, %v6077
        %v6079 = vpop.f32.mrb[0].mxu0
        %6080 = vmatprep.mubr.f32.mxu0 %v3575
        %6081 = vmatmul.mubr.f32.gmra.mrb[0].mxu0 %v3573
        %v6082 = vpop.f32.mrb[0].mxu0
        %v6083 = vadd.f32 %v5858, %v6082
        %v6084 = vpop.f32.mrb[0].mxu0
        %6085 = vmatprep.mubr.f32.mxu0 %v3581
        %6086 = vmatmul.mubr.f32.gmra.mrb[0].mxu0 %v3578
        %v6087 = vpop.f32.mrb[0].mxu0
        %v6088 = vadd.f32 %v5863, %v6087
        %v6089 = vpop.f32.mrb[0].mxu0
        %6090 = vmatprep.mubr.f32.mxu0 %v3585
        %6091 = vmatmul.mubr.f32.gmra.mrb[0].mxu0 %v3583
        %v6092 = vpop.f32.mrb[0].mxu0
        %v6093 = vadd.f32 %v5868, %v6092
        %v6094 = vpop.f32.mrb[0].mxu0
        %6095 = vmatprep.mubr.f32.mxu0 %v3591
        %6096 = vmatmul.mubr.f32.gmra.mrb[0].mxu0 %v3588
        %v6097 = vpop.f32.mrb[0].mxu0
        %v6098 = vadd.f32 %v5873, %v6097
        %v6099 = vpop.f32.mrb[0].mxu0
        %6100 = vmatprep.mubr.f32.mxu0 %v3595
        %6101 = vmatmul.mubr.f32.gmra.mrb[0].mxu0 %v3593
        %v6102 = vpop.f32.mrb[0].mxu0
        %v6103 = vadd.f32 %v5878, %v6102
        %v6104 = vpop.f32.mrb[0].mxu0
        %6105 = vmatprep.mubr.f32.mxu0 %v3601
        %6106 = vmatmul.mubr.f32.gmra.mrb[0].mxu0 %v3598
        %v6107 = vpop.f32.mrb[0].mxu0
        %v6108 = vadd.f32 %v5883, %v6107
        %v6109 = vpop.f32.mrb[0].mxu0
        %6110 = vmatprep.mubr.f32.mxu0 %v3605
        %6111 = vmatmul.mubr.f32.gmra.mrb[0].mxu0 %v3603
        %v6112 = vpop.f32.mrb[0].mxu0
        %v6113 = vadd.f32 %v5888, %v6112
        %v6114 = vpop.f32.mrb[0].mxu0
        %6115 = vmatprep.mubr.f32.mxu0 %v3611
        %6116 = vmatmul.mubr.f32.gmra.mrb[0].mxu0 %v3608
        %v6117 = vpop.f32.mrb[0].mxu0
        %v6118 = vadd.f32 %v5893, %v6117
        %v6119 = vpop.f32.mrb[0].mxu0
        %6120 = vmatprep.mubr.f32.mxu0 %v3615
        %6121 = vmatmul.mubr.f32.gmra.mrb[0].mxu0 %v3613
        %v6122 = vpop.f32.mrb[0].mxu0
        %v6123 = vadd.f32 %v5898, %v6122
        %v6124 = vpop.f32.mrb[0].mxu0
        %6125 = vmatprep.mubr.f32.mxu0 %v3621
        %6126 = vmatmul.mubr.f32.gmra.mrb[0].mxu0 %v3618
        %v6127 = vpop.f32.mrb[0].mxu0
        %v6128 = vadd.f32 %v5903, %v6127
        %v6129 = vpop.f32.mrb[0].mxu0
        %6130 = vmatprep.mubr.f32.mxu0 %v3625
        %6131 = vmatmul.mubr.f32.gmra.mrb[0].mxu0 %v3623
        %v6132 = vpop.f32.mrb[0].mxu0
        %v6133 = vadd.f32 %v5908, %v6132
        %v6134 = vpop.f32.mrb[0].mxu0
        %6135 = vmatprep.mubr.f32.mxu0 %v3631
        %6136 = vmatmul.mubr.f32.gmra.mrb[0].mxu0 %v3628
        %v6137 = vpop.f32.mrb[0].mxu0
        %v6138 = vadd.f32 %v5913, %v6137
        %v6139 = vpop.f32.mrb[0].mxu0
        %6140 = vmatprep.mubr.f32.mxu0 %v3635
        %6141 = vmatmul.mubr.f32.gmra.mrb[0].mxu0 %v3633
        %v6142 = vpop.f32.mrb[0].mxu0
        %v6143 = vadd.f32 %v5918, %v6142
        %v6144 = vpop.f32.mrb[0].mxu0
        %6145 = vmatprep.mubr.f32.mxu0 %v3641
        %6146 = vmatmul.mubr.f32.gmra.mrb[0].mxu0 %v3638
        %v6147 = vpop.f32.mrb[0].mxu0
        %v6148 = vadd.f32 %v5923, %v6147
        %v6149 = vpop.f32.mrb[0].mxu0
        %6150 = vmatprep.mubr.f32.mxu0 %v3645
        %6151 = vmatmul.mubr.f32.gmra.mrb[0].mxu0 %v3643
        %v6152 = vpop.f32.mrb[0].mxu0
        %v6153 = vadd.f32 %v5928, %v6152
        %v6154 = vpop.f32.mrb[0].mxu0
        %6155 = vmatprep.mubr.f32.mxu0 %v3651
        %6156 = vmatmul.mubr.f32.gmra.mrb[0].mxu0 %v3648
        %v6157 = vpop.f32.mrb[0].mxu0
        %v6158 = vadd.f32 %v5933, %v6157
        %v6159 = vpop.f32.mrb[0].mxu0
        %6160 = vmatprep.mubr.f32.mxu0 %v3655
        %6161 = vmatmul.mubr.f32.gmra.mrb[0].mxu0 %v3653
        %v6162 = vpop.f32.mrb[0].mxu0
        %v6163 = vadd.f32 %v5938, %v6162
        %v6164 = vpop.f32.mrb[0].mxu0
        %6165 = vmatprep.mubr.f32.mxu0 %v3661
        %6166 = vmatmul.mubr.f32.gmra.mrb[0].mxu0 %v3658
        %v6167 = vpop.f32.mrb[0].mxu0
        %v6168 = vadd.f32 %v5943, %v6167
        %v6169 = vpop.f32.mrb[0].mxu0
        %6170 = vmatprep.mubr.f32.mxu0 %v3665
        %6171 = vmatmul.mubr.f32.gmra.mrb[0].mxu0 %v3663
        %v6172 = vpop.f32.mrb[0].mxu0
        %v6173 = vadd.f32 %v5948, %v6172
        %v6174 = vpop.f32.mrb[0].mxu0
        %6175 = vdwg.mxu0
        %6176 = vmatprep.subr.mxu0 0.0
        %6177 = vmatpush1.msra.mxu0 %v4723
        %6178 = vmatprep.subr.mxu0 0.0
        %6179 = vmatpush1.msra.mxu0 %v4724
        %6180 = vmatprep.subr.mxu0 0.0
        %6181 = vmatpush1.msra.mxu0 %v4725
        %6182 = vmatprep.subr.mxu0 0.0
        %6183 = vmatpush1.msra.mxu0 %v4726
        %6184 = vmatprep.subr.mxu0 0.0
        %6185 = vmatpush1.msra.mxu0 %v4727
        %6186 = vmatprep.subr.mxu0 0.0
        %6187 = vmatpush1.msra.mxu0 %v4728
        %6188 = vmatprep.subr.mxu0 0.0
        %6189 = vmatpush1.msra.mxu0 %v4729
        %6190 = vmatprep.subr.mxu0 0.0
        %6191 = vmatpush1.msra.mxu0 %v4730
        %6192 = vmatprep.subr.mxu0 0.0
        %6193 = vmatpush1.msra.mxu0 %v4731
        %6194 = vmatprep.subr.mxu0 0.0
        %6195 = vmatpush1.msra.mxu0 %v4732
        %6196 = vmatprep.subr.mxu0 0.0
        %6197 = vmatpush1.msra.mxu0 %v4733
        %6198 = vmatprep.subr.mxu0 0.0
        %6199 = vmatpush1.msra.mxu0 %v4734
        %6200 = vmatprep.subr.mxu0 0.0
        %6201 = vmatpush1.msra.mxu0 %v4735
        %6202 = vmatprep.subr.mxu0 0.0
        %6203 = vmatpush1.msra.mxu0 %v4736
        %6204 = vmatprep.subr.mxu0 0.0
        %6205 = vmatpush1.msra.mxu0 %v4737
        %6206 = vmatprep.subr.mxu0 0.0
        %6207 = vmatpush1.msra.mxu0 %v4738
        %6208 = vmatprep.subr.mxu0 0.0
        %6209 = vmatpush1.msra.mxu0 %v4739
        %6210 = vmatprep.subr.mxu0 0.0
        %6211 = vmatpush1.msra.mxu0 %v4740
        %6212 = vmatprep.subr.mxu0 0.0
        %6213 = vmatpush1.msra.mxu0 %v4741
        %6214 = vmatprep.subr.mxu0 0.0
        %6215 = vmatpush1.msra.mxu0 %v4742
        %6216 = vmatprep.subr.mxu0 0.0
        %6217 = vmatpush1.msra.mxu0 %v4743
        %6218 = vmatprep.subr.mxu0 0.0
        %6219 = vmatpush1.msra.mxu0 %v4744
        %6220 = vmatprep.subr.mxu0 0.0
        %6221 = vmatpush1.msra.mxu0 %v4745
        %6222 = vmatprep.subr.mxu0 0.0
        %6223 = vmatpush1.msra.mxu0 %v4746
        %6224 = vmatprep.subr.mxu0 0.0
        %6225 = vmatpush1.msra.mxu0 %v4747
        %6226 = vmatprep.subr.mxu0 0.0
        %6227 = vmatpush1.msra.mxu0 %v4748
        %6228 = vmatprep.subr.mxu0 0.0
        %6229 = vmatpush1.msra.mxu0 %v4749
        %6230 = vmatprep.subr.mxu0 0.0
        %6231 = vmatpush1.msra.mxu0 %v4750
        %6232 = vmatprep.subr.mxu0 0.0
        %6233 = vmatpush1.msra.mxu0 %v4751
        %6234 = vmatprep.subr.mxu0 0.0
        %6235 = vmatpush1.msra.mxu0 %v4752
        %6236 = vmatprep.subr.mxu0 0.0
        %6237 = vmatpush1.msra.mxu0 %v4753
        %6238 = vmatprep.subr.mxu0 0.0
        %6239 = vmatpush1.msra.mxu0 %v4754
        %6240 = vmatprep.mubr.f32.mxu0 %v3732
        %6241 = vmatmul.mubr.f32.gmra.mrb[0].mxu0 %v3731
        %v6242 = vpop.f32.mrb[0].mxu0
        %v6243 = vadd.f32 %v6018, %v6242
        %v6244 = vpop.f32.mrb[0].mxu0
        %6245 = vmatprep.mubr.f32.mxu0 %v3734
        %6246 = vmatmul.mubr.f32.gmra.mrb[0].mxu0 %v3733
        %v6247 = vpop.f32.mrb[0].mxu0
        %v6248 = vadd.f32 %v6023, %v6247
        %v6249 = vpop.f32.mrb[0].mxu0
        %6250 = vmatprep.mubr.f32.mxu0 %v3736
        %6251 = vmatmul.mubr.f32.gmra.mrb[0].mxu0 %v3735
        %v6252 = vpop.f32.mrb[0].mxu0
        %v6253 = vadd.f32 %v6028, %v6252
        %v6254 = vpop.f32.mrb[0].mxu0
        %6255 = vmatprep.mubr.f32.mxu0 %v3738
        %6256 = vmatmul.mubr.f32.gmra.mrb[0].mxu0 %v3737
        %v6257 = vpop.f32.mrb[0].mxu0
        %v6258 = vadd.f32 %v6033, %v6257
        %v6259 = vpop.f32.mrb[0].mxu0
        %6260 = vmatprep.mubr.f32.mxu0 %v3740
        %6261 = vmatmul.mubr.f32.gmra.mrb[0].mxu0 %v3739
        %v6262 = vpop.f32.mrb[0].mxu0
        %v6263 = vadd.f32 %v6038, %v6262
        %v6264 = vpop.f32.mrb[0].mxu0
        %6265 = vmatprep.mubr.f32.mxu0 %v3742
        %6266 = vmatmul.mubr.f32.gmra.mrb[0].mxu0 %v3741
        %v6267 = vpop.f32.mrb[0].mxu0
        %v6268 = vadd.f32 %v6043, %v6267
        %v6269 = vpop.f32.mrb[0].mxu0
        %6270 = vmatprep.mubr.f32.mxu0 %v3744
        %6271 = vmatmul.mubr.f32.gmra.mrb[0].mxu0 %v3743
        %v6272 = vpop.f32.mrb[0].mxu0
        %v6273 = vadd.f32 %v6048, %v6272
        %v6274 = vpop.f32.mrb[0].mxu0
        %6275 = vmatprep.mubr.f32.mxu0 %v3746
        %6276 = vmatmul.mubr.f32.gmra.mrb[0].mxu0 %v3745
        %v6277 = vpop.f32.mrb[0].mxu0
        %v6278 = vadd.f32 %v6053, %v6277
        %v6279 = vpop.f32.mrb[0].mxu0
        %6280 = vmatprep.mubr.f32.mxu0 %v3748
        %6281 = vmatmul.mubr.f32.gmra.mrb[0].mxu0 %v3747
        %v6282 = vpop.f32.mrb[0].mxu0
        %v6283 = vadd.f32 %v6058, %v6282
        %v6284 = vpop.f32.mrb[0].mxu0
        %6285 = vmatprep.mubr.f32.mxu0 %v3750
        %6286 = vmatmul.mubr.f32.gmra.mrb[0].mxu0 %v3749
        %v6287 = vpop.f32.mrb[0].mxu0
        %v6288 = vadd.f32 %v6063, %v6287
        %v6289 = vpop.f32.mrb[0].mxu0
        %6290 = vmatprep.mubr.f32.mxu0 %v3752
        %6291 = vmatmul.mubr.f32.gmra.mrb[0].mxu0 %v3751
        %v6292 = vpop.f32.mrb[0].mxu0
        %v6293 = vadd.f32 %v6068, %v6292
        %v6294 = vpop.f32.mrb[0].mxu0
        %6295 = vmatprep.mubr.f32.mxu0 %v3754
        %6296 = vmatmul.mubr.f32.gmra.mrb[0].mxu0 %v3753
        %v6297 = vpop.f32.mrb[0].mxu0
        %v6298 = vadd.f32 %v6073, %v6297
        %v6299 = vpop.f32.mrb[0].mxu0
        %6300 = vmatprep.mubr.f32.mxu0 %v3756
        %6301 = vmatmul.mubr.f32.gmra.mrb[0].mxu0 %v3755
        %v6302 = vpop.f32.mrb[0].mxu0
        %v6303 = vadd.f32 %v6078, %v6302
        %v6304 = vpop.f32.mrb[0].mxu0
        %6305 = vmatprep.mubr.f32.mxu0 %v3758
        %6306 = vmatmul.mubr.f32.gmra.mrb[0].mxu0 %v3757
        %v6307 = vpop.f32.mrb[0].mxu0
        %v6308 = vadd.f32 %v6083, %v6307
        %v6309 = vpop.f32.mrb[0].mxu0
        %6310 = vmatprep.mubr.f32.mxu0 %v3760
        %6311 = vmatmul.mubr.f32.gmra.mrb[0].mxu0 %v3759
        %v6312 = vpop.f32.mrb[0].mxu0
        %v6313 = vadd.f32 %v6088, %v6312
        %v6314 = vpop.f32.mrb[0].mxu0
        %6315 = vmatprep.mubr.f32.mxu0 %v3762
        %6316 = vmatmul.mubr.f32.gmra.mrb[0].mxu0 %v3761
        %v6317 = vpop.f32.mrb[0].mxu0
        %v6318 = vadd.f32 %v6093, %v6317
        %v6319 = vpop.f32.mrb[0].mxu0
        %6320 = vmatprep.mubr.f32.mxu0 %v3764
        %6321 = vmatmul.mubr.f32.gmra.mrb[0].mxu0 %v3763
        %v6322 = vpop.f32.mrb[0].mxu0
        %v6323 = vadd.f32 %v6098, %v6322
        %v6324 = vpop.f32.mrb[0].mxu0
        %6325 = vmatprep.mubr.f32.mxu0 %v3766
        %6326 = vmatmul.mubr.f32.gmra.mrb[0].mxu0 %v3765
        %v6327 = vpop.f32.mrb[0].mxu0
        %v6328 = vadd.f32 %v6103, %v6327
        %v6329 = vpop.f32.mrb[0].mxu0
        %6330 = vmatprep.mubr.f32.mxu0 %v3768
        %6331 = vmatmul.mubr.f32.gmra.mrb[0].mxu0 %v3767
        %v6332 = vpop.f32.mrb[0].mxu0
        %v6333 = vadd.f32 %v6108, %v6332
        %v6334 = vpop.f32.mrb[0].mxu0
        %6335 = vmatprep.mubr.f32.mxu0 %v3770
        %6336 = vmatmul.mubr.f32.gmra.mrb[0].mxu0 %v3769
        %v6337 = vpop.f32.mrb[0].mxu0
        %v6338 = vadd.f32 %v6113, %v6337
        %v6339 = vpop.f32.mrb[0].mxu0
        %6340 = vmatprep.mubr.f32.mxu0 %v3772
        %6341 = vmatmul.mubr.f32.gmra.mrb[0].mxu0 %v3771
        %v6342 = vpop.f32.mrb[0].mxu0
        %v6343 = vadd.f32 %v6118, %v6342
        %v6344 = vpop.f32.mrb[0].mxu0
        %6345 = vmatprep.mubr.f32.mxu0 %v3774
        %6346 = vmatmul.mubr.f32.gmra.mrb[0].mxu0 %v3773
        %v6347 = vpop.f32.mrb[0].mxu0
        %v6348 = vadd.f32 %v6123, %v6347
        %v6349 = vpop.f32.mrb[0].mxu0
        %6350 = vmatprep.mubr.f32.mxu0 %v3776
        %6351 = vmatmul.mubr.f32.gmra.mrb[0].mxu0 %v3775
        %v6352 = vpop.f32.mrb[0].mxu0
        %v6353 = vadd.f32 %v6128, %v6352
        %v6354 = vpop.f32.mrb[0].mxu0
        %6355 = vmatprep.mubr.f32.mxu0 %v3778
        %6356 = vmatmul.mubr.f32.gmra.mrb[0].mxu0 %v3777
        %v6357 = vpop.f32.mrb[0].mxu0
        %v6358 = vadd.f32 %v6133, %v6357
        %v6359 = vpop.f32.mrb[0].mxu0
        %6360 = vmatprep.mubr.f32.mxu0 %v3780
        %6361 = vmatmul.mubr.f32.gmra.mrb[0].mxu0 %v3779
        %v6362 = vpop.f32.mrb[0].mxu0
        %v6363 = vadd.f32 %v6138, %v6362
        %v6364 = vpop.f32.mrb[0].mxu0
        %6365 = vmatprep.mubr.f32.mxu0 %v3782
        %6366 = vmatmul.mubr.f32.gmra.mrb[0].mxu0 %v3781
        %v6367 = vpop.f32.mrb[0].mxu0
        %v6368 = vadd.f32 %v6143, %v6367
        %v6369 = vpop.f32.mrb[0].mxu0
        %6370 = vmatprep.mubr.f32.mxu0 %v3784
        %6371 = vmatmul.mubr.f32.gmra.mrb[0].mxu0 %v3783
        %v6372 = vpop.f32.mrb[0].mxu0
        %v6373 = vadd.f32 %v6148, %v6372
        %v6374 = vpop.f32.mrb[0].mxu0
        %6375 = vmatprep.mubr.f32.mxu0 %v3786
        %6376 = vmatmul.mubr.f32.gmra.mrb[0].mxu0 %v3785
        %v6377 = vpop.f32.mrb[0].mxu0
        %v6378 = vadd.f32 %v6153, %v6377
        %v6379 = vpop.f32.mrb[0].mxu0
        %6380 = vmatprep.mubr.f32.mxu0 %v3788
        %6381 = vmatmul.mubr.f32.gmra.mrb[0].mxu0 %v3787
        %v6382 = vpop.f32.mrb[0].mxu0
        %v6383 = vadd.f32 %v6158, %v6382
        %v6384 = vpop.f32.mrb[0].mxu0
        %6385 = vmatprep.mubr.f32.mxu0 %v3790
        %6386 = vmatmul.mubr.f32.gmra.mrb[0].mxu0 %v3789
        %v6387 = vpop.f32.mrb[0].mxu0
        %v6388 = vadd.f32 %v6163, %v6387
        %v6389 = vpop.f32.mrb[0].mxu0
        %6390 = vmatprep.mubr.f32.mxu0 %v3792
        %6391 = vmatmul.mubr.f32.gmra.mrb[0].mxu0 %v3791
        %v6392 = vpop.f32.mrb[0].mxu0
        %v6393 = vadd.f32 %v6168, %v6392
        %v6394 = vpop.f32.mrb[0].mxu0
        %6395 = vmatprep.mubr.f32.mxu0 %v3794
        %6396 = vmatmul.mubr.f32.gmra.mrb[0].mxu0 %v3793
        %v6397 = vpop.f32.mrb[0].mxu0
        %v6398 = vadd.f32 %v6173, %v6397
        %v6399 = vpop.f32.mrb[0].mxu0
        %6400 = vdwg.mxu0
        %6401 = vmatprep.subr.mxu0 0.0
        %6402 = vmatpush1.msra.mxu0 %v4755
        %6403 = vmatprep.subr.mxu0 0.0
        %6404 = vmatpush1.msra.mxu0 %v4756
        %6405 = vmatprep.subr.mxu0 0.0
        %6406 = vmatpush1.msra.mxu0 %v4757
        %6407 = vmatprep.subr.mxu0 0.0
        %6408 = vmatpush1.msra.mxu0 %v4758
        %6409 = vmatprep.subr.mxu0 0.0
        %6410 = vmatpush1.msra.mxu0 %v4759
        %6411 = vmatprep.subr.mxu0 0.0
        %6412 = vmatpush1.msra.mxu0 %v4760
        %6413 = vmatprep.subr.mxu0 0.0
        %6414 = vmatpush1.msra.mxu0 %v4761
        %6415 = vmatprep.subr.mxu0 0.0
        %6416 = vmatpush1.msra.mxu0 %v4762
        %6417 = vmatprep.subr.mxu0 0.0
        %6418 = vmatpush1.msra.mxu0 %v4763
        %6419 = vmatprep.subr.mxu0 0.0
        %6420 = vmatpush1.msra.mxu0 %v4764
        %6421 = vmatprep.subr.mxu0 0.0
        %6422 = vmatpush1.msra.mxu0 %v4765
        %6423 = vmatprep.subr.mxu0 0.0
        %6424 = vmatpush1.msra.mxu0 %v4766
        %6425 = vmatprep.subr.mxu0 0.0
        %6426 = vmatpush1.msra.mxu0 %v4767
        %6427 = vmatprep.subr.mxu0 0.0
        %6428 = vmatpush1.msra.mxu0 %v4768
        %6429 = vmatprep.subr.mxu0 0.0
        %6430 = vmatpush1.msra.mxu0 %v4769
        %6431 = vmatprep.subr.mxu0 0.0
        %6432 = vmatpush1.msra.mxu0 %v4770
        %6433 = vmatprep.subr.mxu0 0.0
        %6434 = vmatpush1.msra.mxu0 %v4771
        %6435 = vmatprep.subr.mxu0 0.0
        %6436 = vmatpush1.msra.mxu0 %v4772
        %6437 = vmatprep.subr.mxu0 0.0
        %6438 = vmatpush1.msra.mxu0 %v4773
        %6439 = vmatprep.subr.mxu0 0.0
        %6440 = vmatpush1.msra.mxu0 %v4774
        %6441 = vmatprep.subr.mxu0 0.0
        %6442 = vmatpush1.msra.mxu0 %v4775
        %6443 = vmatprep.subr.mxu0 0.0
        %6444 = vmatpush1.msra.mxu0 %v4776
        %6445 = vmatprep.subr.mxu0 0.0
        %6446 = vmatpush1.msra.mxu0 %v4777
        %6447 = vmatprep.subr.mxu0 0.0
        %6448 = vmatpush1.msra.mxu0 %v4778
        %6449 = vmatprep.subr.mxu0 0.0
        %6450 = vmatpush1.msra.mxu0 %v4779
        %6451 = vmatprep.subr.mxu0 0.0
        %6452 = vmatpush1.msra.mxu0 %v4780
        %6453 = vmatprep.subr.mxu0 0.0
        %6454 = vmatpush1.msra.mxu0 %v4781
        %6455 = vmatprep.subr.mxu0 0.0
        %6456 = vmatpush1.msra.mxu0 %v4782
        %6457 = vmatprep.subr.mxu0 0.0
        %6458 = vmatpush1.msra.mxu0 %v4783
        %6459 = vmatprep.subr.mxu0 0.0
        %6460 = vmatpush1.msra.mxu0 %v4784
        %6461 = vmatprep.subr.mxu0 0.0
        %6462 = vmatpush1.msra.mxu0 %v4785
        %6463 = vmatprep.subr.mxu0 0.0
        %6464 = vmatpush1.msra.mxu0 %v4786
        %6465 = vmatprep.mubr.f32.mxu0 %v3960
        %6466 = vmatmul.mubr.f32.gmra.mrb[0].mxu0 %v3957
        %v6467 = vpop.f32.mrb[0].mxu0
        %v6468 = vadd.f32 %v6243, %v6467
        %v6469 = vpop.f32.mrb[0].mxu0
        %6470 = vmatprep.mubr.f32.mxu0 %v3964
        %6471 = vmatmul.mubr.f32.gmra.mrb[0].mxu0 %v3962
        %v6472 = vpop.f32.mrb[0].mxu0
        %v6473 = vadd.f32 %v6248, %v6472
        %v6474 = vpop.f32.mrb[0].mxu0
        %6475 = vmatprep.mubr.f32.mxu0 %v3970
        %6476 = vmatmul.mubr.f32.gmra.mrb[0].mxu0 %v3967
        %v6477 = vpop.f32.mrb[0].mxu0
        %v6478 = vadd.f32 %v6253, %v6477
        %v6479 = vpop.f32.mrb[0].mxu0
        %6480 = vmatprep.mubr.f32.mxu0 %v3974
        %6481 = vmatmul.mubr.f32.gmra.mrb[0].mxu0 %v3972
        %v6482 = vpop.f32.mrb[0].mxu0
        %v6483 = vadd.f32 %v6258, %v6482
        %v6484 = vpop.f32.mrb[0].mxu0
        %6485 = vmatprep.mubr.f32.mxu0 %v3980
        %6486 = vmatmul.mubr.f32.gmra.mrb[0].mxu0 %v3977
        %v6487 = vpop.f32.mrb[0].mxu0
        %v6488 = vadd.f32 %v6263, %v6487
        %v6489 = vpop.f32.mrb[0].mxu0
        %6490 = vmatprep.mubr.f32.mxu0 %v3984
        %6491 = vmatmul.mubr.f32.gmra.mrb[0].mxu0 %v3982
        %v6492 = vpop.f32.mrb[0].mxu0
        %v6493 = vadd.f32 %v6268, %v6492
        %v6494 = vpop.f32.mrb[0].mxu0
        %6495 = vmatprep.mubr.f32.mxu0 %v3990
        %6496 = vmatmul.mubr.f32.gmra.mrb[0].mxu0 %v3987
        %v6497 = vpop.f32.mrb[0].mxu0
        %v6498 = vadd.f32 %v6273, %v6497
        %v6499 = vpop.f32.mrb[0].mxu0
        %6500 = vmatprep.mubr.f32.mxu0 %v3994
        %6501 = vmatmul.mubr.f32.gmra.mrb[0].mxu0 %v3992
        %v6502 = vpop.f32.mrb[0].mxu0
        %v6503 = vadd.f32 %v6278, %v6502
        %v6504 = vpop.f32.mrb[0].mxu0
        %6505 = vmatprep.mubr.f32.mxu0 %v4000
        %6506 = vmatmul.mubr.f32.gmra.mrb[0].mxu0 %v3997
        %v6507 = vpop.f32.mrb[0].mxu0
        %v6508 = vadd.f32 %v6283, %v6507
        %v6509 = vpop.f32.mrb[0].mxu0
        %6510 = vmatprep.mubr.f32.mxu0 %v4004
        %6511 = vmatmul.mubr.f32.gmra.mrb[0].mxu0 %v4002
        %v6512 = vpop.f32.mrb[0].mxu0
        %v6513 = vadd.f32 %v6288, %v6512
        %v6514 = vpop.f32.mrb[0].mxu0
        %6515 = vmatprep.mubr.f32.mxu0 %v4010
        %6516 = vmatmul.mubr.f32.gmra.mrb[0].mxu0 %v4007
        %v6517 = vpop.f32.mrb[0].mxu0
        %v6518 = vadd.f32 %v6293, %v6517
        %v6519 = vpop.f32.mrb[0].mxu0
        %6520 = vmatprep.mubr.f32.mxu0 %v4014
        %6521 = vmatmul.mubr.f32.gmra.mrb[0].mxu0 %v4012
        %v6522 = vpop.f32.mrb[0].mxu0
        %v6523 = vadd.f32 %v6298, %v6522
        %v6524 = vpop.f32.mrb[0].mxu0
        %6525 = vmatprep.mubr.f32.mxu0 %v4020
        %6526 = vmatmul.mubr.f32.gmra.mrb[0].mxu0 %v4017
        %v6527 = vpop.f32.mrb[0].mxu0
        %v6528 = vadd.f32 %v6303, %v6527
        %v6529 = vpop.f32.mrb[0].mxu0
        %6530 = vmatprep.mubr.f32.mxu0 %v4024
        %6531 = vmatmul.mubr.f32.gmra.mrb[0].mxu0 %v4022
        %v6532 = vpop.f32.mrb[0].mxu0
        %v6533 = vadd.f32 %v6308, %v6532
        %v6534 = vpop.f32.mrb[0].mxu0
        %6535 = vmatprep.mubr.f32.mxu0 %v4030
        %6536 = vmatmul.mubr.f32.gmra.mrb[0].mxu0 %v4027
        %v6537 = vpop.f32.mrb[0].mxu0
        %v6538 = vadd.f32 %v6313, %v6537
        %v6539 = vpop.f32.mrb[0].mxu0
        %6540 = vmatprep.mubr.f32.mxu0 %v4034
        %6541 = vmatmul.mubr.f32.gmra.mrb[0].mxu0 %v4032
        %v6542 = vpop.f32.mrb[0].mxu0
        %v6543 = vadd.f32 %v6318, %v6542
        %v6544 = vpop.f32.mrb[0].mxu0
        %6545 = vmatprep.mubr.f32.mxu0 %v4040
        %6546 = vmatmul.mubr.f32.gmra.mrb[0].mxu0 %v4037
        %v6547 = vpop.f32.mrb[0].mxu0
        %v6548 = vadd.f32 %v6323, %v6547
        %v6549 = vpop.f32.mrb[0].mxu0
        %6550 = vmatprep.mubr.f32.mxu0 %v4044
        %6551 = vmatmul.mubr.f32.gmra.mrb[0].mxu0 %v4042
        %v6552 = vpop.f32.mrb[0].mxu0
        %v6553 = vadd.f32 %v6328, %v6552
        %v6554 = vpop.f32.mrb[0].mxu0
        %6555 = vmatprep.mubr.f32.mxu0 %v4050
        %6556 = vmatmul.mubr.f32.gmra.mrb[0].mxu0 %v4047
        %v6557 = vpop.f32.mrb[0].mxu0
        %v6558 = vadd.f32 %v6333, %v6557
        %v6559 = vpop.f32.mrb[0].mxu0
        %6560 = vmatprep.mubr.f32.mxu0 %v4054
        %6561 = vmatmul.mubr.f32.gmra.mrb[0].mxu0 %v4052
        %v6562 = vpop.f32.mrb[0].mxu0
        %v6563 = vadd.f32 %v6338, %v6562
        %v6564 = vpop.f32.mrb[0].mxu0
        %6565 = vmatprep.mubr.f32.mxu0 %v4060
        %6566 = vmatmul.mubr.f32.gmra.mrb[0].mxu0 %v4057
        %v6567 = vpop.f32.mrb[0].mxu0
        %v6568 = vadd.f32 %v6343, %v6567
        %v6569 = vpop.f32.mrb[0].mxu0
        %6570 = vmatprep.mubr.f32.mxu0 %v4064
        %6571 = vmatmul.mubr.f32.gmra.mrb[0].mxu0 %v4062
        %v6572 = vpop.f32.mrb[0].mxu0
        %v6573 = vadd.f32 %v6348, %v6572
        %v6574 = vpop.f32.mrb[0].mxu0
        %6575 = vmatprep.mubr.f32.mxu0 %v4070
        %6576 = vmatmul.mubr.f32.gmra.mrb[0].mxu0 %v4067
        %v6577 = vpop.f32.mrb[0].mxu0
        %v6578 = vadd.f32 %v6353, %v6577
        %v6579 = vpop.f32.mrb[0].mxu0
        %6580 = vmatprep.mubr.f32.mxu0 %v4074
        %6581 = vmatmul.mubr.f32.gmra.mrb[0].mxu0 %v4072
        %v6582 = vpop.f32.mrb[0].mxu0
        %v6583 = vadd.f32 %v6358, %v6582
        %v6584 = vpop.f32.mrb[0].mxu0
        %6585 = vmatprep.mubr.f32.mxu0 %v4080
        %6586 = vmatmul.mubr.f32.gmra.mrb[0].mxu0 %v4077
        %v6587 = vpop.f32.mrb[0].mxu0
        %v6588 = vadd.f32 %v6363, %v6587
        %v6589 = vpop.f32.mrb[0].mxu0
        %6590 = vmatprep.mubr.f32.mxu0 %v4084
        %6591 = vmatmul.mubr.f32.gmra.mrb[0].mxu0 %v4082
        %v6592 = vpop.f32.mrb[0].mxu0
        %v6593 = vadd.f32 %v6368, %v6592
        %v6594 = vpop.f32.mrb[0].mxu0
        %6595 = vmatprep.mubr.f32.mxu0 %v4090
        %6596 = vmatmul.mubr.f32.gmra.mrb[0].mxu0 %v4087
        %v6597 = vpop.f32.mrb[0].mxu0
        %v6598 = vadd.f32 %v6373, %v6597
        %v6599 = vpop.f32.mrb[0].mxu0
        %6600 = vmatprep.mubr.f32.mxu0 %v4094
        %6601 = vmatmul.mubr.f32.gmra.mrb[0].mxu0 %v4092
        %v6602 = vpop.f32.mrb[0].mxu0
        %v6603 = vadd.f32 %v6378, %v6602
        %v6604 = vpop.f32.mrb[0].mxu0
        %6605 = vmatprep.mubr.f32.mxu0 %v4100
        %6606 = vmatmul.mubr.f32.gmra.mrb[0].mxu0 %v4097
        %v6607 = vpop.f32.mrb[0].mxu0
        %v6608 = vadd.f32 %v6383, %v6607
        %v6609 = vpop.f32.mrb[0].mxu0
        %6610 = vmatprep.mubr.f32.mxu0 %v4104
        %6611 = vmatmul.mubr.f32.gmra.mrb[0].mxu0 %v4102
        %v6612 = vpop.f32.mrb[0].mxu0
        %v6613 = vadd.f32 %v6388, %v6612
        %v6614 = vpop.f32.mrb[0].mxu0
        %6615 = vmatprep.mubr.f32.mxu0 %v4110
        %6616 = vmatmul.mubr.f32.gmra.mrb[0].mxu0 %v4107
        %v6617 = vpop.f32.mrb[0].mxu0
        %v6618 = vadd.f32 %v6393, %v6617
        %v6619 = vpop.f32.mrb[0].mxu0
        %6620 = vmatprep.mubr.f32.mxu0 %v4114
        %6621 = vmatmul.mubr.f32.gmra.mrb[0].mxu0 %v4112
        %v6622 = vpop.f32.mrb[0].mxu0
        %v6623 = vadd.f32 %v6398, %v6622
        %v6624 = vpop.f32.mrb[0].mxu0
        %6625 = vdwg.mxu0
        %6626 = vmatprep.subr.mxu0 0.0
        %6627 = vmatpush1.msra.mxu0 %v4787
        %6628 = vmatprep.subr.mxu0 0.0
        %6629 = vmatpush1.msra.mxu0 %v4788
        %6630 = vmatprep.subr.mxu0 0.0
        %6631 = vmatpush1.msra.mxu0 %v4789
        %6632 = vmatprep.subr.mxu0 0.0
        %6633 = vmatpush1.msra.mxu0 %v4790
        %6634 = vmatprep.subr.mxu0 0.0
        %6635 = vmatpush1.msra.mxu0 %v4791
        %6636 = vmatprep.subr.mxu0 0.0
        %6637 = vmatpush1.msra.mxu0 %v4792
        %6638 = vmatprep.subr.mxu0 0.0
        %6639 = vmatpush1.msra.mxu0 %v4793
        %6640 = vmatprep.subr.mxu0 0.0
        %6641 = vmatpush1.msra.mxu0 %v4794
        %6642 = vmatprep.subr.mxu0 0.0
        %6643 = vmatpush1.msra.mxu0 %v4795
        %6644 = vmatprep.subr.mxu0 0.0
        %6645 = vmatpush1.msra.mxu0 %v4796
        %6646 = vmatprep.subr.mxu0 0.0
        %6647 = vmatpush1.msra.mxu0 %v4797
        %6648 = vmatprep.subr.mxu0 0.0
        %6649 = vmatpush1.msra.mxu0 %v4798
        %6650 = vmatprep.subr.mxu0 0.0
        %6651 = vmatpush1.msra.mxu0 %v4799
        %6652 = vmatprep.subr.mxu0 0.0
        %6653 = vmatpush1.msra.mxu0 %v4800
        %6654 = vmatprep.subr.mxu0 0.0
        %6655 = vmatpush1.msra.mxu0 %v4801
        %6656 = vmatprep.subr.mxu0 0.0
        %6657 = vmatpush1.msra.mxu0 %v4802
        %6658 = vmatprep.subr.mxu0 0.0
        %6659 = vmatpush1.msra.mxu0 %v4803
        %6660 = vmatprep.subr.mxu0 0.0
        %6661 = vmatpush1.msra.mxu0 %v4804
        %6662 = vmatprep.subr.mxu0 0.0
        %6663 = vmatpush1.msra.mxu0 %v4805
        %6664 = vmatprep.subr.mxu0 0.0
        %6665 = vmatpush1.msra.mxu0 %v4806
        %6666 = vmatprep.subr.mxu0 0.0
        %6667 = vmatpush1.msra.mxu0 %v4807
        %6668 = vmatprep.subr.mxu0 0.0
        %6669 = vmatpush1.msra.mxu0 %v4808
        %6670 = vmatprep.subr.mxu0 0.0
        %6671 = vmatpush1.msra.mxu0 %v4809
        %6672 = vmatprep.subr.mxu0 0.0
        %6673 = vmatpush1.msra.mxu0 %v4810
        %6674 = vmatprep.subr.mxu0 0.0
        %6675 = vmatpush1.msra.mxu0 %v4811
        %6676 = vmatprep.subr.mxu0 0.0
        %6677 = vmatpush1.msra.mxu0 %v4812
        %6678 = vmatprep.subr.mxu0 0.0
        %6679 = vmatpush1.msra.mxu0 %v4813
        %6680 = vmatprep.subr.mxu0 0.0
        %6681 = vmatpush1.msra.mxu0 %v4814
        %6682 = vmatprep.subr.mxu0 0.0
        %6683 = vmatpush1.msra.mxu0 %v4815
        %6684 = vmatprep.subr.mxu0 0.0
        %6685 = vmatpush1.msra.mxu0 %v4816
        %6686 = vmatprep.subr.mxu0 0.0
        %6687 = vmatpush1.msra.mxu0 %v4817
        %6688 = vmatprep.subr.mxu0 0.0
        %6689 = vmatpush1.msra.mxu0 %v4818
        %6690 = vmatprep.mubr.f32.mxu0 %v4312
        %6691 = vmatmul.mubr.f32.gmra.mrb[0].mxu0 %v4309
        %v6692 = vpop.f32.mrb[0].mxu0
        %v6693 = vadd.f32 %v6468, %v6692
        %v6694 = vpop.f32.mrb[0].mxu0
        %6695 = vmatprep.mubr.f32.mxu0 %v4316
        %6696 = vmatmul.mubr.f32.gmra.mrb[0].mxu0 %v4314
        %v6697 = vpop.f32.mrb[0].mxu0
        %v6698 = vadd.f32 %v6473, %v6697
        %v6699 = vpop.f32.mrb[0].mxu0
        %6700 = vmatprep.mubr.f32.mxu0 %v4322
        %6701 = vmatmul.mubr.f32.gmra.mrb[0].mxu0 %v4319
        %v6702 = vpop.f32.mrb[0].mxu0
        %v6703 = vadd.f32 %v6478, %v6702
        %v6704 = vpop.f32.mrb[0].mxu0
        %6705 = vmatprep.mubr.f32.mxu0 %v4326
        %6706 = vmatmul.mubr.f32.gmra.mrb[0].mxu0 %v4324
        %v6707 = vpop.f32.mrb[0].mxu0
        %v6708 = vadd.f32 %v6483, %v6707
        %v6709 = vpop.f32.mrb[0].mxu0
        %6710 = vmatprep.mubr.f32.mxu0 %v4332
        %6711 = vmatmul.mubr.f32.gmra.mrb[0].mxu0 %v4329
        %v6712 = vpop.f32.mrb[0].mxu0
        %v6713 = vadd.f32 %v6488, %v6712
        %v6714 = vpop.f32.mrb[0].mxu0
        %6715 = vmatprep.mubr.f32.mxu0 %v4336
        %6716 = vmatmul.mubr.f32.gmra.mrb[0].mxu0 %v4334
        %v6717 = vpop.f32.mrb[0].mxu0
        %v6718 = vadd.f32 %v6493, %v6717
        %v6719 = vpop.f32.mrb[0].mxu0
        %6720 = vmatprep.mubr.f32.mxu0 %v4342
        %6721 = vmatmul.mubr.f32.gmra.mrb[0].mxu0 %v4339
        %v6722 = vpop.f32.mrb[0].mxu0
        %v6723 = vadd.f32 %v6498, %v6722
        %v6724 = vpop.f32.mrb[0].mxu0
        %6725 = vmatprep.mubr.f32.mxu0 %v4346
        %6726 = vmatmul.mubr.f32.gmra.mrb[0].mxu0 %v4344
        %v6727 = vpop.f32.mrb[0].mxu0
        %v6728 = vadd.f32 %v6503, %v6727
        %v6729 = vpop.f32.mrb[0].mxu0
        %6730 = vmatprep.mubr.f32.mxu0 %v4352
        %6731 = vmatmul.mubr.f32.gmra.mrb[0].mxu0 %v4349
        %v6732 = vpop.f32.mrb[0].mxu0
        %v6733 = vadd.f32 %v6508, %v6732
        %v6734 = vpop.f32.mrb[0].mxu0
        %6735 = vmatprep.mubr.f32.mxu0 %v4356
        %6736 = vmatmul.mubr.f32.gmra.mrb[0].mxu0 %v4354
        %v6737 = vpop.f32.mrb[0].mxu0
        %v6738 = vadd.f32 %v6513, %v6737
        %v6739 = vpop.f32.mrb[0].mxu0
        %6740 = vmatprep.mubr.f32.mxu0 %v4362
        %6741 = vmatmul.mubr.f32.gmra.mrb[0].mxu0 %v4359
        %v6742 = vpop.f32.mrb[0].mxu0
        %v6743 = vadd.f32 %v6518, %v6742
        %v6744 = vpop.f32.mrb[0].mxu0
        %6745 = vmatprep.mubr.f32.mxu0 %v4366
        %6746 = vmatmul.mubr.f32.gmra.mrb[0].mxu0 %v4364
        %v6747 = vpop.f32.mrb[0].mxu0
        %v6748 = vadd.f32 %v6523, %v6747
        %v6749 = vpop.f32.mrb[0].mxu0
        %6750 = vmatprep.mubr.f32.mxu0 %v4372
        %6751 = vmatmul.mubr.f32.gmra.mrb[0].mxu0 %v4369
        %v6752 = vpop.f32.mrb[0].mxu0
        %v6753 = vadd.f32 %v6528, %v6752
        %v6754 = vpop.f32.mrb[0].mxu0
        %6755 = vmatprep.mubr.f32.mxu0 %v4376
        %6756 = vmatmul.mubr.f32.gmra.mrb[0].mxu0 %v4374
        %v6757 = vpop.f32.mrb[0].mxu0
        %v6758 = vadd.f32 %v6533, %v6757
        %v6759 = vpop.f32.mrb[0].mxu0
        %6760 = vmatprep.mubr.f32.mxu0 %v4382
        %6761 = vmatmul.mubr.f32.gmra.mrb[0].mxu0 %v4379
        %v6762 = vpop.f32.mrb[0].mxu0
        %v6763 = vadd.f32 %v6538, %v6762
        %v6764 = vpop.f32.mrb[0].mxu0
        %6765 = vmatprep.mubr.f32.mxu0 %v4386
        %6766 = vmatmul.mubr.f32.gmra.mrb[0].mxu0 %v4384
        %v6767 = vpop.f32.mrb[0].mxu0
        %v6768 = vadd.f32 %v6543, %v6767
        %v6769 = vpop.f32.mrb[0].mxu0
        %6770 = vmatprep.mubr.f32.mxu0 %v4392
        %6771 = vmatmul.mubr.f32.gmra.mrb[0].mxu0 %v4389
        %v6772 = vpop.f32.mrb[0].mxu0
        %v6773 = vadd.f32 %v6548, %v6772
        %v6774 = vpop.f32.mrb[0].mxu0
        %6775 = vmatprep.mubr.f32.mxu0 %v4396
        %6776 = vmatmul.mubr.f32.gmra.mrb[0].mxu0 %v4394
        %v6777 = vpop.f32.mrb[0].mxu0
        %v6778 = vadd.f32 %v6553, %v6777
        %v6779 = vpop.f32.mrb[0].mxu0
        %6780 = vmatprep.mubr.f32.mxu0 %v4402
        %6781 = vmatmul.mubr.f32.gmra.mrb[0].mxu0 %v4399
        %v6782 = vpop.f32.mrb[0].mxu0
        %v6783 = vadd.f32 %v6558, %v6782
        %v6784 = vpop.f32.mrb[0].mxu0
        %6785 = vmatprep.mubr.f32.mxu0 %v4406
        %6786 = vmatmul.mubr.f32.gmra.mrb[0].mxu0 %v4404
        %v6787 = vpop.f32.mrb[0].mxu0
        %v6788 = vadd.f32 %v6563, %v6787
        %v6789 = vpop.f32.mrb[0].mxu0
        %6790 = vmatprep.mubr.f32.mxu0 %v4412
        %6791 = vmatmul.mubr.f32.gmra.mrb[0].mxu0 %v4409
        %v6792 = vpop.f32.mrb[0].mxu0
        %v6793 = vadd.f32 %v6568, %v6792
        %v6794 = vpop.f32.mrb[0].mxu0
        %6795 = vmatprep.mubr.f32.mxu0 %v4416
        %6796 = vmatmul.mubr.f32.gmra.mrb[0].mxu0 %v4414
        %v6797 = vpop.f32.mrb[0].mxu0
        %v6798 = vadd.f32 %v6573, %v6797
        %v6799 = vpop.f32.mrb[0].mxu0
        %6800 = vmatprep.mubr.f32.mxu0 %v4422
        %6801 = vmatmul.mubr.f32.gmra.mrb[0].mxu0 %v4419
        %v6802 = vpop.f32.mrb[0].mxu0
        %v6803 = vadd.f32 %v6578, %v6802
        %v6804 = vpop.f32.mrb[0].mxu0
        %6805 = vmatprep.mubr.f32.mxu0 %v4426
        %6806 = vmatmul.mubr.f32.gmra.mrb[0].mxu0 %v4424
        %v6807 = vpop.f32.mrb[0].mxu0
        %v6808 = vadd.f32 %v6583, %v6807
        %v6809 = vpop.f32.mrb[0].mxu0
        %6810 = vmatprep.mubr.f32.mxu0 %v4432
        %6811 = vmatmul.mubr.f32.gmra.mrb[0].mxu0 %v4429
        %v6812 = vpop.f32.mrb[0].mxu0
        %v6813 = vadd.f32 %v6588, %v6812
        %v6814 = vpop.f32.mrb[0].mxu0
        %6815 = vmatprep.mubr.f32.mxu0 %v4436
        %6816 = vmatmul.mubr.f32.gmra.mrb[0].mxu0 %v4434
        %v6817 = vpop.f32.mrb[0].mxu0
        %v6818 = vadd.f32 %v6593, %v6817
        %v6819 = vpop.f32.mrb[0].mxu0
        %6820 = vmatprep.mubr.f32.mxu0 %v4442
        %6821 = vmatmul.mubr.f32.gmra.mrb[0].mxu0 %v4439
        %v6822 = vpop.f32.mrb[0].mxu0
        %v6823 = vadd.f32 %v6598, %v6822
        %v6824 = vpop.f32.mrb[0].mxu0
        %6825 = vmatprep.mubr.f32.mxu0 %v4446
        %6826 = vmatmul.mubr.f32.gmra.mrb[0].mxu0 %v4444
        %v6827 = vpop.f32.mrb[0].mxu0
        %v6828 = vadd.f32 %v6603, %v6827
        %v6829 = vpop.f32.mrb[0].mxu0
        %6830 = vmatprep.mubr.f32.mxu0 %v4452
        %6831 = vmatmul.mubr.f32.gmra.mrb[0].mxu0 %v4449
        %v6832 = vpop.f32.mrb[0].mxu0
        %v6833 = vadd.f32 %v6608, %v6832
        %v6834 = vpop.f32.mrb[0].mxu0
        %6835 = vmatprep.mubr.f32.mxu0 %v4456
        %6836 = vmatmul.mubr.f32.gmra.mrb[0].mxu0 %v4454
        %v6837 = vpop.f32.mrb[0].mxu0
        %v6838 = vadd.f32 %v6613, %v6837
        %v6839 = vpop.f32.mrb[0].mxu0
        %6840 = vmatprep.mubr.f32.mxu0 %v4462
        %6841 = vmatmul.mubr.f32.gmra.mrb[0].mxu0 %v4459
        %v6842 = vpop.f32.mrb[0].mxu0
        %v6843 = vadd.f32 %v6618, %v6842
        %v6844 = vpop.f32.mrb[0].mxu0
        %6845 = vmatprep.mubr.f32.mxu0 %v4466
        %6846 = vmatmul.mubr.f32.gmra.mrb[0].mxu0 %v4464
        %v6847 = vpop.f32.mrb[0].mxu0
        %v6848 = vadd.f32 %v6623, %v6847
        %v6849 = vpop.f32.mrb[0].mxu0
        %6850 = vdwg.mxu0
        %v6851 = vmax.f32 %v6693, 0.0
        %v6852 = vmax.f32 %v6698, 0.0
        %v6853 = vmax.f32 %v6703, 0.0
        %v6854 = vmax.f32 %v6708, 0.0
        %v6855 = vmax.f32 %v6713, 0.0
        %v6856 = vmax.f32 %v6718, 0.0
        %v6857 = vmax.f32 %v6723, 0.0
        %v6858 = vmax.f32 %v6728, 0.0
        %v6859 = vmax.f32 %v6733, 0.0
        %v6860 = vmax.f32 %v6738, 0.0
        %v6861 = vmax.f32 %v6743, 0.0
        %v6862 = vmax.f32 %v6748, 0.0
        %v6863 = vmax.f32 %v6753, 0.0
        %v6864 = vmax.f32 %v6758, 0.0
        %v6865 = vmax.f32 %v6763, 0.0
        %v6866 = vmax.f32 %v6768, 0.0
        %v6867 = vmax.f32 %v6773, 0.0
        %v6868 = vmax.f32 %v6778, 0.0
        %v6869 = vmax.f32 %v6783, 0.0
        %v6870 = vmax.f32 %v6788, 0.0
        %v6871 = vmax.f32 %v6793, 0.0
        %v6872 = vmax.f32 %v6798, 0.0
        %v6873 = vmax.f32 %v6803, 0.0
        %v6874 = vmax.f32 %v6808, 0.0
        %v6875 = vmax.f32 %v6813, 0.0
        %v6876 = vmax.f32 %v6818, 0.0
        %v6877 = vmax.f32 %v6823, 0.0
        %v6878 = vmax.f32 %v6828, 0.0
        %v6879 = vmax.f32 %v6833, 0.0
        %v6880 = vmax.f32 %v6838, 0.0
        %v6881 = vmax.f32 %v6843, 0.0
        %v6882 = vmax.f32 %v6848, 0.0
        %6883 = vst [vmem:[%s469] sm:$0xff] %v6851
        %6884 = vst [vmem:[%s469 + $0x8] sm:$0xff] %v6852
        %6885 = vst [vmem:[%s469 + $0x10] sm:$0xff] %v6853
        %6886 = vst [vmem:[%s469 + $0x18] sm:$0xff] %v6854
        %6887 = vst [vmem:[%s469 + $0x20] sm:$0xff] %v6855
        %6888 = vst [vmem:[%s469 + $0x28] sm:$0xff] %v6856
        %6889 = vst [vmem:[%s469 + $0x30] sm:$0xff] %v6857
        %6890 = vst [vmem:[%s469 + $0x38] sm:$0xff] %v6858
        %6891 = vst [vmem:[%s469 + $0x40] sm:$0xff] %v6859
        %6892 = vst [vmem:[%s469 + $0x48] sm:$0xff] %v6860
        %6893 = vst [vmem:[%s469 + $0x50] sm:$0xff] %v6861
        %6894 = vst [vmem:[%s469 + $0x58] sm:$0xff] %v6862
        %6895 = vst [vmem:[%s469 + $0x60] sm:$0xff] %v6863
        %6896 = vst [vmem:[%s469 + $0x68] sm:$0xff] %v6864
        %6897 = vst [vmem:[%s469 + $0x70] sm:$0xff] %v6865
        %6898 = vst [vmem:[%s469 + $0x78] sm:$0xff] %v6866
        %6899 = vst [vmem:[%s469 + $0x80] sm:$0xff] %v6867
        %6900 = vst [vmem:[%s469 + $0x88] sm:$0xff] %v6868
        %6901 = vst [vmem:[%s469 + $0x90] sm:$0xff] %v6869
        %6902 = vst [vmem:[%s469 + $0x98] sm:$0xff] %v6870
        %6903 = vst [vmem:[%s469 + $0xa0] sm:$0xff] %v6871
        %6904 = vst [vmem:[%s469 + $0xa8] sm:$0xff] %v6872
        %6905 = vst [vmem:[%s469 + $0xb0] sm:$0xff] %v6873
        %6906 = vst [vmem:[%s469 + $0xb8] sm:$0xff] %v6874
        %6907 = vst [vmem:[%s469 + $0xc0] sm:$0xff] %v6875
        %6908 = vst [vmem:[%s469 + $0xc8] sm:$0xff] %v6876
        %6909 = vst [vmem:[%s469 + $0xd0] sm:$0xff] %v6877
        %6910 = vst [vmem:[%s469 + $0xd8] sm:$0xff] %v6878
        %6911 = vst [vmem:[%s469 + $0xe0] sm:$0xff] %v6879
        %6912 = vst [vmem:[%s469 + $0xe8] sm:$0xff] %v6880
        %6913 = vst [vmem:[%s469 + $0xf0] sm:$0xff] %v6881
        %6914 = vst [vmem:[%s469 + $0xf8] sm:$0xff] %v6882
        %s6915 = sand.u32 %s222, 1
        %s6916 = scalar_lea.sflag [#allocation6], %s6915
        %s6917 = sand.u32 %s222, 1
        %s6918 = smul.addr %s6917, 256
        %s6919 = scalar_lea.vmem [#allocation18], %s6918
        // Predicated region
        $region85: #{_decoder_block_forward.1} parent=51 // pred_check
          %p6920 = pneg %p232
        $region86: #{_decoder_block_forward.1} parent=51 // pred_check_branch
          %6922 = sbr.rel (%p6920) target = $region88
        $region87: #{_decoder_block_forward.1} parent=51 // pred_region
          %s6924 = ssub.s32 4096, 4096
          %6925 = vsyncadd %s6916, %s6924
          %s6926 = smul.addr %s31, 32
          %s6927 = smul.addr %s6926, 128
          %s6928 = scalar_lea.hbm %s8, %s6927
          %s6929 = sshll.u32 %s6919, 4
          %s6930 = int_to_ptr.vmem [resolvable:$true] %s6929
          %6935 = dma.vmem_to_hbm [thread:$0]  %s6930, 4096, %s6928, %s6916, 128, 128, 8
        $region88: #{_decoder_block_forward.1} parent=51 // pred_fallthru
          _
      $region52: #{_decoder_block_forward.1} parent=5 // pred_fallthru
        _
      %p6936 = scmp.le.s32.totalorder 2, %s26
      // Predicated region
      $region89: #{_decoder_block_forward.1} parent=5 // pred_check
        %p6937 = pneg %p6936
      $region90: #{_decoder_block_forward.1} parent=5 // pred_check_branch
        %6939 = sbr.rel (%p6937) target = $region92
      $region91: #{_decoder_block_forward.1} parent=5 // pred_region
        %s6940 = ssub.s32 %s26, 2
        // Predicated region
        $region93: #{_decoder_block_forward.1} parent=91 // pred_check
          %p6941 = pneg %p238
        $region94: #{_decoder_block_forward.1} parent=91 // pred_check_branch
          %6943 = sbr.rel (%p6941) target = $region96
        $region95: #{_decoder_block_forward.1} parent=91 // pred_region
          %s6944 = sand.u32 %s223, 1
          %s6945 = scalar_lea.sflag [#allocation6], %s6944
          %s6946 = sand.u32 %s223, 1
          %s6947 = smul.addr %s6946, 256
          %s6948 = scalar_lea.vmem [#allocation18], %s6947
          %6949 = dma.done %s6945, 4096
        $region96: #{_decoder_block_forward.1} parent=91 // pred_fallthru
          _
      $region92: #{_decoder_block_forward.1} parent=5 // pred_fallthru
        _
    $region6: #{_decoder_block_forward.1} parent=1 // loop_footer
      %s30 = sadd.s32 1, %s26
    $region7: #{_decoder_block_forward.1} parent=1 // loop_footer_branch
      %25 = sbr.rel target = $region3
    $region8: #{_decoder_block_forward.1} parent=1 // loop_exit
      _
    %6950 = vsyncpa [#allocation5], 1
    %s6951 = scalar_lea.sflag [#allocation5], 1
    %6952 = vsyncpa %s6951, 1
    %6953 = vsyncpa [#allocation8], 1
    %s6954 = scalar_lea.sflag [#allocation8], 1
    %6955 = vsyncpa %s6954, 1
    %6956 = vsyncpa [#allocation11], 1
    %6957 = vsyncpa [#allocation14], 1
    %6958 = vsyncpa [#allocation17], 1
    %6959 = vsyncpa [#allocation6], 1
    %s6960 = scalar_lea.sflag [#allocation6], 1
    %6961 = vsyncpa %s6960, 1

</llo_original>
